<compile_context>
chip_gen: v7x
topology: tpu7x:2x2x1
jax: 0.10.0
libtpu: 0.0.40
codegen_flags: <defaults>
</compile_context>

<pallas_src>
import functools

import jax
import jax.numpy as jnp
from jax.experimental import pallas as pl
from jax.experimental.pallas import tpu as pltpu


def _round_up(x, m):
    return ((x + m - 1) // m) * m


# ---------------------------------------------------------------------------
# Conv GEMM kernel:  Y(Cout, tn) = relu(W(Cout, K) @ P(K, tn) + b(Cout, 1))
# Grid over the lane axis M; weights/bias are tiny and re-used every step.
# ---------------------------------------------------------------------------
def _conv_gemm_kernel(w_ref, p_ref, b_ref, o_ref, *, apply_relu):
    out = jnp.dot(w_ref[...], p_ref[...], preferred_element_type=jnp.float32)
    out = out + b_ref[...]
    if apply_relu:
        out = jnp.maximum(out, 0.0)
    o_ref[...] = out


def conv_gemm_pallas(w_pad, b_col, patches, *, relu=True):
    """w_pad: (Coutp, Kp) f32 pre-padded; b_col: (Coutp, 1) f32;
    patches: (K, M) f32  ->  (Coutp, M) f32."""
    Coutp, Kp = w_pad.shape
    K, M = patches.shape
    assert Kp >= K
    tn = min(512, _round_up(M, 128))          # lane tile
    Mp = _round_up(M, tn)
    p = jnp.pad(patches.astype(jnp.float32), ((0, Kp - K), (0, Mp - M)))
    out = pl.pallas_call(
        functools.partial(_conv_gemm_kernel, apply_relu=relu),
        out_shape=jax.ShapeDtypeStruct((Coutp, Mp), jnp.float32),
        grid=(Mp // tn,),
        in_specs=[
            pl.BlockSpec((Coutp, Kp), lambda m: (0, 0)),
            pl.BlockSpec((Kp, tn), lambda m: (0, m)),
            pl.BlockSpec((Coutp, 1), lambda m: (0, 0)),
        ],
        out_specs=pl.BlockSpec((Coutp, tn), lambda m: (0, m)),
        compiler_params=pltpu.CompilerParams(
            dimension_semantics=("parallel",)),
    )(w_pad, p, b_col)
    return out[:, :M]


# ---------------------------------------------------------------------------
# Fused AvgPool2d(3,2) + BatchNorm2d(affine=False, batch stats) kernel.
# Input: pool patches (C, 9, M3) (M3 = N*OH3*OW3); output: (C, M3) normalized.
# ---------------------------------------------------------------------------
def _pool_bn_kernel(p_ref, o_ref, *, eps):
    p = p_ref[...]                                   # (C, 9, M3)
    pooled = jnp.mean(p, axis=1)                     # (C, M3)  -- avg pool
    mean = jnp.mean(pooled, axis=1, keepdims=True)   # per-channel batch mean
    var = jnp.mean(jnp.square(pooled - mean), axis=1, keepdims=True)
    o_ref[...] = (pooled - mean) * jax.lax.rsqrt(var + eps)


def pool_bn_pallas(p, *, eps=1e-5):
    C, KK, M = p.shape
    return pl.pallas_call(
        functools.partial(_pool_bn_kernel, eps=eps),
        out_shape=jax.ShapeDtypeStruct((C, M), jnp.float32),
        grid=(1,),
        in_specs=[pl.BlockSpec((C, KK, M), lambda i: (0, 0, 0))],
        out_specs=pl.BlockSpec((C, M), lambda i: (0, 0)),
    )(p.astype(jnp.float32))


# ---------------------------------------------------------------------------
# Fused MLP head:  relu(z@W1+b1) -> relu(.@W2+b2) -> BatchNorm1d -> .@w3+b3
# Single pallas_call; bf16 MXU dots with f32 accumulation; padded batch rows
# are excluded from the BN1d statistics via a row mask.
# ---------------------------------------------------------------------------
def _mlp_head_kernel(z_ref, w1_ref, b1_ref, w2_ref, b2_ref, w3_ref, b3_ref,
                     o_ref, *, n_valid, eps):
    z = z_ref[...].astype(jnp.bfloat16)                       # cast in-kernel
    h1 = jnp.dot(z, w1_ref[...], preferred_element_type=jnp.float32)
    h1 = jnp.maximum(h1 + b1_ref[...], 0.0)                   # (Mp, 1024)
    h2 = jnp.dot(h1.astype(jnp.bfloat16), w2_ref[...],
                 preferred_element_type=jnp.float32)
    h2 = jnp.maximum(h2 + b2_ref[...], 0.0)                   # (Mp, 128)

    # BatchNorm1d (training-mode batch stats, biased variance) over the
    # n_valid real rows only -- padded rows must not contaminate the stats.
    rows = jax.lax.broadcasted_iota(jnp.int32, h2.shape, 0)
    valid = (rows < n_valid).astype(jnp.float32)
    inv_n = 1.0 / float(n_valid)
    mean = jnp.sum(h2 * valid, axis=0, keepdims=True) * inv_n
    cent = (h2 - mean) * valid
    var = jnp.sum(cent * cent, axis=0, keepdims=True) * inv_n
    hn = (h2 - mean) * jax.lax.rsqrt(var + eps)

    # Final Linear(128, 1): elementwise multiply + lane reduction.
    o_ref[...] = jnp.sum(hn * w3_ref[...], axis=1, keepdims=True) + b3_ref[...]


def mlp_head_pallas(z, w1, b1, w2, b2, w3, b3, *, eps=1e-5):
    """z: (M, K) f32; w1: (Kp, N1) bf16; b1: (1, N1) f32; w2: (N1, N2) bf16;
    b2: (1, N2) f32; w3: (1, N2) f32; b3: (1, 1) f32.  Returns (M, 1) f32."""
    M, K = z.shape
    Kp, N1 = w1.shape
    N1b, N2 = w2.shape
    assert Kp >= K and N1b == N1
    Mp = _round_up(M, 8)
    zp = jnp.pad(z.astype(jnp.float32), ((0, Mp - M), (0, Kp - K)))
    out = pl.pallas_call(
        functools.partial(_mlp_head_kernel, n_valid=M, eps=eps),
        out_shape=jax.ShapeDtypeStruct((Mp, 1), jnp.float32),
        grid=(1,),
        in_specs=[
            pl.BlockSpec((Mp, Kp), lambda i: (0, 0)),
            pl.BlockSpec((Kp, N1), lambda i: (0, 0)),
            pl.BlockSpec((1, N1), lambda i: (0, 0)),
            pl.BlockSpec((N1, N2), lambda i: (0, 0)),
            pl.BlockSpec((1, N2), lambda i: (0, 0)),
            pl.BlockSpec((1, N2), lambda i: (0, 0)),
            pl.BlockSpec((1, 1), lambda i: (0, 0)),
        ],
        out_specs=pl.BlockSpec((Mp, 1), lambda i: (0, 0)),
    )(zp, w1, b1, w2, b2, w3, b3)
    return out[:M, :]


# ---------------------------------------------------------------------------
# im2col on channel-first activations (XLA glue: pure slicing / reshape).
# x: (C, N, H, W) -> (C*k*k, N*OH*OW); K ordered (c, kh, kw), M ordered (n, oh, ow).
# ---------------------------------------------------------------------------
def im2col_cnhw(x, k, s):
    C, N, H, W = x.shape
    OH = (H - k) // s + 1
    OW = (W - k) // s + 1
    cols = []
    for kh in range(k):
        for kw in range(k):
            cols.append(
                x[:, :, kh: kh + s * (OH - 1) + 1: s, kw: kw + s * (OW - 1) + 1: s]
            )
    p = jnp.stack(cols, axis=1)                      # (C, k*k, N, OH, OW)
    return p.reshape(C * k * k, N * OH * OW), OH, OW


# ---------------------------------------------------------------------------
# Full forward pass (mirrors opticalFlowModel.forward)
# ---------------------------------------------------------------------------
def optical_flow_forward(prep, opt, x):
    N = opt.shape[0]
    cn = jnp.transpose(opt, (1, 0, 2, 3))            # (3, N, H, W) channel-first

    # conv1 (3->5, k=5, s=2) + ReLU
    p1, OH1, OW1 = im2col_cnhw(cn, 5, 2)
    y1 = conv_gemm_pallas(prep["conv1_w"], prep["conv1_b"], p1, relu=True)
    y1 = y1[:5].reshape(5, N, OH1, OW1)

    # conv2 (5->3, k=5, s=2) + ReLU
    p2, OH2, OW2 = im2col_cnhw(y1, 5, 2)
    y2 = conv_gemm_pallas(prep["conv2_w"], prep["conv2_b"], p2, relu=True)
    y2 = y2[:3].reshape(3, N, OH2, OW2)

    # AvgPool2d(3, stride=2) + BatchNorm2d(3, affine=False) fused.
    OH3 = (OH2 - 3) // 2 + 1
    OW3 = (OW2 - 3) // 2 + 1
    cols = []
    for kh in range(3):
        for kw in range(3):
            cols.append(
                y2[:, :, kh: kh + 2 * (OH3 - 1) + 1: 2, kw: kw + 2 * (OW3 - 1) + 1: 2]
            )
    pool_p = jnp.stack(cols, axis=1).reshape(3, 9, N * OH3 * OW3)
    y4 = pool_bn_pallas(pool_p)                      # (3, N*OH3*OW3)

    # Flatten in PyTorch NCHW order -> (N, 3*OH3*OW3), concat with x.
    feat = (
        y4.reshape(3, N, OH3 * OW3).transpose(1, 0, 2).reshape(N, 3 * OH3 * OW3)
    )
    z = jnp.concatenate([feat, x], axis=1)

    # Fused MLP head: (2000+feat) -> 1000 -> 128 -> BN1d -> 1  (one pallas_call)
    out = mlp_head_pallas(
        z, prep["lin1_w"], prep["lin1_b"], prep["lin2_w"], prep["lin2_b"],
        prep["lin3_w"], prep["lin3_b"],
    )
    return out                                       # (N, 1)


# ---------------------------------------------------------------------------
# Deterministic parameter init (PyTorch-style 1/sqrt(fan_in) uniform) and
# one-time weight preparation (reshape / pad / bf16 cast) OUTSIDE jit.
# ---------------------------------------------------------------------------
def init_params(key, conv_feat_dim, x_dim):
    ks = jax.random.split(key, 10)

    def u(k, shape, fan_in):
        b = 1.0 / jnp.sqrt(float(fan_in))
        return jax.random.uniform(k, shape, jnp.float32, -b, b)

    return {
        "conv1_w": u(ks[0], (5, 3, 5, 5), 3 * 25),
        "conv1_b": u(ks[1], (5,), 3 * 25),
        "conv2_w": u(ks[2], (3, 5, 5, 5), 5 * 25),
        "conv2_b": u(ks[3], (3,), 5 * 25),
        "lin1_w": u(ks[4], (x_dim + conv_feat_dim, 1000), x_dim + conv_feat_dim),
        "lin1_b": u(ks[5], (1000,), x_dim + conv_feat_dim),
        "lin2_w": u(ks[6], (1000, 128), 1000),
        "lin2_b": u(ks[7], (128,), 1000),
        "lin3_w": u(ks[8], (128, 1), 128),
        "lin3_b": u(ks[9], (1,), 128),
    }


def prepare_params(params):
    prep = {}
    # Conv weights -> (Coutp, Kp) f32, bias -> (Coutp, 1) f32.
    for name, cout in (("conv1", 5), ("conv2", 3)):
        w = params[f"{name}_w"].reshape(cout, -1).astype(jnp.float32)
        K = w.shape[1]
        coutp, kp = _round_up(cout, 8), _round_up(K, 128)
        prep[f"{name}_w"] = jnp.pad(w, ((0, coutp - cout), (0, kp - K)))
        prep[f"{name}_b"] = jnp.pad(
            params[f"{name}_b"].astype(jnp.float32).reshape(cout, 1),
            ((0, coutp - cout), (0, 0)),
        )
    # Linear weights -> (Kp, Np) bf16, bias -> (1, Np) f32 (zero-padded, so
    # padded output columns stay exactly 0 after ReLU and do not leak into
    # the next layer's padded-K dot).
    for name in ("lin1", "lin2"):
        w = params[f"{name}_w"].astype(jnp.float32)
        K, Nn = w.shape
        kp, np_ = _round_up(K, 128), _round_up(Nn, 128)
        prep[f"{name}_w"] = jnp.pad(w, ((0, kp - K), (0, np_ - Nn))).astype(
            jnp.bfloat16
        )
        prep[f"{name}_b"] = jnp.pad(
            params[f"{name}_b"].astype(jnp.float32).reshape(1, -1),
            ((0, 0), (0, np_ - Nn)),
        )
    # lin3 stored row-major (1, 128) for the fused head kernel.
    prep["lin3_w"] = params["lin3_w"].astype(jnp.float32).reshape(1, -1)
    prep["lin3_b"] = params["lin3_b"].astype(jnp.float32).reshape(1, 1)
    return prep


if __name__ == "__main__":
    # Small shapes: spatial 64x64 (module hardcodes 480; scaled down), batch 2,
    # x feature dim kept at 2000 as in the module.
    N, H, W, X_DIM = 2, 64, 64, 2000

    # Derive conv feature count exactly like the module does (trace shapes).
    oh = (H - 5) // 2 + 1          # conv1
    oh = (oh - 5) // 2 + 1         # conv2
    oh = (oh - 3) // 2 + 1         # avgpool
    conv_feat = 3 * oh * oh

    key = jax.random.PRNGKey(0)
    k_opt, k_x, k_param = jax.random.split(key, 3)
    opt = jax.random.normal(k_opt, (N, 3, H, W), jnp.float32)
    x = jax.random.normal(k_x, (N, X_DIM), jnp.float32)
    params = init_params(k_param, conv_feat, X_DIM)
    prep = prepare_params(params)          # weight reshape/pad/bf16 done once, outside jit

    fwd = jax.jit(optical_flow_forward)
    out = jax.block_until_ready(fwd(prep, opt, x))
    assert out.shape == (N, 1) and out.dtype == jnp.float32
    print("KERNEL_OK")
</pallas_src>

<mosaic_0001>
module attributes {stable_mosaic.version = 11 : i64} {
  func.func @_conv_gemm_kernel(%arg0: i32, %arg1: memref<8x128xf32, #tpu.memory_space<vmem>>, %arg2: memref<128x512xf32, #tpu.memory_space<vmem>>, %arg3: memref<8x1xf32, #tpu.memory_space<vmem>>, %arg4: memref<8x512xf32, #tpu.memory_space<vmem>>) attributes {dimension_semantics = [#tpu.dimension_semantics<parallel>], iteration_bounds = array<i64: 4>, scalar_prefetch = 0 : i64, scratch_operands = 0 : i64, tpu.core_type = #tpu.core_type<tc>, window_params = [{pipeline_mode = #tpu.pipeline_mode<synchronous>, transform_indices = @transform_0, window_bounds = array<i64: 8, 128>}, {transform_indices = @transform_1, window_bounds = array<i64: 128, 512>}, {pipeline_mode = #tpu.pipeline_mode<synchronous>, transform_indices = @transform_2, window_bounds = array<i64: 8, 1>}, {transform_indices = @transform_3, window_bounds = array<i64: 8, 512>}]} {
    %c0 = arith.constant 0 : index
    %c0_0 = arith.constant 0 : index
    %0 = vector.load %arg1[%c0, %c0_0] : memref<8x128xf32, #tpu.memory_space<vmem>>, vector<8x128xf32>
    %c0_1 = arith.constant 0 : index
    %c0_2 = arith.constant 0 : index
    %1 = vector.load %arg2[%c0_1, %c0_2] : memref<128x512xf32, #tpu.memory_space<vmem>>, vector<128x512xf32>
    %cst = arith.constant dense<0.000000e+00> : vector<8x512xf32>
    %2 = tpu.matmul %0, %1, %cst {dimension_numbers = #tpu.dot_dimension_numbers<[1], [0], [0], [1], [0, 0, 1, 1], [], []>} : vector<8x128xf32>, vector<128x512xf32>, vector<8x512xf32> -> vector<8x512xf32>
    %c0_3 = arith.constant 0 : index
    %c0_4 = arith.constant 0 : index
    %3 = vector.load %arg3[%c0_3, %c0_4] : memref<8x1xf32, #tpu.memory_space<vmem>>, vector<8x1xf32>
    %4 = vector.broadcast %3 : vector<8x1xf32> to vector<8x512xf32>
    %5 = arith.addf %2, %4 : vector<8x512xf32>
    %cst_5 = arith.constant 0.000000e+00 : f32
    %6 = vector.broadcast %cst_5 : f32 to vector<8x512xf32>
    %7 = arith.maximumf %5, %6 : vector<8x512xf32>
    %c0_6 = arith.constant 0 : index
    %c0_7 = arith.constant 0 : index
    %8 = vector.load %arg4[%c0_6, %c0_7] : memref<8x512xf32, #tpu.memory_space<vmem>>, vector<8x512xf32>
    tpu.vector_store %arg4[%c0_6, %c0_7], %7 {strides = array<i32>} : memref<8x512xf32, #tpu.memory_space<vmem>>, vector<8x512xf32>,
    return
  }
  func.func @transform_0(%arg0: i32) -> (i32, i32) {
    %c0_i32 = arith.constant 0 : i32
    %c0_i32_0 = arith.constant 0 : i32
    %c0_i32_1 = arith.constant 0 : i32
    return %c0_i32, %c0_i32_0 : i32, i32
  }
  func.func @transform_1(%arg0: i32) -> (i32, i32) {
    %c0_i32 = arith.constant 0 : i32
    %c0_i32_0 = arith.constant 0 : i32
    return %c0_i32, %arg0 : i32, i32
  }
  func.func @transform_2(%arg0: i32) -> (i32, i32) {
    %c0_i32 = arith.constant 0 : i32
    %c0_i32_0 = arith.constant 0 : i32
    %c0_i32_1 = arith.constant 0 : i32
    return %c0_i32, %c0_i32_0 : i32, i32
  }
  func.func @transform_3(%arg0: i32) -> (i32, i32) {
    %c0_i32 = arith.constant 0 : i32
    %c0_i32_0 = arith.constant 0 : i32
    return %c0_i32, %arg0 : i32, i32
  }
}

module attributes {stable_mosaic.version = 11 : i64} {
  func.func @_conv_gemm_kernel(%arg0: i32, %arg1: memref<8x128xf32, #tpu.memory_space<vmem>>, %arg2: memref<128x384xf32, #tpu.memory_space<vmem>>, %arg3: memref<8x1xf32, #tpu.memory_space<vmem>>, %arg4: memref<8x384xf32, #tpu.memory_space<vmem>>) attributes {dimension_semantics = [#tpu.dimension_semantics<parallel>], iteration_bounds = array<i64: 1>, scalar_prefetch = 0 : i64, scratch_operands = 0 : i64, tpu.core_type = #tpu.core_type<tc>, window_params = [{pipeline_mode = #tpu.pipeline_mode<synchronous>, transform_indices = @transform_0, window_bounds = array<i64: 8, 128>}, {transform_indices = @transform_1, window_bounds = array<i64: 128, 384>}, {pipeline_mode = #tpu.pipeline_mode<synchronous>, transform_indices = @transform_2, window_bounds = array<i64: 8, 1>}, {transform_indices = @transform_3, window_bounds = array<i64: 8, 384>}]} {
    %c0 = arith.constant 0 : index
    %c0_0 = arith.constant 0 : index
    %0 = vector.load %arg1[%c0, %c0_0] : memref<8x128xf32, #tpu.memory_space<vmem>>, vector<8x128xf32>
    %c0_1 = arith.constant 0 : index
    %c0_2 = arith.constant 0 : index
    %1 = vector.load %arg2[%c0_1, %c0_2] : memref<128x384xf32, #tpu.memory_space<vmem>>, vector<128x384xf32>
    %cst = arith.constant dense<0.000000e+00> : vector<8x384xf32>
    %2 = tpu.matmul %0, %1, %cst {dimension_numbers = #tpu.dot_dimension_numbers<[1], [0], [0], [1], [0, 0, 1, 1], [], []>} : vector<8x128xf32>, vector<128x384xf32>, vector<8x384xf32> -> vector<8x384xf32>
    %c0_3 = arith.constant 0 : index
    %c0_4 = arith.constant 0 : index
    %3 = vector.load %arg3[%c0_3, %c0_4] : memref<8x1xf32, #tpu.memory_space<vmem>>, vector<8x1xf32>
    %4 = vector.broadcast %3 : vector<8x1xf32> to vector<8x384xf32>
    %5 = arith.addf %2, %4 : vector<8x384xf32>
    %cst_5 = arith.constant 0.000000e+00 : f32
    %6 = vector.broadcast %cst_5 : f32 to vector<8x384xf32>
    %7 = arith.maximumf %5, %6 : vector<8x384xf32>
    %c0_6 = arith.constant 0 : index
    %c0_7 = arith.constant 0 : index
    %8 = vector.load %arg4[%c0_6, %c0_7] : memref<8x384xf32, #tpu.memory_space<vmem>>, vector<8x384xf32>
    tpu.vector_store %arg4[%c0_6, %c0_7], %7 {strides = array<i32>} : memref<8x384xf32, #tpu.memory_space<vmem>>, vector<8x384xf32>,
    return
  }
  func.func @transform_0(%arg0: i32) -> (i32, i32) {
    %c0_i32 = arith.constant 0 : i32
    %c0_i32_0 = arith.constant 0 : i32
    %c0_i32_1 = arith.constant 0 : i32
    return %c0_i32, %c0_i32_0 : i32, i32
  }
  func.func @transform_1(%arg0: i32) -> (i32, i32) {
    %c0_i32 = arith.constant 0 : i32
    %c0_i32_0 = arith.constant 0 : i32
    return %c0_i32, %arg0 : i32, i32
  }
  func.func @transform_2(%arg0: i32) -> (i32, i32) {
    %c0_i32 = arith.constant 0 : i32
    %c0_i32_0 = arith.constant 0 : i32
    %c0_i32_1 = arith.constant 0 : i32
    return %c0_i32, %c0_i32_0 : i32, i32
  }
  func.func @transform_3(%arg0: i32) -> (i32, i32) {
    %c0_i32 = arith.constant 0 : i32
    %c0_i32_0 = arith.constant 0 : i32
    return %c0_i32, %arg0 : i32, i32
  }
}

module attributes {stable_mosaic.version = 11 : i64} {
  func.func @_pool_bn_kernel(%arg0: i32, %arg1: memref<3x9x72xf32, #tpu.memory_space<vmem>>, %arg2: memref<3x72xf32, #tpu.memory_space<vmem>>) attributes {dimension_semantics = [#tpu.dimension_semantics<arbitrary>], iteration_bounds = array<i64: 1>, scalar_prefetch = 0 : i64, scratch_operands = 0 : i64, tpu.core_type = #tpu.core_type<tc>, window_params = [{pipeline_mode = #tpu.pipeline_mode<synchronous>, transform_indices = @transform_0, window_bounds = array<i64: 3, 9, 72>}, {pipeline_mode = #tpu.pipeline_mode<synchronous>, transform_indices = @transform_1, window_bounds = array<i64: 3, 72>}]} {
    %c0 = arith.constant 0 : index
    %c0_0 = arith.constant 0 : index
    %c0_1 = arith.constant 0 : index
    %0 = vector.load %arg1[%c0, %c0_0, %c0_1] : memref<3x9x72xf32, #tpu.memory_space<vmem>>, vector<3x9x72xf32>
    %cst = arith.constant dense<0.000000e+00> : vector<3x72xf32>
    %1 = vector.multi_reduction <add>, %0, %cst [1] : vector<3x9x72xf32> to vector<3x72xf32>
    %cst_2 = arith.constant 9.000000e+00 : f32
    %2 = vector.broadcast %cst_2 : f32 to vector<3x72xf32>
    %3 = arith.divf %1, %2 : vector<3x72xf32>
    %cst_3 = arith.constant dense<0.000000e+00> : vector<3xf32>
    %4 = vector.multi_reduction <add>, %3, %cst_3 [1] : vector<3x72xf32> to vector<3xf32>
    %5 = vector.shape_cast %4 : vector<3xf32> to vector<3x1xf32>
    %cst_4 = arith.constant 7.200000e+01 : f32
    %6 = vector.broadcast %cst_4 : f32 to vector<3x1xf32>
    %7 = arith.divf %5, %6 : vector<3x1xf32>
    %8 = vector.broadcast %7 : vector<3x1xf32> to vector<3x72xf32>
    %9 = arith.subf %3, %8 : vector<3x72xf32>
    %10 = arith.mulf %9, %9 : vector<3x72xf32>
    %cst_5 = arith.constant dense<0.000000e+00> : vector<3xf32>
    %11 = vector.multi_reduction <add>, %10, %cst_5 [1] : vector<3x72xf32> to vector<3xf32>
    %12 = vector.shape_cast %11 : vector<3xf32> to vector<3x1xf32>
    %cst_6 = arith.constant 7.200000e+01 : f32
    %13 = vector.broadcast %cst_6 : f32 to vector<3x1xf32>
    %14 = arith.divf %12, %13 : vector<3x1xf32>
    %15 = vector.broadcast %7 : vector<3x1xf32> to vector<3x72xf32>
    %16 = arith.subf %3, %15 : vector<3x72xf32>
    %cst_7 = arith.constant 9.99999974E-6 : f32
    %17 = vector.broadcast %cst_7 : f32 to vector<3x1xf32>
    %18 = arith.addf %14, %17 : vector<3x1xf32>
    %19 = math.rsqrt %18 : vector<3x1xf32>
    %20 = vector.broadcast %19 : vector<3x1xf32> to vector<3x72xf32>
    %21 = arith.mulf %16, %20 : vector<3x72xf32>
    %c0_8 = arith.constant 0 : index
    %c0_9 = arith.constant 0 : index
    %22 = vector.load %arg2[%c0_8, %c0_9] : memref<3x72xf32, #tpu.memory_space<vmem>>, vector<3x72xf32>
    tpu.vector_store %arg2[%c0_8, %c0_9], %21 {strides = array<i32>} : memref<3x72xf32, #tpu.memory_space<vmem>>, vector<3x72xf32>,
    return
  }
  func.func @transform_0(%arg0: i32) -> (i32, i32, i32) {
    %c0_i32 = arith.constant 0 : i32
    %c0_i32_0 = arith.constant 0 : i32
    %c0_i32_1 = arith.constant 0 : i32
    %c0_i32_2 = arith.constant 0 : i32
    return %c0_i32, %c0_i32_0, %c0_i32_1 : i32, i32, i32
  }
  func.func @transform_1(%arg0: i32) -> (i32, i32) {
    %c0_i32 = arith.constant 0 : i32
    %c0_i32_0 = arith.constant 0 : i32
    %c0_i32_1 = arith.constant 0 : i32
    return %c0_i32, %c0_i32_0 : i32, i32
  }
}

module attributes {stable_mosaic.version = 11 : i64} {
  func.func @_mlp_head_kernel(%arg0: i32, %arg1: memref<8x2176xf32, #tpu.memory_space<vmem>>, %arg2: memref<2176x1024xbf16, #tpu.memory_space<vmem>>, %arg3: memref<1x1024xf32, #tpu.memory_space<vmem>>, %arg4: memref<1024x128xbf16, #tpu.memory_space<vmem>>, %arg5: memref<1x128xf32, #tpu.memory_space<vmem>>, %arg6: memref<1x128xf32, #tpu.memory_space<vmem>>, %arg7: memref<1x1xf32, #tpu.memory_space<vmem>>, %arg8: memref<8x1xf32, #tpu.memory_space<vmem>>) attributes {dimension_semantics = [#tpu.dimension_semantics<arbitrary>], iteration_bounds = array<i64: 1>, scalar_prefetch = 0 : i64, scratch_operands = 0 : i64, tpu.core_type = #tpu.core_type<tc>, window_params = [{pipeline_mode = #tpu.pipeline_mode<synchronous>, transform_indices = @transform_0, window_bounds = array<i64: 8, 2176>}, {pipeline_mode = #tpu.pipeline_mode<synchronous>, transform_indices = @transform_1, window_bounds = array<i64: 2176, 1024>}, {pipeline_mode = #tpu.pipeline_mode<synchronous>, transform_indices = @transform_2, window_bounds = array<i64: 1, 1024>}, {pipeline_mode = #tpu.pipeline_mode<synchronous>, transform_indices = @transform_3, window_bounds = array<i64: 1024, 128>}, {pipeline_mode = #tpu.pipeline_mode<synchronous>, transform_indices = @transform_4, window_bounds = array<i64: 1, 128>}, {pipeline_mode = #tpu.pipeline_mode<synchronous>, transform_indices = @transform_5, window_bounds = array<i64: 1, 128>}, {pipeline_mode = #tpu.pipeline_mode<synchronous>, transform_indices = @transform_6, window_bounds = array<i64: 1, 1>}, {pipeline_mode = #tpu.pipeline_mode<synchronous>, transform_indices = @transform_7, window_bounds = array<i64: 8, 1>}]} {
    %c0 = arith.constant 0 : index
    %c0_0 = arith.constant 0 : index
    %0 = vector.load %arg1[%c0, %c0_0] : memref<8x2176xf32, #tpu.memory_space<vmem>>, vector<8x2176xf32>
    %1 = arith.truncf %0 : vector<8x2176xf32> to vector<8x2176xbf16>
    %c0_1 = arith.constant 0 : index
    %c0_2 = arith.constant 0 : index
    %2 = vector.load %arg2[%c0_1, %c0_2] : memref<2176x1024xbf16, #tpu.memory_space<vmem>>, vector<2176x1024xbf16>
    %cst = arith.constant dense<0.000000e+00> : vector<8x1024xf32>
    %3 = tpu.matmul %1, %2, %cst {dimension_numbers = #tpu.dot_dimension_numbers<[1], [0], [0], [1], [0, 0, 1, 1], [], []>} : vector<8x2176xbf16>, vector<2176x1024xbf16>, vector<8x1024xf32> -> vector<8x1024xf32>
    %c0_3 = arith.constant 0 : index
    %c0_4 = arith.constant 0 : index
    %4 = vector.load %arg3[%c0_3, %c0_4] : memref<1x1024xf32, #tpu.memory_space<vmem>>, vector<1x1024xf32>
    %5 = vector.broadcast %4 : vector<1x1024xf32> to vector<8x1024xf32>
    %6 = arith.addf %3, %5 : vector<8x1024xf32>
    %cst_5 = arith.constant 0.000000e+00 : f32
    %7 = vector.broadcast %cst_5 : f32 to vector<8x1024xf32>
    %8 = arith.maximumf %6, %7 : vector<8x1024xf32>
    %9 = arith.truncf %8 : vector<8x1024xf32> to vector<8x1024xbf16>
    %c0_6 = arith.constant 0 : index
    %c0_7 = arith.constant 0 : index
    %10 = vector.load %arg4[%c0_6, %c0_7] : memref<1024x128xbf16, #tpu.memory_space<vmem>>, vector<1024x128xbf16>
    %cst_8 = arith.constant dense<0.000000e+00> : vector<8x128xf32>
    %11 = tpu.matmul %9, %10, %cst_8 {dimension_numbers = #tpu.dot_dimension_numbers<[1], [0], [0], [1], [0, 0, 1, 1], [], []>} : vector<8x1024xbf16>, vector<1024x128xbf16>, vector<8x128xf32> -> vector<8x128xf32>
    %c0_9 = arith.constant 0 : index
    %c0_10 = arith.constant 0 : index
    %12 = vector.load %arg5[%c0_9, %c0_10] : memref<1x128xf32, #tpu.memory_space<vmem>>, vector<1x128xf32>
    %13 = vector.broadcast %12 : vector<1x128xf32> to vector<8x128xf32>
    %14 = arith.addf %11, %13 : vector<8x128xf32>
    %cst_11 = arith.constant 0.000000e+00 : f32
    %15 = vector.broadcast %cst_11 : f32 to vector<8x128xf32>
    %16 = arith.maximumf %14, %15 : vector<8x128xf32>
    %17 = tpu.iota {dimensions = array<i32: 0>} : vector<8x128xi32>
    %c2_i32 = arith.constant 2 : i32
    %18 = vector.broadcast %c2_i32 : i32 to vector<8x128xi32>
    %19 = arith.cmpi slt, %17, %18 : vector<8x128xi32>
    %20 = arith.extui %19 : vector<8x128xi1> to vector<8x128xi32>
    %21 = arith.sitofp %20 : vector<8x128xi32> to vector<8x128xf32>
    %22 = arith.mulf %16, %21 : vector<8x128xf32>
    %cst_12 = arith.constant dense<0.000000e+00> : vector<128xf32>
    %23 = vector.multi_reduction <add>, %22, %cst_12 [0] : vector<8x128xf32> to vector<128xf32>
    %24 = vector.shape_cast %23 : vector<128xf32> to vector<1x128xf32>
    %cst_13 = arith.constant 5.000000e-01 : f32
    %25 = vector.broadcast %cst_13 : f32 to vector<1x128xf32>
    %26 = arith.mulf %24, %25 : vector<1x128xf32>
    %27 = vector.broadcast %26 : vector<1x128xf32> to vector<8x128xf32>
    %28 = arith.subf %16, %27 : vector<8x128xf32>
    %29 = arith.mulf %28, %21 : vector<8x128xf32>
    %30 = arith.mulf %29, %29 : vector<8x128xf32>
    %cst_14 = arith.constant dense<0.000000e+00> : vector<128xf32>
    %31 = vector.multi_reduction <add>, %30, %cst_14 [0] : vector<8x128xf32> to vector<128xf32>
    %32 = vector.shape_cast %31 : vector<128xf32> to vector<1x128xf32>
    %cst_15 = arith.constant 5.000000e-01 : f32
    %33 = vector.broadcast %cst_15 : f32 to vector<1x128xf32>
    %34 = arith.mulf %32, %33 : vector<1x128xf32>
    %35 = vector.broadcast %26 : vector<1x128xf32> to vector<8x128xf32>
    %36 = arith.subf %16, %35 : vector<8x128xf32>
    %cst_16 = arith.constant 9.99999974E-6 : f32
    %37 = vector.broadcast %cst_16 : f32 to vector<1x128xf32>
    %38 = arith.addf %34, %37 : vector<1x128xf32>
    %39 = math.rsqrt %38 : vector<1x128xf32>
    %40 = vector.broadcast %39 : vector<1x128xf32> to vector<8x128xf32>
    %41 = arith.mulf %36, %40 : vector<8x128xf32>
    %c0_17 = arith.constant 0 : index
    %c0_18 = arith.constant 0 : index
    %42 = vector.load %arg6[%c0_17, %c0_18] : memref<1x128xf32, #tpu.memory_space<vmem>>, vector<1x128xf32>
    %43 = vector.broadcast %42 : vector<1x128xf32> to vector<8x128xf32>
    %44 = arith.mulf %41, %43 : vector<8x128xf32>
    %cst_19 = arith.constant dense<0.000000e+00> : vector<8xf32>
    %45 = vector.multi_reduction <add>, %44, %cst_19 [1] : vector<8x128xf32> to vector<8xf32>
    %46 = vector.shape_cast %45 : vector<8xf32> to vector<8x1xf32>
    %c0_20 = arith.constant 0 : index
    %c0_21 = arith.constant 0 : index
    %47 = vector.load %arg7[%c0_20, %c0_21] : memref<1x1xf32, #tpu.memory_space<vmem>>, vector<1x1xf32>
    %48 = vector.broadcast %47 : vector<1x1xf32> to vector<8x1xf32>
    %49 = arith.addf %46, %48 : vector<8x1xf32>
    %c0_22 = arith.constant 0 : index
    %c0_23 = arith.constant 0 : index
    %50 = vector.load %arg8[%c0_22, %c0_23] : memref<8x1xf32, #tpu.memory_space<vmem>>, vector<8x1xf32>
    tpu.vector_store %arg8[%c0_22, %c0_23], %49 {strides = array<i32>} : memref<8x1xf32, #tpu.memory_space<vmem>>, vector<8x1xf32>,
    return
  }
  func.func @transform_0(%arg0: i32) -> (i32, i32) {
    %c0_i32 = arith.constant 0 : i32
    %c0_i32_0 = arith.constant 0 : i32
    %c0_i32_1 = arith.constant 0 : i32
    return %c0_i32, %c0_i32_0 : i32, i32
  }
  func.func @transform_1(%arg0: i32) -> (i32, i32) {
    %c0_i32 = arith.constant 0 : i32
    %c0_i32_0 = arith.constant 0 : i32
    %c0_i32_1 = arith.constant 0 : i32
    return %c0_i32, %c0_i32_0 : i32, i32
  }
  func.func @transform_2(%arg0: i32) -> (i32, i32) {
    %c0_i32 = arith.constant 0 : i32
    %c0_i32_0 = arith.constant 0 : i32
    %c0_i32_1 = arith.constant 0 : i32
    return %c0_i32, %c0_i32_0 : i32, i32
  }
  func.func @transform_3(%arg0: i32) -> (i32, i32) {
    %c0_i32 = arith.constant 0 : i32
    %c0_i32_0 = arith.constant 0 : i32
    %c0_i32_1 = arith.constant 0 : i32
    return %c0_i32, %c0_i32_0 : i32, i32
  }
  func.func @transform_4(%arg0: i32) -> (i32, i32) {
    %c0_i32 = arith.constant 0 : i32
    %c0_i32_0 = arith.constant 0 : i32
    %c0_i32_1 = arith.constant 0 : i32
    return %c0_i32, %c0_i32_0 : i32, i32
  }
  func.func @transform_5(%arg0: i32) -> (i32, i32) {
    %c0_i32 = arith.constant 0 : i32
    %c0_i32_0 = arith.constant 0 : i32
    %c0_i32_1 = arith.constant 0 : i32
    return %c0_i32, %c0_i32_0 : i32, i32
  }
  func.func @transform_6(%arg0: i32) -> (i32, i32) {
    %c0_i32 = arith.constant 0 : i32
    %c0_i32_0 = arith.constant 0 : i32
    %c0_i32_1 = arith.constant 0 : i32
    return %c0_i32, %c0_i32_0 : i32, i32
  }
  func.func @transform_7(%arg0: i32) -> (i32, i32) {
    %c0_i32 = arith.constant 0 : i32
    %c0_i32_0 = arith.constant 0 : i32
    %c0_i32_1 = arith.constant 0 : i32
    return %c0_i32, %c0_i32_0 : i32, i32
  }
}

</mosaic_0001>

<llo_original>
// kernel: optical_flow_forward.4
$region0: #{optical_flow_forward.4}
  #allocation0 [shape = 'u32[]', space=smem, size = 0x4, offset = 0x4, fixed_abs, tag = 'smem constant byte address 0x4 - core index']
  #allocation1 [shape = 'u32[144,128]{1,0:T(1,128)}', space=vmem, size = 0x12000, scoped, tag = 'internal scratch']
  %s0 = inlined_call_operand.vmem [shape: f32[8,128], index: 0, kind: input, shape index: {}]
  %s1 = inlined_call_operand.vmem [shape: f32[128,2048], index: 1, kind: input, shape index: {}]
  %s2 = inlined_call_operand.vmem [shape: f32[8,1], index: 2, kind: input, shape index: {}]
  %s3 = inlined_call_operand.vmem [shape: f32[8,2048], index: 3, kind: output, shape index: {}]
  %s4 = sld [smem:[#allocation0]]
  $region68: #{optical_flow_forward.4} parent=0
    _
  %s6 = ssub.s32 1, %s4
  %s7 = scalar_select 0, %s6, %s4
  $region1: #{optical_flow_forward.4} parent=0
    #allocation2 [shape = 'u8[524288]{0}', space=vmem, size = 0x80000, scoped, tag = 'input window, operand 1']
    loop: start=0, step=1, limit=6
    $region2: #{optical_flow_forward.4} parent=1 // loop_pre_header
      _
    $region3: #{optical_flow_forward.4} parent=1 // loop_header
      %s9 = sphi 0, %s13
      %p10 = scmp.ge.s32.totalorder %s9, 6
      %s17 = sphi 0, %s17
      %s19 = sphi 0, %s17
      %s20 = sphi 0, %s19
      %s34 = sphi 0, %s20
      %s40 = sphi 0, %s42
      %s43 = sphi 0, %s40
      %s44 = sphi 0, %s43
      %s60 = sphi 0, %s44
      %s64 = sphi 0, %s64
      %s66 = sphi 0, %s64
      %s67 = sphi 0, %s66
      %s81 = sphi 0, %s67
      %s87 = sphi 0, %s89
      %s90 = sphi 0, %s87
      %s91 = sphi 0, %s90
      %s107 = sphi 0, %s91
    $region4: #{optical_flow_forward.4} parent=1 // loop_header_branch
      %12 = sbr.rel (%p10) target = $region8
    $region5: #{optical_flow_forward.4} parent=1 // loop_body
      %s14 = ssub.s32 %s9, 1
      %s15 = ssub.s32 %s9, 2
      %s16 = sadd.s32 %s9, 1
      %s18 = sadd.s32 %s17, 1
      %p21 = scmp.eq.s32.totalorder %s9, 3
      %p22 = scmp.ne.s32.totalorder %s17, %s19
      %p23 = scmp.eq.s32.totalorder %s9, 0
      %p24 = por %p22, %p23
      %p25 = scmp.ne.s32.totalorder %s17, %s19
      %p26 = scmp.eq.s32.totalorder %s14, 3
      %p27 = por %p25, %p26
      %p28 = scmp.ne.s32.totalorder %s19, %s20
      %p29 = scmp.eq.s32.totalorder %s14, 0
      %p30 = por %p28, %p29
      %p31 = scmp.ne.s32.totalorder %s19, %s20
      %p32 = scmp.eq.s32.totalorder %s15, 3
      %p33 = por %p31, %p32
      %p35 = scmp.ne.s32.totalorder %s20, %s34
      %p36 = scmp.eq.s32.totalorder %s15, 0
      %p37 = por %p35, %p36
      %s38 = ssub.s32 %s9, %s16
      %p39 = scmp.eq.s32.totalorder %s38, 0
      %s41 = sadd.s32 %s40, 1
      %s42 = scalar_select %p39, %s40, %s41
      %p45 = pneg %p39
      %p46 = scmp.eq.s32.totalorder %s9, 3
      %p47 = por %p45, %p46
      %p48 = scmp.ne.s32.totalorder %s40, %s43
      %p49 = scmp.eq.s32.totalorder %s9, 0
      %p50 = por %p48, %p49
      %p51 = scmp.ne.s32.totalorder %s40, %s43
      %p52 = scmp.eq.s32.totalorder %s14, 3
      %p53 = por %p51, %p52
      %p54 = scmp.ne.s32.totalorder %s43, %s44
      %p55 = scmp.eq.s32.totalorder %s14, 0
      %p56 = por %p54, %p55
      %p57 = scmp.ne.s32.totalorder %s43, %s44
      %p58 = scmp.eq.s32.totalorder %s15, 3
      %p59 = por %p57, %p58
      %p61 = scmp.ne.s32.totalorder %s44, %s60
      %p62 = scmp.eq.s32.totalorder %s15, 0
      %p63 = por %p61, %p62
      %s65 = sadd.s32 %s64, 1
      %p68 = scmp.eq.s32.totalorder %s9, 3
      %p69 = scmp.ne.s32.totalorder %s64, %s66
      %p70 = scmp.eq.s32.totalorder %s9, 0
      %p71 = por %p69, %p70
      %p72 = scmp.ne.s32.totalorder %s64, %s66
      %p73 = scmp.eq.s32.totalorder %s14, 3
      %p74 = por %p72, %p73
      %p75 = scmp.ne.s32.totalorder %s66, %s67
      %p76 = scmp.eq.s32.totalorder %s14, 0
      %p77 = por %p75, %p76
      %p78 = scmp.ne.s32.totalorder %s66, %s67
      %p79 = scmp.eq.s32.totalorder %s15, 3
      %p80 = por %p78, %p79
      %p82 = scmp.ne.s32.totalorder %s67, %s81
      %p83 = scmp.eq.s32.totalorder %s15, 0
      %p84 = por %p82, %p83
      %s85 = ssub.s32 %s9, %s16
      %p86 = scmp.eq.s32.totalorder %s85, 0
      %s88 = sadd.s32 %s87, 1
      %s89 = scalar_select %p86, %s87, %s88
      %p92 = pneg %p86
      %p93 = scmp.eq.s32.totalorder %s9, 3
      %p94 = por %p92, %p93
      %p95 = scmp.ne.s32.totalorder %s87, %s90
      %p96 = scmp.eq.s32.totalorder %s9, 0
      %p97 = por %p95, %p96
      %p98 = scmp.ne.s32.totalorder %s87, %s90
      %p99 = scmp.eq.s32.totalorder %s14, 3
      %p100 = por %p98, %p99
      %p101 = scmp.ne.s32.totalorder %s90, %s91
      %p102 = scmp.eq.s32.totalorder %s14, 0
      %p103 = por %p101, %p102
      %p104 = scmp.ne.s32.totalorder %s90, %s91
      %p105 = scmp.eq.s32.totalorder %s15, 3
      %p106 = por %p104, %p105
      %p108 = scmp.ne.s32.totalorder %s91, %s107
      %p109 = scmp.eq.s32.totalorder %s15, 0
      %p110 = por %p108, %p109
      %p111 = scmp.le.s32.totalorder 1, %s9
      %p112 = scmp.lt.s32.totalorder %s9, 5
      %p113 = pnand %p111, %p112
      %p114 = pneg %p113
      // Predicated region
      $region9: #{optical_flow_forward.4} parent=5 // pred_check
        _
      $region10: #{optical_flow_forward.4} parent=5 // pred_check_branch
        %116 = sbr.rel (%p113) target = $region12
      $region11: #{optical_flow_forward.4} parent=5 // pred_region
        %s117 = ssub.s32 %s9, 1
        // Predicated region
        $region13: #{optical_flow_forward.4} parent=11 // pred_check
          %p118 = pneg %p30
        $region14: #{optical_flow_forward.4} parent=11 // pred_check_branch
          %120 = sbr.rel (%p118) target = $region16
        $region15: #{optical_flow_forward.4} parent=11 // pred_region
          _
        $region16: #{optical_flow_forward.4} parent=11 // pred_fallthru
          _
        // Predicated region
        $region17: #{optical_flow_forward.4} parent=11 // pred_check
          %p121 = pneg %p77
        $region18: #{optical_flow_forward.4} parent=11 // pred_check_branch
          %123 = sbr.rel (%p121) target = $region20
        $region19: #{optical_flow_forward.4} parent=11 // pred_region
          _
        $region20: #{optical_flow_forward.4} parent=11 // pred_fallthru
          _
      $region12: #{optical_flow_forward.4} parent=5 // pred_fallthru
        _
      %p124 = scmp.lt.s32.totalorder %s9, 4
      // Predicated region
      $region21: #{optical_flow_forward.4} parent=5 // pred_check
        %p125 = pneg %p124
      $region22: #{optical_flow_forward.4} parent=5 // pred_check_branch
        %127 = sbr.rel (%p125) target = $region24
      $region23: #{optical_flow_forward.4} parent=5 // pred_region
        // Predicated region
        $region25: #{optical_flow_forward.4} parent=23 // pred_check
          %p128 = pneg %p50
        $region26: #{optical_flow_forward.4} parent=23 // pred_check_branch
          %130 = sbr.rel (%p128) target = $region28
        $region27: #{optical_flow_forward.4} parent=23 // pred_region
          %s131 = sand.u32 %s40, 1
          %s132 = sand.u32 %s40, 1
          %s133 = smul.addr %s132, 512
          %s134 = scalar_lea.vmem [#allocation2], %s133
          %s135 = smul.u32 4, %s9
          %s136 = smul.addr %s135, 8
          %s137 = scalar_lea.vmem %s1, %s136
          // Predicated region
          $region29: #{optical_flow_forward.4} parent=27 // pred_check
            _
          $region30: #{optical_flow_forward.4} parent=27 // pred_check_branch
            %139 = sbr.rel (0) target = $region32
          $region31: #{optical_flow_forward.4} parent=27 // pred_region
            // Predicated region
            $region33: #{optical_flow_forward.4} parent=31 // pred_check
              _
            $region34: #{optical_flow_forward.4} parent=31 // pred_check_branch
              %141 = sbr.rel (0) target = $region36
            $region35: #{optical_flow_forward.4} parent=31 // pred_region
              loop: start=0, step=1, limit=1
              $region37: #{optical_flow_forward.4} parent=35 // loop_pre_header
                _
              $region38: #{optical_flow_forward.4} parent=35 // loop_header
                %s143 = sphi 0, %s147
                %p144 = scmp.ge.s32.totalorder %s143, 1
                %s148 = sphi %s137, %s137
                %s149 = sphi %s134, %s134
              $region39: #{optical_flow_forward.4} parent=35 // loop_header_branch
                %146 = sbr.rel (%p144) target = $region43
              $region40: #{optical_flow_forward.4} parent=35 // loop_body
                %v150 = vld [vmem:[%s148] sm:$0xff]
                %151 = vst [vmem:[%s149] sm:$0xff] %v150
                %v152 = vld [vmem:[%s148 + $0x8] sm:$0xff]
                %153 = vst [vmem:[%s149 + $0x8] sm:$0xff] %v152
                %v154 = vld [vmem:[%s148 + $0x10] sm:$0xff]
                %155 = vst [vmem:[%s149 + $0x10] sm:$0xff] %v154
                %v156 = vld [vmem:[%s148 + $0x18] sm:$0xff]
                %157 = vst [vmem:[%s149 + $0x18] sm:$0xff] %v156
                %v158 = vld [vmem:[%s148 + $0x80] sm:$0xff]
                %159 = vst [vmem:[%s149 + $0x20] sm:$0xff] %v158
                %v160 = vld [vmem:[%s148 + $0x88] sm:$0xff]
                %161 = vst [vmem:[%s149 + $0x28] sm:$0xff] %v160
                %v162 = vld [vmem:[%s148 + $0x90] sm:$0xff]
                %163 = vst [vmem:[%s149 + $0x30] sm:$0xff] %v162
                %v164 = vld [vmem:[%s148 + $0x98] sm:$0xff]
                %165 = vst [vmem:[%s149 + $0x38] sm:$0xff] %v164
                %v166 = vld [vmem:[%s148 + $0x100] sm:$0xff]
                %167 = vst [vmem:[%s149 + $0x40] sm:$0xff] %v166
                %v168 = vld [vmem:[%s148 + $0x108] sm:$0xff]
                %169 = vst [vmem:[%s149 + $0x48] sm:$0xff] %v168
                %v170 = vld [vmem:[%s148 + $0x110] sm:$0xff]
                %171 = vst [vmem:[%s149 + $0x50] sm:$0xff] %v170
                %v172 = vld [vmem:[%s148 + $0x118] sm:$0xff]
                %173 = vst [vmem:[%s149 + $0x58] sm:$0xff] %v172
                %v174 = vld [vmem:[%s148 + $0x180] sm:$0xff]
                %175 = vst [vmem:[%s149 + $0x60] sm:$0xff] %v174
                %v176 = vld [vmem:[%s148 + $0x188] sm:$0xff]
                %177 = vst [vmem:[%s149 + $0x68] sm:$0xff] %v176
                %v178 = vld [vmem:[%s148 + $0x190] sm:$0xff]
                %179 = vst [vmem:[%s149 + $0x70] sm:$0xff] %v178
                %v180 = vld [vmem:[%s148 + $0x198] sm:$0xff]
                %181 = vst [vmem:[%s149 + $0x78] sm:$0xff] %v180
                %v182 = vld [vmem:[%s148 + $0x200] sm:$0xff]
                %183 = vst [vmem:[%s149 + $0x80] sm:$0xff] %v182
                %v184 = vld [vmem:[%s148 + $0x208] sm:$0xff]
                %185 = vst [vmem:[%s149 + $0x88] sm:$0xff] %v184
                %v186 = vld [vmem:[%s148 + $0x210] sm:$0xff]
                %187 = vst [vmem:[%s149 + $0x90] sm:$0xff] %v186
                %v188 = vld [vmem:[%s148 + $0x218] sm:$0xff]
                %189 = vst [vmem:[%s149 + $0x98] sm:$0xff] %v188
                %v190 = vld [vmem:[%s148 + $0x280] sm:$0xff]
                %191 = vst [vmem:[%s149 + $0xa0] sm:$0xff] %v190
                %v192 = vld [vmem:[%s148 + $0x288] sm:$0xff]
                %193 = vst [vmem:[%s149 + $0xa8] sm:$0xff] %v192
                %v194 = vld [vmem:[%s148 + $0x290] sm:$0xff]
                %195 = vst [vmem:[%s149 + $0xb0] sm:$0xff] %v194
                %v196 = vld [vmem:[%s148 + $0x298] sm:$0xff]
                %197 = vst [vmem:[%s149 + $0xb8] sm:$0xff] %v196
                %v198 = vld [vmem:[%s148 + $0x300] sm:$0xff]
                %199 = vst [vmem:[%s149 + $0xc0] sm:$0xff] %v198
                %v200 = vld [vmem:[%s148 + $0x308] sm:$0xff]
                %201 = vst [vmem:[%s149 + $0xc8] sm:$0xff] %v200
                %v202 = vld [vmem:[%s148 + $0x310] sm:$0xff]
                %203 = vst [vmem:[%s149 + $0xd0] sm:$0xff] %v202
                %v204 = vld [vmem:[%s148 + $0x318] sm:$0xff]
                %205 = vst [vmem:[%s149 + $0xd8] sm:$0xff] %v204
                %v206 = vld [vmem:[%s148 + $0x380] sm:$0xff]
                %207 = vst [vmem:[%s149 + $0xe0] sm:$0xff] %v206
                %v208 = vld [vmem:[%s148 + $0x388] sm:$0xff]
                %209 = vst [vmem:[%s149 + $0xe8] sm:$0xff] %v208
                %v210 = vld [vmem:[%s148 + $0x390] sm:$0xff]
                %211 = vst [vmem:[%s149 + $0xf0] sm:$0xff] %v210
                %v212 = vld [vmem:[%s148 + $0x398] sm:$0xff]
                %213 = vst [vmem:[%s149 + $0xf8] sm:$0xff] %v212
                %v214 = vld [vmem:[%s148 + $0x400] sm:$0xff]
                %215 = vst [vmem:[%s149 + $0x100] sm:$0xff] %v214
                %v216 = vld [vmem:[%s148 + $0x408] sm:$0xff]
                %217 = vst [vmem:[%s149 + $0x108] sm:$0xff] %v216
                %v218 = vld [vmem:[%s148 + $0x410] sm:$0xff]
                %219 = vst [vmem:[%s149 + $0x110] sm:$0xff] %v218
                %v220 = vld [vmem:[%s148 + $0x418] sm:$0xff]
                %221 = vst [vmem:[%s149 + $0x118] sm:$0xff] %v220
                %v222 = vld [vmem:[%s148 + $0x480] sm:$0xff]
                %223 = vst [vmem:[%s149 + $0x120] sm:$0xff] %v222
                %v224 = vld [vmem:[%s148 + $0x488] sm:$0xff]
                %225 = vst [vmem:[%s149 + $0x128] sm:$0xff] %v224
                %v226 = vld [vmem:[%s148 + $0x490] sm:$0xff]
                %227 = vst [vmem:[%s149 + $0x130] sm:$0xff] %v226
                %v228 = vld [vmem:[%s148 + $0x498] sm:$0xff]
                %229 = vst [vmem:[%s149 + $0x138] sm:$0xff] %v228
                %v230 = vld [vmem:[%s148 + $0x500] sm:$0xff]
                %231 = vst [vmem:[%s149 + $0x140] sm:$0xff] %v230
                %v232 = vld [vmem:[%s148 + $0x508] sm:$0xff]
                %233 = vst [vmem:[%s149 + $0x148] sm:$0xff] %v232
                %v234 = vld [vmem:[%s148 + $0x510] sm:$0xff]
                %235 = vst [vmem:[%s149 + $0x150] sm:$0xff] %v234
                %v236 = vld [vmem:[%s148 + $0x518] sm:$0xff]
                %237 = vst [vmem:[%s149 + $0x158] sm:$0xff] %v236
                %v238 = vld [vmem:[%s148 + $0x580] sm:$0xff]
                %239 = vst [vmem:[%s149 + $0x160] sm:$0xff] %v238
                %v240 = vld [vmem:[%s148 + $0x588] sm:$0xff]
                %241 = vst [vmem:[%s149 + $0x168] sm:$0xff] %v240
                %v242 = vld [vmem:[%s148 + $0x590] sm:$0xff]
                %243 = vst [vmem:[%s149 + $0x170] sm:$0xff] %v242
                %v244 = vld [vmem:[%s148 + $0x598] sm:$0xff]
                %245 = vst [vmem:[%s149 + $0x178] sm:$0xff] %v244
                %v246 = vld [vmem:[%s148 + $0x600] sm:$0xff]
                %247 = vst [vmem:[%s149 + $0x180] sm:$0xff] %v246
                %v248 = vld [vmem:[%s148 + $0x608] sm:$0xff]
                %249 = vst [vmem:[%s149 + $0x188] sm:$0xff] %v248
                %v250 = vld [vmem:[%s148 + $0x610] sm:$0xff]
                %251 = vst [vmem:[%s149 + $0x190] sm:$0xff] %v250
                %v252 = vld [vmem:[%s148 + $0x618] sm:$0xff]
                %253 = vst [vmem:[%s149 + $0x198] sm:$0xff] %v252
                %v254 = vld [vmem:[%s148 + $0x680] sm:$0xff]
                %255 = vst [vmem:[%s149 + $0x1a0] sm:$0xff] %v254
                %v256 = vld [vmem:[%s148 + $0x688] sm:$0xff]
                %257 = vst [vmem:[%s149 + $0x1a8] sm:$0xff] %v256
                %v258 = vld [vmem:[%s148 + $0x690] sm:$0xff]
                %259 = vst [vmem:[%s149 + $0x1b0] sm:$0xff] %v258
                %v260 = vld [vmem:[%s148 + $0x698] sm:$0xff]
                %261 = vst [vmem:[%s149 + $0x1b8] sm:$0xff] %v260
                %v262 = vld [vmem:[%s148 + $0x700] sm:$0xff]
                %263 = vst [vmem:[%s149 + $0x1c0] sm:$0xff] %v262
                %v264 = vld [vmem:[%s148 + $0x708] sm:$0xff]
                %265 = vst [vmem:[%s149 + $0x1c8] sm:$0xff] %v264
                %v266 = vld [vmem:[%s148 + $0x710] sm:$0xff]
                %267 = vst [vmem:[%s149 + $0x1d0] sm:$0xff] %v266
                %v268 = vld [vmem:[%s148 + $0x718] sm:$0xff]
                %269 = vst [vmem:[%s149 + $0x1d8] sm:$0xff] %v268
                %v270 = vld [vmem:[%s148 + $0x780] sm:$0xff]
                %271 = vst [vmem:[%s149 + $0x1e0] sm:$0xff] %v270
                %v272 = vld [vmem:[%s148 + $0x788] sm:$0xff]
                %273 = vst [vmem:[%s149 + $0x1e8] sm:$0xff] %v272
                %v274 = vld [vmem:[%s148 + $0x790] sm:$0xff]
                %275 = vst [vmem:[%s149 + $0x1f0] sm:$0xff] %v274
                %v276 = vld [vmem:[%s148 + $0x798] sm:$0xff]
                %277 = vst [vmem:[%s149 + $0x1f8] sm:$0xff] %v276
              $region41: #{optical_flow_forward.4} parent=35 // loop_footer
                %s147 = sadd.s32 1, %s143
              $region42: #{optical_flow_forward.4} parent=35 // loop_footer_branch
                %142 = sbr.rel target = $region38
              $region43: #{optical_flow_forward.4} parent=35 // loop_exit
                _
            $region36: #{optical_flow_forward.4} parent=31 // pred_fallthru
              _
            // Predicated region
            $region44: #{optical_flow_forward.4} parent=31 // pred_check
              _
            $region45: #{optical_flow_forward.4} parent=31 // pred_check_branch
              %279 = sbr.rel target = $region47
            $region46: #{optical_flow_forward.4} parent=31 // pred_region
              _
            $region47: #{optical_flow_forward.4} parent=31 // pred_fallthru
              _
          $region32: #{optical_flow_forward.4} parent=27 // pred_fallthru
            _
          %280 = vnop
        $region28: #{optical_flow_forward.4} parent=23 // pred_fallthru
          _
      $region24: #{optical_flow_forward.4} parent=5 // pred_fallthru
        _
      %p281 = scmp.le.s32.totalorder 1, %s9
      %p282 = scmp.lt.s32.totalorder %s9, 5
      %p283 = pnand %p281, %p282
      %p284 = pneg %p283
      // Predicated region
      $region48: #{optical_flow_forward.4} parent=5 // pred_check
        _
      $region49: #{optical_flow_forward.4} parent=5 // pred_check_branch
        %286 = sbr.rel (%p283) target = $region51
      $region50: #{optical_flow_forward.4} parent=5 // pred_region
        %s287 = ssub.s32 %s9, 1
        %s288 = sand.u32 %s43, 1
        %s289 = sand.u32 %s43, 1
        %s290 = smul.addr %s289, 512
        %s291 = scalar_lea.vmem [#allocation2], %s290
        // Predicated region
        $region52: #{optical_flow_forward.4} parent=50 // pred_check
          %p292 = pneg %p56
        $region53: #{optical_flow_forward.4} parent=50 // pred_check_branch
          %294 = sbr.rel (%p292) target = $region55
        $region54: #{optical_flow_forward.4} parent=50 // pred_region
          _
        $region55: #{optical_flow_forward.4} parent=50 // pred_fallthru
          _
        %p295 = pneg %p30
        %p296 = pneg %p27
        %s297 = sand.u32 %s43, 1
        %s298 = sand.u32 %s43, 1
        %s299 = smul.addr %s298, 512
        %s300 = scalar_lea.vmem [#allocation2], %s299
        %p301 = pneg %p56
        %p302 = pneg %p53
        %p303 = pneg %p77
        %p304 = pneg %p74
        %p305 = pneg %p103
        %p306 = pneg %p100
        %s307 = smul.u32 4, %s14
        %p308 = scmp.lt.s32.totalorder %s307, 15
        %s309 = scalar_select %p308, %s307, 15
        %s310 = smul.addr %s309, 8
        %s311 = scalar_lea.vmem %s3, %s310
        %s312 = smul.u32 4, %s14
        %s313 = smul.u32 4, %s14
        %p314 = scmp.lt.s32.totalorder %s313, 15
        %s315 = scalar_select %p314, %s313, 15
        %s316 = smul.addr %s315, 8
        %s317 = scalar_lea.vmem %s3, %s316
        %s318 = smul.u32 4, %s14
        %v319 = vld [vmem:[%s0] sm:$0xff]
        %v320 = vld [vmem:[%s291] sm:$0xff]
        %v321 = vld [vmem:[%s291 + $0x8] sm:$0xff]
        %v322 = vld [vmem:[%s291 + $0x10] sm:$0xff]
        %v323 = vld [vmem:[%s291 + $0x18] sm:$0xff]
        %v324 = vld [vmem:[%s291 + $0x20] sm:$0xff]
        %v325 = vld [vmem:[%s291 + $0x28] sm:$0xff]
        %v326 = vld [vmem:[%s291 + $0x30] sm:$0xff]
        %v327 = vld [vmem:[%s291 + $0x38] sm:$0xff]
        %v328 = vld [vmem:[%s291 + $0x40] sm:$0xff]
        %v329 = vld [vmem:[%s291 + $0x48] sm:$0xff]
        %v330 = vld [vmem:[%s291 + $0x50] sm:$0xff]
        %v331 = vld [vmem:[%s291 + $0x58] sm:$0xff]
        %v332 = vld [vmem:[%s291 + $0x60] sm:$0xff]
        %v333 = vld [vmem:[%s291 + $0x68] sm:$0xff]
        %v334 = vld [vmem:[%s291 + $0x70] sm:$0xff]
        %v335 = vld [vmem:[%s291 + $0x78] sm:$0xff]
        %v336 = vld [vmem:[%s291 + $0x80] sm:$0xff]
        %v337 = vld [vmem:[%s291 + $0x88] sm:$0xff]
        %v338 = vld [vmem:[%s291 + $0x90] sm:$0xff]
        %v339 = vld [vmem:[%s291 + $0x98] sm:$0xff]
        %v340 = vld [vmem:[%s291 + $0xa0] sm:$0xff]
        %v341 = vld [vmem:[%s291 + $0xa8] sm:$0xff]
        %v342 = vld [vmem:[%s291 + $0xb0] sm:$0xff]
        %v343 = vld [vmem:[%s291 + $0xb8] sm:$0xff]
        %v344 = vld [vmem:[%s291 + $0xc0] sm:$0xff]
        %v345 = vld [vmem:[%s291 + $0xc8] sm:$0xff]
        %v346 = vld [vmem:[%s291 + $0xd0] sm:$0xff]
        %v347 = vld [vmem:[%s291 + $0xd8] sm:$0xff]
        %v348 = vld [vmem:[%s291 + $0xe0] sm:$0xff]
        %v349 = vld [vmem:[%s291 + $0xe8] sm:$0xff]
        %v350 = vld [vmem:[%s291 + $0xf0] sm:$0xff]
        %v351 = vld [vmem:[%s291 + $0xf8] sm:$0xff]
        %v352 = vld [vmem:[%s291 + $0x100] sm:$0xff]
        %v353 = vld [vmem:[%s291 + $0x108] sm:$0xff]
        %v354 = vld [vmem:[%s291 + $0x110] sm:$0xff]
        %v355 = vld [vmem:[%s291 + $0x118] sm:$0xff]
        %v356 = vld [vmem:[%s291 + $0x120] sm:$0xff]
        %v357 = vld [vmem:[%s291 + $0x128] sm:$0xff]
        %v358 = vld [vmem:[%s291 + $0x130] sm:$0xff]
        %v359 = vld [vmem:[%s291 + $0x138] sm:$0xff]
        %v360 = vld [vmem:[%s291 + $0x140] sm:$0xff]
        %v361 = vld [vmem:[%s291 + $0x148] sm:$0xff]
        %v362 = vld [vmem:[%s291 + $0x150] sm:$0xff]
        %v363 = vld [vmem:[%s291 + $0x158] sm:$0xff]
        %v364 = vld [vmem:[%s291 + $0x160] sm:$0xff]
        %v365 = vld [vmem:[%s291 + $0x168] sm:$0xff]
        %v366 = vld [vmem:[%s291 + $0x170] sm:$0xff]
        %v367 = vld [vmem:[%s291 + $0x178] sm:$0xff]
        %v368 = vld [vmem:[%s291 + $0x180] sm:$0xff]
        %v369 = vld [vmem:[%s291 + $0x188] sm:$0xff]
        %v370 = vld [vmem:[%s291 + $0x190] sm:$0xff]
        %v371 = vld [vmem:[%s291 + $0x198] sm:$0xff]
        %v372 = vld [vmem:[%s291 + $0x1a0] sm:$0xff]
        %v373 = vld [vmem:[%s291 + $0x1a8] sm:$0xff]
        %v374 = vld [vmem:[%s291 + $0x1b0] sm:$0xff]
        %v375 = vld [vmem:[%s291 + $0x1b8] sm:$0xff]
        %v376 = vld [vmem:[%s291 + $0x1c0] sm:$0xff]
        %v377 = vld [vmem:[%s291 + $0x1c8] sm:$0xff]
        %v378 = vld [vmem:[%s291 + $0x1d0] sm:$0xff]
        %v379 = vld [vmem:[%s291 + $0x1d8] sm:$0xff]
        %v380 = vld [vmem:[%s291 + $0x1e0] sm:$0xff]
        %v381 = vld [vmem:[%s291 + $0x1e8] sm:$0xff]
        %v382 = vld [vmem:[%s291 + $0x1f0] sm:$0xff]
        %v383 = vld [vmem:[%s291 + $0x1f8] sm:$0xff]
        %v384 = vld [vmem:[%s2] sm:$0xff]
        %386 = vset.pattern.permute.xlu0 0
        %387 = vperm.xlu0 %386, %v384
        %v388 = vpop.permute.xlu0 %387
        %390 = vmatprep.subr.mxu0 %v321
        %391 = vmatpush1.msra.mxu0 %v320
        %392 = vmatprep.subr.mxu0 %v325
        %393 = vmatpush1.msra.mxu0 %v324
        %394 = vmatprep.subr.mxu0 %v329
        %395 = vmatpush1.msra.mxu0 %v328
        %396 = vmatprep.subr.mxu0 %v333
        %397 = vmatpush1.msra.mxu0 %v332
        %398 = vmatprep.subr.mxu0 %v337
        %399 = vmatpush1.msra.mxu0 %v336
        %400 = vmatprep.subr.mxu0 %v341
        %401 = vmatpush1.msra.mxu0 %v340
        %402 = vmatprep.subr.mxu0 %v345
        %403 = vmatpush1.msra.mxu0 %v344
        %404 = vmatprep.subr.mxu0 %v349
        %405 = vmatpush1.msra.mxu0 %v348
        %406 = vmatprep.subr.mxu0 %v353
        %407 = vmatpush1.msra.mxu0 %v352
        %408 = vmatprep.subr.mxu0 %v357
        %409 = vmatpush1.msra.mxu0 %v356
        %410 = vmatprep.subr.mxu0 %v361
        %411 = vmatpush1.msra.mxu0 %v360
        %412 = vmatprep.subr.mxu0 %v365
        %413 = vmatpush1.msra.mxu0 %v364
        %414 = vmatprep.subr.mxu0 %v369
        %415 = vmatpush1.msra.mxu0 %v368
        %416 = vmatprep.subr.mxu0 %v373
        %417 = vmatpush1.msra.mxu0 %v372
        %418 = vmatprep.subr.mxu0 %v377
        %419 = vmatpush1.msra.mxu0 %v376
        %420 = vmatprep.subr.mxu0 %v381
        %421 = vmatpush1.msra.mxu0 %v380
        %422 = vmatprep.subr.mxu0 0.0
        %423 = vmatpush1.msra.mxu0 0.0
        %424 = vmatprep.subr.mxu0 0.0
        %425 = vmatpush1.msra.mxu0 0.0
        %426 = vmatprep.subr.mxu0 0.0
        %427 = vmatpush1.msra.mxu0 0.0
        %428 = vmatprep.subr.mxu0 0.0
        %429 = vmatpush1.msra.mxu0 0.0
        %430 = vmatprep.subr.mxu0 0.0
        %431 = vmatpush1.msra.mxu0 0.0
        %432 = vmatprep.subr.mxu0 0.0
        %433 = vmatpush1.msra.mxu0 0.0
        %434 = vmatprep.subr.mxu0 0.0
        %435 = vmatpush1.msra.mxu0 0.0
        %436 = vmatprep.subr.mxu0 0.0
        %437 = vmatpush1.msra.mxu0 0.0
        %438 = vmatprep.subr.mxu0 0.0
        %439 = vmatpush1.msra.mxu0 0.0
        %440 = vmatprep.subr.mxu0 0.0
        %441 = vmatpush1.msra.mxu0 0.0
        %442 = vmatprep.subr.mxu0 0.0
        %443 = vmatpush1.msra.mxu0 0.0
        %444 = vmatprep.subr.mxu0 0.0
        %445 = vmatpush1.msra.mxu0 0.0
        %446 = vmatprep.subr.mxu0 0.0
        %447 = vmatpush1.msra.mxu0 0.0
        %448 = vmatprep.subr.mxu0 0.0
        %449 = vmatpush1.msra.mxu0 0.0
        %450 = vmatprep.subr.mxu0 0.0
        %451 = vmatpush1.msra.mxu0 0.0
        %452 = vmatprep.subr.mxu0 0.0
        %453 = vmatpush1.msra.mxu0 0.0
        %454 = vmatprep.mubr.f32.mxu0 0.0
        %455 = vmatmul.mubr.f32.gmra.mrb[0].mxu0 %v319
        %v456 = vpop.f32.mrb[0].mxu0
        %v457 = vadd.f32 %v388, %v456
        %v458 = vpop.f32.mrb[0].mxu0
        %v459 = vadd.f32 %v388, %v458
        %460 = vdwg.mxu0
        %461 = vmatprep.subr.mxu0 %v323
        %462 = vmatpush1.msra.mxu0 %v322
        %463 = vmatprep.subr.mxu0 %v327
        %464 = vmatpush1.msra.mxu0 %v326
        %465 = vmatprep.subr.mxu0 %v331
        %466 = vmatpush1.msra.mxu0 %v330
        %467 = vmatprep.subr.mxu0 %v335
        %468 = vmatpush1.msra.mxu0 %v334
        %469 = vmatprep.subr.mxu0 %v339
        %470 = vmatpush1.msra.mxu0 %v338
        %471 = vmatprep.subr.mxu0 %v343
        %472 = vmatpush1.msra.mxu0 %v342
        %473 = vmatprep.subr.mxu0 %v347
        %474 = vmatpush1.msra.mxu0 %v346
        %475 = vmatprep.subr.mxu0 %v351
        %476 = vmatpush1.msra.mxu0 %v350
        %477 = vmatprep.subr.mxu0 %v355
        %478 = vmatpush1.msra.mxu0 %v354
        %479 = vmatprep.subr.mxu0 %v359
        %480 = vmatpush1.msra.mxu0 %v358
        %481 = vmatprep.subr.mxu0 %v363
        %482 = vmatpush1.msra.mxu0 %v362
        %483 = vmatprep.subr.mxu0 %v367
        %484 = vmatpush1.msra.mxu0 %v366
        %485 = vmatprep.subr.mxu0 %v371
        %486 = vmatpush1.msra.mxu0 %v370
        %487 = vmatprep.subr.mxu0 %v375
        %488 = vmatpush1.msra.mxu0 %v374
        %489 = vmatprep.subr.mxu0 %v379
        %490 = vmatpush1.msra.mxu0 %v378
        %491 = vmatprep.subr.mxu0 %v383
        %492 = vmatpush1.msra.mxu0 %v382
        %493 = vmatprep.subr.mxu0 0.0
        %494 = vmatpush1.msra.mxu0 0.0
        %495 = vmatprep.subr.mxu0 0.0
        %496 = vmatpush1.msra.mxu0 0.0
        %497 = vmatprep.subr.mxu0 0.0
        %498 = vmatpush1.msra.mxu0 0.0
        %499 = vmatprep.subr.mxu0 0.0
        %500 = vmatpush1.msra.mxu0 0.0
        %501 = vmatprep.subr.mxu0 0.0
        %502 = vmatpush1.msra.mxu0 0.0
        %503 = vmatprep.subr.mxu0 0.0
        %504 = vmatpush1.msra.mxu0 0.0
        %505 = vmatprep.subr.mxu0 0.0
        %506 = vmatpush1.msra.mxu0 0.0
        %507 = vmatprep.subr.mxu0 0.0
        %508 = vmatpush1.msra.mxu0 0.0
        %509 = vmatprep.subr.mxu0 0.0
        %510 = vmatpush1.msra.mxu0 0.0
        %511 = vmatprep.subr.mxu0 0.0
        %512 = vmatpush1.msra.mxu0 0.0
        %513 = vmatprep.subr.mxu0 0.0
        %514 = vmatpush1.msra.mxu0 0.0
        %515 = vmatprep.subr.mxu0 0.0
        %516 = vmatpush1.msra.mxu0 0.0
        %517 = vmatprep.subr.mxu0 0.0
        %518 = vmatpush1.msra.mxu0 0.0
        %519 = vmatprep.subr.mxu0 0.0
        %520 = vmatpush1.msra.mxu0 0.0
        %521 = vmatprep.subr.mxu0 0.0
        %522 = vmatpush1.msra.mxu0 0.0
        %523 = vmatprep.subr.mxu0 0.0
        %524 = vmatpush1.msra.mxu0 0.0
        %525 = vmatprep.mubr.f32.mxu0 0.0
        %526 = vmatmul.mubr.f32.gmra.mrb[0].mxu0 %v319
        %v527 = vpop.f32.mrb[0].mxu0
        %v528 = vadd.f32 %v388, %v527
        %v529 = vpop.f32.mrb[0].mxu0
        %v530 = vadd.f32 %v388, %v529
        %531 = vdwg.mxu0
        %v532 = vmax.f32 %v457, 0.0
        %v533 = vmax.f32 %v459, 0.0
        %v534 = vmax.f32 %v528, 0.0
        %v535 = vmax.f32 %v530, 0.0
        %536 = vst [vmem:[%s317] sm:$0xff] %v532
        %537 = vst [vmem:[%s317 + $0x8] sm:$0xff] %v533
        %538 = vst [vmem:[%s317 + $0x10] sm:$0xff] %v534
        %539 = vst [vmem:[%s317 + $0x18] sm:$0xff] %v535
        %s540 = smul.u32 4, %s14
        %p541 = scmp.lt.s32.totalorder %s540, 15
        %s542 = scalar_select %p541, %s540, 15
        %s543 = smul.addr %s542, 8
        %s544 = scalar_lea.vmem %s3, %s543
        // Predicated region
        $region56: #{optical_flow_forward.4} parent=50 // pred_check
          %p545 = pneg %p100
        $region57: #{optical_flow_forward.4} parent=50 // pred_check_branch
          %547 = sbr.rel (%p545) target = $region59
        $region58: #{optical_flow_forward.4} parent=50 // pred_region
          %s548 = smul.u32 4, %s14
        $region59: #{optical_flow_forward.4} parent=50 // pred_fallthru
          _
      $region51: #{optical_flow_forward.4} parent=5 // pred_fallthru
        _
      %p549 = scmp.le.s32.totalorder 2, %s9
      // Predicated region
      $region60: #{optical_flow_forward.4} parent=5 // pred_check
        %p550 = pneg %p549
      $region61: #{optical_flow_forward.4} parent=5 // pred_check_branch
        %552 = sbr.rel (%p550) target = $region63
      $region62: #{optical_flow_forward.4} parent=5 // pred_region
        %s553 = ssub.s32 %s9, 2
        // Predicated region
        $region64: #{optical_flow_forward.4} parent=62 // pred_check
          %p554 = pneg %p106
        $region65: #{optical_flow_forward.4} parent=62 // pred_check_branch
          %556 = sbr.rel (%p554) target = $region67
        $region66: #{optical_flow_forward.4} parent=62 // pred_region
          %s557 = smul.u32 4, %s15
          %p558 = scmp.lt.s32.totalorder %s557, 15
          %s559 = scalar_select %p558, %s557, 15
          %s560 = smul.addr %s559, 8
          %s561 = scalar_lea.vmem %s3, %s560
        $region67: #{optical_flow_forward.4} parent=62 // pred_fallthru
          _
      $region63: #{optical_flow_forward.4} parent=5 // pred_fallthru
        _
    $region6: #{optical_flow_forward.4} parent=1 // loop_footer
      %s13 = sadd.s32 1, %s9
    $region7: #{optical_flow_forward.4} parent=1 // loop_footer_branch
      %8 = sbr.rel target = $region3
    $region8: #{optical_flow_forward.4} parent=1 // loop_exit
      _

// kernel: optical_flow_forward.5
$region0: #{optical_flow_forward.5}
  #allocation0 [shape = 'u32[]', space=smem, size = 0x4, offset = 0x4, fixed_abs, tag = 'smem constant byte address 0x4 - core index']
  #allocation1 [shape = 'u32[144,128]{1,0:T(1,128)}', space=vmem, size = 0x12000, scoped, tag = 'internal scratch']
  %s0 = inlined_call_operand.vmem [shape: f32[8,128], index: 0, kind: input, shape index: {}]
  %s1 = inlined_call_operand.vmem [shape: f32[128,384], index: 1, kind: input, shape index: {}]
  %s2 = inlined_call_operand.vmem [shape: f32[8,1], index: 2, kind: input, shape index: {}]
  %s3 = inlined_call_operand.vmem [shape: f32[8,384], index: 3, kind: output, shape index: {}]
  %s4 = sld [smem:[#allocation0]]
  $region22: #{optical_flow_forward.5} parent=0
    _
  %s6 = ssub.s32 1, %s4
  %s7 = scalar_select 0, %s6, %s4
  // Predicated region
  $region2: #{optical_flow_forward.5} parent=0 // pred_check
    _
  $region3: #{optical_flow_forward.5} parent=0 // pred_check_branch
    %9 = sbr.rel (0) target = $region5
  $region4: #{optical_flow_forward.5} parent=0 // pred_region
    _
  $region5: #{optical_flow_forward.5} parent=0 // pred_fallthru
    _
  // Predicated region
  $region6: #{optical_flow_forward.5} parent=0 // pred_check
    _
  $region7: #{optical_flow_forward.5} parent=0 // pred_check_branch
    %11 = sbr.rel (0) target = $region9
  $region8: #{optical_flow_forward.5} parent=0 // pred_region
    _
  $region9: #{optical_flow_forward.5} parent=0 // pred_fallthru
    _
  // Predicated region
  $region10: #{optical_flow_forward.5} parent=0 // pred_check
    _
  $region11: #{optical_flow_forward.5} parent=0 // pred_check_branch
    %13 = sbr.rel (0) target = $region13
  $region12: #{optical_flow_forward.5} parent=0 // pred_region
    _
  $region13: #{optical_flow_forward.5} parent=0 // pred_fallthru
    _
  %v14 = vld [vmem:[%s0] sm:$0xff]
  %v15 = vld [vmem:[%s1] sm:$0xff]
  %v16 = vld [vmem:[%s1 + $0x8] sm:$0xff]
  %v17 = vld [vmem:[%s1 + $0x10] sm:$0xff]
  %v18 = vld [vmem:[%s1 + $0x18] sm:$0xff]
  %v19 = vld [vmem:[%s1 + $0x20] sm:$0xff]
  %v20 = vld [vmem:[%s1 + $0x28] sm:$0xff]
  %v21 = vld [vmem:[%s1 + $0x30] sm:$0xff]
  %v22 = vld [vmem:[%s1 + $0x38] sm:$0xff]
  %v23 = vld [vmem:[%s1 + $0x40] sm:$0xff]
  %v24 = vld [vmem:[%s1 + $0x48] sm:$0xff]
  %v25 = vld [vmem:[%s1 + $0x50] sm:$0xff]
  %v26 = vld [vmem:[%s1 + $0x58] sm:$0xff]
  %v27 = vld [vmem:[%s1 + $0x60] sm:$0xff]
  %v28 = vld [vmem:[%s1 + $0x68] sm:$0xff]
  %v29 = vld [vmem:[%s1 + $0x70] sm:$0xff]
  %v30 = vld [vmem:[%s1 + $0x78] sm:$0xff]
  %v31 = vld [vmem:[%s1 + $0x80] sm:$0xff]
  %v32 = vld [vmem:[%s1 + $0x88] sm:$0xff]
  %v33 = vld [vmem:[%s1 + $0x90] sm:$0xff]
  %v34 = vld [vmem:[%s1 + $0x98] sm:$0xff]
  %v35 = vld [vmem:[%s1 + $0xa0] sm:$0xff]
  %v36 = vld [vmem:[%s1 + $0xa8] sm:$0xff]
  %v37 = vld [vmem:[%s1 + $0xb0] sm:$0xff]
  %v38 = vld [vmem:[%s1 + $0xb8] sm:$0xff]
  %v39 = vld [vmem:[%s1 + $0xc0] sm:$0xff]
  %v40 = vld [vmem:[%s1 + $0xc8] sm:$0xff]
  %v41 = vld [vmem:[%s1 + $0xd0] sm:$0xff]
  %v42 = vld [vmem:[%s1 + $0xd8] sm:$0xff]
  %v43 = vld [vmem:[%s1 + $0xe0] sm:$0xff]
  %v44 = vld [vmem:[%s1 + $0xe8] sm:$0xff]
  %v45 = vld [vmem:[%s1 + $0xf0] sm:$0xff]
  %v46 = vld [vmem:[%s1 + $0xf8] sm:$0xff]
  %v47 = vld [vmem:[%s1 + $0x100] sm:$0xff]
  %v48 = vld [vmem:[%s1 + $0x108] sm:$0xff]
  %v49 = vld [vmem:[%s1 + $0x110] sm:$0xff]
  %v50 = vld [vmem:[%s1 + $0x118] sm:$0xff]
  %v51 = vld [vmem:[%s1 + $0x120] sm:$0xff]
  %v52 = vld [vmem:[%s1 + $0x128] sm:$0xff]
  %v53 = vld [vmem:[%s1 + $0x130] sm:$0xff]
  %v54 = vld [vmem:[%s1 + $0x138] sm:$0xff]
  %v55 = vld [vmem:[%s1 + $0x140] sm:$0xff]
  %v56 = vld [vmem:[%s1 + $0x148] sm:$0xff]
  %v57 = vld [vmem:[%s1 + $0x150] sm:$0xff]
  %v58 = vld [vmem:[%s1 + $0x158] sm:$0xff]
  %v59 = vld [vmem:[%s1 + $0x160] sm:$0xff]
  %v60 = vld [vmem:[%s1 + $0x168] sm:$0xff]
  %v61 = vld [vmem:[%s1 + $0x170] sm:$0xff]
  %v62 = vld [vmem:[%s1 + $0x178] sm:$0xff]
  %v63 = vld [vmem:[%s2] sm:$0xff]
  %65 = vset.pattern.permute.xlu0 0
  %66 = vperm.xlu0 %65, %v63
  %v67 = vpop.permute.xlu0 %66
  %69 = vmatprep.subr.mxu0 %v16
  %70 = vmatpush1.msra.mxu0 %v15
  %71 = vmatprep.subr.mxu0 %v19
  %72 = vmatpush1.msra.mxu0 %v18
  %73 = vmatprep.subr.mxu0 %v22
  %74 = vmatpush1.msra.mxu0 %v21
  %75 = vmatprep.subr.mxu0 %v25
  %76 = vmatpush1.msra.mxu0 %v24
  %77 = vmatprep.subr.mxu0 %v28
  %78 = vmatpush1.msra.mxu0 %v27
  %79 = vmatprep.subr.mxu0 %v31
  %80 = vmatpush1.msra.mxu0 %v30
  %81 = vmatprep.subr.mxu0 %v34
  %82 = vmatpush1.msra.mxu0 %v33
  %83 = vmatprep.subr.mxu0 %v37
  %84 = vmatpush1.msra.mxu0 %v36
  %85 = vmatprep.subr.mxu0 %v40
  %86 = vmatpush1.msra.mxu0 %v39
  %87 = vmatprep.subr.mxu0 %v43
  %88 = vmatpush1.msra.mxu0 %v42
  %89 = vmatprep.subr.mxu0 %v46
  %90 = vmatpush1.msra.mxu0 %v45
  %91 = vmatprep.subr.mxu0 %v49
  %92 = vmatpush1.msra.mxu0 %v48
  %93 = vmatprep.subr.mxu0 %v52
  %94 = vmatpush1.msra.mxu0 %v51
  %95 = vmatprep.subr.mxu0 %v55
  %96 = vmatpush1.msra.mxu0 %v54
  %97 = vmatprep.subr.mxu0 %v58
  %98 = vmatpush1.msra.mxu0 %v57
  %99 = vmatprep.subr.mxu0 %v61
  %100 = vmatpush1.msra.mxu0 %v60
  %101 = vmatprep.subr.mxu0 0.0
  %102 = vmatpush1.msra.mxu0 0.0
  %103 = vmatprep.subr.mxu0 0.0
  %104 = vmatpush1.msra.mxu0 0.0
  %105 = vmatprep.subr.mxu0 0.0
  %106 = vmatpush1.msra.mxu0 0.0
  %107 = vmatprep.subr.mxu0 0.0
  %108 = vmatpush1.msra.mxu0 0.0
  %109 = vmatprep.subr.mxu0 0.0
  %110 = vmatpush1.msra.mxu0 0.0
  %111 = vmatprep.subr.mxu0 0.0
  %112 = vmatpush1.msra.mxu0 0.0
  %113 = vmatprep.subr.mxu0 0.0
  %114 = vmatpush1.msra.mxu0 0.0
  %115 = vmatprep.subr.mxu0 0.0
  %116 = vmatpush1.msra.mxu0 0.0
  %117 = vmatprep.subr.mxu0 0.0
  %118 = vmatpush1.msra.mxu0 0.0
  %119 = vmatprep.subr.mxu0 0.0
  %120 = vmatpush1.msra.mxu0 0.0
  %121 = vmatprep.subr.mxu0 0.0
  %122 = vmatpush1.msra.mxu0 0.0
  %123 = vmatprep.subr.mxu0 0.0
  %124 = vmatpush1.msra.mxu0 0.0
  %125 = vmatprep.subr.mxu0 0.0
  %126 = vmatpush1.msra.mxu0 0.0
  %127 = vmatprep.subr.mxu0 0.0
  %128 = vmatpush1.msra.mxu0 0.0
  %129 = vmatprep.subr.mxu0 0.0
  %130 = vmatpush1.msra.mxu0 0.0
  %131 = vmatprep.subr.mxu0 0.0
  %132 = vmatpush1.msra.mxu0 0.0
  %133 = vmatprep.mubr.f32.mxu0 0.0
  %134 = vmatmul.mubr.f32.gmra.mrb[0].mxu0 %v14
  %v135 = vpop.f32.mrb[0].mxu0
  %v136 = vadd.f32 %v67, %v135
  %v137 = vpop.f32.mrb[0].mxu0
  %v138 = vadd.f32 %v67, %v137
  %139 = vdwg.mxu0
  %140 = vmatprep.subr.mxu0 0.0
  %141 = vmatpush1.msra.mxu0 %v17
  %142 = vmatprep.subr.mxu0 0.0
  %143 = vmatpush1.msra.mxu0 %v20
  %144 = vmatprep.subr.mxu0 0.0
  %145 = vmatpush1.msra.mxu0 %v23
  %146 = vmatprep.subr.mxu0 0.0
  %147 = vmatpush1.msra.mxu0 %v26
  %148 = vmatprep.subr.mxu0 0.0
  %149 = vmatpush1.msra.mxu0 %v29
  %150 = vmatprep.subr.mxu0 0.0
  %151 = vmatpush1.msra.mxu0 %v32
  %152 = vmatprep.subr.mxu0 0.0
  %153 = vmatpush1.msra.mxu0 %v35
  %154 = vmatprep.subr.mxu0 0.0
  %155 = vmatpush1.msra.mxu0 %v38
  %156 = vmatprep.subr.mxu0 0.0
  %157 = vmatpush1.msra.mxu0 %v41
  %158 = vmatprep.subr.mxu0 0.0
  %159 = vmatpush1.msra.mxu0 %v44
  %160 = vmatprep.subr.mxu0 0.0
  %161 = vmatpush1.msra.mxu0 %v47
  %162 = vmatprep.subr.mxu0 0.0
  %163 = vmatpush1.msra.mxu0 %v50
  %164 = vmatprep.subr.mxu0 0.0
  %165 = vmatpush1.msra.mxu0 %v53
  %166 = vmatprep.subr.mxu0 0.0
  %167 = vmatpush1.msra.mxu0 %v56
  %168 = vmatprep.subr.mxu0 0.0
  %169 = vmatpush1.msra.mxu0 %v59
  %170 = vmatprep.subr.mxu0 0.0
  %171 = vmatpush1.msra.mxu0 %v62
  %172 = vmatprep.subr.mxu0 0.0
  %173 = vmatpush1.msra.mxu0 0.0
  %174 = vmatprep.subr.mxu0 0.0
  %175 = vmatpush1.msra.mxu0 0.0
  %176 = vmatprep.subr.mxu0 0.0
  %177 = vmatpush1.msra.mxu0 0.0
  %178 = vmatprep.subr.mxu0 0.0
  %179 = vmatpush1.msra.mxu0 0.0
  %180 = vmatprep.subr.mxu0 0.0
  %181 = vmatpush1.msra.mxu0 0.0
  %182 = vmatprep.subr.mxu0 0.0
  %183 = vmatpush1.msra.mxu0 0.0
  %184 = vmatprep.subr.mxu0 0.0
  %185 = vmatpush1.msra.mxu0 0.0
  %186 = vmatprep.subr.mxu0 0.0
  %187 = vmatpush1.msra.mxu0 0.0
  %188 = vmatprep.subr.mxu0 0.0
  %189 = vmatpush1.msra.mxu0 0.0
  %190 = vmatprep.subr.mxu0 0.0
  %191 = vmatpush1.msra.mxu0 0.0
  %192 = vmatprep.subr.mxu0 0.0
  %193 = vmatpush1.msra.mxu0 0.0
  %194 = vmatprep.subr.mxu0 0.0
  %195 = vmatpush1.msra.mxu0 0.0
  %196 = vmatprep.subr.mxu0 0.0
  %197 = vmatpush1.msra.mxu0 0.0
  %198 = vmatprep.subr.mxu0 0.0
  %199 = vmatpush1.msra.mxu0 0.0
  %200 = vmatprep.subr.mxu0 0.0
  %201 = vmatpush1.msra.mxu0 0.0
  %202 = vmatprep.subr.mxu0 0.0
  %203 = vmatpush1.msra.mxu0 0.0
  %204 = vmatprep.mubr.f32.mxu0 0.0
  %205 = vmatmul.mubr.f32.gmra.mrb[0].mxu0 %v14
  %v206 = vpop.f32.mrb[0].mxu0
  %v207 = vadd.f32 %v67, %v206
  %v208 = vpop.f32.mrb[0].mxu0
  %209 = vdwg.mxu0
  %v210 = vmax.f32 %v136, 0.0
  %v211 = vmax.f32 %v138, 0.0
  %v212 = vmax.f32 %v207, 0.0
  %213 = vst [vmem:[%s3] sm:$0xff] %v210
  %214 = vst [vmem:[%s3 + $0x8] sm:$0xff] %v211
  %215 = vst [vmem:[%s3 + $0x10] sm:$0xff] %v212
  // Predicated region
  $region14: #{optical_flow_forward.5} parent=0 // pred_check
    _
  $region15: #{optical_flow_forward.5} parent=0 // pred_check_branch
    %217 = sbr.rel (0) target = $region17
  $region16: #{optical_flow_forward.5} parent=0 // pred_region
    _
  $region17: #{optical_flow_forward.5} parent=0 // pred_fallthru
    _
  // Predicated region
  $region18: #{optical_flow_forward.5} parent=0 // pred_check
    _
  $region19: #{optical_flow_forward.5} parent=0 // pred_check_branch
    %219 = sbr.rel (0) target = $region21
  $region20: #{optical_flow_forward.5} parent=0 // pred_region
    _
  $region21: #{optical_flow_forward.5} parent=0 // pred_fallthru
    _

// kernel: optical_flow_forward.6
$region0: #{optical_flow_forward.6}
  #allocation0 [shape = 'u32[]', space=smem, size = 0x4, offset = 0x4, fixed_abs, tag = 'smem constant byte address 0x4 - core index']
  #allocation1 [shape = 'u32[144,128]{1,0:T(1,128)}', space=vmem, size = 0x12000, scoped, tag = 'internal scratch']
  %s0 = inlined_call_operand.vmem [shape: f32[3,9,72], index: 0, kind: input, shape index: {}]
  %s1 = inlined_call_operand.vmem [shape: f32[3,72], index: 1, kind: output, shape index: {}]
  %s2 = sld [smem:[#allocation0]]
  $region14: #{optical_flow_forward.6} parent=0
    _
  %s4 = ssub.s32 1, %s2
  %s5 = scalar_select 0, %s4, %s2
  // Predicated region
  $region2: #{optical_flow_forward.6} parent=0 // pred_check
    _
  $region3: #{optical_flow_forward.6} parent=0 // pred_check_branch
    %7 = sbr.rel (0) target = $region5
  $region4: #{optical_flow_forward.6} parent=0 // pred_region
    _
  $region5: #{optical_flow_forward.6} parent=0 // pred_fallthru
    _
  %v8 = vld [vmem:[%s0] sm:$0xff]
  %v9 = vld [vmem:[%s0 + $0x8] sm:$0x1]
  %v10 = vld [vmem:[%s0 + $0x10] sm:$0xff]
  %v11 = vld [vmem:[%s0 + $0x18] sm:$0x1]
  %v12 = vld [vmem:[%s0 + $0x20] sm:$0xff]
  %v13 = vld [vmem:[%s0 + $0x28] sm:$0x1]
  %vm14 = vcmask 588800
  %v15 = vsel %vm14, %v8, 0.0
  %vm16 = vcmask 581632
  %v17 = vsel %vm16, %v9, 0.0
  %v18 = vadd.f32 %v15, %v17
  %v19 = vrot.slane %v18, 4
  %v20 = vadd.f32 %v18, %v19
  %v21 = vrot.slane %v20, 2
  %v22 = vadd.f32 %v20, %v21
  %v23 = vrot.slane %v22, 1
  %v24 = vadd.f32 %v22, %v23
  %v25 = vsel %vm14, %v10, 0.0
  %v26 = vsel %vm16, %v11, 0.0
  %v27 = vadd.f32 %v25, %v26
  %v28 = vrot.slane %v27, 4
  %v29 = vadd.f32 %v27, %v28
  %v30 = vrot.slane %v29, 2
  %v31 = vadd.f32 %v29, %v30
  %v32 = vrot.slane %v31, 1
  %v33 = vadd.f32 %v31, %v32
  %v34 = vsel %vm14, %v12, 0.0
  %v35 = vsel %vm16, %v13, 0.0
  %v36 = vadd.f32 %v34, %v35
  %v37 = vrot.slane %v36, 4
  %v38 = vadd.f32 %v36, %v37
  %v39 = vrot.slane %v38, 2
  %v40 = vadd.f32 %v38, %v39
  %v41 = vrot.slane %v40, 1
  %v42 = vadd.f32 %v40, %v41
  %v43 = vrcp.pop 9.0
  %v44 = vmul.f32 %v24, %v43
  %v45 = vmul.f32 %v33, %v43
  %v46 = vmul.f32 %v42, %v43
  %vm50 = vcmask 1041409
  %v51 = vsel %vm50, %v45, %v44
  %vm52 = vcmask 1042434
  %v53 = vsel %vm52, %v46, %v51
  %vm55 = vcmask 583680
  %v56 = vsel %vm55, %v53, 0.0
  %57 = vadd.xlane.f32.xlu0 %v56
  %v58 = vpop.xlane.xlu0 %57
  %v59 = vrcp.pop 72.0
  %v60 = vmul.f32 %v58, %v59
  %v62 = vrot.slane %v60, 1
  %v63 = vrot.slane %v60, 2
  %v67 = vsub.f32 %v44, %v60
  %v68 = vsub.f32 %v45, %v62
  %v69 = vsub.f32 %v46, %v63
  %v70 = vmul.f32 %v67, %v67
  %v71 = vmul.f32 %v68, %v68
  %v72 = vmul.f32 %v69, %v69
  %v76 = vrot.slane %v71, 7
  %v77 = vsel %vm50, %v76, %v70
  %v78 = vrot.slane %v72, 6
  %v79 = vsel %vm52, %v78, %v77
  %v81 = vsel %vm55, %v79, 0.0
  %82 = vadd.xlane.f32.xlu0 %v81
  %v83 = vpop.xlane.xlu0 %82
  %v84 = vmul.f32 %v83, %v59
  %v85 = vadd.f32 %v84, 1e-05
  %v86 = vrsqrt.pop %v85
  %v88 = vrot.slane %v86, 1
  %v89 = vrot.slane %v86, 2
  %v93 = vmul.f32 %v67, %v86
  %v94 = vmul.f32 %v68, %v88
  %v95 = vmul.f32 %v69, %v89
  %v99 = vrot.slane %v94, 7
  %v100 = vsel %vm50, %v99, %v93
  %v101 = vrot.slane %v95, 6
  %v102 = vsel %vm52, %v101, %v100
  %104 = vst.msk [vmem:[%s1] sm:$0x7] %vm55, %v102
  // Predicated region
  $region6: #{optical_flow_forward.6} parent=0 // pred_check
    _
  $region7: #{optical_flow_forward.6} parent=0 // pred_check_branch
    %106 = sbr.rel (0) target = $region9
  $region8: #{optical_flow_forward.6} parent=0 // pred_region
    _
  $region9: #{optical_flow_forward.6} parent=0 // pred_fallthru
    _
  // Predicated region
  $region10: #{optical_flow_forward.6} parent=0 // pred_check
    _
  $region11: #{optical_flow_forward.6} parent=0 // pred_check_branch
    %108 = sbr.rel (0) target = $region13
  $region12: #{optical_flow_forward.6} parent=0 // pred_region
    _
  $region13: #{optical_flow_forward.6} parent=0 // pred_fallthru
    _

// kernel: optical_flow_forward.7
$region0: #{optical_flow_forward.7}
  #allocation0 [shape = 'u32[]', space=smem, size = 0x4, offset = 0x4, fixed_abs, tag = 'smem constant byte address 0x4 - core index']
  #allocation1 [shape = 'u32[144,128]{1,0:T(1,128)}', space=vmem, size = 0x12000, scoped, tag = 'internal scratch']
  #allocation2 [shape = 'f32[1,1]{1,0:T(1,128)S(1)}', space=vmem, size = 0x200, scoped, tag = 'scoped memory for optical_flow_forward.7']
  %s0 = inlined_call_operand.vmem [shape: f32[8,2176], index: 0, kind: input, shape index: {}]
  %s1 = inlined_call_operand.vmem [shape: bf16[2176,1024], index: 1, kind: input, shape index: {}]
  %s2 = inlined_call_operand.vmem [shape: f32[1,1024], index: 2, kind: input, shape index: {}]
  %s3 = inlined_call_operand.vmem [shape: bf16[1024,128], index: 3, kind: input, shape index: {}]
  %s4 = inlined_call_operand.vmem [shape: f32[1,128], index: 4, kind: input, shape index: {}]
  %s5 = inlined_call_operand.vmem [shape: f32[1,128], index: 5, kind: input, shape index: {}]
  %s6 = inlined_call_operand.<no memory space> [shape: f32[1,1], index: 6, kind: input, shape index: {}]
  %s7 = inlined_call_operand.vmem [shape: f32[8,1], index: 7, kind: output, shape index: {}]
  %s8 = sld [smem:[#allocation0]]
  $region38: #{optical_flow_forward.7} parent=0
    _
  %s10 = ssub.s32 1, %s8
  %s11 = scalar_select 0, %s10, %s8
  %v12 = vstv %s6
  %13 = vst [vmem:[#allocation2] sm:$0x1] %v12
  // Predicated region
  $region2: #{optical_flow_forward.7} parent=0 // pred_check
    _
  $region3: #{optical_flow_forward.7} parent=0 // pred_check_branch
    %15 = sbr.rel (0) target = $region5
  $region4: #{optical_flow_forward.7} parent=0 // pred_region
    _
  $region5: #{optical_flow_forward.7} parent=0 // pred_fallthru
    _
  // Predicated region
  $region6: #{optical_flow_forward.7} parent=0 // pred_check
    _
  $region7: #{optical_flow_forward.7} parent=0 // pred_check_branch
    %17 = sbr.rel (0) target = $region9
  $region8: #{optical_flow_forward.7} parent=0 // pred_region
    _
  $region9: #{optical_flow_forward.7} parent=0 // pred_fallthru
    _
  // Predicated region
  $region10: #{optical_flow_forward.7} parent=0 // pred_check
    _
  $region11: #{optical_flow_forward.7} parent=0 // pred_check_branch
    %19 = sbr.rel (0) target = $region13
  $region12: #{optical_flow_forward.7} parent=0 // pred_region
    _
  $region13: #{optical_flow_forward.7} parent=0 // pred_fallthru
    _
  // Predicated region
  $region14: #{optical_flow_forward.7} parent=0 // pred_check
    _
  $region15: #{optical_flow_forward.7} parent=0 // pred_check_branch
    %21 = sbr.rel (0) target = $region17
  $region16: #{optical_flow_forward.7} parent=0 // pred_region
    _
  $region17: #{optical_flow_forward.7} parent=0 // pred_fallthru
    _
  // Predicated region
  $region18: #{optical_flow_forward.7} parent=0 // pred_check
    _
  $region19: #{optical_flow_forward.7} parent=0 // pred_check_branch
    %23 = sbr.rel (0) target = $region21
  $region20: #{optical_flow_forward.7} parent=0 // pred_region
    _
  $region21: #{optical_flow_forward.7} parent=0 // pred_fallthru
    _
  // Predicated region
  $region22: #{optical_flow_forward.7} parent=0 // pred_check
    _
  $region23: #{optical_flow_forward.7} parent=0 // pred_check_branch
    %25 = sbr.rel (0) target = $region25
  $region24: #{optical_flow_forward.7} parent=0 // pred_region
    _
  $region25: #{optical_flow_forward.7} parent=0 // pred_fallthru
    _
  // Predicated region
  $region26: #{optical_flow_forward.7} parent=0 // pred_check
    _
  $region27: #{optical_flow_forward.7} parent=0 // pred_check_branch
    %27 = sbr.rel (0) target = $region29
  $region28: #{optical_flow_forward.7} parent=0 // pred_region
    _
  $region29: #{optical_flow_forward.7} parent=0 // pred_fallthru
    _
  %v29 = vld [vmem:[%s0] sm:$0xff]
  %v30 = vld [vmem:[%s0 + $0x8] sm:$0xff]
  %v31 = vld [vmem:[%s0 + $0x10] sm:$0xff]
  %v32 = vld [vmem:[%s0 + $0x18] sm:$0xff]
  %v33 = vld [vmem:[%s0 + $0x20] sm:$0xff]
  %v34 = vld [vmem:[%s0 + $0x28] sm:$0xff]
  %v35 = vld [vmem:[%s0 + $0x30] sm:$0xff]
  %v36 = vld [vmem:[%s0 + $0x38] sm:$0xff]
  %v37 = vld [vmem:[%s0 + $0x40] sm:$0xff]
  %v38 = vld [vmem:[%s0 + $0x48] sm:$0xff]
  %v39 = vld [vmem:[%s0 + $0x50] sm:$0xff]
  %v40 = vld [vmem:[%s0 + $0x58] sm:$0xff]
  %v41 = vld [vmem:[%s0 + $0x60] sm:$0xff]
  %v42 = vld [vmem:[%s0 + $0x68] sm:$0xff]
  %v43 = vld [vmem:[%s0 + $0x70] sm:$0xff]
  %v44 = vld [vmem:[%s0 + $0x78] sm:$0xff]
  %v45 = vld [vmem:[%s0 + $0x80] sm:$0xff]
  %v46 = vpack.c.bf16 %v29, %v29
  %v47 = vpack.c.bf16 %v30, %v30
  %v48 = vpack.c.bf16 %v31, %v31
  %v49 = vpack.c.bf16 %v32, %v32
  %v50 = vpack.c.bf16 %v33, %v33
  %v51 = vpack.c.bf16 %v34, %v34
  %v52 = vpack.c.bf16 %v35, %v35
  %v53 = vpack.c.bf16 %v36, %v36
  %v54 = vpack.c.bf16 %v37, %v37
  %v55 = vpack.c.bf16 %v38, %v38
  %v56 = vpack.c.bf16 %v39, %v39
  %v57 = vpack.c.bf16 %v40, %v40
  %v58 = vpack.c.bf16 %v41, %v41
  %v59 = vpack.c.bf16 %v42, %v42
  %v60 = vpack.c.bf16 %v43, %v43
  %v61 = vpack.c.bf16 %v44, %v44
  %v62 = vpack.c.bf16 %v45, %v45
  %v63 = vld [vmem:[%s1] sm:$0xff]
  %v64 = vld [vmem:[%s1 + $0x8] sm:$0xff]
  %v65 = vld [vmem:[%s1 + $0x10] sm:$0xff]
  %v66 = vld [vmem:[%s1 + $0x18] sm:$0xff]
  %v67 = vld [vmem:[%s1 + $0x20] sm:$0xff]
  %v68 = vld [vmem:[%s1 + $0x28] sm:$0xff]
  %v69 = vld [vmem:[%s1 + $0x30] sm:$0xff]
  %v70 = vld [vmem:[%s1 + $0x38] sm:$0xff]
  %v71 = vld [vmem:[%s1 + $0x40] sm:$0xff]
  %v72 = vld [vmem:[%s1 + $0x48] sm:$0xff]
  %v73 = vld [vmem:[%s1 + $0x50] sm:$0xff]
  %v74 = vld [vmem:[%s1 + $0x58] sm:$0xff]
  %v75 = vld [vmem:[%s1 + $0x60] sm:$0xff]
  %v76 = vld [vmem:[%s1 + $0x68] sm:$0xff]
  %v77 = vld [vmem:[%s1 + $0x70] sm:$0xff]
  %v78 = vld [vmem:[%s1 + $0x78] sm:$0xff]
  %v79 = vld [vmem:[%s1 + $0x80] sm:$0xff]
  %v80 = vld [vmem:[%s1 + $0x88] sm:$0xff]
  %v81 = vld [vmem:[%s1 + $0x90] sm:$0xff]
  %v82 = vld [vmem:[%s1 + $0x98] sm:$0xff]
  %v83 = vld [vmem:[%s1 + $0xa0] sm:$0xff]
  %v84 = vld [vmem:[%s1 + $0xa8] sm:$0xff]
  %v85 = vld [vmem:[%s1 + $0xb0] sm:$0xff]
  %v86 = vld [vmem:[%s1 + $0xb8] sm:$0xff]
  %v87 = vld [vmem:[%s1 + $0xc0] sm:$0xff]
  %v88 = vld [vmem:[%s1 + $0xc8] sm:$0xff]
  %v89 = vld [vmem:[%s1 + $0xd0] sm:$0xff]
  %v90 = vld [vmem:[%s1 + $0xd8] sm:$0xff]
  %v91 = vld [vmem:[%s1 + $0xe0] sm:$0xff]
  %v92 = vld [vmem:[%s1 + $0xe8] sm:$0xff]
  %v93 = vld [vmem:[%s1 + $0xf0] sm:$0xff]
  %v94 = vld [vmem:[%s1 + $0xf8] sm:$0xff]
  %v95 = vld [vmem:[%s1 + $0x100] sm:$0xff]
  %v96 = vld [vmem:[%s1 + $0x108] sm:$0xff]
  %v97 = vld [vmem:[%s1 + $0x110] sm:$0xff]
  %v98 = vld [vmem:[%s1 + $0x118] sm:$0xff]
  %v99 = vld [vmem:[%s1 + $0x120] sm:$0xff]
  %v100 = vld [vmem:[%s1 + $0x128] sm:$0xff]
  %v101 = vld [vmem:[%s1 + $0x130] sm:$0xff]
  %v102 = vld [vmem:[%s1 + $0x138] sm:$0xff]
  %v103 = vld [vmem:[%s1 + $0x140] sm:$0xff]
  %v104 = vld [vmem:[%s1 + $0x148] sm:$0xff]
  %v105 = vld [vmem:[%s1 + $0x150] sm:$0xff]
  %v106 = vld [vmem:[%s1 + $0x158] sm:$0xff]
  %v107 = vld [vmem:[%s1 + $0x160] sm:$0xff]
  %v108 = vld [vmem:[%s1 + $0x168] sm:$0xff]
  %v109 = vld [vmem:[%s1 + $0x170] sm:$0xff]
  %v110 = vld [vmem:[%s1 + $0x178] sm:$0xff]
  %v111 = vld [vmem:[%s1 + $0x180] sm:$0xff]
  %v112 = vld [vmem:[%s1 + $0x188] sm:$0xff]
  %v113 = vld [vmem:[%s1 + $0x190] sm:$0xff]
  %v114 = vld [vmem:[%s1 + $0x198] sm:$0xff]
  %v115 = vld [vmem:[%s1 + $0x1a0] sm:$0xff]
  %v116 = vld [vmem:[%s1 + $0x1a8] sm:$0xff]
  %v117 = vld [vmem:[%s1 + $0x1b0] sm:$0xff]
  %v118 = vld [vmem:[%s1 + $0x1b8] sm:$0xff]
  %v119 = vld [vmem:[%s1 + $0x1c0] sm:$0xff]
  %v120 = vld [vmem:[%s1 + $0x1c8] sm:$0xff]
  %v121 = vld [vmem:[%s1 + $0x1d0] sm:$0xff]
  %v122 = vld [vmem:[%s1 + $0x1d8] sm:$0xff]
  %v123 = vld [vmem:[%s1 + $0x1e0] sm:$0xff]
  %v124 = vld [vmem:[%s1 + $0x1e8] sm:$0xff]
  %v125 = vld [vmem:[%s1 + $0x1f0] sm:$0xff]
  %v126 = vld [vmem:[%s1 + $0x1f8] sm:$0xff]
  %v127 = vld [vmem:[%s1 + $0x200] sm:$0xff]
  %v128 = vld [vmem:[%s1 + $0x208] sm:$0xff]
  %v129 = vld [vmem:[%s1 + $0x210] sm:$0xff]
  %v130 = vld [vmem:[%s1 + $0x218] sm:$0xff]
  %v131 = vld [vmem:[%s1 + $0x220] sm:$0xff]
  %v132 = vld [vmem:[%s1 + $0x228] sm:$0xff]
  %v133 = vld [vmem:[%s1 + $0x230] sm:$0xff]
  %v134 = vld [vmem:[%s1 + $0x238] sm:$0xff]
  %v135 = vld [vmem:[%s1 + $0x240] sm:$0xff]
  %v136 = vld [vmem:[%s1 + $0x248] sm:$0xff]
  %v137 = vld [vmem:[%s1 + $0x250] sm:$0xff]
  %v138 = vld [vmem:[%s1 + $0x258] sm:$0xff]
  %v139 = vld [vmem:[%s1 + $0x260] sm:$0xff]
  %v140 = vld [vmem:[%s1 + $0x268] sm:$0xff]
  %v141 = vld [vmem:[%s1 + $0x270] sm:$0xff]
  %v142 = vld [vmem:[%s1 + $0x278] sm:$0xff]
  %v143 = vld [vmem:[%s1 + $0x280] sm:$0xff]
  %v144 = vld [vmem:[%s1 + $0x288] sm:$0xff]
  %v145 = vld [vmem:[%s1 + $0x290] sm:$0xff]
  %v146 = vld [vmem:[%s1 + $0x298] sm:$0xff]
  %v147 = vld [vmem:[%s1 + $0x2a0] sm:$0xff]
  %v148 = vld [vmem:[%s1 + $0x2a8] sm:$0xff]
  %v149 = vld [vmem:[%s1 + $0x2b0] sm:$0xff]
  %v150 = vld [vmem:[%s1 + $0x2b8] sm:$0xff]
  %v151 = vld [vmem:[%s1 + $0x2c0] sm:$0xff]
  %v152 = vld [vmem:[%s1 + $0x2c8] sm:$0xff]
  %v153 = vld [vmem:[%s1 + $0x2d0] sm:$0xff]
  %v154 = vld [vmem:[%s1 + $0x2d8] sm:$0xff]
  %v155 = vld [vmem:[%s1 + $0x2e0] sm:$0xff]
  %v156 = vld [vmem:[%s1 + $0x2e8] sm:$0xff]
  %v157 = vld [vmem:[%s1 + $0x2f0] sm:$0xff]
  %v158 = vld [vmem:[%s1 + $0x2f8] sm:$0xff]
  %v159 = vld [vmem:[%s1 + $0x300] sm:$0xff]
  %v160 = vld [vmem:[%s1 + $0x308] sm:$0xff]
  %v161 = vld [vmem:[%s1 + $0x310] sm:$0xff]
  %v162 = vld [vmem:[%s1 + $0x318] sm:$0xff]
  %v163 = vld [vmem:[%s1 + $0x320] sm:$0xff]
  %v164 = vld [vmem:[%s1 + $0x328] sm:$0xff]
  %v165 = vld [vmem:[%s1 + $0x330] sm:$0xff]
  %v166 = vld [vmem:[%s1 + $0x338] sm:$0xff]
  %v167 = vld [vmem:[%s1 + $0x340] sm:$0xff]
  %v168 = vld [vmem:[%s1 + $0x348] sm:$0xff]
  %v169 = vld [vmem:[%s1 + $0x350] sm:$0xff]
  %v170 = vld [vmem:[%s1 + $0x358] sm:$0xff]
  %v171 = vld [vmem:[%s1 + $0x360] sm:$0xff]
  %v172 = vld [vmem:[%s1 + $0x368] sm:$0xff]
  %v173 = vld [vmem:[%s1 + $0x370] sm:$0xff]
  %v174 = vld [vmem:[%s1 + $0x378] sm:$0xff]
  %v175 = vld [vmem:[%s1 + $0x380] sm:$0xff]
  %v176 = vld [vmem:[%s1 + $0x388] sm:$0xff]
  %v177 = vld [vmem:[%s1 + $0x390] sm:$0xff]
  %v178 = vld [vmem:[%s1 + $0x398] sm:$0xff]
  %v179 = vld [vmem:[%s1 + $0x3a0] sm:$0xff]
  %v180 = vld [vmem:[%s1 + $0x3a8] sm:$0xff]
  %v181 = vld [vmem:[%s1 + $0x3b0] sm:$0xff]
  %v182 = vld [vmem:[%s1 + $0x3b8] sm:$0xff]
  %v183 = vld [vmem:[%s1 + $0x3c0] sm:$0xff]
  %v184 = vld [vmem:[%s1 + $0x3c8] sm:$0xff]
  %v185 = vld [vmem:[%s1 + $0x3d0] sm:$0xff]
  %v186 = vld [vmem:[%s1 + $0x3d8] sm:$0xff]
  %v187 = vld [vmem:[%s1 + $0x3e0] sm:$0xff]
  %v188 = vld [vmem:[%s1 + $0x3e8] sm:$0xff]
  %v189 = vld [vmem:[%s1 + $0x3f0] sm:$0xff]
  %v190 = vld [vmem:[%s1 + $0x3f8] sm:$0xff]
  %v191 = vld [vmem:[%s1 + $0x400] sm:$0xff]
  %v192 = vld [vmem:[%s1 + $0x408] sm:$0xff]
  %v193 = vld [vmem:[%s1 + $0x410] sm:$0xff]
  %v194 = vld [vmem:[%s1 + $0x418] sm:$0xff]
  %v195 = vld [vmem:[%s1 + $0x420] sm:$0xff]
  %v196 = vld [vmem:[%s1 + $0x428] sm:$0xff]
  %v197 = vld [vmem:[%s1 + $0x430] sm:$0xff]
  %v198 = vld [vmem:[%s1 + $0x438] sm:$0xff]
  %v199 = vld [vmem:[%s1 + $0x440] sm:$0xff]
  %v200 = vld [vmem:[%s1 + $0x448] sm:$0xff]
  %v201 = vld [vmem:[%s1 + $0x450] sm:$0xff]
  %v202 = vld [vmem:[%s1 + $0x458] sm:$0xff]
  %v203 = vld [vmem:[%s1 + $0x460] sm:$0xff]
  %v204 = vld [vmem:[%s1 + $0x468] sm:$0xff]
  %v205 = vld [vmem:[%s1 + $0x470] sm:$0xff]
  %v206 = vld [vmem:[%s1 + $0x478] sm:$0xff]
  %v207 = vld [vmem:[%s1 + $0x480] sm:$0xff]
  %v208 = vld [vmem:[%s1 + $0x488] sm:$0xff]
  %v209 = vld [vmem:[%s1 + $0x490] sm:$0xff]
  %v210 = vld [vmem:[%s1 + $0x498] sm:$0xff]
  %v211 = vld [vmem:[%s1 + $0x4a0] sm:$0xff]
  %v212 = vld [vmem:[%s1 + $0x4a8] sm:$0xff]
  %v213 = vld [vmem:[%s1 + $0x4b0] sm:$0xff]
  %v214 = vld [vmem:[%s1 + $0x4b8] sm:$0xff]
  %v215 = vld [vmem:[%s1 + $0x4c0] sm:$0xff]
  %v216 = vld [vmem:[%s1 + $0x4c8] sm:$0xff]
  %v217 = vld [vmem:[%s1 + $0x4d0] sm:$0xff]
  %v218 = vld [vmem:[%s1 + $0x4d8] sm:$0xff]
  %v219 = vld [vmem:[%s1 + $0x4e0] sm:$0xff]
  %v220 = vld [vmem:[%s1 + $0x4e8] sm:$0xff]
  %v221 = vld [vmem:[%s1 + $0x4f0] sm:$0xff]
  %v222 = vld [vmem:[%s1 + $0x4f8] sm:$0xff]
  %v223 = vld [vmem:[%s1 + $0x500] sm:$0xff]
  %v224 = vld [vmem:[%s1 + $0x508] sm:$0xff]
  %v225 = vld [vmem:[%s1 + $0x510] sm:$0xff]
  %v226 = vld [vmem:[%s1 + $0x518] sm:$0xff]
  %v227 = vld [vmem:[%s1 + $0x520] sm:$0xff]
  %v228 = vld [vmem:[%s1 + $0x528] sm:$0xff]
  %v229 = vld [vmem:[%s1 + $0x530] sm:$0xff]
  %v230 = vld [vmem:[%s1 + $0x538] sm:$0xff]
  %v231 = vld [vmem:[%s1 + $0x540] sm:$0xff]
  %v232 = vld [vmem:[%s1 + $0x548] sm:$0xff]
  %v233 = vld [vmem:[%s1 + $0x550] sm:$0xff]
  %v234 = vld [vmem:[%s1 + $0x558] sm:$0xff]
  %v235 = vld [vmem:[%s1 + $0x560] sm:$0xff]
  %v236 = vld [vmem:[%s1 + $0x568] sm:$0xff]
  %v237 = vld [vmem:[%s1 + $0x570] sm:$0xff]
  %v238 = vld [vmem:[%s1 + $0x578] sm:$0xff]
  %v239 = vld [vmem:[%s1 + $0x580] sm:$0xff]
  %v240 = vld [vmem:[%s1 + $0x588] sm:$0xff]
  %v241 = vld [vmem:[%s1 + $0x590] sm:$0xff]
  %v242 = vld [vmem:[%s1 + $0x598] sm:$0xff]
  %v243 = vld [vmem:[%s1 + $0x5a0] sm:$0xff]
  %v244 = vld [vmem:[%s1 + $0x5a8] sm:$0xff]
  %v245 = vld [vmem:[%s1 + $0x5b0] sm:$0xff]
  %v246 = vld [vmem:[%s1 + $0x5b8] sm:$0xff]
  %v247 = vld [vmem:[%s1 + $0x5c0] sm:$0xff]
  %v248 = vld [vmem:[%s1 + $0x5c8] sm:$0xff]
  %v249 = vld [vmem:[%s1 + $0x5d0] sm:$0xff]
  %v250 = vld [vmem:[%s1 + $0x5d8] sm:$0xff]
  %v251 = vld [vmem:[%s1 + $0x5e0] sm:$0xff]
  %v252 = vld [vmem:[%s1 + $0x5e8] sm:$0xff]
  %v253 = vld [vmem:[%s1 + $0x5f0] sm:$0xff]
  %v254 = vld [vmem:[%s1 + $0x5f8] sm:$0xff]
  %v255 = vld [vmem:[%s1 + $0x600] sm:$0xff]
  %v256 = vld [vmem:[%s1 + $0x608] sm:$0xff]
  %v257 = vld [vmem:[%s1 + $0x610] sm:$0xff]
  %v258 = vld [vmem:[%s1 + $0x618] sm:$0xff]
  %v259 = vld [vmem:[%s1 + $0x620] sm:$0xff]
  %v260 = vld [vmem:[%s1 + $0x628] sm:$0xff]
  %v261 = vld [vmem:[%s1 + $0x630] sm:$0xff]
  %v262 = vld [vmem:[%s1 + $0x638] sm:$0xff]
  %v263 = vld [vmem:[%s1 + $0x640] sm:$0xff]
  %v264 = vld [vmem:[%s1 + $0x648] sm:$0xff]
  %v265 = vld [vmem:[%s1 + $0x650] sm:$0xff]
  %v266 = vld [vmem:[%s1 + $0x658] sm:$0xff]
  %v267 = vld [vmem:[%s1 + $0x660] sm:$0xff]
  %v268 = vld [vmem:[%s1 + $0x668] sm:$0xff]
  %v269 = vld [vmem:[%s1 + $0x670] sm:$0xff]
  %v270 = vld [vmem:[%s1 + $0x678] sm:$0xff]
  %v271 = vld [vmem:[%s1 + $0x680] sm:$0xff]
  %v272 = vld [vmem:[%s1 + $0x688] sm:$0xff]
  %v273 = vld [vmem:[%s1 + $0x690] sm:$0xff]
  %v274 = vld [vmem:[%s1 + $0x698] sm:$0xff]
  %v275 = vld [vmem:[%s1 + $0x6a0] sm:$0xff]
  %v276 = vld [vmem:[%s1 + $0x6a8] sm:$0xff]
  %v277 = vld [vmem:[%s1 + $0x6b0] sm:$0xff]
  %v278 = vld [vmem:[%s1 + $0x6b8] sm:$0xff]
  %v279 = vld [vmem:[%s1 + $0x6c0] sm:$0xff]
  %v280 = vld [vmem:[%s1 + $0x6c8] sm:$0xff]
  %v281 = vld [vmem:[%s1 + $0x6d0] sm:$0xff]
  %v282 = vld [vmem:[%s1 + $0x6d8] sm:$0xff]
  %v283 = vld [vmem:[%s1 + $0x6e0] sm:$0xff]
  %v284 = vld [vmem:[%s1 + $0x6e8] sm:$0xff]
  %v285 = vld [vmem:[%s1 + $0x6f0] sm:$0xff]
  %v286 = vld [vmem:[%s1 + $0x6f8] sm:$0xff]
  %v287 = vld [vmem:[%s1 + $0x700] sm:$0xff]
  %v288 = vld [vmem:[%s1 + $0x708] sm:$0xff]
  %v289 = vld [vmem:[%s1 + $0x710] sm:$0xff]
  %v290 = vld [vmem:[%s1 + $0x718] sm:$0xff]
  %v291 = vld [vmem:[%s1 + $0x720] sm:$0xff]
  %v292 = vld [vmem:[%s1 + $0x728] sm:$0xff]
  %v293 = vld [vmem:[%s1 + $0x730] sm:$0xff]
  %v294 = vld [vmem:[%s1 + $0x738] sm:$0xff]
  %v295 = vld [vmem:[%s1 + $0x740] sm:$0xff]
  %v296 = vld [vmem:[%s1 + $0x748] sm:$0xff]
  %v297 = vld [vmem:[%s1 + $0x750] sm:$0xff]
  %v298 = vld [vmem:[%s1 + $0x758] sm:$0xff]
  %v299 = vld [vmem:[%s1 + $0x760] sm:$0xff]
  %v300 = vld [vmem:[%s1 + $0x768] sm:$0xff]
  %v301 = vld [vmem:[%s1 + $0x770] sm:$0xff]
  %v302 = vld [vmem:[%s1 + $0x778] sm:$0xff]
  %v303 = vld [vmem:[%s1 + $0x780] sm:$0xff]
  %v304 = vld [vmem:[%s1 + $0x788] sm:$0xff]
  %v305 = vld [vmem:[%s1 + $0x790] sm:$0xff]
  %v306 = vld [vmem:[%s1 + $0x798] sm:$0xff]
  %v307 = vld [vmem:[%s1 + $0x7a0] sm:$0xff]
  %v308 = vld [vmem:[%s1 + $0x7a8] sm:$0xff]
  %v309 = vld [vmem:[%s1 + $0x7b0] sm:$0xff]
  %v310 = vld [vmem:[%s1 + $0x7b8] sm:$0xff]
  %v311 = vld [vmem:[%s1 + $0x7c0] sm:$0xff]
  %v312 = vld [vmem:[%s1 + $0x7c8] sm:$0xff]
  %v313 = vld [vmem:[%s1 + $0x7d0] sm:$0xff]
  %v314 = vld [vmem:[%s1 + $0x7d8] sm:$0xff]
  %v315 = vld [vmem:[%s1 + $0x7e0] sm:$0xff]
  %v316 = vld [vmem:[%s1 + $0x7e8] sm:$0xff]
  %v317 = vld [vmem:[%s1 + $0x7f0] sm:$0xff]
  %v318 = vld [vmem:[%s1 + $0x7f8] sm:$0xff]
  %v319 = vld [vmem:[%s1 + $0x800] sm:$0xff]
  %v320 = vld [vmem:[%s1 + $0x808] sm:$0xff]
  %v321 = vld [vmem:[%s1 + $0x810] sm:$0xff]
  %v322 = vld [vmem:[%s1 + $0x818] sm:$0xff]
  %v323 = vld [vmem:[%s1 + $0x820] sm:$0xff]
  %v324 = vld [vmem:[%s1 + $0x828] sm:$0xff]
  %v325 = vld [vmem:[%s1 + $0x830] sm:$0xff]
  %v326 = vld [vmem:[%s1 + $0x838] sm:$0xff]
  %v327 = vld [vmem:[%s1 + $0x840] sm:$0xff]
  %v328 = vld [vmem:[%s1 + $0x848] sm:$0xff]
  %v329 = vld [vmem:[%s1 + $0x850] sm:$0xff]
  %v330 = vld [vmem:[%s1 + $0x858] sm:$0xff]
  %v331 = vld [vmem:[%s1 + $0x860] sm:$0xff]
  %v332 = vld [vmem:[%s1 + $0x868] sm:$0xff]
  %v333 = vld [vmem:[%s1 + $0x870] sm:$0xff]
  %v334 = vld [vmem:[%s1 + $0x878] sm:$0xff]
  %v335 = vld [vmem:[%s1 + $0x880] sm:$0xff]
  %v336 = vld [vmem:[%s1 + $0x888] sm:$0xff]
  %v337 = vld [vmem:[%s1 + $0x890] sm:$0xff]
  %v338 = vld [vmem:[%s1 + $0x898] sm:$0xff]
  %v339 = vld [vmem:[%s1 + $0x8a0] sm:$0xff]
  %v340 = vld [vmem:[%s1 + $0x8a8] sm:$0xff]
  %v341 = vld [vmem:[%s1 + $0x8b0] sm:$0xff]
  %v342 = vld [vmem:[%s1 + $0x8b8] sm:$0xff]
  %v343 = vld [vmem:[%s1 + $0x8c0] sm:$0xff]
  %v344 = vld [vmem:[%s1 + $0x8c8] sm:$0xff]
  %v345 = vld [vmem:[%s1 + $0x8d0] sm:$0xff]
  %v346 = vld [vmem:[%s1 + $0x8d8] sm:$0xff]
  %v347 = vld [vmem:[%s1 + $0x8e0] sm:$0xff]
  %v348 = vld [vmem:[%s1 + $0x8e8] sm:$0xff]
  %v349 = vld [vmem:[%s1 + $0x8f0] sm:$0xff]
  %v350 = vld [vmem:[%s1 + $0x8f8] sm:$0xff]
  %v351 = vld [vmem:[%s1 + $0x900] sm:$0xff]
  %v352 = vld [vmem:[%s1 + $0x908] sm:$0xff]
  %v353 = vld [vmem:[%s1 + $0x910] sm:$0xff]
  %v354 = vld [vmem:[%s1 + $0x918] sm:$0xff]
  %v355 = vld [vmem:[%s1 + $0x920] sm:$0xff]
  %v356 = vld [vmem:[%s1 + $0x928] sm:$0xff]
  %v357 = vld [vmem:[%s1 + $0x930] sm:$0xff]
  %v358 = vld [vmem:[%s1 + $0x938] sm:$0xff]
  %v359 = vld [vmem:[%s1 + $0x940] sm:$0xff]
  %v360 = vld [vmem:[%s1 + $0x948] sm:$0xff]
  %v361 = vld [vmem:[%s1 + $0x950] sm:$0xff]
  %v362 = vld [vmem:[%s1 + $0x958] sm:$0xff]
  %v363 = vld [vmem:[%s1 + $0x960] sm:$0xff]
  %v364 = vld [vmem:[%s1 + $0x968] sm:$0xff]
  %v365 = vld [vmem:[%s1 + $0x970] sm:$0xff]
  %v366 = vld [vmem:[%s1 + $0x978] sm:$0xff]
  %v367 = vld [vmem:[%s1 + $0x980] sm:$0xff]
  %v368 = vld [vmem:[%s1 + $0x988] sm:$0xff]
  %v369 = vld [vmem:[%s1 + $0x990] sm:$0xff]
  %v370 = vld [vmem:[%s1 + $0x998] sm:$0xff]
  %v371 = vld [vmem:[%s1 + $0x9a0] sm:$0xff]
  %v372 = vld [vmem:[%s1 + $0x9a8] sm:$0xff]
  %v373 = vld [vmem:[%s1 + $0x9b0] sm:$0xff]
  %v374 = vld [vmem:[%s1 + $0x9b8] sm:$0xff]
  %v375 = vld [vmem:[%s1 + $0x9c0] sm:$0xff]
  %v376 = vld [vmem:[%s1 + $0x9c8] sm:$0xff]
  %v377 = vld [vmem:[%s1 + $0x9d0] sm:$0xff]
  %v378 = vld [vmem:[%s1 + $0x9d8] sm:$0xff]
  %v379 = vld [vmem:[%s1 + $0x9e0] sm:$0xff]
  %v380 = vld [vmem:[%s1 + $0x9e8] sm:$0xff]
  %v381 = vld [vmem:[%s1 + $0x9f0] sm:$0xff]
  %v382 = vld [vmem:[%s1 + $0x9f8] sm:$0xff]
  %v383 = vld [vmem:[%s1 + $0xa00] sm:$0xff]
  %v384 = vld [vmem:[%s1 + $0xa08] sm:$0xff]
  %v385 = vld [vmem:[%s1 + $0xa10] sm:$0xff]
  %v386 = vld [vmem:[%s1 + $0xa18] sm:$0xff]
  %v387 = vld [vmem:[%s1 + $0xa20] sm:$0xff]
  %v388 = vld [vmem:[%s1 + $0xa28] sm:$0xff]
  %v389 = vld [vmem:[%s1 + $0xa30] sm:$0xff]
  %v390 = vld [vmem:[%s1 + $0xa38] sm:$0xff]
  %v391 = vld [vmem:[%s1 + $0xa40] sm:$0xff]
  %v392 = vld [vmem:[%s1 + $0xa48] sm:$0xff]
  %v393 = vld [vmem:[%s1 + $0xa50] sm:$0xff]
  %v394 = vld [vmem:[%s1 + $0xa58] sm:$0xff]
  %v395 = vld [vmem:[%s1 + $0xa60] sm:$0xff]
  %v396 = vld [vmem:[%s1 + $0xa68] sm:$0xff]
  %v397 = vld [vmem:[%s1 + $0xa70] sm:$0xff]
  %v398 = vld [vmem:[%s1 + $0xa78] sm:$0xff]
  %v399 = vld [vmem:[%s1 + $0xa80] sm:$0xff]
  %v400 = vld [vmem:[%s1 + $0xa88] sm:$0xff]
  %v401 = vld [vmem:[%s1 + $0xa90] sm:$0xff]
  %v402 = vld [vmem:[%s1 + $0xa98] sm:$0xff]
  %v403 = vld [vmem:[%s1 + $0xaa0] sm:$0xff]
  %v404 = vld [vmem:[%s1 + $0xaa8] sm:$0xff]
  %v405 = vld [vmem:[%s1 + $0xab0] sm:$0xff]
  %v406 = vld [vmem:[%s1 + $0xab8] sm:$0xff]
  %v407 = vld [vmem:[%s1 + $0xac0] sm:$0xff]
  %v408 = vld [vmem:[%s1 + $0xac8] sm:$0xff]
  %v409 = vld [vmem:[%s1 + $0xad0] sm:$0xff]
  %v410 = vld [vmem:[%s1 + $0xad8] sm:$0xff]
  %v411 = vld [vmem:[%s1 + $0xae0] sm:$0xff]
  %v412 = vld [vmem:[%s1 + $0xae8] sm:$0xff]
  %v413 = vld [vmem:[%s1 + $0xaf0] sm:$0xff]
  %v414 = vld [vmem:[%s1 + $0xaf8] sm:$0xff]
  %v415 = vld [vmem:[%s1 + $0xb00] sm:$0xff]
  %v416 = vld [vmem:[%s1 + $0xb08] sm:$0xff]
  %v417 = vld [vmem:[%s1 + $0xb10] sm:$0xff]
  %v418 = vld [vmem:[%s1 + $0xb18] sm:$0xff]
  %v419 = vld [vmem:[%s1 + $0xb20] sm:$0xff]
  %v420 = vld [vmem:[%s1 + $0xb28] sm:$0xff]
  %v421 = vld [vmem:[%s1 + $0xb30] sm:$0xff]
  %v422 = vld [vmem:[%s1 + $0xb38] sm:$0xff]
  %v423 = vld [vmem:[%s1 + $0xb40] sm:$0xff]
  %v424 = vld [vmem:[%s1 + $0xb48] sm:$0xff]
  %v425 = vld [vmem:[%s1 + $0xb50] sm:$0xff]
  %v426 = vld [vmem:[%s1 + $0xb58] sm:$0xff]
  %v427 = vld [vmem:[%s1 + $0xb60] sm:$0xff]
  %v428 = vld [vmem:[%s1 + $0xb68] sm:$0xff]
  %v429 = vld [vmem:[%s1 + $0xb70] sm:$0xff]
  %v430 = vld [vmem:[%s1 + $0xb78] sm:$0xff]
  %v431 = vld [vmem:[%s1 + $0xb80] sm:$0xff]
  %v432 = vld [vmem:[%s1 + $0xb88] sm:$0xff]
  %v433 = vld [vmem:[%s1 + $0xb90] sm:$0xff]
  %v434 = vld [vmem:[%s1 + $0xb98] sm:$0xff]
  %v435 = vld [vmem:[%s1 + $0xba0] sm:$0xff]
  %v436 = vld [vmem:[%s1 + $0xba8] sm:$0xff]
  %v437 = vld [vmem:[%s1 + $0xbb0] sm:$0xff]
  %v438 = vld [vmem:[%s1 + $0xbb8] sm:$0xff]
  %v439 = vld [vmem:[%s1 + $0xbc0] sm:$0xff]
  %v440 = vld [vmem:[%s1 + $0xbc8] sm:$0xff]
  %v441 = vld [vmem:[%s1 + $0xbd0] sm:$0xff]
  %v442 = vld [vmem:[%s1 + $0xbd8] sm:$0xff]
  %v443 = vld [vmem:[%s1 + $0xbe0] sm:$0xff]
  %v444 = vld [vmem:[%s1 + $0xbe8] sm:$0xff]
  %v445 = vld [vmem:[%s1 + $0xbf0] sm:$0xff]
  %v446 = vld [vmem:[%s1 + $0xbf8] sm:$0xff]
  %v447 = vld [vmem:[%s1 + $0xc00] sm:$0xff]
  %v448 = vld [vmem:[%s1 + $0xc08] sm:$0xff]
  %v449 = vld [vmem:[%s1 + $0xc10] sm:$0xff]
  %v450 = vld [vmem:[%s1 + $0xc18] sm:$0xff]
  %v451 = vld [vmem:[%s1 + $0xc20] sm:$0xff]
  %v452 = vld [vmem:[%s1 + $0xc28] sm:$0xff]
  %v453 = vld [vmem:[%s1 + $0xc30] sm:$0xff]
  %v454 = vld [vmem:[%s1 + $0xc38] sm:$0xff]
  %v455 = vld [vmem:[%s1 + $0xc40] sm:$0xff]
  %v456 = vld [vmem:[%s1 + $0xc48] sm:$0xff]
  %v457 = vld [vmem:[%s1 + $0xc50] sm:$0xff]
  %v458 = vld [vmem:[%s1 + $0xc58] sm:$0xff]
  %v459 = vld [vmem:[%s1 + $0xc60] sm:$0xff]
  %v460 = vld [vmem:[%s1 + $0xc68] sm:$0xff]
  %v461 = vld [vmem:[%s1 + $0xc70] sm:$0xff]
  %v462 = vld [vmem:[%s1 + $0xc78] sm:$0xff]
  %v463 = vld [vmem:[%s1 + $0xc80] sm:$0xff]
  %v464 = vld [vmem:[%s1 + $0xc88] sm:$0xff]
  %v465 = vld [vmem:[%s1 + $0xc90] sm:$0xff]
  %v466 = vld [vmem:[%s1 + $0xc98] sm:$0xff]
  %v467 = vld [vmem:[%s1 + $0xca0] sm:$0xff]
  %v468 = vld [vmem:[%s1 + $0xca8] sm:$0xff]
  %v469 = vld [vmem:[%s1 + $0xcb0] sm:$0xff]
  %v470 = vld [vmem:[%s1 + $0xcb8] sm:$0xff]
  %v471 = vld [vmem:[%s1 + $0xcc0] sm:$0xff]
  %v472 = vld [vmem:[%s1 + $0xcc8] sm:$0xff]
  %v473 = vld [vmem:[%s1 + $0xcd0] sm:$0xff]
  %v474 = vld [vmem:[%s1 + $0xcd8] sm:$0xff]
  %v475 = vld [vmem:[%s1 + $0xce0] sm:$0xff]
  %v476 = vld [vmem:[%s1 + $0xce8] sm:$0xff]
  %v477 = vld [vmem:[%s1 + $0xcf0] sm:$0xff]
  %v478 = vld [vmem:[%s1 + $0xcf8] sm:$0xff]
  %v479 = vld [vmem:[%s1 + $0xd00] sm:$0xff]
  %v480 = vld [vmem:[%s1 + $0xd08] sm:$0xff]
  %v481 = vld [vmem:[%s1 + $0xd10] sm:$0xff]
  %v482 = vld [vmem:[%s1 + $0xd18] sm:$0xff]
  %v483 = vld [vmem:[%s1 + $0xd20] sm:$0xff]
  %v484 = vld [vmem:[%s1 + $0xd28] sm:$0xff]
  %v485 = vld [vmem:[%s1 + $0xd30] sm:$0xff]
  %v486 = vld [vmem:[%s1 + $0xd38] sm:$0xff]
  %v487 = vld [vmem:[%s1 + $0xd40] sm:$0xff]
  %v488 = vld [vmem:[%s1 + $0xd48] sm:$0xff]
  %v489 = vld [vmem:[%s1 + $0xd50] sm:$0xff]
  %v490 = vld [vmem:[%s1 + $0xd58] sm:$0xff]
  %v491 = vld [vmem:[%s1 + $0xd60] sm:$0xff]
  %v492 = vld [vmem:[%s1 + $0xd68] sm:$0xff]
  %v493 = vld [vmem:[%s1 + $0xd70] sm:$0xff]
  %v494 = vld [vmem:[%s1 + $0xd78] sm:$0xff]
  %v495 = vld [vmem:[%s1 + $0xd80] sm:$0xff]
  %v496 = vld [vmem:[%s1 + $0xd88] sm:$0xff]
  %v497 = vld [vmem:[%s1 + $0xd90] sm:$0xff]
  %v498 = vld [vmem:[%s1 + $0xd98] sm:$0xff]
  %v499 = vld [vmem:[%s1 + $0xda0] sm:$0xff]
  %v500 = vld [vmem:[%s1 + $0xda8] sm:$0xff]
  %v501 = vld [vmem:[%s1 + $0xdb0] sm:$0xff]
  %v502 = vld [vmem:[%s1 + $0xdb8] sm:$0xff]
  %v503 = vld [vmem:[%s1 + $0xdc0] sm:$0xff]
  %v504 = vld [vmem:[%s1 + $0xdc8] sm:$0xff]
  %v505 = vld [vmem:[%s1 + $0xdd0] sm:$0xff]
  %v506 = vld [vmem:[%s1 + $0xdd8] sm:$0xff]
  %v507 = vld [vmem:[%s1 + $0xde0] sm:$0xff]
  %v508 = vld [vmem:[%s1 + $0xde8] sm:$0xff]
  %v509 = vld [vmem:[%s1 + $0xdf0] sm:$0xff]
  %v510 = vld [vmem:[%s1 + $0xdf8] sm:$0xff]
  %v511 = vld [vmem:[%s1 + $0xe00] sm:$0xff]
  %v512 = vld [vmem:[%s1 + $0xe08] sm:$0xff]
  %v513 = vld [vmem:[%s1 + $0xe10] sm:$0xff]
  %v514 = vld [vmem:[%s1 + $0xe18] sm:$0xff]
  %v515 = vld [vmem:[%s1 + $0xe20] sm:$0xff]
  %v516 = vld [vmem:[%s1 + $0xe28] sm:$0xff]
  %v517 = vld [vmem:[%s1 + $0xe30] sm:$0xff]
  %v518 = vld [vmem:[%s1 + $0xe38] sm:$0xff]
  %v519 = vld [vmem:[%s1 + $0xe40] sm:$0xff]
  %v520 = vld [vmem:[%s1 + $0xe48] sm:$0xff]
  %v521 = vld [vmem:[%s1 + $0xe50] sm:$0xff]
  %v522 = vld [vmem:[%s1 + $0xe58] sm:$0xff]
  %v523 = vld [vmem:[%s1 + $0xe60] sm:$0xff]
  %v524 = vld [vmem:[%s1 + $0xe68] sm:$0xff]
  %v525 = vld [vmem:[%s1 + $0xe70] sm:$0xff]
  %v526 = vld [vmem:[%s1 + $0xe78] sm:$0xff]
  %v527 = vld [vmem:[%s1 + $0xe80] sm:$0xff]
  %v528 = vld [vmem:[%s1 + $0xe88] sm:$0xff]
  %v529 = vld [vmem:[%s1 + $0xe90] sm:$0xff]
  %v530 = vld [vmem:[%s1 + $0xe98] sm:$0xff]
  %v531 = vld [vmem:[%s1 + $0xea0] sm:$0xff]
  %v532 = vld [vmem:[%s1 + $0xea8] sm:$0xff]
  %v533 = vld [vmem:[%s1 + $0xeb0] sm:$0xff]
  %v534 = vld [vmem:[%s1 + $0xeb8] sm:$0xff]
  %v535 = vld [vmem:[%s1 + $0xec0] sm:$0xff]
  %v536 = vld [vmem:[%s1 + $0xec8] sm:$0xff]
  %v537 = vld [vmem:[%s1 + $0xed0] sm:$0xff]
  %v538 = vld [vmem:[%s1 + $0xed8] sm:$0xff]
  %v539 = vld [vmem:[%s1 + $0xee0] sm:$0xff]
  %v540 = vld [vmem:[%s1 + $0xee8] sm:$0xff]
  %v541 = vld [vmem:[%s1 + $0xef0] sm:$0xff]
  %v542 = vld [vmem:[%s1 + $0xef8] sm:$0xff]
  %v543 = vld [vmem:[%s1 + $0xf00] sm:$0xff]
  %v544 = vld [vmem:[%s1 + $0xf08] sm:$0xff]
  %v545 = vld [vmem:[%s1 + $0xf10] sm:$0xff]
  %v546 = vld [vmem:[%s1 + $0xf18] sm:$0xff]
  %v547 = vld [vmem:[%s1 + $0xf20] sm:$0xff]
  %v548 = vld [vmem:[%s1 + $0xf28] sm:$0xff]
  %v549 = vld [vmem:[%s1 + $0xf30] sm:$0xff]
  %v550 = vld [vmem:[%s1 + $0xf38] sm:$0xff]
  %v551 = vld [vmem:[%s1 + $0xf40] sm:$0xff]
  %v552 = vld [vmem:[%s1 + $0xf48] sm:$0xff]
  %v553 = vld [vmem:[%s1 + $0xf50] sm:$0xff]
  %v554 = vld [vmem:[%s1 + $0xf58] sm:$0xff]
  %v555 = vld [vmem:[%s1 + $0xf60] sm:$0xff]
  %v556 = vld [vmem:[%s1 + $0xf68] sm:$0xff]
  %v557 = vld [vmem:[%s1 + $0xf70] sm:$0xff]
  %v558 = vld [vmem:[%s1 + $0xf78] sm:$0xff]
  %v559 = vld [vmem:[%s1 + $0xf80] sm:$0xff]
  %v560 = vld [vmem:[%s1 + $0xf88] sm:$0xff]
  %v561 = vld [vmem:[%s1 + $0xf90] sm:$0xff]
  %v562 = vld [vmem:[%s1 + $0xf98] sm:$0xff]
  %v563 = vld [vmem:[%s1 + $0xfa0] sm:$0xff]
  %v564 = vld [vmem:[%s1 + $0xfa8] sm:$0xff]
  %v565 = vld [vmem:[%s1 + $0xfb0] sm:$0xff]
  %v566 = vld [vmem:[%s1 + $0xfb8] sm:$0xff]
  %v567 = vld [vmem:[%s1 + $0xfc0] sm:$0xff]
  %v568 = vld [vmem:[%s1 + $0xfc8] sm:$0xff]
  %v569 = vld [vmem:[%s1 + $0xfd0] sm:$0xff]
  %v570 = vld [vmem:[%s1 + $0xfd8] sm:$0xff]
  %v571 = vld [vmem:[%s1 + $0xfe0] sm:$0xff]
  %v572 = vld [vmem:[%s1 + $0xfe8] sm:$0xff]
  %v573 = vld [vmem:[%s1 + $0xff0] sm:$0xff]
  %v574 = vld [vmem:[%s1 + $0xff8] sm:$0xff]
  %v575 = vld [vmem:[%s1 + $0x1000] sm:$0xff]
  %v576 = vld [vmem:[%s1 + $0x1008] sm:$0xff]
  %v577 = vld [vmem:[%s1 + $0x1010] sm:$0xff]
  %v578 = vld [vmem:[%s1 + $0x1018] sm:$0xff]
  %v579 = vld [vmem:[%s1 + $0x1020] sm:$0xff]
  %v580 = vld [vmem:[%s1 + $0x1028] sm:$0xff]
  %v581 = vld [vmem:[%s1 + $0x1030] sm:$0xff]
  %v582 = vld [vmem:[%s1 + $0x1038] sm:$0xff]
  %v583 = vld [vmem:[%s1 + $0x1040] sm:$0xff]
  %v584 = vld [vmem:[%s1 + $0x1048] sm:$0xff]
  %v585 = vld [vmem:[%s1 + $0x1050] sm:$0xff]
  %v586 = vld [vmem:[%s1 + $0x1058] sm:$0xff]
  %v587 = vld [vmem:[%s1 + $0x1060] sm:$0xff]
  %v588 = vld [vmem:[%s1 + $0x1068] sm:$0xff]
  %v589 = vld [vmem:[%s1 + $0x1070] sm:$0xff]
  %v590 = vld [vmem:[%s1 + $0x1078] sm:$0xff]
  %v591 = vld [vmem:[%s1 + $0x1080] sm:$0xff]
  %v592 = vld [vmem:[%s1 + $0x1088] sm:$0xff]
  %v593 = vld [vmem:[%s1 + $0x1090] sm:$0xff]
  %v594 = vld [vmem:[%s1 + $0x1098] sm:$0xff]
  %v595 = vld [vmem:[%s1 + $0x10a0] sm:$0xff]
  %v596 = vld [vmem:[%s1 + $0x10a8] sm:$0xff]
  %v597 = vld [vmem:[%s1 + $0x10b0] sm:$0xff]
  %v598 = vld [vmem:[%s1 + $0x10b8] sm:$0xff]
  %v599 = vld [vmem:[%s1 + $0x10c0] sm:$0xff]
  %v600 = vld [vmem:[%s1 + $0x10c8] sm:$0xff]
  %v601 = vld [vmem:[%s1 + $0x10d0] sm:$0xff]
  %v602 = vld [vmem:[%s1 + $0x10d8] sm:$0xff]
  %v603 = vld [vmem:[%s1 + $0x10e0] sm:$0xff]
  %v604 = vld [vmem:[%s1 + $0x10e8] sm:$0xff]
  %v605 = vld [vmem:[%s1 + $0x10f0] sm:$0xff]
  %v606 = vld [vmem:[%s1 + $0x10f8] sm:$0xff]
  %v607 = vld [vmem:[%s1 + $0x1100] sm:$0xff]
  %v608 = vld [vmem:[%s1 + $0x1108] sm:$0xff]
  %v609 = vld [vmem:[%s1 + $0x1110] sm:$0xff]
  %v610 = vld [vmem:[%s1 + $0x1118] sm:$0xff]
  %v611 = vld [vmem:[%s1 + $0x1120] sm:$0xff]
  %v612 = vld [vmem:[%s1 + $0x1128] sm:$0xff]
  %v613 = vld [vmem:[%s1 + $0x1130] sm:$0xff]
  %v614 = vld [vmem:[%s1 + $0x1138] sm:$0xff]
  %v615 = vld [vmem:[%s1 + $0x1140] sm:$0xff]
  %v616 = vld [vmem:[%s1 + $0x1148] sm:$0xff]
  %v617 = vld [vmem:[%s1 + $0x1150] sm:$0xff]
  %v618 = vld [vmem:[%s1 + $0x1158] sm:$0xff]
  %v619 = vld [vmem:[%s1 + $0x1160] sm:$0xff]
  %v620 = vld [vmem:[%s1 + $0x1168] sm:$0xff]
  %v621 = vld [vmem:[%s1 + $0x1170] sm:$0xff]
  %v622 = vld [vmem:[%s1 + $0x1178] sm:$0xff]
  %v623 = vld [vmem:[%s1 + $0x1180] sm:$0xff]
  %v624 = vld [vmem:[%s1 + $0x1188] sm:$0xff]
  %v625 = vld [vmem:[%s1 + $0x1190] sm:$0xff]
  %v626 = vld [vmem:[%s1 + $0x1198] sm:$0xff]
  %v627 = vld [vmem:[%s1 + $0x11a0] sm:$0xff]
  %v628 = vld [vmem:[%s1 + $0x11a8] sm:$0xff]
  %v629 = vld [vmem:[%s1 + $0x11b0] sm:$0xff]
  %v630 = vld [vmem:[%s1 + $0x11b8] sm:$0xff]
  %v631 = vld [vmem:[%s1 + $0x11c0] sm:$0xff]
  %v632 = vld [vmem:[%s1 + $0x11c8] sm:$0xff]
  %v633 = vld [vmem:[%s1 + $0x11d0] sm:$0xff]
  %v634 = vld [vmem:[%s1 + $0x11d8] sm:$0xff]
  %v635 = vld [vmem:[%s1 + $0x11e0] sm:$0xff]
  %v636 = vld [vmem:[%s1 + $0x11e8] sm:$0xff]
  %v637 = vld [vmem:[%s1 + $0x11f0] sm:$0xff]
  %v638 = vld [vmem:[%s1 + $0x11f8] sm:$0xff]
  %v639 = vld [vmem:[%s1 + $0x1200] sm:$0xff]
  %v640 = vld [vmem:[%s1 + $0x1208] sm:$0xff]
  %v641 = vld [vmem:[%s1 + $0x1210] sm:$0xff]
  %v642 = vld [vmem:[%s1 + $0x1218] sm:$0xff]
  %v643 = vld [vmem:[%s1 + $0x1220] sm:$0xff]
  %v644 = vld [vmem:[%s1 + $0x1228] sm:$0xff]
  %v645 = vld [vmem:[%s1 + $0x1230] sm:$0xff]
  %v646 = vld [vmem:[%s1 + $0x1238] sm:$0xff]
  %v647 = vld [vmem:[%s1 + $0x1240] sm:$0xff]
  %v648 = vld [vmem:[%s1 + $0x1248] sm:$0xff]
  %v649 = vld [vmem:[%s1 + $0x1250] sm:$0xff]
  %v650 = vld [vmem:[%s1 + $0x1258] sm:$0xff]
  %v651 = vld [vmem:[%s1 + $0x1260] sm:$0xff]
  %v652 = vld [vmem:[%s1 + $0x1268] sm:$0xff]
  %v653 = vld [vmem:[%s1 + $0x1270] sm:$0xff]
  %v654 = vld [vmem:[%s1 + $0x1278] sm:$0xff]
  %v655 = vld [vmem:[%s1 + $0x1280] sm:$0xff]
  %v656 = vld [vmem:[%s1 + $0x1288] sm:$0xff]
  %v657 = vld [vmem:[%s1 + $0x1290] sm:$0xff]
  %v658 = vld [vmem:[%s1 + $0x1298] sm:$0xff]
  %v659 = vld [vmem:[%s1 + $0x12a0] sm:$0xff]
  %v660 = vld [vmem:[%s1 + $0x12a8] sm:$0xff]
  %v661 = vld [vmem:[%s1 + $0x12b0] sm:$0xff]
  %v662 = vld [vmem:[%s1 + $0x12b8] sm:$0xff]
  %v663 = vld [vmem:[%s1 + $0x12c0] sm:$0xff]
  %v664 = vld [vmem:[%s1 + $0x12c8] sm:$0xff]
  %v665 = vld [vmem:[%s1 + $0x12d0] sm:$0xff]
  %v666 = vld [vmem:[%s1 + $0x12d8] sm:$0xff]
  %v667 = vld [vmem:[%s1 + $0x12e0] sm:$0xff]
  %v668 = vld [vmem:[%s1 + $0x12e8] sm:$0xff]
  %v669 = vld [vmem:[%s1 + $0x12f0] sm:$0xff]
  %v670 = vld [vmem:[%s1 + $0x12f8] sm:$0xff]
  %v671 = vld [vmem:[%s1 + $0x1300] sm:$0xff]
  %v672 = vld [vmem:[%s1 + $0x1308] sm:$0xff]
  %v673 = vld [vmem:[%s1 + $0x1310] sm:$0xff]
  %v674 = vld [vmem:[%s1 + $0x1318] sm:$0xff]
  %v675 = vld [vmem:[%s1 + $0x1320] sm:$0xff]
  %v676 = vld [vmem:[%s1 + $0x1328] sm:$0xff]
  %v677 = vld [vmem:[%s1 + $0x1330] sm:$0xff]
  %v678 = vld [vmem:[%s1 + $0x1338] sm:$0xff]
  %v679 = vld [vmem:[%s1 + $0x1340] sm:$0xff]
  %v680 = vld [vmem:[%s1 + $0x1348] sm:$0xff]
  %v681 = vld [vmem:[%s1 + $0x1350] sm:$0xff]
  %v682 = vld [vmem:[%s1 + $0x1358] sm:$0xff]
  %v683 = vld [vmem:[%s1 + $0x1360] sm:$0xff]
  %v684 = vld [vmem:[%s1 + $0x1368] sm:$0xff]
  %v685 = vld [vmem:[%s1 + $0x1370] sm:$0xff]
  %v686 = vld [vmem:[%s1 + $0x1378] sm:$0xff]
  %v687 = vld [vmem:[%s1 + $0x1380] sm:$0xff]
  %v688 = vld [vmem:[%s1 + $0x1388] sm:$0xff]
  %v689 = vld [vmem:[%s1 + $0x1390] sm:$0xff]
  %v690 = vld [vmem:[%s1 + $0x1398] sm:$0xff]
  %v691 = vld [vmem:[%s1 + $0x13a0] sm:$0xff]
  %v692 = vld [vmem:[%s1 + $0x13a8] sm:$0xff]
  %v693 = vld [vmem:[%s1 + $0x13b0] sm:$0xff]
  %v694 = vld [vmem:[%s1 + $0x13b8] sm:$0xff]
  %v695 = vld [vmem:[%s1 + $0x13c0] sm:$0xff]
  %v696 = vld [vmem:[%s1 + $0x13c8] sm:$0xff]
  %v697 = vld [vmem:[%s1 + $0x13d0] sm:$0xff]
  %v698 = vld [vmem:[%s1 + $0x13d8] sm:$0xff]
  %v699 = vld [vmem:[%s1 + $0x13e0] sm:$0xff]
  %v700 = vld [vmem:[%s1 + $0x13e8] sm:$0xff]
  %v701 = vld [vmem:[%s1 + $0x13f0] sm:$0xff]
  %v702 = vld [vmem:[%s1 + $0x13f8] sm:$0xff]
  %v703 = vld [vmem:[%s1 + $0x1400] sm:$0xff]
  %v704 = vld [vmem:[%s1 + $0x1408] sm:$0xff]
  %v705 = vld [vmem:[%s1 + $0x1410] sm:$0xff]
  %v706 = vld [vmem:[%s1 + $0x1418] sm:$0xff]
  %v707 = vld [vmem:[%s1 + $0x1420] sm:$0xff]
  %v708 = vld [vmem:[%s1 + $0x1428] sm:$0xff]
  %v709 = vld [vmem:[%s1 + $0x1430] sm:$0xff]
  %v710 = vld [vmem:[%s1 + $0x1438] sm:$0xff]
  %v711 = vld [vmem:[%s1 + $0x1440] sm:$0xff]
  %v712 = vld [vmem:[%s1 + $0x1448] sm:$0xff]
  %v713 = vld [vmem:[%s1 + $0x1450] sm:$0xff]
  %v714 = vld [vmem:[%s1 + $0x1458] sm:$0xff]
  %v715 = vld [vmem:[%s1 + $0x1460] sm:$0xff]
  %v716 = vld [vmem:[%s1 + $0x1468] sm:$0xff]
  %v717 = vld [vmem:[%s1 + $0x1470] sm:$0xff]
  %v718 = vld [vmem:[%s1 + $0x1478] sm:$0xff]
  %v719 = vld [vmem:[%s1 + $0x1480] sm:$0xff]
  %v720 = vld [vmem:[%s1 + $0x1488] sm:$0xff]
  %v721 = vld [vmem:[%s1 + $0x1490] sm:$0xff]
  %v722 = vld [vmem:[%s1 + $0x1498] sm:$0xff]
  %v723 = vld [vmem:[%s1 + $0x14a0] sm:$0xff]
  %v724 = vld [vmem:[%s1 + $0x14a8] sm:$0xff]
  %v725 = vld [vmem:[%s1 + $0x14b0] sm:$0xff]
  %v726 = vld [vmem:[%s1 + $0x14b8] sm:$0xff]
  %v727 = vld [vmem:[%s1 + $0x14c0] sm:$0xff]
  %v728 = vld [vmem:[%s1 + $0x14c8] sm:$0xff]
  %v729 = vld [vmem:[%s1 + $0x14d0] sm:$0xff]
  %v730 = vld [vmem:[%s1 + $0x14d8] sm:$0xff]
  %v731 = vld [vmem:[%s1 + $0x14e0] sm:$0xff]
  %v732 = vld [vmem:[%s1 + $0x14e8] sm:$0xff]
  %v733 = vld [vmem:[%s1 + $0x14f0] sm:$0xff]
  %v734 = vld [vmem:[%s1 + $0x14f8] sm:$0xff]
  %v735 = vld [vmem:[%s1 + $0x1500] sm:$0xff]
  %v736 = vld [vmem:[%s1 + $0x1508] sm:$0xff]
  %v737 = vld [vmem:[%s1 + $0x1510] sm:$0xff]
  %v738 = vld [vmem:[%s1 + $0x1518] sm:$0xff]
  %v739 = vld [vmem:[%s1 + $0x1520] sm:$0xff]
  %v740 = vld [vmem:[%s1 + $0x1528] sm:$0xff]
  %v741 = vld [vmem:[%s1 + $0x1530] sm:$0xff]
  %v742 = vld [vmem:[%s1 + $0x1538] sm:$0xff]
  %v743 = vld [vmem:[%s1 + $0x1540] sm:$0xff]
  %v744 = vld [vmem:[%s1 + $0x1548] sm:$0xff]
  %v745 = vld [vmem:[%s1 + $0x1550] sm:$0xff]
  %v746 = vld [vmem:[%s1 + $0x1558] sm:$0xff]
  %v747 = vld [vmem:[%s1 + $0x1560] sm:$0xff]
  %v748 = vld [vmem:[%s1 + $0x1568] sm:$0xff]
  %v749 = vld [vmem:[%s1 + $0x1570] sm:$0xff]
  %v750 = vld [vmem:[%s1 + $0x1578] sm:$0xff]
  %v751 = vld [vmem:[%s1 + $0x1580] sm:$0xff]
  %v752 = vld [vmem:[%s1 + $0x1588] sm:$0xff]
  %v753 = vld [vmem:[%s1 + $0x1590] sm:$0xff]
  %v754 = vld [vmem:[%s1 + $0x1598] sm:$0xff]
  %v755 = vld [vmem:[%s1 + $0x15a0] sm:$0xff]
  %v756 = vld [vmem:[%s1 + $0x15a8] sm:$0xff]
  %v757 = vld [vmem:[%s1 + $0x15b0] sm:$0xff]
  %v758 = vld [vmem:[%s1 + $0x15b8] sm:$0xff]
  %v759 = vld [vmem:[%s1 + $0x15c0] sm:$0xff]
  %v760 = vld [vmem:[%s1 + $0x15c8] sm:$0xff]
  %v761 = vld [vmem:[%s1 + $0x15d0] sm:$0xff]
  %v762 = vld [vmem:[%s1 + $0x15d8] sm:$0xff]
  %v763 = vld [vmem:[%s1 + $0x15e0] sm:$0xff]
  %v764 = vld [vmem:[%s1 + $0x15e8] sm:$0xff]
  %v765 = vld [vmem:[%s1 + $0x15f0] sm:$0xff]
  %v766 = vld [vmem:[%s1 + $0x15f8] sm:$0xff]
  %v767 = vld [vmem:[%s1 + $0x1600] sm:$0xff]
  %v768 = vld [vmem:[%s1 + $0x1608] sm:$0xff]
  %v769 = vld [vmem:[%s1 + $0x1610] sm:$0xff]
  %v770 = vld [vmem:[%s1 + $0x1618] sm:$0xff]
  %v771 = vld [vmem:[%s1 + $0x1620] sm:$0xff]
  %v772 = vld [vmem:[%s1 + $0x1628] sm:$0xff]
  %v773 = vld [vmem:[%s1 + $0x1630] sm:$0xff]
  %v774 = vld [vmem:[%s1 + $0x1638] sm:$0xff]
  %v775 = vld [vmem:[%s1 + $0x1640] sm:$0xff]
  %v776 = vld [vmem:[%s1 + $0x1648] sm:$0xff]
  %v777 = vld [vmem:[%s1 + $0x1650] sm:$0xff]
  %v778 = vld [vmem:[%s1 + $0x1658] sm:$0xff]
  %v779 = vld [vmem:[%s1 + $0x1660] sm:$0xff]
  %v780 = vld [vmem:[%s1 + $0x1668] sm:$0xff]
  %v781 = vld [vmem:[%s1 + $0x1670] sm:$0xff]
  %v782 = vld [vmem:[%s1 + $0x1678] sm:$0xff]
  %v783 = vld [vmem:[%s1 + $0x1680] sm:$0xff]
  %v784 = vld [vmem:[%s1 + $0x1688] sm:$0xff]
  %v785 = vld [vmem:[%s1 + $0x1690] sm:$0xff]
  %v786 = vld [vmem:[%s1 + $0x1698] sm:$0xff]
  %v787 = vld [vmem:[%s1 + $0x16a0] sm:$0xff]
  %v788 = vld [vmem:[%s1 + $0x16a8] sm:$0xff]
  %v789 = vld [vmem:[%s1 + $0x16b0] sm:$0xff]
  %v790 = vld [vmem:[%s1 + $0x16b8] sm:$0xff]
  %v791 = vld [vmem:[%s1 + $0x16c0] sm:$0xff]
  %v792 = vld [vmem:[%s1 + $0x16c8] sm:$0xff]
  %v793 = vld [vmem:[%s1 + $0x16d0] sm:$0xff]
  %v794 = vld [vmem:[%s1 + $0x16d8] sm:$0xff]
  %v795 = vld [vmem:[%s1 + $0x16e0] sm:$0xff]
  %v796 = vld [vmem:[%s1 + $0x16e8] sm:$0xff]
  %v797 = vld [vmem:[%s1 + $0x16f0] sm:$0xff]
  %v798 = vld [vmem:[%s1 + $0x16f8] sm:$0xff]
  %v799 = vld [vmem:[%s1 + $0x1700] sm:$0xff]
  %v800 = vld [vmem:[%s1 + $0x1708] sm:$0xff]
  %v801 = vld [vmem:[%s1 + $0x1710] sm:$0xff]
  %v802 = vld [vmem:[%s1 + $0x1718] sm:$0xff]
  %v803 = vld [vmem:[%s1 + $0x1720] sm:$0xff]
  %v804 = vld [vmem:[%s1 + $0x1728] sm:$0xff]
  %v805 = vld [vmem:[%s1 + $0x1730] sm:$0xff]
  %v806 = vld [vmem:[%s1 + $0x1738] sm:$0xff]
  %v807 = vld [vmem:[%s1 + $0x1740] sm:$0xff]
  %v808 = vld [vmem:[%s1 + $0x1748] sm:$0xff]
  %v809 = vld [vmem:[%s1 + $0x1750] sm:$0xff]
  %v810 = vld [vmem:[%s1 + $0x1758] sm:$0xff]
  %v811 = vld [vmem:[%s1 + $0x1760] sm:$0xff]
  %v812 = vld [vmem:[%s1 + $0x1768] sm:$0xff]
  %v813 = vld [vmem:[%s1 + $0x1770] sm:$0xff]
  %v814 = vld [vmem:[%s1 + $0x1778] sm:$0xff]
  %v815 = vld [vmem:[%s1 + $0x1780] sm:$0xff]
  %v816 = vld [vmem:[%s1 + $0x1788] sm:$0xff]
  %v817 = vld [vmem:[%s1 + $0x1790] sm:$0xff]
  %v818 = vld [vmem:[%s1 + $0x1798] sm:$0xff]
  %v819 = vld [vmem:[%s1 + $0x17a0] sm:$0xff]
  %v820 = vld [vmem:[%s1 + $0x17a8] sm:$0xff]
  %v821 = vld [vmem:[%s1 + $0x17b0] sm:$0xff]
  %v822 = vld [vmem:[%s1 + $0x17b8] sm:$0xff]
  %v823 = vld [vmem:[%s1 + $0x17c0] sm:$0xff]
  %v824 = vld [vmem:[%s1 + $0x17c8] sm:$0xff]
  %v825 = vld [vmem:[%s1 + $0x17d0] sm:$0xff]
  %v826 = vld [vmem:[%s1 + $0x17d8] sm:$0xff]
  %v827 = vld [vmem:[%s1 + $0x17e0] sm:$0xff]
  %v828 = vld [vmem:[%s1 + $0x17e8] sm:$0xff]
  %v829 = vld [vmem:[%s1 + $0x17f0] sm:$0xff]
  %v830 = vld [vmem:[%s1 + $0x17f8] sm:$0xff]
  %v831 = vld [vmem:[%s1 + $0x1800] sm:$0xff]
  %v832 = vld [vmem:[%s1 + $0x1808] sm:$0xff]
  %v833 = vld [vmem:[%s1 + $0x1810] sm:$0xff]
  %v834 = vld [vmem:[%s1 + $0x1818] sm:$0xff]
  %v835 = vld [vmem:[%s1 + $0x1820] sm:$0xff]
  %v836 = vld [vmem:[%s1 + $0x1828] sm:$0xff]
  %v837 = vld [vmem:[%s1 + $0x1830] sm:$0xff]
  %v838 = vld [vmem:[%s1 + $0x1838] sm:$0xff]
  %v839 = vld [vmem:[%s1 + $0x1840] sm:$0xff]
  %v840 = vld [vmem:[%s1 + $0x1848] sm:$0xff]
  %v841 = vld [vmem:[%s1 + $0x1850] sm:$0xff]
  %v842 = vld [vmem:[%s1 + $0x1858] sm:$0xff]
  %v843 = vld [vmem:[%s1 + $0x1860] sm:$0xff]
  %v844 = vld [vmem:[%s1 + $0x1868] sm:$0xff]
  %v845 = vld [vmem:[%s1 + $0x1870] sm:$0xff]
  %v846 = vld [vmem:[%s1 + $0x1878] sm:$0xff]
  %v847 = vld [vmem:[%s1 + $0x1880] sm:$0xff]
  %v848 = vld [vmem:[%s1 + $0x1888] sm:$0xff]
  %v849 = vld [vmem:[%s1 + $0x1890] sm:$0xff]
  %v850 = vld [vmem:[%s1 + $0x1898] sm:$0xff]
  %v851 = vld [vmem:[%s1 + $0x18a0] sm:$0xff]
  %v852 = vld [vmem:[%s1 + $0x18a8] sm:$0xff]
  %v853 = vld [vmem:[%s1 + $0x18b0] sm:$0xff]
  %v854 = vld [vmem:[%s1 + $0x18b8] sm:$0xff]
  %v855 = vld [vmem:[%s1 + $0x18c0] sm:$0xff]
  %v856 = vld [vmem:[%s1 + $0x18c8] sm:$0xff]
  %v857 = vld [vmem:[%s1 + $0x18d0] sm:$0xff]
  %v858 = vld [vmem:[%s1 + $0x18d8] sm:$0xff]
  %v859 = vld [vmem:[%s1 + $0x18e0] sm:$0xff]
  %v860 = vld [vmem:[%s1 + $0x18e8] sm:$0xff]
  %v861 = vld [vmem:[%s1 + $0x18f0] sm:$0xff]
  %v862 = vld [vmem:[%s1 + $0x18f8] sm:$0xff]
  %v863 = vld [vmem:[%s1 + $0x1900] sm:$0xff]
  %v864 = vld [vmem:[%s1 + $0x1908] sm:$0xff]
  %v865 = vld [vmem:[%s1 + $0x1910] sm:$0xff]
  %v866 = vld [vmem:[%s1 + $0x1918] sm:$0xff]
  %v867 = vld [vmem:[%s1 + $0x1920] sm:$0xff]
  %v868 = vld [vmem:[%s1 + $0x1928] sm:$0xff]
  %v869 = vld [vmem:[%s1 + $0x1930] sm:$0xff]
  %v870 = vld [vmem:[%s1 + $0x1938] sm:$0xff]
  %v871 = vld [vmem:[%s1 + $0x1940] sm:$0xff]
  %v872 = vld [vmem:[%s1 + $0x1948] sm:$0xff]
  %v873 = vld [vmem:[%s1 + $0x1950] sm:$0xff]
  %v874 = vld [vmem:[%s1 + $0x1958] sm:$0xff]
  %v875 = vld [vmem:[%s1 + $0x1960] sm:$0xff]
  %v876 = vld [vmem:[%s1 + $0x1968] sm:$0xff]
  %v877 = vld [vmem:[%s1 + $0x1970] sm:$0xff]
  %v878 = vld [vmem:[%s1 + $0x1978] sm:$0xff]
  %v879 = vld [vmem:[%s1 + $0x1980] sm:$0xff]
  %v880 = vld [vmem:[%s1 + $0x1988] sm:$0xff]
  %v881 = vld [vmem:[%s1 + $0x1990] sm:$0xff]
  %v882 = vld [vmem:[%s1 + $0x1998] sm:$0xff]
  %v883 = vld [vmem:[%s1 + $0x19a0] sm:$0xff]
  %v884 = vld [vmem:[%s1 + $0x19a8] sm:$0xff]
  %v885 = vld [vmem:[%s1 + $0x19b0] sm:$0xff]
  %v886 = vld [vmem:[%s1 + $0x19b8] sm:$0xff]
  %v887 = vld [vmem:[%s1 + $0x19c0] sm:$0xff]
  %v888 = vld [vmem:[%s1 + $0x19c8] sm:$0xff]
  %v889 = vld [vmem:[%s1 + $0x19d0] sm:$0xff]
  %v890 = vld [vmem:[%s1 + $0x19d8] sm:$0xff]
  %v891 = vld [vmem:[%s1 + $0x19e0] sm:$0xff]
  %v892 = vld [vmem:[%s1 + $0x19e8] sm:$0xff]
  %v893 = vld [vmem:[%s1 + $0x19f0] sm:$0xff]
  %v894 = vld [vmem:[%s1 + $0x19f8] sm:$0xff]
  %v895 = vld [vmem:[%s1 + $0x1a00] sm:$0xff]
  %v896 = vld [vmem:[%s1 + $0x1a08] sm:$0xff]
  %v897 = vld [vmem:[%s1 + $0x1a10] sm:$0xff]
  %v898 = vld [vmem:[%s1 + $0x1a18] sm:$0xff]
  %v899 = vld [vmem:[%s1 + $0x1a20] sm:$0xff]
  %v900 = vld [vmem:[%s1 + $0x1a28] sm:$0xff]
  %v901 = vld [vmem:[%s1 + $0x1a30] sm:$0xff]
  %v902 = vld [vmem:[%s1 + $0x1a38] sm:$0xff]
  %v903 = vld [vmem:[%s1 + $0x1a40] sm:$0xff]
  %v904 = vld [vmem:[%s1 + $0x1a48] sm:$0xff]
  %v905 = vld [vmem:[%s1 + $0x1a50] sm:$0xff]
  %v906 = vld [vmem:[%s1 + $0x1a58] sm:$0xff]
  %v907 = vld [vmem:[%s1 + $0x1a60] sm:$0xff]
  %v908 = vld [vmem:[%s1 + $0x1a68] sm:$0xff]
  %v909 = vld [vmem:[%s1 + $0x1a70] sm:$0xff]
  %v910 = vld [vmem:[%s1 + $0x1a78] sm:$0xff]
  %v911 = vld [vmem:[%s1 + $0x1a80] sm:$0xff]
  %v912 = vld [vmem:[%s1 + $0x1a88] sm:$0xff]
  %v913 = vld [vmem:[%s1 + $0x1a90] sm:$0xff]
  %v914 = vld [vmem:[%s1 + $0x1a98] sm:$0xff]
  %v915 = vld [vmem:[%s1 + $0x1aa0] sm:$0xff]
  %v916 = vld [vmem:[%s1 + $0x1aa8] sm:$0xff]
  %v917 = vld [vmem:[%s1 + $0x1ab0] sm:$0xff]
  %v918 = vld [vmem:[%s1 + $0x1ab8] sm:$0xff]
  %v919 = vld [vmem:[%s1 + $0x1ac0] sm:$0xff]
  %v920 = vld [vmem:[%s1 + $0x1ac8] sm:$0xff]
  %v921 = vld [vmem:[%s1 + $0x1ad0] sm:$0xff]
  %v922 = vld [vmem:[%s1 + $0x1ad8] sm:$0xff]
  %v923 = vld [vmem:[%s1 + $0x1ae0] sm:$0xff]
  %v924 = vld [vmem:[%s1 + $0x1ae8] sm:$0xff]
  %v925 = vld [vmem:[%s1 + $0x1af0] sm:$0xff]
  %v926 = vld [vmem:[%s1 + $0x1af8] sm:$0xff]
  %v927 = vld [vmem:[%s1 + $0x1b00] sm:$0xff]
  %v928 = vld [vmem:[%s1 + $0x1b08] sm:$0xff]
  %v929 = vld [vmem:[%s1 + $0x1b10] sm:$0xff]
  %v930 = vld [vmem:[%s1 + $0x1b18] sm:$0xff]
  %v931 = vld [vmem:[%s1 + $0x1b20] sm:$0xff]
  %v932 = vld [vmem:[%s1 + $0x1b28] sm:$0xff]
  %v933 = vld [vmem:[%s1 + $0x1b30] sm:$0xff]
  %v934 = vld [vmem:[%s1 + $0x1b38] sm:$0xff]
  %v935 = vld [vmem:[%s1 + $0x1b40] sm:$0xff]
  %v936 = vld [vmem:[%s1 + $0x1b48] sm:$0xff]
  %v937 = vld [vmem:[%s1 + $0x1b50] sm:$0xff]
  %v938 = vld [vmem:[%s1 + $0x1b58] sm:$0xff]
  %v939 = vld [vmem:[%s1 + $0x1b60] sm:$0xff]
  %v940 = vld [vmem:[%s1 + $0x1b68] sm:$0xff]
  %v941 = vld [vmem:[%s1 + $0x1b70] sm:$0xff]
  %v942 = vld [vmem:[%s1 + $0x1b78] sm:$0xff]
  %v943 = vld [vmem:[%s1 + $0x1b80] sm:$0xff]
  %v944 = vld [vmem:[%s1 + $0x1b88] sm:$0xff]
  %v945 = vld [vmem:[%s1 + $0x1b90] sm:$0xff]
  %v946 = vld [vmem:[%s1 + $0x1b98] sm:$0xff]
  %v947 = vld [vmem:[%s1 + $0x1ba0] sm:$0xff]
  %v948 = vld [vmem:[%s1 + $0x1ba8] sm:$0xff]
  %v949 = vld [vmem:[%s1 + $0x1bb0] sm:$0xff]
  %v950 = vld [vmem:[%s1 + $0x1bb8] sm:$0xff]
  %v951 = vld [vmem:[%s1 + $0x1bc0] sm:$0xff]
  %v952 = vld [vmem:[%s1 + $0x1bc8] sm:$0xff]
  %v953 = vld [vmem:[%s1 + $0x1bd0] sm:$0xff]
  %v954 = vld [vmem:[%s1 + $0x1bd8] sm:$0xff]
  %v955 = vld [vmem:[%s1 + $0x1be0] sm:$0xff]
  %v956 = vld [vmem:[%s1 + $0x1be8] sm:$0xff]
  %v957 = vld [vmem:[%s1 + $0x1bf0] sm:$0xff]
  %v958 = vld [vmem:[%s1 + $0x1bf8] sm:$0xff]
  %v959 = vld [vmem:[%s1 + $0x1c00] sm:$0xff]
  %v960 = vld [vmem:[%s1 + $0x1c08] sm:$0xff]
  %v961 = vld [vmem:[%s1 + $0x1c10] sm:$0xff]
  %v962 = vld [vmem:[%s1 + $0x1c18] sm:$0xff]
  %v963 = vld [vmem:[%s1 + $0x1c20] sm:$0xff]
  %v964 = vld [vmem:[%s1 + $0x1c28] sm:$0xff]
  %v965 = vld [vmem:[%s1 + $0x1c30] sm:$0xff]
  %v966 = vld [vmem:[%s1 + $0x1c38] sm:$0xff]
  %v967 = vld [vmem:[%s1 + $0x1c40] sm:$0xff]
  %v968 = vld [vmem:[%s1 + $0x1c48] sm:$0xff]
  %v969 = vld [vmem:[%s1 + $0x1c50] sm:$0xff]
  %v970 = vld [vmem:[%s1 + $0x1c58] sm:$0xff]
  %v971 = vld [vmem:[%s1 + $0x1c60] sm:$0xff]
  %v972 = vld [vmem:[%s1 + $0x1c68] sm:$0xff]
  %v973 = vld [vmem:[%s1 + $0x1c70] sm:$0xff]
  %v974 = vld [vmem:[%s1 + $0x1c78] sm:$0xff]
  %v975 = vld [vmem:[%s1 + $0x1c80] sm:$0xff]
  %v976 = vld [vmem:[%s1 + $0x1c88] sm:$0xff]
  %v977 = vld [vmem:[%s1 + $0x1c90] sm:$0xff]
  %v978 = vld [vmem:[%s1 + $0x1c98] sm:$0xff]
  %v979 = vld [vmem:[%s1 + $0x1ca0] sm:$0xff]
  %v980 = vld [vmem:[%s1 + $0x1ca8] sm:$0xff]
  %v981 = vld [vmem:[%s1 + $0x1cb0] sm:$0xff]
  %v982 = vld [vmem:[%s1 + $0x1cb8] sm:$0xff]
  %v983 = vld [vmem:[%s1 + $0x1cc0] sm:$0xff]
  %v984 = vld [vmem:[%s1 + $0x1cc8] sm:$0xff]
  %v985 = vld [vmem:[%s1 + $0x1cd0] sm:$0xff]
  %v986 = vld [vmem:[%s1 + $0x1cd8] sm:$0xff]
  %v987 = vld [vmem:[%s1 + $0x1ce0] sm:$0xff]
  %v988 = vld [vmem:[%s1 + $0x1ce8] sm:$0xff]
  %v989 = vld [vmem:[%s1 + $0x1cf0] sm:$0xff]
  %v990 = vld [vmem:[%s1 + $0x1cf8] sm:$0xff]
  %v991 = vld [vmem:[%s1 + $0x1d00] sm:$0xff]
  %v992 = vld [vmem:[%s1 + $0x1d08] sm:$0xff]
  %v993 = vld [vmem:[%s1 + $0x1d10] sm:$0xff]
  %v994 = vld [vmem:[%s1 + $0x1d18] sm:$0xff]
  %v995 = vld [vmem:[%s1 + $0x1d20] sm:$0xff]
  %v996 = vld [vmem:[%s1 + $0x1d28] sm:$0xff]
  %v997 = vld [vmem:[%s1 + $0x1d30] sm:$0xff]
  %v998 = vld [vmem:[%s1 + $0x1d38] sm:$0xff]
  %v999 = vld [vmem:[%s1 + $0x1d40] sm:$0xff]
  %v1000 = vld [vmem:[%s1 + $0x1d48] sm:$0xff]
  %v1001 = vld [vmem:[%s1 + $0x1d50] sm:$0xff]
  %v1002 = vld [vmem:[%s1 + $0x1d58] sm:$0xff]
  %v1003 = vld [vmem:[%s1 + $0x1d60] sm:$0xff]
  %v1004 = vld [vmem:[%s1 + $0x1d68] sm:$0xff]
  %v1005 = vld [vmem:[%s1 + $0x1d70] sm:$0xff]
  %v1006 = vld [vmem:[%s1 + $0x1d78] sm:$0xff]
  %v1007 = vld [vmem:[%s1 + $0x1d80] sm:$0xff]
  %v1008 = vld [vmem:[%s1 + $0x1d88] sm:$0xff]
  %v1009 = vld [vmem:[%s1 + $0x1d90] sm:$0xff]
  %v1010 = vld [vmem:[%s1 + $0x1d98] sm:$0xff]
  %v1011 = vld [vmem:[%s1 + $0x1da0] sm:$0xff]
  %v1012 = vld [vmem:[%s1 + $0x1da8] sm:$0xff]
  %v1013 = vld [vmem:[%s1 + $0x1db0] sm:$0xff]
  %v1014 = vld [vmem:[%s1 + $0x1db8] sm:$0xff]
  %v1015 = vld [vmem:[%s1 + $0x1dc0] sm:$0xff]
  %v1016 = vld [vmem:[%s1 + $0x1dc8] sm:$0xff]
  %v1017 = vld [vmem:[%s1 + $0x1dd0] sm:$0xff]
  %v1018 = vld [vmem:[%s1 + $0x1dd8] sm:$0xff]
  %v1019 = vld [vmem:[%s1 + $0x1de0] sm:$0xff]
  %v1020 = vld [vmem:[%s1 + $0x1de8] sm:$0xff]
  %v1021 = vld [vmem:[%s1 + $0x1df0] sm:$0xff]
  %v1022 = vld [vmem:[%s1 + $0x1df8] sm:$0xff]
  %v1023 = vld [vmem:[%s1 + $0x1e00] sm:$0xff]
  %v1024 = vld [vmem:[%s1 + $0x1e08] sm:$0xff]
  %v1025 = vld [vmem:[%s1 + $0x1e10] sm:$0xff]
  %v1026 = vld [vmem:[%s1 + $0x1e18] sm:$0xff]
  %v1027 = vld [vmem:[%s1 + $0x1e20] sm:$0xff]
  %v1028 = vld [vmem:[%s1 + $0x1e28] sm:$0xff]
  %v1029 = vld [vmem:[%s1 + $0x1e30] sm:$0xff]
  %v1030 = vld [vmem:[%s1 + $0x1e38] sm:$0xff]
  %v1031 = vld [vmem:[%s1 + $0x1e40] sm:$0xff]
  %v1032 = vld [vmem:[%s1 + $0x1e48] sm:$0xff]
  %v1033 = vld [vmem:[%s1 + $0x1e50] sm:$0xff]
  %v1034 = vld [vmem:[%s1 + $0x1e58] sm:$0xff]
  %v1035 = vld [vmem:[%s1 + $0x1e60] sm:$0xff]
  %v1036 = vld [vmem:[%s1 + $0x1e68] sm:$0xff]
  %v1037 = vld [vmem:[%s1 + $0x1e70] sm:$0xff]
  %v1038 = vld [vmem:[%s1 + $0x1e78] sm:$0xff]
  %v1039 = vld [vmem:[%s1 + $0x1e80] sm:$0xff]
  %v1040 = vld [vmem:[%s1 + $0x1e88] sm:$0xff]
  %v1041 = vld [vmem:[%s1 + $0x1e90] sm:$0xff]
  %v1042 = vld [vmem:[%s1 + $0x1e98] sm:$0xff]
  %v1043 = vld [vmem:[%s1 + $0x1ea0] sm:$0xff]
  %v1044 = vld [vmem:[%s1 + $0x1ea8] sm:$0xff]
  %v1045 = vld [vmem:[%s1 + $0x1eb0] sm:$0xff]
  %v1046 = vld [vmem:[%s1 + $0x1eb8] sm:$0xff]
  %v1047 = vld [vmem:[%s1 + $0x1ec0] sm:$0xff]
  %v1048 = vld [vmem:[%s1 + $0x1ec8] sm:$0xff]
  %v1049 = vld [vmem:[%s1 + $0x1ed0] sm:$0xff]
  %v1050 = vld [vmem:[%s1 + $0x1ed8] sm:$0xff]
  %v1051 = vld [vmem:[%s1 + $0x1ee0] sm:$0xff]
  %v1052 = vld [vmem:[%s1 + $0x1ee8] sm:$0xff]
  %v1053 = vld [vmem:[%s1 + $0x1ef0] sm:$0xff]
  %v1054 = vld [vmem:[%s1 + $0x1ef8] sm:$0xff]
  %v1055 = vld [vmem:[%s1 + $0x1f00] sm:$0xff]
  %v1056 = vld [vmem:[%s1 + $0x1f08] sm:$0xff]
  %v1057 = vld [vmem:[%s1 + $0x1f10] sm:$0xff]
  %v1058 = vld [vmem:[%s1 + $0x1f18] sm:$0xff]
  %v1059 = vld [vmem:[%s1 + $0x1f20] sm:$0xff]
  %v1060 = vld [vmem:[%s1 + $0x1f28] sm:$0xff]
  %v1061 = vld [vmem:[%s1 + $0x1f30] sm:$0xff]
  %v1062 = vld [vmem:[%s1 + $0x1f38] sm:$0xff]
  %v1063 = vld [vmem:[%s1 + $0x1f40] sm:$0xff]
  %v1064 = vld [vmem:[%s1 + $0x1f48] sm:$0xff]
  %v1065 = vld [vmem:[%s1 + $0x1f50] sm:$0xff]
  %v1066 = vld [vmem:[%s1 + $0x1f58] sm:$0xff]
  %v1067 = vld [vmem:[%s1 + $0x1f60] sm:$0xff]
  %v1068 = vld [vmem:[%s1 + $0x1f68] sm:$0xff]
  %v1069 = vld [vmem:[%s1 + $0x1f70] sm:$0xff]
  %v1070 = vld [vmem:[%s1 + $0x1f78] sm:$0xff]
  %v1071 = vld [vmem:[%s1 + $0x1f80] sm:$0xff]
  %v1072 = vld [vmem:[%s1 + $0x1f88] sm:$0xff]
  %v1073 = vld [vmem:[%s1 + $0x1f90] sm:$0xff]
  %v1074 = vld [vmem:[%s1 + $0x1f98] sm:$0xff]
  %v1075 = vld [vmem:[%s1 + $0x1fa0] sm:$0xff]
  %v1076 = vld [vmem:[%s1 + $0x1fa8] sm:$0xff]
  %v1077 = vld [vmem:[%s1 + $0x1fb0] sm:$0xff]
  %v1078 = vld [vmem:[%s1 + $0x1fb8] sm:$0xff]
  %v1079 = vld [vmem:[%s1 + $0x1fc0] sm:$0xff]
  %v1080 = vld [vmem:[%s1 + $0x1fc8] sm:$0xff]
  %v1081 = vld [vmem:[%s1 + $0x1fd0] sm:$0xff]
  %v1082 = vld [vmem:[%s1 + $0x1fd8] sm:$0xff]
  %v1083 = vld [vmem:[%s1 + $0x1fe0] sm:$0xff]
  %v1084 = vld [vmem:[%s1 + $0x1fe8] sm:$0xff]
  %v1085 = vld [vmem:[%s1 + $0x1ff0] sm:$0xff]
  %v1086 = vld [vmem:[%s1 + $0x1ff8] sm:$0xff]
  %v1087 = vld [vmem:[%s1 + $0x2000] sm:$0xff]
  %v1088 = vld [vmem:[%s1 + $0x2008] sm:$0xff]
  %v1089 = vld [vmem:[%s1 + $0x2010] sm:$0xff]
  %v1090 = vld [vmem:[%s1 + $0x2018] sm:$0xff]
  %v1091 = vld [vmem:[%s1 + $0x2020] sm:$0xff]
  %v1092 = vld [vmem:[%s1 + $0x2028] sm:$0xff]
  %v1093 = vld [vmem:[%s1 + $0x2030] sm:$0xff]
  %v1094 = vld [vmem:[%s1 + $0x2038] sm:$0xff]
  %v1095 = vld [vmem:[%s1 + $0x2040] sm:$0xff]
  %v1096 = vld [vmem:[%s1 + $0x2048] sm:$0xff]
  %v1097 = vld [vmem:[%s1 + $0x2050] sm:$0xff]
  %v1098 = vld [vmem:[%s1 + $0x2058] sm:$0xff]
  %v1099 = vld [vmem:[%s1 + $0x2060] sm:$0xff]
  %v1100 = vld [vmem:[%s1 + $0x2068] sm:$0xff]
  %v1101 = vld [vmem:[%s1 + $0x2070] sm:$0xff]
  %v1102 = vld [vmem:[%s1 + $0x2078] sm:$0xff]
  %v1103 = vld [vmem:[%s1 + $0x2080] sm:$0xff]
  %v1104 = vld [vmem:[%s1 + $0x2088] sm:$0xff]
  %v1105 = vld [vmem:[%s1 + $0x2090] sm:$0xff]
  %v1106 = vld [vmem:[%s1 + $0x2098] sm:$0xff]
  %v1107 = vld [vmem:[%s1 + $0x20a0] sm:$0xff]
  %v1108 = vld [vmem:[%s1 + $0x20a8] sm:$0xff]
  %v1109 = vld [vmem:[%s1 + $0x20b0] sm:$0xff]
  %v1110 = vld [vmem:[%s1 + $0x20b8] sm:$0xff]
  %v1111 = vld [vmem:[%s1 + $0x20c0] sm:$0xff]
  %v1112 = vld [vmem:[%s1 + $0x20c8] sm:$0xff]
  %v1113 = vld [vmem:[%s1 + $0x20d0] sm:$0xff]
  %v1114 = vld [vmem:[%s1 + $0x20d8] sm:$0xff]
  %v1115 = vld [vmem:[%s1 + $0x20e0] sm:$0xff]
  %v1116 = vld [vmem:[%s1 + $0x20e8] sm:$0xff]
  %v1117 = vld [vmem:[%s1 + $0x20f0] sm:$0xff]
  %v1118 = vld [vmem:[%s1 + $0x20f8] sm:$0xff]
  %v1119 = vld [vmem:[%s1 + $0x2100] sm:$0xff]
  %v1120 = vld [vmem:[%s1 + $0x2108] sm:$0xff]
  %v1121 = vld [vmem:[%s1 + $0x2110] sm:$0xff]
  %v1122 = vld [vmem:[%s1 + $0x2118] sm:$0xff]
  %v1123 = vld [vmem:[%s1 + $0x2120] sm:$0xff]
  %v1124 = vld [vmem:[%s1 + $0x2128] sm:$0xff]
  %v1125 = vld [vmem:[%s1 + $0x2130] sm:$0xff]
  %v1126 = vld [vmem:[%s1 + $0x2138] sm:$0xff]
  %v1127 = vld [vmem:[%s1 + $0x2140] sm:$0xff]
  %v1128 = vld [vmem:[%s1 + $0x2148] sm:$0xff]
  %v1129 = vld [vmem:[%s1 + $0x2150] sm:$0xff]
  %v1130 = vld [vmem:[%s1 + $0x2158] sm:$0xff]
  %v1131 = vld [vmem:[%s1 + $0x2160] sm:$0xff]
  %v1132 = vld [vmem:[%s1 + $0x2168] sm:$0xff]
  %v1133 = vld [vmem:[%s1 + $0x2170] sm:$0xff]
  %v1134 = vld [vmem:[%s1 + $0x2178] sm:$0xff]
  %v1135 = vld [vmem:[%s1 + $0x2180] sm:$0xff]
  %v1136 = vld [vmem:[%s1 + $0x2188] sm:$0xff]
  %v1137 = vld [vmem:[%s1 + $0x2190] sm:$0xff]
  %v1138 = vld [vmem:[%s1 + $0x2198] sm:$0xff]
  %v1139 = vld [vmem:[%s1 + $0x21a0] sm:$0xff]
  %v1140 = vld [vmem:[%s1 + $0x21a8] sm:$0xff]
  %v1141 = vld [vmem:[%s1 + $0x21b0] sm:$0xff]
  %v1142 = vld [vmem:[%s1 + $0x21b8] sm:$0xff]
  %v1143 = vld [vmem:[%s1 + $0x21c0] sm:$0xff]
  %v1144 = vld [vmem:[%s1 + $0x21c8] sm:$0xff]
  %v1145 = vld [vmem:[%s1 + $0x21d0] sm:$0xff]
  %v1146 = vld [vmem:[%s1 + $0x21d8] sm:$0xff]
  %v1147 = vld [vmem:[%s1 + $0x21e0] sm:$0xff]
  %v1148 = vld [vmem:[%s1 + $0x21e8] sm:$0xff]
  %v1149 = vld [vmem:[%s1 + $0x21f0] sm:$0xff]
  %v1150 = vld [vmem:[%s1 + $0x21f8] sm:$0xff]
  %v1151 = vld [vmem:[%s2] sm:$0xff]
  %v1153 = vlaneseq
  %v1154 = vshrl.u32 %v1153, 7
  %v1155 = vsub.s32 0, %v1154
  %v1156 = vrot.slane %v1151, %v1155
  %v1157 = vlaneseq
  %v1158 = vshrl.u32 %v1157, 7
  %v1159 = vsub.s32 1, %v1158
  %v1160 = vrot.slane %v1151, %v1159
  %v1161 = vlaneseq
  %v1162 = vshrl.u32 %v1161, 7
  %v1163 = vsub.s32 2, %v1162
  %v1164 = vrot.slane %v1151, %v1163
  %v1165 = vlaneseq
  %v1166 = vshrl.u32 %v1165, 7
  %v1167 = vsub.s32 3, %v1166
  %v1168 = vrot.slane %v1151, %v1167
  %v1169 = vlaneseq
  %v1170 = vshrl.u32 %v1169, 7
  %v1171 = vsub.s32 4, %v1170
  %v1172 = vrot.slane %v1151, %v1171
  %v1173 = vlaneseq
  %v1174 = vshrl.u32 %v1173, 7
  %v1175 = vsub.s32 5, %v1174
  %v1176 = vrot.slane %v1151, %v1175
  %v1177 = vlaneseq
  %v1178 = vshrl.u32 %v1177, 7
  %v1179 = vsub.s32 6, %v1178
  %v1180 = vrot.slane %v1151, %v1179
  %v1181 = vlaneseq
  %v1182 = vshrl.u32 %v1181, 7
  %v1183 = vsub.s32 7, %v1182
  %v1184 = vrot.slane %v1151, %v1183
  %v2281 = vunpack.c.l.b16 %v63
  %v2282 = vunpack.c.h.b16 %v63
  %v2283 = vunpack.c.l.b16 %v64
  %v2284 = vunpack.c.h.b16 %v64
  %v2285 = vunpack.c.l.b16 %v65
  %v2286 = vunpack.c.h.b16 %v65
  %v2287 = vunpack.c.l.b16 %v66
  %v2288 = vunpack.c.h.b16 %v66
  %v2289 = vunpack.c.l.b16 %v67
  %v2290 = vunpack.c.h.b16 %v67
  %v2291 = vunpack.c.l.b16 %v68
  %v2292 = vunpack.c.h.b16 %v68
  %v2293 = vunpack.c.l.b16 %v69
  %v2294 = vunpack.c.h.b16 %v69
  %v2295 = vunpack.c.l.b16 %v70
  %v2296 = vunpack.c.h.b16 %v70
  %v2297 = vunpack.c.l.b16 %v71
  %v2298 = vunpack.c.h.b16 %v71
  %v2299 = vunpack.c.l.b16 %v72
  %v2300 = vunpack.c.h.b16 %v72
  %v2301 = vunpack.c.l.b16 %v73
  %v2302 = vunpack.c.h.b16 %v73
  %v2303 = vunpack.c.l.b16 %v74
  %v2304 = vunpack.c.h.b16 %v74
  %v2305 = vunpack.c.l.b16 %v75
  %v2306 = vunpack.c.h.b16 %v75
  %v2307 = vunpack.c.l.b16 %v76
  %v2308 = vunpack.c.h.b16 %v76
  %v2309 = vunpack.c.l.b16 %v77
  %v2310 = vunpack.c.h.b16 %v77
  %v2311 = vunpack.c.l.b16 %v78
  %v2312 = vunpack.c.h.b16 %v78
  %v2313 = vunpack.c.l.b16 %v79
  %v2314 = vunpack.c.h.b16 %v79
  %v2315 = vunpack.c.l.b16 %v80
  %v2316 = vunpack.c.h.b16 %v80
  %v2317 = vunpack.c.l.b16 %v81
  %v2318 = vunpack.c.h.b16 %v81
  %v2319 = vunpack.c.l.b16 %v82
  %v2320 = vunpack.c.h.b16 %v82
  %v2321 = vunpack.c.l.b16 %v83
  %v2322 = vunpack.c.h.b16 %v83
  %v2323 = vunpack.c.l.b16 %v84
  %v2324 = vunpack.c.h.b16 %v84
  %v2325 = vunpack.c.l.b16 %v85
  %v2326 = vunpack.c.h.b16 %v85
  %v2327 = vunpack.c.l.b16 %v86
  %v2328 = vunpack.c.h.b16 %v86
  %v2329 = vunpack.c.l.b16 %v87
  %v2330 = vunpack.c.h.b16 %v87
  %v2331 = vunpack.c.l.b16 %v88
  %v2332 = vunpack.c.h.b16 %v88
  %v2333 = vunpack.c.l.b16 %v89
  %v2334 = vunpack.c.h.b16 %v89
  %v2335 = vunpack.c.l.b16 %v90
  %v2336 = vunpack.c.h.b16 %v90
  %v2337 = vunpack.c.l.b16 %v91
  %v2338 = vunpack.c.h.b16 %v91
  %v2339 = vunpack.c.l.b16 %v92
  %v2340 = vunpack.c.h.b16 %v92
  %v2341 = vunpack.c.l.b16 %v93
  %v2342 = vunpack.c.h.b16 %v93
  %v2343 = vunpack.c.l.b16 %v94
  %v2344 = vunpack.c.h.b16 %v94
  %v2345 = vunpack.c.l.b16 %v95
  %v2346 = vunpack.c.h.b16 %v95
  %v2347 = vunpack.c.l.b16 %v96
  %v2348 = vunpack.c.h.b16 %v96
  %v2349 = vunpack.c.l.b16 %v97
  %v2350 = vunpack.c.h.b16 %v97
  %v2351 = vunpack.c.l.b16 %v98
  %v2352 = vunpack.c.h.b16 %v98
  %v2353 = vunpack.c.l.b16 %v99
  %v2354 = vunpack.c.h.b16 %v99
  %v2355 = vunpack.c.l.b16 %v100
  %v2356 = vunpack.c.h.b16 %v100
  %v2357 = vunpack.c.l.b16 %v101
  %v2358 = vunpack.c.h.b16 %v101
  %v2359 = vunpack.c.l.b16 %v102
  %v2360 = vunpack.c.h.b16 %v102
  %v2361 = vunpack.c.l.b16 %v103
  %v2362 = vunpack.c.h.b16 %v103
  %v2363 = vunpack.c.l.b16 %v104
  %v2364 = vunpack.c.h.b16 %v104
  %v2365 = vunpack.c.l.b16 %v105
  %v2366 = vunpack.c.h.b16 %v105
  %v2367 = vunpack.c.l.b16 %v106
  %v2368 = vunpack.c.h.b16 %v106
  %v2369 = vunpack.c.l.b16 %v107
  %v2370 = vunpack.c.h.b16 %v107
  %v2371 = vunpack.c.l.b16 %v108
  %v2372 = vunpack.c.h.b16 %v108
  %v2373 = vunpack.c.l.b16 %v109
  %v2374 = vunpack.c.h.b16 %v109
  %v2375 = vunpack.c.l.b16 %v110
  %v2376 = vunpack.c.h.b16 %v110
  %v2377 = vunpack.c.l.b16 %v111
  %v2378 = vunpack.c.h.b16 %v111
  %v2379 = vunpack.c.l.b16 %v112
  %v2380 = vunpack.c.h.b16 %v112
  %v2381 = vunpack.c.l.b16 %v113
  %v2382 = vunpack.c.h.b16 %v113
  %v2383 = vunpack.c.l.b16 %v114
  %v2384 = vunpack.c.h.b16 %v114
  %v2385 = vunpack.c.l.b16 %v115
  %v2386 = vunpack.c.h.b16 %v115
  %v2387 = vunpack.c.l.b16 %v116
  %v2388 = vunpack.c.h.b16 %v116
  %v2389 = vunpack.c.l.b16 %v117
  %v2390 = vunpack.c.h.b16 %v117
  %v2391 = vunpack.c.l.b16 %v118
  %v2392 = vunpack.c.h.b16 %v118
  %v2393 = vunpack.c.l.b16 %v119
  %v2394 = vunpack.c.h.b16 %v119
  %v2395 = vunpack.c.l.b16 %v120
  %v2396 = vunpack.c.h.b16 %v120
  %v2397 = vunpack.c.l.b16 %v121
  %v2398 = vunpack.c.h.b16 %v121
  %v2399 = vunpack.c.l.b16 %v122
  %v2400 = vunpack.c.h.b16 %v122
  %v2401 = vunpack.c.l.b16 %v123
  %v2402 = vunpack.c.h.b16 %v123
  %v2403 = vunpack.c.l.b16 %v124
  %v2404 = vunpack.c.h.b16 %v124
  %v2405 = vunpack.c.l.b16 %v125
  %v2406 = vunpack.c.h.b16 %v125
  %v2407 = vunpack.c.l.b16 %v126
  %v2408 = vunpack.c.h.b16 %v126
  %v2409 = vunpack.c.l.b16 %v127
  %v2410 = vunpack.c.h.b16 %v127
  %v2411 = vunpack.c.l.b16 %v128
  %v2412 = vunpack.c.h.b16 %v128
  %v2413 = vunpack.c.l.b16 %v129
  %v2414 = vunpack.c.h.b16 %v129
  %v2415 = vunpack.c.l.b16 %v130
  %v2416 = vunpack.c.h.b16 %v130
  %v2417 = vunpack.c.l.b16 %v131
  %v2418 = vunpack.c.h.b16 %v131
  %v2419 = vunpack.c.l.b16 %v132
  %v2420 = vunpack.c.h.b16 %v132
  %v2421 = vunpack.c.l.b16 %v133
  %v2422 = vunpack.c.h.b16 %v133
  %v2423 = vunpack.c.l.b16 %v134
  %v2424 = vunpack.c.h.b16 %v134
  %v2425 = vunpack.c.l.b16 %v135
  %v2426 = vunpack.c.h.b16 %v135
  %v2427 = vunpack.c.l.b16 %v136
  %v2428 = vunpack.c.h.b16 %v136
  %v2429 = vunpack.c.l.b16 %v137
  %v2430 = vunpack.c.h.b16 %v137
  %v2431 = vunpack.c.l.b16 %v138
  %v2432 = vunpack.c.h.b16 %v138
  %v2433 = vunpack.c.l.b16 %v139
  %v2434 = vunpack.c.h.b16 %v139
  %v2435 = vunpack.c.l.b16 %v140
  %v2436 = vunpack.c.h.b16 %v140
  %v2437 = vunpack.c.l.b16 %v141
  %v2438 = vunpack.c.h.b16 %v141
  %v2439 = vunpack.c.l.b16 %v142
  %v2440 = vunpack.c.h.b16 %v142
  %v2441 = vunpack.c.l.b16 %v143
  %v2442 = vunpack.c.h.b16 %v143
  %v2443 = vunpack.c.l.b16 %v144
  %v2444 = vunpack.c.h.b16 %v144
  %v2445 = vunpack.c.l.b16 %v145
  %v2446 = vunpack.c.h.b16 %v145
  %v2447 = vunpack.c.l.b16 %v146
  %v2448 = vunpack.c.h.b16 %v146
  %v2449 = vunpack.c.l.b16 %v147
  %v2450 = vunpack.c.h.b16 %v147
  %v2451 = vunpack.c.l.b16 %v148
  %v2452 = vunpack.c.h.b16 %v148
  %v2453 = vunpack.c.l.b16 %v149
  %v2454 = vunpack.c.h.b16 %v149
  %v2455 = vunpack.c.l.b16 %v150
  %v2456 = vunpack.c.h.b16 %v150
  %v2457 = vunpack.c.l.b16 %v151
  %v2458 = vunpack.c.h.b16 %v151
  %v2459 = vunpack.c.l.b16 %v152
  %v2460 = vunpack.c.h.b16 %v152
  %v2461 = vunpack.c.l.b16 %v153
  %v2462 = vunpack.c.h.b16 %v153
  %v2463 = vunpack.c.l.b16 %v154
  %v2464 = vunpack.c.h.b16 %v154
  %v2465 = vunpack.c.l.b16 %v155
  %v2466 = vunpack.c.h.b16 %v155
  %v2467 = vunpack.c.l.b16 %v156
  %v2468 = vunpack.c.h.b16 %v156
  %v2469 = vunpack.c.l.b16 %v157
  %v2470 = vunpack.c.h.b16 %v157
  %v2471 = vunpack.c.l.b16 %v158
  %v2472 = vunpack.c.h.b16 %v158
  %v2473 = vunpack.c.l.b16 %v159
  %v2474 = vunpack.c.h.b16 %v159
  %v2475 = vunpack.c.l.b16 %v160
  %v2476 = vunpack.c.h.b16 %v160
  %v2477 = vunpack.c.l.b16 %v161
  %v2478 = vunpack.c.h.b16 %v161
  %v2479 = vunpack.c.l.b16 %v162
  %v2480 = vunpack.c.h.b16 %v162
  %v2481 = vunpack.c.l.b16 %v163
  %v2482 = vunpack.c.h.b16 %v163
  %v2483 = vunpack.c.l.b16 %v164
  %v2484 = vunpack.c.h.b16 %v164
  %v2485 = vunpack.c.l.b16 %v165
  %v2486 = vunpack.c.h.b16 %v165
  %v2487 = vunpack.c.l.b16 %v166
  %v2488 = vunpack.c.h.b16 %v166
  %v2489 = vunpack.c.l.b16 %v167
  %v2490 = vunpack.c.h.b16 %v167
  %v2491 = vunpack.c.l.b16 %v168
  %v2492 = vunpack.c.h.b16 %v168
  %v2493 = vunpack.c.l.b16 %v169
  %v2494 = vunpack.c.h.b16 %v169
  %v2495 = vunpack.c.l.b16 %v170
  %v2496 = vunpack.c.h.b16 %v170
  %v2497 = vunpack.c.l.b16 %v171
  %v2498 = vunpack.c.h.b16 %v171
  %v2499 = vunpack.c.l.b16 %v172
  %v2500 = vunpack.c.h.b16 %v172
  %v2501 = vunpack.c.l.b16 %v173
  %v2502 = vunpack.c.h.b16 %v173
  %v2503 = vunpack.c.l.b16 %v174
  %v2504 = vunpack.c.h.b16 %v174
  %v2505 = vunpack.c.l.b16 %v175
  %v2506 = vunpack.c.h.b16 %v175
  %v2507 = vunpack.c.l.b16 %v176
  %v2508 = vunpack.c.h.b16 %v176
  %v2509 = vunpack.c.l.b16 %v177
  %v2510 = vunpack.c.h.b16 %v177
  %v2511 = vunpack.c.l.b16 %v178
  %v2512 = vunpack.c.h.b16 %v178
  %v2513 = vunpack.c.l.b16 %v179
  %v2514 = vunpack.c.h.b16 %v179
  %v2515 = vunpack.c.l.b16 %v180
  %v2516 = vunpack.c.h.b16 %v180
  %v2517 = vunpack.c.l.b16 %v181
  %v2518 = vunpack.c.h.b16 %v181
  %v2519 = vunpack.c.l.b16 %v182
  %v2520 = vunpack.c.h.b16 %v182
  %v2521 = vunpack.c.l.b16 %v183
  %v2522 = vunpack.c.h.b16 %v183
  %v2523 = vunpack.c.l.b16 %v184
  %v2524 = vunpack.c.h.b16 %v184
  %v2525 = vunpack.c.l.b16 %v185
  %v2526 = vunpack.c.h.b16 %v185
  %v2527 = vunpack.c.l.b16 %v186
  %v2528 = vunpack.c.h.b16 %v186
  %v2529 = vunpack.c.l.b16 %v187
  %v2530 = vunpack.c.h.b16 %v187
  %v2531 = vunpack.c.l.b16 %v188
  %v2532 = vunpack.c.h.b16 %v188
  %v2533 = vunpack.c.l.b16 %v189
  %v2534 = vunpack.c.h.b16 %v189
  %v2535 = vunpack.c.l.b16 %v190
  %v2536 = vunpack.c.h.b16 %v190
  %v2537 = vunpack.c.l.b16 %v191
  %v2538 = vunpack.c.h.b16 %v191
  %v2539 = vunpack.c.l.b16 %v192
  %v2540 = vunpack.c.h.b16 %v192
  %v2541 = vunpack.c.l.b16 %v193
  %v2542 = vunpack.c.h.b16 %v193
  %v2543 = vunpack.c.l.b16 %v194
  %v2544 = vunpack.c.h.b16 %v194
  %v2545 = vunpack.c.l.b16 %v195
  %v2546 = vunpack.c.h.b16 %v195
  %v2547 = vunpack.c.l.b16 %v196
  %v2548 = vunpack.c.h.b16 %v196
  %v2549 = vunpack.c.l.b16 %v197
  %v2550 = vunpack.c.h.b16 %v197
  %v2551 = vunpack.c.l.b16 %v198
  %v2552 = vunpack.c.h.b16 %v198
  %v2553 = vunpack.c.l.b16 %v199
  %v2554 = vunpack.c.h.b16 %v199
  %v2555 = vunpack.c.l.b16 %v200
  %v2556 = vunpack.c.h.b16 %v200
  %v2557 = vunpack.c.l.b16 %v201
  %v2558 = vunpack.c.h.b16 %v201
  %v2559 = vunpack.c.l.b16 %v202
  %v2560 = vunpack.c.h.b16 %v202
  %v2561 = vunpack.c.l.b16 %v203
  %v2562 = vunpack.c.h.b16 %v203
  %v2563 = vunpack.c.l.b16 %v204
  %v2564 = vunpack.c.h.b16 %v204
  %v2565 = vunpack.c.l.b16 %v205
  %v2566 = vunpack.c.h.b16 %v205
  %v2567 = vunpack.c.l.b16 %v206
  %v2568 = vunpack.c.h.b16 %v206
  %v2569 = vunpack.c.l.b16 %v207
  %v2570 = vunpack.c.h.b16 %v207
  %v2571 = vunpack.c.l.b16 %v208
  %v2572 = vunpack.c.h.b16 %v208
  %v2573 = vunpack.c.l.b16 %v209
  %v2574 = vunpack.c.h.b16 %v209
  %v2575 = vunpack.c.l.b16 %v210
  %v2576 = vunpack.c.h.b16 %v210
  %v2577 = vunpack.c.l.b16 %v211
  %v2578 = vunpack.c.h.b16 %v211
  %v2579 = vunpack.c.l.b16 %v212
  %v2580 = vunpack.c.h.b16 %v212
  %v2581 = vunpack.c.l.b16 %v213
  %v2582 = vunpack.c.h.b16 %v213
  %v2583 = vunpack.c.l.b16 %v214
  %v2584 = vunpack.c.h.b16 %v214
  %v2585 = vunpack.c.l.b16 %v215
  %v2586 = vunpack.c.h.b16 %v215
  %v2587 = vunpack.c.l.b16 %v216
  %v2588 = vunpack.c.h.b16 %v216
  %v2589 = vunpack.c.l.b16 %v217
  %v2590 = vunpack.c.h.b16 %v217
  %v2591 = vunpack.c.l.b16 %v218
  %v2592 = vunpack.c.h.b16 %v218
  %v2593 = vunpack.c.l.b16 %v219
  %v2594 = vunpack.c.h.b16 %v219
  %v2595 = vunpack.c.l.b16 %v220
  %v2596 = vunpack.c.h.b16 %v220
  %v2597 = vunpack.c.l.b16 %v221
  %v2598 = vunpack.c.h.b16 %v221
  %v2599 = vunpack.c.l.b16 %v222
  %v2600 = vunpack.c.h.b16 %v222
  %v2601 = vunpack.c.l.b16 %v223
  %v2602 = vunpack.c.h.b16 %v223
  %v2603 = vunpack.c.l.b16 %v224
  %v2604 = vunpack.c.h.b16 %v224
  %v2605 = vunpack.c.l.b16 %v225
  %v2606 = vunpack.c.h.b16 %v225
  %v2607 = vunpack.c.l.b16 %v226
  %v2608 = vunpack.c.h.b16 %v226
  %v2609 = vunpack.c.l.b16 %v227
  %v2610 = vunpack.c.h.b16 %v227
  %v2611 = vunpack.c.l.b16 %v228
  %v2612 = vunpack.c.h.b16 %v228
  %v2613 = vunpack.c.l.b16 %v229
  %v2614 = vunpack.c.h.b16 %v229
  %v2615 = vunpack.c.l.b16 %v230
  %v2616 = vunpack.c.h.b16 %v230
  %v2617 = vunpack.c.l.b16 %v231
  %v2618 = vunpack.c.h.b16 %v231
  %v2619 = vunpack.c.l.b16 %v232
  %v2620 = vunpack.c.h.b16 %v232
  %v2621 = vunpack.c.l.b16 %v233
  %v2622 = vunpack.c.h.b16 %v233
  %v2623 = vunpack.c.l.b16 %v234
  %v2624 = vunpack.c.h.b16 %v234
  %v2625 = vunpack.c.l.b16 %v235
  %v2626 = vunpack.c.h.b16 %v235
  %v2627 = vunpack.c.l.b16 %v236
  %v2628 = vunpack.c.h.b16 %v236
  %v2629 = vunpack.c.l.b16 %v237
  %v2630 = vunpack.c.h.b16 %v237
  %v2631 = vunpack.c.l.b16 %v238
  %v2632 = vunpack.c.h.b16 %v238
  %v2633 = vunpack.c.l.b16 %v239
  %v2634 = vunpack.c.h.b16 %v239
  %v2635 = vunpack.c.l.b16 %v240
  %v2636 = vunpack.c.h.b16 %v240
  %v2637 = vunpack.c.l.b16 %v241
  %v2638 = vunpack.c.h.b16 %v241
  %v2639 = vunpack.c.l.b16 %v242
  %v2640 = vunpack.c.h.b16 %v242
  %v2641 = vunpack.c.l.b16 %v243
  %v2642 = vunpack.c.h.b16 %v243
  %v2643 = vunpack.c.l.b16 %v244
  %v2644 = vunpack.c.h.b16 %v244
  %v2645 = vunpack.c.l.b16 %v245
  %v2646 = vunpack.c.h.b16 %v245
  %v2647 = vunpack.c.l.b16 %v246
  %v2648 = vunpack.c.h.b16 %v246
  %v2649 = vunpack.c.l.b16 %v247
  %v2650 = vunpack.c.h.b16 %v247
  %v2651 = vunpack.c.l.b16 %v248
  %v2652 = vunpack.c.h.b16 %v248
  %v2653 = vunpack.c.l.b16 %v249
  %v2654 = vunpack.c.h.b16 %v249
  %v2655 = vunpack.c.l.b16 %v250
  %v2656 = vunpack.c.h.b16 %v250
  %v2657 = vunpack.c.l.b16 %v251
  %v2658 = vunpack.c.h.b16 %v251
  %v2659 = vunpack.c.l.b16 %v252
  %v2660 = vunpack.c.h.b16 %v252
  %v2661 = vunpack.c.l.b16 %v253
  %v2662 = vunpack.c.h.b16 %v253
  %v2663 = vunpack.c.l.b16 %v254
  %v2664 = vunpack.c.h.b16 %v254
  %v2665 = vunpack.c.l.b16 %v255
  %v2666 = vunpack.c.h.b16 %v255
  %v2667 = vunpack.c.l.b16 %v256
  %v2668 = vunpack.c.h.b16 %v256
  %v2669 = vunpack.c.l.b16 %v257
  %v2670 = vunpack.c.h.b16 %v257
  %v2671 = vunpack.c.l.b16 %v258
  %v2672 = vunpack.c.h.b16 %v258
  %v2673 = vunpack.c.l.b16 %v259
  %v2674 = vunpack.c.h.b16 %v259
  %v2675 = vunpack.c.l.b16 %v260
  %v2676 = vunpack.c.h.b16 %v260
  %v2677 = vunpack.c.l.b16 %v261
  %v2678 = vunpack.c.h.b16 %v261
  %v2679 = vunpack.c.l.b16 %v262
  %v2680 = vunpack.c.h.b16 %v262
  %v2681 = vunpack.c.l.b16 %v263
  %v2682 = vunpack.c.h.b16 %v263
  %v2683 = vunpack.c.l.b16 %v264
  %v2684 = vunpack.c.h.b16 %v264
  %v2685 = vunpack.c.l.b16 %v265
  %v2686 = vunpack.c.h.b16 %v265
  %v2687 = vunpack.c.l.b16 %v266
  %v2688 = vunpack.c.h.b16 %v266
  %v2689 = vunpack.c.l.b16 %v267
  %v2690 = vunpack.c.h.b16 %v267
  %v2691 = vunpack.c.l.b16 %v268
  %v2692 = vunpack.c.h.b16 %v268
  %v2693 = vunpack.c.l.b16 %v269
  %v2694 = vunpack.c.h.b16 %v269
  %v2695 = vunpack.c.l.b16 %v270
  %v2696 = vunpack.c.h.b16 %v270
  %v2697 = vunpack.c.l.b16 %v271
  %v2698 = vunpack.c.h.b16 %v271
  %v2699 = vunpack.c.l.b16 %v272
  %v2700 = vunpack.c.h.b16 %v272
  %v2701 = vunpack.c.l.b16 %v273
  %v2702 = vunpack.c.h.b16 %v273
  %v2703 = vunpack.c.l.b16 %v274
  %v2704 = vunpack.c.h.b16 %v274
  %v2705 = vunpack.c.l.b16 %v275
  %v2706 = vunpack.c.h.b16 %v275
  %v2707 = vunpack.c.l.b16 %v276
  %v2708 = vunpack.c.h.b16 %v276
  %v2709 = vunpack.c.l.b16 %v277
  %v2710 = vunpack.c.h.b16 %v277
  %v2711 = vunpack.c.l.b16 %v278
  %v2712 = vunpack.c.h.b16 %v278
  %v2713 = vunpack.c.l.b16 %v279
  %v2714 = vunpack.c.h.b16 %v279
  %v2715 = vunpack.c.l.b16 %v280
  %v2716 = vunpack.c.h.b16 %v280
  %v2717 = vunpack.c.l.b16 %v281
  %v2718 = vunpack.c.h.b16 %v281
  %v2719 = vunpack.c.l.b16 %v282
  %v2720 = vunpack.c.h.b16 %v282
  %v2721 = vunpack.c.l.b16 %v283
  %v2722 = vunpack.c.h.b16 %v283
  %v2723 = vunpack.c.l.b16 %v284
  %v2724 = vunpack.c.h.b16 %v284
  %v2725 = vunpack.c.l.b16 %v285
  %v2726 = vunpack.c.h.b16 %v285
  %v2727 = vunpack.c.l.b16 %v286
  %v2728 = vunpack.c.h.b16 %v286
  %v2729 = vunpack.c.l.b16 %v287
  %v2730 = vunpack.c.h.b16 %v287
  %v2731 = vunpack.c.l.b16 %v288
  %v2732 = vunpack.c.h.b16 %v288
  %v2733 = vunpack.c.l.b16 %v289
  %v2734 = vunpack.c.h.b16 %v289
  %v2735 = vunpack.c.l.b16 %v290
  %v2736 = vunpack.c.h.b16 %v290
  %v2737 = vunpack.c.l.b16 %v291
  %v2738 = vunpack.c.h.b16 %v291
  %v2739 = vunpack.c.l.b16 %v292
  %v2740 = vunpack.c.h.b16 %v292
  %v2741 = vunpack.c.l.b16 %v293
  %v2742 = vunpack.c.h.b16 %v293
  %v2743 = vunpack.c.l.b16 %v294
  %v2744 = vunpack.c.h.b16 %v294
  %v2745 = vunpack.c.l.b16 %v295
  %v2746 = vunpack.c.h.b16 %v295
  %v2747 = vunpack.c.l.b16 %v296
  %v2748 = vunpack.c.h.b16 %v296
  %v2749 = vunpack.c.l.b16 %v297
  %v2750 = vunpack.c.h.b16 %v297
  %v2751 = vunpack.c.l.b16 %v298
  %v2752 = vunpack.c.h.b16 %v298
  %v2753 = vunpack.c.l.b16 %v299
  %v2754 = vunpack.c.h.b16 %v299
  %v2755 = vunpack.c.l.b16 %v300
  %v2756 = vunpack.c.h.b16 %v300
  %v2757 = vunpack.c.l.b16 %v301
  %v2758 = vunpack.c.h.b16 %v301
  %v2759 = vunpack.c.l.b16 %v302
  %v2760 = vunpack.c.h.b16 %v302
  %v2761 = vunpack.c.l.b16 %v303
  %v2762 = vunpack.c.h.b16 %v303
  %v2763 = vunpack.c.l.b16 %v304
  %v2764 = vunpack.c.h.b16 %v304
  %v2765 = vunpack.c.l.b16 %v305
  %v2766 = vunpack.c.h.b16 %v305
  %v2767 = vunpack.c.l.b16 %v306
  %v2768 = vunpack.c.h.b16 %v306
  %v2769 = vunpack.c.l.b16 %v307
  %v2770 = vunpack.c.h.b16 %v307
  %v2771 = vunpack.c.l.b16 %v308
  %v2772 = vunpack.c.h.b16 %v308
  %v2773 = vunpack.c.l.b16 %v309
  %v2774 = vunpack.c.h.b16 %v309
  %v2775 = vunpack.c.l.b16 %v310
  %v2776 = vunpack.c.h.b16 %v310
  %v2777 = vunpack.c.l.b16 %v311
  %v2778 = vunpack.c.h.b16 %v311
  %v2779 = vunpack.c.l.b16 %v312
  %v2780 = vunpack.c.h.b16 %v312
  %v2781 = vunpack.c.l.b16 %v313
  %v2782 = vunpack.c.h.b16 %v313
  %v2783 = vunpack.c.l.b16 %v314
  %v2784 = vunpack.c.h.b16 %v314
  %v2785 = vunpack.c.l.b16 %v315
  %v2786 = vunpack.c.h.b16 %v315
  %v2787 = vunpack.c.l.b16 %v316
  %v2788 = vunpack.c.h.b16 %v316
  %v2789 = vunpack.c.l.b16 %v317
  %v2790 = vunpack.c.h.b16 %v317
  %v2791 = vunpack.c.l.b16 %v318
  %v2792 = vunpack.c.h.b16 %v318
  %v2793 = vunpack.c.l.b16 %v319
  %v2794 = vunpack.c.h.b16 %v319
  %v2795 = vunpack.c.l.b16 %v320
  %v2796 = vunpack.c.h.b16 %v320
  %v2797 = vunpack.c.l.b16 %v321
  %v2798 = vunpack.c.h.b16 %v321
  %v2799 = vunpack.c.l.b16 %v322
  %v2800 = vunpack.c.h.b16 %v322
  %v2801 = vunpack.c.l.b16 %v323
  %v2802 = vunpack.c.h.b16 %v323
  %v2803 = vunpack.c.l.b16 %v324
  %v2804 = vunpack.c.h.b16 %v324
  %v2805 = vunpack.c.l.b16 %v325
  %v2806 = vunpack.c.h.b16 %v325
  %v2807 = vunpack.c.l.b16 %v326
  %v2808 = vunpack.c.h.b16 %v326
  %v2809 = vunpack.c.l.b16 %v327
  %v2810 = vunpack.c.h.b16 %v327
  %v2811 = vunpack.c.l.b16 %v328
  %v2812 = vunpack.c.h.b16 %v328
  %v2813 = vunpack.c.l.b16 %v329
  %v2814 = vunpack.c.h.b16 %v329
  %v2815 = vunpack.c.l.b16 %v330
  %v2816 = vunpack.c.h.b16 %v330
  %v2817 = vunpack.c.l.b16 %v331
  %v2818 = vunpack.c.h.b16 %v331
  %v2819 = vunpack.c.l.b16 %v332
  %v2820 = vunpack.c.h.b16 %v332
  %v2821 = vunpack.c.l.b16 %v333
  %v2822 = vunpack.c.h.b16 %v333
  %v2823 = vunpack.c.l.b16 %v334
  %v2824 = vunpack.c.h.b16 %v334
  %v2825 = vunpack.c.l.b16 %v335
  %v2826 = vunpack.c.h.b16 %v335
  %v2827 = vunpack.c.l.b16 %v336
  %v2828 = vunpack.c.h.b16 %v336
  %v2829 = vunpack.c.l.b16 %v337
  %v2830 = vunpack.c.h.b16 %v337
  %v2831 = vunpack.c.l.b16 %v338
  %v2832 = vunpack.c.h.b16 %v338
  %v2833 = vunpack.c.l.b16 %v339
  %v2834 = vunpack.c.h.b16 %v339
  %v2835 = vunpack.c.l.b16 %v340
  %v2836 = vunpack.c.h.b16 %v340
  %v2837 = vunpack.c.l.b16 %v341
  %v2838 = vunpack.c.h.b16 %v341
  %v2839 = vunpack.c.l.b16 %v342
  %v2840 = vunpack.c.h.b16 %v342
  %v2841 = vunpack.c.l.b16 %v343
  %v2842 = vunpack.c.h.b16 %v343
  %v2843 = vunpack.c.l.b16 %v344
  %v2844 = vunpack.c.h.b16 %v344
  %v2845 = vunpack.c.l.b16 %v345
  %v2846 = vunpack.c.h.b16 %v345
  %v2847 = vunpack.c.l.b16 %v346
  %v2848 = vunpack.c.h.b16 %v346
  %v2849 = vunpack.c.l.b16 %v347
  %v2850 = vunpack.c.h.b16 %v347
  %v2851 = vunpack.c.l.b16 %v348
  %v2852 = vunpack.c.h.b16 %v348
  %v2853 = vunpack.c.l.b16 %v349
  %v2854 = vunpack.c.h.b16 %v349
  %v2855 = vunpack.c.l.b16 %v350
  %v2856 = vunpack.c.h.b16 %v350
  %v2857 = vunpack.c.l.b16 %v351
  %v2858 = vunpack.c.h.b16 %v351
  %v2859 = vunpack.c.l.b16 %v352
  %v2860 = vunpack.c.h.b16 %v352
  %v2861 = vunpack.c.l.b16 %v353
  %v2862 = vunpack.c.h.b16 %v353
  %v2863 = vunpack.c.l.b16 %v354
  %v2864 = vunpack.c.h.b16 %v354
  %v2865 = vunpack.c.l.b16 %v355
  %v2866 = vunpack.c.h.b16 %v355
  %v2867 = vunpack.c.l.b16 %v356
  %v2868 = vunpack.c.h.b16 %v356
  %v2869 = vunpack.c.l.b16 %v357
  %v2870 = vunpack.c.h.b16 %v357
  %v2871 = vunpack.c.l.b16 %v358
  %v2872 = vunpack.c.h.b16 %v358
  %v2873 = vunpack.c.l.b16 %v359
  %v2874 = vunpack.c.h.b16 %v359
  %v2875 = vunpack.c.l.b16 %v360
  %v2876 = vunpack.c.h.b16 %v360
  %v2877 = vunpack.c.l.b16 %v361
  %v2878 = vunpack.c.h.b16 %v361
  %v2879 = vunpack.c.l.b16 %v362
  %v2880 = vunpack.c.h.b16 %v362
  %v2881 = vunpack.c.l.b16 %v363
  %v2882 = vunpack.c.h.b16 %v363
  %v2883 = vunpack.c.l.b16 %v364
  %v2884 = vunpack.c.h.b16 %v364
  %v2885 = vunpack.c.l.b16 %v365
  %v2886 = vunpack.c.h.b16 %v365
  %v2887 = vunpack.c.l.b16 %v366
  %v2888 = vunpack.c.h.b16 %v366
  %v2889 = vunpack.c.l.b16 %v367
  %v2890 = vunpack.c.h.b16 %v367
  %v2891 = vunpack.c.l.b16 %v368
  %v2892 = vunpack.c.h.b16 %v368
  %v2893 = vunpack.c.l.b16 %v369
  %v2894 = vunpack.c.h.b16 %v369
  %v2895 = vunpack.c.l.b16 %v370
  %v2896 = vunpack.c.h.b16 %v370
  %v2897 = vunpack.c.l.b16 %v371
  %v2898 = vunpack.c.h.b16 %v371
  %v2899 = vunpack.c.l.b16 %v372
  %v2900 = vunpack.c.h.b16 %v372
  %v2901 = vunpack.c.l.b16 %v373
  %v2902 = vunpack.c.h.b16 %v373
  %v2903 = vunpack.c.l.b16 %v374
  %v2904 = vunpack.c.h.b16 %v374
  %v2905 = vunpack.c.l.b16 %v375
  %v2906 = vunpack.c.h.b16 %v375
  %v2907 = vunpack.c.l.b16 %v376
  %v2908 = vunpack.c.h.b16 %v376
  %v2909 = vunpack.c.l.b16 %v377
  %v2910 = vunpack.c.h.b16 %v377
  %v2911 = vunpack.c.l.b16 %v378
  %v2912 = vunpack.c.h.b16 %v378
  %v2913 = vunpack.c.l.b16 %v379
  %v2914 = vunpack.c.h.b16 %v379
  %v2915 = vunpack.c.l.b16 %v380
  %v2916 = vunpack.c.h.b16 %v380
  %v2917 = vunpack.c.l.b16 %v381
  %v2918 = vunpack.c.h.b16 %v381
  %v2919 = vunpack.c.l.b16 %v382
  %v2920 = vunpack.c.h.b16 %v382
  %v2921 = vunpack.c.l.b16 %v383
  %v2922 = vunpack.c.h.b16 %v383
  %v2923 = vunpack.c.l.b16 %v384
  %v2924 = vunpack.c.h.b16 %v384
  %v2925 = vunpack.c.l.b16 %v385
  %v2926 = vunpack.c.h.b16 %v385
  %v2927 = vunpack.c.l.b16 %v386
  %v2928 = vunpack.c.h.b16 %v386
  %v2929 = vunpack.c.l.b16 %v387
  %v2930 = vunpack.c.h.b16 %v387
  %v2931 = vunpack.c.l.b16 %v388
  %v2932 = vunpack.c.h.b16 %v388
  %v2933 = vunpack.c.l.b16 %v389
  %v2934 = vunpack.c.h.b16 %v389
  %v2935 = vunpack.c.l.b16 %v390
  %v2936 = vunpack.c.h.b16 %v390
  %v2937 = vunpack.c.l.b16 %v391
  %v2938 = vunpack.c.h.b16 %v391
  %v2939 = vunpack.c.l.b16 %v392
  %v2940 = vunpack.c.h.b16 %v392
  %v2941 = vunpack.c.l.b16 %v393
  %v2942 = vunpack.c.h.b16 %v393
  %v2943 = vunpack.c.l.b16 %v394
  %v2944 = vunpack.c.h.b16 %v394
  %v2945 = vunpack.c.l.b16 %v395
  %v2946 = vunpack.c.h.b16 %v395
  %v2947 = vunpack.c.l.b16 %v396
  %v2948 = vunpack.c.h.b16 %v396
  %v2949 = vunpack.c.l.b16 %v397
  %v2950 = vunpack.c.h.b16 %v397
  %v2951 = vunpack.c.l.b16 %v398
  %v2952 = vunpack.c.h.b16 %v398
  %v2953 = vunpack.c.l.b16 %v399
  %v2954 = vunpack.c.h.b16 %v399
  %v2955 = vunpack.c.l.b16 %v400
  %v2956 = vunpack.c.h.b16 %v400
  %v2957 = vunpack.c.l.b16 %v401
  %v2958 = vunpack.c.h.b16 %v401
  %v2959 = vunpack.c.l.b16 %v402
  %v2960 = vunpack.c.h.b16 %v402
  %v2961 = vunpack.c.l.b16 %v403
  %v2962 = vunpack.c.h.b16 %v403
  %v2963 = vunpack.c.l.b16 %v404
  %v2964 = vunpack.c.h.b16 %v404
  %v2965 = vunpack.c.l.b16 %v405
  %v2966 = vunpack.c.h.b16 %v405
  %v2967 = vunpack.c.l.b16 %v406
  %v2968 = vunpack.c.h.b16 %v406
  %v2969 = vunpack.c.l.b16 %v407
  %v2970 = vunpack.c.h.b16 %v407
  %v2971 = vunpack.c.l.b16 %v408
  %v2972 = vunpack.c.h.b16 %v408
  %v2973 = vunpack.c.l.b16 %v409
  %v2974 = vunpack.c.h.b16 %v409
  %v2975 = vunpack.c.l.b16 %v410
  %v2976 = vunpack.c.h.b16 %v410
  %v2977 = vunpack.c.l.b16 %v411
  %v2978 = vunpack.c.h.b16 %v411
  %v2979 = vunpack.c.l.b16 %v412
  %v2980 = vunpack.c.h.b16 %v412
  %v2981 = vunpack.c.l.b16 %v413
  %v2982 = vunpack.c.h.b16 %v413
  %v2983 = vunpack.c.l.b16 %v414
  %v2984 = vunpack.c.h.b16 %v414
  %v2985 = vunpack.c.l.b16 %v415
  %v2986 = vunpack.c.h.b16 %v415
  %v2987 = vunpack.c.l.b16 %v416
  %v2988 = vunpack.c.h.b16 %v416
  %v2989 = vunpack.c.l.b16 %v417
  %v2990 = vunpack.c.h.b16 %v417
  %v2991 = vunpack.c.l.b16 %v418
  %v2992 = vunpack.c.h.b16 %v418
  %v2993 = vunpack.c.l.b16 %v419
  %v2994 = vunpack.c.h.b16 %v419
  %v2995 = vunpack.c.l.b16 %v420
  %v2996 = vunpack.c.h.b16 %v420
  %v2997 = vunpack.c.l.b16 %v421
  %v2998 = vunpack.c.h.b16 %v421
  %v2999 = vunpack.c.l.b16 %v422
  %v3000 = vunpack.c.h.b16 %v422
  %v3001 = vunpack.c.l.b16 %v423
  %v3002 = vunpack.c.h.b16 %v423
  %v3003 = vunpack.c.l.b16 %v424
  %v3004 = vunpack.c.h.b16 %v424
  %v3005 = vunpack.c.l.b16 %v425
  %v3006 = vunpack.c.h.b16 %v425
  %v3007 = vunpack.c.l.b16 %v426
  %v3008 = vunpack.c.h.b16 %v426
  %v3009 = vunpack.c.l.b16 %v427
  %v3010 = vunpack.c.h.b16 %v427
  %v3011 = vunpack.c.l.b16 %v428
  %v3012 = vunpack.c.h.b16 %v428
  %v3013 = vunpack.c.l.b16 %v429
  %v3014 = vunpack.c.h.b16 %v429
  %v3015 = vunpack.c.l.b16 %v430
  %v3016 = vunpack.c.h.b16 %v430
  %v3017 = vunpack.c.l.b16 %v431
  %v3018 = vunpack.c.h.b16 %v431
  %v3019 = vunpack.c.l.b16 %v432
  %v3020 = vunpack.c.h.b16 %v432
  %v3021 = vunpack.c.l.b16 %v433
  %v3022 = vunpack.c.h.b16 %v433
  %v3023 = vunpack.c.l.b16 %v434
  %v3024 = vunpack.c.h.b16 %v434
  %v3025 = vunpack.c.l.b16 %v435
  %v3026 = vunpack.c.h.b16 %v435
  %v3027 = vunpack.c.l.b16 %v436
  %v3028 = vunpack.c.h.b16 %v436
  %v3029 = vunpack.c.l.b16 %v437
  %v3030 = vunpack.c.h.b16 %v437
  %v3031 = vunpack.c.l.b16 %v438
  %v3032 = vunpack.c.h.b16 %v438
  %v3033 = vunpack.c.l.b16 %v439
  %v3034 = vunpack.c.h.b16 %v439
  %v3035 = vunpack.c.l.b16 %v440
  %v3036 = vunpack.c.h.b16 %v440
  %v3037 = vunpack.c.l.b16 %v441
  %v3038 = vunpack.c.h.b16 %v441
  %v3039 = vunpack.c.l.b16 %v442
  %v3040 = vunpack.c.h.b16 %v442
  %v3041 = vunpack.c.l.b16 %v443
  %v3042 = vunpack.c.h.b16 %v443
  %v3043 = vunpack.c.l.b16 %v444
  %v3044 = vunpack.c.h.b16 %v444
  %v3045 = vunpack.c.l.b16 %v445
  %v3046 = vunpack.c.h.b16 %v445
  %v3047 = vunpack.c.l.b16 %v446
  %v3048 = vunpack.c.h.b16 %v446
  %v3049 = vunpack.c.l.b16 %v447
  %v3050 = vunpack.c.h.b16 %v447
  %v3051 = vunpack.c.l.b16 %v448
  %v3052 = vunpack.c.h.b16 %v448
  %v3053 = vunpack.c.l.b16 %v449
  %v3054 = vunpack.c.h.b16 %v449
  %v3055 = vunpack.c.l.b16 %v450
  %v3056 = vunpack.c.h.b16 %v450
  %v3057 = vunpack.c.l.b16 %v451
  %v3058 = vunpack.c.h.b16 %v451
  %v3059 = vunpack.c.l.b16 %v452
  %v3060 = vunpack.c.h.b16 %v452
  %v3061 = vunpack.c.l.b16 %v453
  %v3062 = vunpack.c.h.b16 %v453
  %v3063 = vunpack.c.l.b16 %v454
  %v3064 = vunpack.c.h.b16 %v454
  %v3065 = vunpack.c.l.b16 %v455
  %v3066 = vunpack.c.h.b16 %v455
  %v3067 = vunpack.c.l.b16 %v456
  %v3068 = vunpack.c.h.b16 %v456
  %v3069 = vunpack.c.l.b16 %v457
  %v3070 = vunpack.c.h.b16 %v457
  %v3071 = vunpack.c.l.b16 %v458
  %v3072 = vunpack.c.h.b16 %v458
  %v3073 = vunpack.c.l.b16 %v459
  %v3074 = vunpack.c.h.b16 %v459
  %v3075 = vunpack.c.l.b16 %v460
  %v3076 = vunpack.c.h.b16 %v460
  %v3077 = vunpack.c.l.b16 %v461
  %v3078 = vunpack.c.h.b16 %v461
  %v3079 = vunpack.c.l.b16 %v462
  %v3080 = vunpack.c.h.b16 %v462
  %v3081 = vunpack.c.l.b16 %v463
  %v3082 = vunpack.c.h.b16 %v463
  %v3083 = vunpack.c.l.b16 %v464
  %v3084 = vunpack.c.h.b16 %v464
  %v3085 = vunpack.c.l.b16 %v465
  %v3086 = vunpack.c.h.b16 %v465
  %v3087 = vunpack.c.l.b16 %v466
  %v3088 = vunpack.c.h.b16 %v466
  %v3089 = vunpack.c.l.b16 %v467
  %v3090 = vunpack.c.h.b16 %v467
  %v3091 = vunpack.c.l.b16 %v468
  %v3092 = vunpack.c.h.b16 %v468
  %v3093 = vunpack.c.l.b16 %v469
  %v3094 = vunpack.c.h.b16 %v469
  %v3095 = vunpack.c.l.b16 %v470
  %v3096 = vunpack.c.h.b16 %v470
  %v3097 = vunpack.c.l.b16 %v471
  %v3098 = vunpack.c.h.b16 %v471
  %v3099 = vunpack.c.l.b16 %v472
  %v3100 = vunpack.c.h.b16 %v472
  %v3101 = vunpack.c.l.b16 %v473
  %v3102 = vunpack.c.h.b16 %v473
  %v3103 = vunpack.c.l.b16 %v474
  %v3104 = vunpack.c.h.b16 %v474
  %v3105 = vunpack.c.l.b16 %v475
  %v3106 = vunpack.c.h.b16 %v475
  %v3107 = vunpack.c.l.b16 %v476
  %v3108 = vunpack.c.h.b16 %v476
  %v3109 = vunpack.c.l.b16 %v477
  %v3110 = vunpack.c.h.b16 %v477
  %v3111 = vunpack.c.l.b16 %v478
  %v3112 = vunpack.c.h.b16 %v478
  %v3113 = vunpack.c.l.b16 %v479
  %v3114 = vunpack.c.h.b16 %v479
  %v3115 = vunpack.c.l.b16 %v480
  %v3116 = vunpack.c.h.b16 %v480
  %v3117 = vunpack.c.l.b16 %v481
  %v3118 = vunpack.c.h.b16 %v481
  %v3119 = vunpack.c.l.b16 %v482
  %v3120 = vunpack.c.h.b16 %v482
  %v3121 = vunpack.c.l.b16 %v483
  %v3122 = vunpack.c.h.b16 %v483
  %v3123 = vunpack.c.l.b16 %v484
  %v3124 = vunpack.c.h.b16 %v484
  %v3125 = vunpack.c.l.b16 %v485
  %v3126 = vunpack.c.h.b16 %v485
  %v3127 = vunpack.c.l.b16 %v486
  %v3128 = vunpack.c.h.b16 %v486
  %v3129 = vunpack.c.l.b16 %v487
  %v3130 = vunpack.c.h.b16 %v487
  %v3131 = vunpack.c.l.b16 %v488
  %v3132 = vunpack.c.h.b16 %v488
  %v3133 = vunpack.c.l.b16 %v489
  %v3134 = vunpack.c.h.b16 %v489
  %v3135 = vunpack.c.l.b16 %v490
  %v3136 = vunpack.c.h.b16 %v490
  %v3137 = vunpack.c.l.b16 %v491
  %v3138 = vunpack.c.h.b16 %v491
  %v3139 = vunpack.c.l.b16 %v492
  %v3140 = vunpack.c.h.b16 %v492
  %v3141 = vunpack.c.l.b16 %v493
  %v3142 = vunpack.c.h.b16 %v493
  %v3143 = vunpack.c.l.b16 %v494
  %v3144 = vunpack.c.h.b16 %v494
  %v3145 = vunpack.c.l.b16 %v495
  %v3146 = vunpack.c.h.b16 %v495
  %v3147 = vunpack.c.l.b16 %v496
  %v3148 = vunpack.c.h.b16 %v496
  %v3149 = vunpack.c.l.b16 %v497
  %v3150 = vunpack.c.h.b16 %v497
  %v3151 = vunpack.c.l.b16 %v498
  %v3152 = vunpack.c.h.b16 %v498
  %v3153 = vunpack.c.l.b16 %v499
  %v3154 = vunpack.c.h.b16 %v499
  %v3155 = vunpack.c.l.b16 %v500
  %v3156 = vunpack.c.h.b16 %v500
  %v3157 = vunpack.c.l.b16 %v501
  %v3158 = vunpack.c.h.b16 %v501
  %v3159 = vunpack.c.l.b16 %v502
  %v3160 = vunpack.c.h.b16 %v502
  %v3161 = vunpack.c.l.b16 %v503
  %v3162 = vunpack.c.h.b16 %v503
  %v3163 = vunpack.c.l.b16 %v504
  %v3164 = vunpack.c.h.b16 %v504
  %v3165 = vunpack.c.l.b16 %v505
  %v3166 = vunpack.c.h.b16 %v505
  %v3167 = vunpack.c.l.b16 %v506
  %v3168 = vunpack.c.h.b16 %v506
  %v3169 = vunpack.c.l.b16 %v507
  %v3170 = vunpack.c.h.b16 %v507
  %v3171 = vunpack.c.l.b16 %v508
  %v3172 = vunpack.c.h.b16 %v508
  %v3173 = vunpack.c.l.b16 %v509
  %v3174 = vunpack.c.h.b16 %v509
  %v3175 = vunpack.c.l.b16 %v510
  %v3176 = vunpack.c.h.b16 %v510
  %v3177 = vunpack.c.l.b16 %v511
  %v3178 = vunpack.c.h.b16 %v511
  %v3179 = vunpack.c.l.b16 %v512
  %v3180 = vunpack.c.h.b16 %v512
  %v3181 = vunpack.c.l.b16 %v513
  %v3182 = vunpack.c.h.b16 %v513
  %v3183 = vunpack.c.l.b16 %v514
  %v3184 = vunpack.c.h.b16 %v514
  %v3185 = vunpack.c.l.b16 %v515
  %v3186 = vunpack.c.h.b16 %v515
  %v3187 = vunpack.c.l.b16 %v516
  %v3188 = vunpack.c.h.b16 %v516
  %v3189 = vunpack.c.l.b16 %v517
  %v3190 = vunpack.c.h.b16 %v517
  %v3191 = vunpack.c.l.b16 %v518
  %v3192 = vunpack.c.h.b16 %v518
  %v3193 = vunpack.c.l.b16 %v519
  %v3194 = vunpack.c.h.b16 %v519
  %v3195 = vunpack.c.l.b16 %v520
  %v3196 = vunpack.c.h.b16 %v520
  %v3197 = vunpack.c.l.b16 %v521
  %v3198 = vunpack.c.h.b16 %v521
  %v3199 = vunpack.c.l.b16 %v522
  %v3200 = vunpack.c.h.b16 %v522
  %v3201 = vunpack.c.l.b16 %v523
  %v3202 = vunpack.c.h.b16 %v523
  %v3203 = vunpack.c.l.b16 %v524
  %v3204 = vunpack.c.h.b16 %v524
  %v3205 = vunpack.c.l.b16 %v525
  %v3206 = vunpack.c.h.b16 %v525
  %v3207 = vunpack.c.l.b16 %v526
  %v3208 = vunpack.c.h.b16 %v526
  %v3209 = vunpack.c.l.b16 %v527
  %v3210 = vunpack.c.h.b16 %v527
  %v3211 = vunpack.c.l.b16 %v528
  %v3212 = vunpack.c.h.b16 %v528
  %v3213 = vunpack.c.l.b16 %v529
  %v3214 = vunpack.c.h.b16 %v529
  %v3215 = vunpack.c.l.b16 %v530
  %v3216 = vunpack.c.h.b16 %v530
  %v3217 = vunpack.c.l.b16 %v531
  %v3218 = vunpack.c.h.b16 %v531
  %v3219 = vunpack.c.l.b16 %v532
  %v3220 = vunpack.c.h.b16 %v532
  %v3221 = vunpack.c.l.b16 %v533
  %v3222 = vunpack.c.h.b16 %v533
  %v3223 = vunpack.c.l.b16 %v534
  %v3224 = vunpack.c.h.b16 %v534
  %v3225 = vunpack.c.l.b16 %v535
  %v3226 = vunpack.c.h.b16 %v535
  %v3227 = vunpack.c.l.b16 %v536
  %v3228 = vunpack.c.h.b16 %v536
  %v3229 = vunpack.c.l.b16 %v537
  %v3230 = vunpack.c.h.b16 %v537
  %v3231 = vunpack.c.l.b16 %v538
  %v3232 = vunpack.c.h.b16 %v538
  %v3233 = vunpack.c.l.b16 %v539
  %v3234 = vunpack.c.h.b16 %v539
  %v3235 = vunpack.c.l.b16 %v540
  %v3236 = vunpack.c.h.b16 %v540
  %v3237 = vunpack.c.l.b16 %v541
  %v3238 = vunpack.c.h.b16 %v541
  %v3239 = vunpack.c.l.b16 %v542
  %v3240 = vunpack.c.h.b16 %v542
  %v3241 = vunpack.c.l.b16 %v543
  %v3242 = vunpack.c.h.b16 %v543
  %v3243 = vunpack.c.l.b16 %v544
  %v3244 = vunpack.c.h.b16 %v544
  %v3245 = vunpack.c.l.b16 %v545
  %v3246 = vunpack.c.h.b16 %v545
  %v3247 = vunpack.c.l.b16 %v546
  %v3248 = vunpack.c.h.b16 %v546
  %v3249 = vunpack.c.l.b16 %v547
  %v3250 = vunpack.c.h.b16 %v547
  %v3251 = vunpack.c.l.b16 %v548
  %v3252 = vunpack.c.h.b16 %v548
  %v3253 = vunpack.c.l.b16 %v549
  %v3254 = vunpack.c.h.b16 %v549
  %v3255 = vunpack.c.l.b16 %v550
  %v3256 = vunpack.c.h.b16 %v550
  %v3257 = vunpack.c.l.b16 %v551
  %v3258 = vunpack.c.h.b16 %v551
  %v3259 = vunpack.c.l.b16 %v552
  %v3260 = vunpack.c.h.b16 %v552
  %v3261 = vunpack.c.l.b16 %v553
  %v3262 = vunpack.c.h.b16 %v553
  %v3263 = vunpack.c.l.b16 %v554
  %v3264 = vunpack.c.h.b16 %v554
  %v3265 = vunpack.c.l.b16 %v555
  %v3266 = vunpack.c.h.b16 %v555
  %v3267 = vunpack.c.l.b16 %v556
  %v3268 = vunpack.c.h.b16 %v556
  %v3269 = vunpack.c.l.b16 %v557
  %v3270 = vunpack.c.h.b16 %v557
  %v3271 = vunpack.c.l.b16 %v558
  %v3272 = vunpack.c.h.b16 %v558
  %v3273 = vunpack.c.l.b16 %v559
  %v3274 = vunpack.c.h.b16 %v559
  %v3275 = vunpack.c.l.b16 %v560
  %v3276 = vunpack.c.h.b16 %v560
  %v3277 = vunpack.c.l.b16 %v561
  %v3278 = vunpack.c.h.b16 %v561
  %v3279 = vunpack.c.l.b16 %v562
  %v3280 = vunpack.c.h.b16 %v562
  %v3281 = vunpack.c.l.b16 %v563
  %v3282 = vunpack.c.h.b16 %v563
  %v3283 = vunpack.c.l.b16 %v564
  %v3284 = vunpack.c.h.b16 %v564
  %v3285 = vunpack.c.l.b16 %v565
  %v3286 = vunpack.c.h.b16 %v565
  %v3287 = vunpack.c.l.b16 %v566
  %v3288 = vunpack.c.h.b16 %v566
  %v3289 = vunpack.c.l.b16 %v567
  %v3290 = vunpack.c.h.b16 %v567
  %v3291 = vunpack.c.l.b16 %v568
  %v3292 = vunpack.c.h.b16 %v568
  %v3293 = vunpack.c.l.b16 %v569
  %v3294 = vunpack.c.h.b16 %v569
  %v3295 = vunpack.c.l.b16 %v570
  %v3296 = vunpack.c.h.b16 %v570
  %v3297 = vunpack.c.l.b16 %v571
  %v3298 = vunpack.c.h.b16 %v571
  %v3299 = vunpack.c.l.b16 %v572
  %v3300 = vunpack.c.h.b16 %v572
  %v3301 = vunpack.c.l.b16 %v573
  %v3302 = vunpack.c.h.b16 %v573
  %v3303 = vunpack.c.l.b16 %v574
  %v3304 = vunpack.c.h.b16 %v574
  %v3305 = vunpack.c.l.b16 %v575
  %v3306 = vunpack.c.h.b16 %v575
  %v3307 = vunpack.c.l.b16 %v576
  %v3308 = vunpack.c.h.b16 %v576
  %v3309 = vunpack.c.l.b16 %v577
  %v3310 = vunpack.c.h.b16 %v577
  %v3311 = vunpack.c.l.b16 %v578
  %v3312 = vunpack.c.h.b16 %v578
  %v3313 = vunpack.c.l.b16 %v579
  %v3314 = vunpack.c.h.b16 %v579
  %v3315 = vunpack.c.l.b16 %v580
  %v3316 = vunpack.c.h.b16 %v580
  %v3317 = vunpack.c.l.b16 %v581
  %v3318 = vunpack.c.h.b16 %v581
  %v3319 = vunpack.c.l.b16 %v582
  %v3320 = vunpack.c.h.b16 %v582
  %v3321 = vunpack.c.l.b16 %v583
  %v3322 = vunpack.c.h.b16 %v583
  %v3323 = vunpack.c.l.b16 %v584
  %v3324 = vunpack.c.h.b16 %v584
  %v3325 = vunpack.c.l.b16 %v585
  %v3326 = vunpack.c.h.b16 %v585
  %v3327 = vunpack.c.l.b16 %v586
  %v3328 = vunpack.c.h.b16 %v586
  %v3329 = vunpack.c.l.b16 %v587
  %v3330 = vunpack.c.h.b16 %v587
  %v3331 = vunpack.c.l.b16 %v588
  %v3332 = vunpack.c.h.b16 %v588
  %v3333 = vunpack.c.l.b16 %v589
  %v3334 = vunpack.c.h.b16 %v589
  %v3335 = vunpack.c.l.b16 %v590
  %v3336 = vunpack.c.h.b16 %v590
  %v3337 = vunpack.c.l.b16 %v591
  %v3338 = vunpack.c.h.b16 %v591
  %v3339 = vunpack.c.l.b16 %v592
  %v3340 = vunpack.c.h.b16 %v592
  %v3341 = vunpack.c.l.b16 %v593
  %v3342 = vunpack.c.h.b16 %v593
  %v3343 = vunpack.c.l.b16 %v594
  %v3344 = vunpack.c.h.b16 %v594
  %v3345 = vunpack.c.l.b16 %v595
  %v3346 = vunpack.c.h.b16 %v595
  %v3347 = vunpack.c.l.b16 %v596
  %v3348 = vunpack.c.h.b16 %v596
  %v3349 = vunpack.c.l.b16 %v597
  %v3350 = vunpack.c.h.b16 %v597
  %v3351 = vunpack.c.l.b16 %v598
  %v3352 = vunpack.c.h.b16 %v598
  %v3353 = vunpack.c.l.b16 %v599
  %v3354 = vunpack.c.h.b16 %v599
  %v3355 = vunpack.c.l.b16 %v600
  %v3356 = vunpack.c.h.b16 %v600
  %v3357 = vunpack.c.l.b16 %v601
  %v3358 = vunpack.c.h.b16 %v601
  %v3359 = vunpack.c.l.b16 %v602
  %v3360 = vunpack.c.h.b16 %v602
  %v3361 = vunpack.c.l.b16 %v603
  %v3362 = vunpack.c.h.b16 %v603
  %v3363 = vunpack.c.l.b16 %v604
  %v3364 = vunpack.c.h.b16 %v604
  %v3365 = vunpack.c.l.b16 %v605
  %v3366 = vunpack.c.h.b16 %v605
  %v3367 = vunpack.c.l.b16 %v606
  %v3368 = vunpack.c.h.b16 %v606
  %v3369 = vunpack.c.l.b16 %v607
  %v3370 = vunpack.c.h.b16 %v607
  %v3371 = vunpack.c.l.b16 %v608
  %v3372 = vunpack.c.h.b16 %v608
  %v3373 = vunpack.c.l.b16 %v609
  %v3374 = vunpack.c.h.b16 %v609
  %v3375 = vunpack.c.l.b16 %v610
  %v3376 = vunpack.c.h.b16 %v610
  %v3377 = vunpack.c.l.b16 %v611
  %v3378 = vunpack.c.h.b16 %v611
  %v3379 = vunpack.c.l.b16 %v612
  %v3380 = vunpack.c.h.b16 %v612
  %v3381 = vunpack.c.l.b16 %v613
  %v3382 = vunpack.c.h.b16 %v613
  %v3383 = vunpack.c.l.b16 %v614
  %v3384 = vunpack.c.h.b16 %v614
  %v3385 = vunpack.c.l.b16 %v615
  %v3386 = vunpack.c.h.b16 %v615
  %v3387 = vunpack.c.l.b16 %v616
  %v3388 = vunpack.c.h.b16 %v616
  %v3389 = vunpack.c.l.b16 %v617
  %v3390 = vunpack.c.h.b16 %v617
  %v3391 = vunpack.c.l.b16 %v618
  %v3392 = vunpack.c.h.b16 %v618
  %v3393 = vunpack.c.l.b16 %v619
  %v3394 = vunpack.c.h.b16 %v619
  %v3395 = vunpack.c.l.b16 %v620
  %v3396 = vunpack.c.h.b16 %v620
  %v3397 = vunpack.c.l.b16 %v621
  %v3398 = vunpack.c.h.b16 %v621
  %v3399 = vunpack.c.l.b16 %v622
  %v3400 = vunpack.c.h.b16 %v622
  %v3401 = vunpack.c.l.b16 %v623
  %v3402 = vunpack.c.h.b16 %v623
  %v3403 = vunpack.c.l.b16 %v624
  %v3404 = vunpack.c.h.b16 %v624
  %v3405 = vunpack.c.l.b16 %v625
  %v3406 = vunpack.c.h.b16 %v625
  %v3407 = vunpack.c.l.b16 %v626
  %v3408 = vunpack.c.h.b16 %v626
  %v3409 = vunpack.c.l.b16 %v627
  %v3410 = vunpack.c.h.b16 %v627
  %v3411 = vunpack.c.l.b16 %v628
  %v3412 = vunpack.c.h.b16 %v628
  %v3413 = vunpack.c.l.b16 %v629
  %v3414 = vunpack.c.h.b16 %v629
  %v3415 = vunpack.c.l.b16 %v630
  %v3416 = vunpack.c.h.b16 %v630
  %v3417 = vunpack.c.l.b16 %v631
  %v3418 = vunpack.c.h.b16 %v631
  %v3419 = vunpack.c.l.b16 %v632
  %v3420 = vunpack.c.h.b16 %v632
  %v3421 = vunpack.c.l.b16 %v633
  %v3422 = vunpack.c.h.b16 %v633
  %v3423 = vunpack.c.l.b16 %v634
  %v3424 = vunpack.c.h.b16 %v634
  %v3425 = vunpack.c.l.b16 %v635
  %v3426 = vunpack.c.h.b16 %v635
  %v3427 = vunpack.c.l.b16 %v636
  %v3428 = vunpack.c.h.b16 %v636
  %v3429 = vunpack.c.l.b16 %v637
  %v3430 = vunpack.c.h.b16 %v637
  %v3431 = vunpack.c.l.b16 %v638
  %v3432 = vunpack.c.h.b16 %v638
  %v3433 = vunpack.c.l.b16 %v639
  %v3434 = vunpack.c.h.b16 %v639
  %v3435 = vunpack.c.l.b16 %v640
  %v3436 = vunpack.c.h.b16 %v640
  %v3437 = vunpack.c.l.b16 %v641
  %v3438 = vunpack.c.h.b16 %v641
  %v3439 = vunpack.c.l.b16 %v642
  %v3440 = vunpack.c.h.b16 %v642
  %v3441 = vunpack.c.l.b16 %v643
  %v3442 = vunpack.c.h.b16 %v643
  %v3443 = vunpack.c.l.b16 %v644
  %v3444 = vunpack.c.h.b16 %v644
  %v3445 = vunpack.c.l.b16 %v645
  %v3446 = vunpack.c.h.b16 %v645
  %v3447 = vunpack.c.l.b16 %v646
  %v3448 = vunpack.c.h.b16 %v646
  %v3449 = vunpack.c.l.b16 %v647
  %v3450 = vunpack.c.h.b16 %v647
  %v3451 = vunpack.c.l.b16 %v648
  %v3452 = vunpack.c.h.b16 %v648
  %v3453 = vunpack.c.l.b16 %v649
  %v3454 = vunpack.c.h.b16 %v649
  %v3455 = vunpack.c.l.b16 %v650
  %v3456 = vunpack.c.h.b16 %v650
  %v3457 = vunpack.c.l.b16 %v651
  %v3458 = vunpack.c.h.b16 %v651
  %v3459 = vunpack.c.l.b16 %v652
  %v3460 = vunpack.c.h.b16 %v652
  %v3461 = vunpack.c.l.b16 %v653
  %v3462 = vunpack.c.h.b16 %v653
  %v3463 = vunpack.c.l.b16 %v654
  %v3464 = vunpack.c.h.b16 %v654
  %v3465 = vunpack.c.l.b16 %v655
  %v3466 = vunpack.c.h.b16 %v655
  %v3467 = vunpack.c.l.b16 %v656
  %v3468 = vunpack.c.h.b16 %v656
  %v3469 = vunpack.c.l.b16 %v657
  %v3470 = vunpack.c.h.b16 %v657
  %v3471 = vunpack.c.l.b16 %v658
  %v3472 = vunpack.c.h.b16 %v658
  %v3473 = vunpack.c.l.b16 %v659
  %v3474 = vunpack.c.h.b16 %v659
  %v3475 = vunpack.c.l.b16 %v660
  %v3476 = vunpack.c.h.b16 %v660
  %v3477 = vunpack.c.l.b16 %v661
  %v3478 = vunpack.c.h.b16 %v661
  %v3479 = vunpack.c.l.b16 %v662
  %v3480 = vunpack.c.h.b16 %v662
  %v3481 = vunpack.c.l.b16 %v663
  %v3482 = vunpack.c.h.b16 %v663
  %v3483 = vunpack.c.l.b16 %v664
  %v3484 = vunpack.c.h.b16 %v664
  %v3485 = vunpack.c.l.b16 %v665
  %v3486 = vunpack.c.h.b16 %v665
  %v3487 = vunpack.c.l.b16 %v666
  %v3488 = vunpack.c.h.b16 %v666
  %v3489 = vunpack.c.l.b16 %v667
  %v3490 = vunpack.c.h.b16 %v667
  %v3491 = vunpack.c.l.b16 %v668
  %v3492 = vunpack.c.h.b16 %v668
  %v3493 = vunpack.c.l.b16 %v669
  %v3494 = vunpack.c.h.b16 %v669
  %v3495 = vunpack.c.l.b16 %v670
  %v3496 = vunpack.c.h.b16 %v670
  %v3497 = vunpack.c.l.b16 %v671
  %v3498 = vunpack.c.h.b16 %v671
  %v3499 = vunpack.c.l.b16 %v672
  %v3500 = vunpack.c.h.b16 %v672
  %v3501 = vunpack.c.l.b16 %v673
  %v3502 = vunpack.c.h.b16 %v673
  %v3503 = vunpack.c.l.b16 %v674
  %v3504 = vunpack.c.h.b16 %v674
  %v3505 = vunpack.c.l.b16 %v675
  %v3506 = vunpack.c.h.b16 %v675
  %v3507 = vunpack.c.l.b16 %v676
  %v3508 = vunpack.c.h.b16 %v676
  %v3509 = vunpack.c.l.b16 %v677
  %v3510 = vunpack.c.h.b16 %v677
  %v3511 = vunpack.c.l.b16 %v678
  %v3512 = vunpack.c.h.b16 %v678
  %v3513 = vunpack.c.l.b16 %v679
  %v3514 = vunpack.c.h.b16 %v679
  %v3515 = vunpack.c.l.b16 %v680
  %v3516 = vunpack.c.h.b16 %v680
  %v3517 = vunpack.c.l.b16 %v681
  %v3518 = vunpack.c.h.b16 %v681
  %v3519 = vunpack.c.l.b16 %v682
  %v3520 = vunpack.c.h.b16 %v682
  %v3521 = vunpack.c.l.b16 %v683
  %v3522 = vunpack.c.h.b16 %v683
  %v3523 = vunpack.c.l.b16 %v684
  %v3524 = vunpack.c.h.b16 %v684
  %v3525 = vunpack.c.l.b16 %v685
  %v3526 = vunpack.c.h.b16 %v685
  %v3527 = vunpack.c.l.b16 %v686
  %v3528 = vunpack.c.h.b16 %v686
  %v3529 = vunpack.c.l.b16 %v687
  %v3530 = vunpack.c.h.b16 %v687
  %v3531 = vunpack.c.l.b16 %v688
  %v3532 = vunpack.c.h.b16 %v688
  %v3533 = vunpack.c.l.b16 %v689
  %v3534 = vunpack.c.h.b16 %v689
  %v3535 = vunpack.c.l.b16 %v690
  %v3536 = vunpack.c.h.b16 %v690
  %v3537 = vunpack.c.l.b16 %v691
  %v3538 = vunpack.c.h.b16 %v691
  %v3539 = vunpack.c.l.b16 %v692
  %v3540 = vunpack.c.h.b16 %v692
  %v3541 = vunpack.c.l.b16 %v693
  %v3542 = vunpack.c.h.b16 %v693
  %v3543 = vunpack.c.l.b16 %v694
  %v3544 = vunpack.c.h.b16 %v694
  %v3545 = vunpack.c.l.b16 %v695
  %v3546 = vunpack.c.h.b16 %v695
  %v3547 = vunpack.c.l.b16 %v696
  %v3548 = vunpack.c.h.b16 %v696
  %v3549 = vunpack.c.l.b16 %v697
  %v3550 = vunpack.c.h.b16 %v697
  %v3551 = vunpack.c.l.b16 %v698
  %v3552 = vunpack.c.h.b16 %v698
  %v3553 = vunpack.c.l.b16 %v699
  %v3554 = vunpack.c.h.b16 %v699
  %v3555 = vunpack.c.l.b16 %v700
  %v3556 = vunpack.c.h.b16 %v700
  %v3557 = vunpack.c.l.b16 %v701
  %v3558 = vunpack.c.h.b16 %v701
  %v3559 = vunpack.c.l.b16 %v702
  %v3560 = vunpack.c.h.b16 %v702
  %v3561 = vunpack.c.l.b16 %v703
  %v3562 = vunpack.c.h.b16 %v703
  %v3563 = vunpack.c.l.b16 %v704
  %v3564 = vunpack.c.h.b16 %v704
  %v3565 = vunpack.c.l.b16 %v705
  %v3566 = vunpack.c.h.b16 %v705
  %v3567 = vunpack.c.l.b16 %v706
  %v3568 = vunpack.c.h.b16 %v706
  %v3569 = vunpack.c.l.b16 %v707
  %v3570 = vunpack.c.h.b16 %v707
  %v3571 = vunpack.c.l.b16 %v708
  %v3572 = vunpack.c.h.b16 %v708
  %v3573 = vunpack.c.l.b16 %v709
  %v3574 = vunpack.c.h.b16 %v709
  %v3575 = vunpack.c.l.b16 %v710
  %v3576 = vunpack.c.h.b16 %v710
  %v3577 = vunpack.c.l.b16 %v711
  %v3578 = vunpack.c.h.b16 %v711
  %v3579 = vunpack.c.l.b16 %v712
  %v3580 = vunpack.c.h.b16 %v712
  %v3581 = vunpack.c.l.b16 %v713
  %v3582 = vunpack.c.h.b16 %v713
  %v3583 = vunpack.c.l.b16 %v714
  %v3584 = vunpack.c.h.b16 %v714
  %v3585 = vunpack.c.l.b16 %v715
  %v3586 = vunpack.c.h.b16 %v715
  %v3587 = vunpack.c.l.b16 %v716
  %v3588 = vunpack.c.h.b16 %v716
  %v3589 = vunpack.c.l.b16 %v717
  %v3590 = vunpack.c.h.b16 %v717
  %v3591 = vunpack.c.l.b16 %v718
  %v3592 = vunpack.c.h.b16 %v718
  %v3593 = vunpack.c.l.b16 %v719
  %v3594 = vunpack.c.h.b16 %v719
  %v3595 = vunpack.c.l.b16 %v720
  %v3596 = vunpack.c.h.b16 %v720
  %v3597 = vunpack.c.l.b16 %v721
  %v3598 = vunpack.c.h.b16 %v721
  %v3599 = vunpack.c.l.b16 %v722
  %v3600 = vunpack.c.h.b16 %v722
  %v3601 = vunpack.c.l.b16 %v723
  %v3602 = vunpack.c.h.b16 %v723
  %v3603 = vunpack.c.l.b16 %v724
  %v3604 = vunpack.c.h.b16 %v724
  %v3605 = vunpack.c.l.b16 %v725
  %v3606 = vunpack.c.h.b16 %v725
  %v3607 = vunpack.c.l.b16 %v726
  %v3608 = vunpack.c.h.b16 %v726
  %v3609 = vunpack.c.l.b16 %v727
  %v3610 = vunpack.c.h.b16 %v727
  %v3611 = vunpack.c.l.b16 %v728
  %v3612 = vunpack.c.h.b16 %v728
  %v3613 = vunpack.c.l.b16 %v729
  %v3614 = vunpack.c.h.b16 %v729
  %v3615 = vunpack.c.l.b16 %v730
  %v3616 = vunpack.c.h.b16 %v730
  %v3617 = vunpack.c.l.b16 %v731
  %v3618 = vunpack.c.h.b16 %v731
  %v3619 = vunpack.c.l.b16 %v732
  %v3620 = vunpack.c.h.b16 %v732
  %v3621 = vunpack.c.l.b16 %v733
  %v3622 = vunpack.c.h.b16 %v733
  %v3623 = vunpack.c.l.b16 %v734
  %v3624 = vunpack.c.h.b16 %v734
  %v3625 = vunpack.c.l.b16 %v735
  %v3626 = vunpack.c.h.b16 %v735
  %v3627 = vunpack.c.l.b16 %v736
  %v3628 = vunpack.c.h.b16 %v736
  %v3629 = vunpack.c.l.b16 %v737
  %v3630 = vunpack.c.h.b16 %v737
  %v3631 = vunpack.c.l.b16 %v738
  %v3632 = vunpack.c.h.b16 %v738
  %v3633 = vunpack.c.l.b16 %v739
  %v3634 = vunpack.c.h.b16 %v739
  %v3635 = vunpack.c.l.b16 %v740
  %v3636 = vunpack.c.h.b16 %v740
  %v3637 = vunpack.c.l.b16 %v741
  %v3638 = vunpack.c.h.b16 %v741
  %v3639 = vunpack.c.l.b16 %v742
  %v3640 = vunpack.c.h.b16 %v742
  %v3641 = vunpack.c.l.b16 %v743
  %v3642 = vunpack.c.h.b16 %v743
  %v3643 = vunpack.c.l.b16 %v744
  %v3644 = vunpack.c.h.b16 %v744
  %v3645 = vunpack.c.l.b16 %v745
  %v3646 = vunpack.c.h.b16 %v745
  %v3647 = vunpack.c.l.b16 %v746
  %v3648 = vunpack.c.h.b16 %v746
  %v3649 = vunpack.c.l.b16 %v747
  %v3650 = vunpack.c.h.b16 %v747
  %v3651 = vunpack.c.l.b16 %v748
  %v3652 = vunpack.c.h.b16 %v748
  %v3653 = vunpack.c.l.b16 %v749
  %v3654 = vunpack.c.h.b16 %v749
  %v3655 = vunpack.c.l.b16 %v750
  %v3656 = vunpack.c.h.b16 %v750
  %v3657 = vunpack.c.l.b16 %v751
  %v3658 = vunpack.c.h.b16 %v751
  %v3659 = vunpack.c.l.b16 %v752
  %v3660 = vunpack.c.h.b16 %v752
  %v3661 = vunpack.c.l.b16 %v753
  %v3662 = vunpack.c.h.b16 %v753
  %v3663 = vunpack.c.l.b16 %v754
  %v3664 = vunpack.c.h.b16 %v754
  %v3665 = vunpack.c.l.b16 %v755
  %v3666 = vunpack.c.h.b16 %v755
  %v3667 = vunpack.c.l.b16 %v756
  %v3668 = vunpack.c.h.b16 %v756
  %v3669 = vunpack.c.l.b16 %v757
  %v3670 = vunpack.c.h.b16 %v757
  %v3671 = vunpack.c.l.b16 %v758
  %v3672 = vunpack.c.h.b16 %v758
  %v3673 = vunpack.c.l.b16 %v759
  %v3674 = vunpack.c.h.b16 %v759
  %v3675 = vunpack.c.l.b16 %v760
  %v3676 = vunpack.c.h.b16 %v760
  %v3677 = vunpack.c.l.b16 %v761
  %v3678 = vunpack.c.h.b16 %v761
  %v3679 = vunpack.c.l.b16 %v762
  %v3680 = vunpack.c.h.b16 %v762
  %v3681 = vunpack.c.l.b16 %v763
  %v3682 = vunpack.c.h.b16 %v763
  %v3683 = vunpack.c.l.b16 %v764
  %v3684 = vunpack.c.h.b16 %v764
  %v3685 = vunpack.c.l.b16 %v765
  %v3686 = vunpack.c.h.b16 %v765
  %v3687 = vunpack.c.l.b16 %v766
  %v3688 = vunpack.c.h.b16 %v766
  %v3689 = vunpack.c.l.b16 %v767
  %v3690 = vunpack.c.h.b16 %v767
  %v3691 = vunpack.c.l.b16 %v768
  %v3692 = vunpack.c.h.b16 %v768
  %v3693 = vunpack.c.l.b16 %v769
  %v3694 = vunpack.c.h.b16 %v769
  %v3695 = vunpack.c.l.b16 %v770
  %v3696 = vunpack.c.h.b16 %v770
  %v3697 = vunpack.c.l.b16 %v771
  %v3698 = vunpack.c.h.b16 %v771
  %v3699 = vunpack.c.l.b16 %v772
  %v3700 = vunpack.c.h.b16 %v772
  %v3701 = vunpack.c.l.b16 %v773
  %v3702 = vunpack.c.h.b16 %v773
  %v3703 = vunpack.c.l.b16 %v774
  %v3704 = vunpack.c.h.b16 %v774
  %v3705 = vunpack.c.l.b16 %v775
  %v3706 = vunpack.c.h.b16 %v775
  %v3707 = vunpack.c.l.b16 %v776
  %v3708 = vunpack.c.h.b16 %v776
  %v3709 = vunpack.c.l.b16 %v777
  %v3710 = vunpack.c.h.b16 %v777
  %v3711 = vunpack.c.l.b16 %v778
  %v3712 = vunpack.c.h.b16 %v778
  %v3713 = vunpack.c.l.b16 %v779
  %v3714 = vunpack.c.h.b16 %v779
  %v3715 = vunpack.c.l.b16 %v780
  %v3716 = vunpack.c.h.b16 %v780
  %v3717 = vunpack.c.l.b16 %v781
  %v3718 = vunpack.c.h.b16 %v781
  %v3719 = vunpack.c.l.b16 %v782
  %v3720 = vunpack.c.h.b16 %v782
  %v3721 = vunpack.c.l.b16 %v783
  %v3722 = vunpack.c.h.b16 %v783
  %v3723 = vunpack.c.l.b16 %v784
  %v3724 = vunpack.c.h.b16 %v784
  %v3725 = vunpack.c.l.b16 %v785
  %v3726 = vunpack.c.h.b16 %v785
  %v3727 = vunpack.c.l.b16 %v786
  %v3728 = vunpack.c.h.b16 %v786
  %v3729 = vunpack.c.l.b16 %v787
  %v3730 = vunpack.c.h.b16 %v787
  %v3731 = vunpack.c.l.b16 %v788
  %v3732 = vunpack.c.h.b16 %v788
  %v3733 = vunpack.c.l.b16 %v789
  %v3734 = vunpack.c.h.b16 %v789
  %v3735 = vunpack.c.l.b16 %v790
  %v3736 = vunpack.c.h.b16 %v790
  %v3737 = vunpack.c.l.b16 %v791
  %v3738 = vunpack.c.h.b16 %v791
  %v3739 = vunpack.c.l.b16 %v792
  %v3740 = vunpack.c.h.b16 %v792
  %v3741 = vunpack.c.l.b16 %v793
  %v3742 = vunpack.c.h.b16 %v793
  %v3743 = vunpack.c.l.b16 %v794
  %v3744 = vunpack.c.h.b16 %v794
  %v3745 = vunpack.c.l.b16 %v795
  %v3746 = vunpack.c.h.b16 %v795
  %v3747 = vunpack.c.l.b16 %v796
  %v3748 = vunpack.c.h.b16 %v796
  %v3749 = vunpack.c.l.b16 %v797
  %v3750 = vunpack.c.h.b16 %v797
  %v3751 = vunpack.c.l.b16 %v798
  %v3752 = vunpack.c.h.b16 %v798
  %v3753 = vunpack.c.l.b16 %v799
  %v3754 = vunpack.c.h.b16 %v799
  %v3755 = vunpack.c.l.b16 %v800
  %v3756 = vunpack.c.h.b16 %v800
  %v3757 = vunpack.c.l.b16 %v801
  %v3758 = vunpack.c.h.b16 %v801
  %v3759 = vunpack.c.l.b16 %v802
  %v3760 = vunpack.c.h.b16 %v802
  %v3761 = vunpack.c.l.b16 %v803
  %v3762 = vunpack.c.h.b16 %v803
  %v3763 = vunpack.c.l.b16 %v804
  %v3764 = vunpack.c.h.b16 %v804
  %v3765 = vunpack.c.l.b16 %v805
  %v3766 = vunpack.c.h.b16 %v805
  %v3767 = vunpack.c.l.b16 %v806
  %v3768 = vunpack.c.h.b16 %v806
  %v3769 = vunpack.c.l.b16 %v807
  %v3770 = vunpack.c.h.b16 %v807
  %v3771 = vunpack.c.l.b16 %v808
  %v3772 = vunpack.c.h.b16 %v808
  %v3773 = vunpack.c.l.b16 %v809
  %v3774 = vunpack.c.h.b16 %v809
  %v3775 = vunpack.c.l.b16 %v810
  %v3776 = vunpack.c.h.b16 %v810
  %v3777 = vunpack.c.l.b16 %v811
  %v3778 = vunpack.c.h.b16 %v811
  %v3779 = vunpack.c.l.b16 %v812
  %v3780 = vunpack.c.h.b16 %v812
  %v3781 = vunpack.c.l.b16 %v813
  %v3782 = vunpack.c.h.b16 %v813
  %v3783 = vunpack.c.l.b16 %v814
  %v3784 = vunpack.c.h.b16 %v814
  %v3785 = vunpack.c.l.b16 %v815
  %v3786 = vunpack.c.h.b16 %v815
  %v3787 = vunpack.c.l.b16 %v816
  %v3788 = vunpack.c.h.b16 %v816
  %v3789 = vunpack.c.l.b16 %v817
  %v3790 = vunpack.c.h.b16 %v817
  %v3791 = vunpack.c.l.b16 %v818
  %v3792 = vunpack.c.h.b16 %v818
  %v3793 = vunpack.c.l.b16 %v819
  %v3794 = vunpack.c.h.b16 %v819
  %v3795 = vunpack.c.l.b16 %v820
  %v3796 = vunpack.c.h.b16 %v820
  %v3797 = vunpack.c.l.b16 %v821
  %v3798 = vunpack.c.h.b16 %v821
  %v3799 = vunpack.c.l.b16 %v822
  %v3800 = vunpack.c.h.b16 %v822
  %v3801 = vunpack.c.l.b16 %v823
  %v3802 = vunpack.c.h.b16 %v823
  %v3803 = vunpack.c.l.b16 %v824
  %v3804 = vunpack.c.h.b16 %v824
  %v3805 = vunpack.c.l.b16 %v825
  %v3806 = vunpack.c.h.b16 %v825
  %v3807 = vunpack.c.l.b16 %v826
  %v3808 = vunpack.c.h.b16 %v826
  %v3809 = vunpack.c.l.b16 %v827
  %v3810 = vunpack.c.h.b16 %v827
  %v3811 = vunpack.c.l.b16 %v828
  %v3812 = vunpack.c.h.b16 %v828
  %v3813 = vunpack.c.l.b16 %v829
  %v3814 = vunpack.c.h.b16 %v829
  %v3815 = vunpack.c.l.b16 %v830
  %v3816 = vunpack.c.h.b16 %v830
  %v3817 = vunpack.c.l.b16 %v831
  %v3818 = vunpack.c.h.b16 %v831
  %v3819 = vunpack.c.l.b16 %v832
  %v3820 = vunpack.c.h.b16 %v832
  %v3821 = vunpack.c.l.b16 %v833
  %v3822 = vunpack.c.h.b16 %v833
  %v3823 = vunpack.c.l.b16 %v834
  %v3824 = vunpack.c.h.b16 %v834
  %v3825 = vunpack.c.l.b16 %v835
  %v3826 = vunpack.c.h.b16 %v835
  %v3827 = vunpack.c.l.b16 %v836
  %v3828 = vunpack.c.h.b16 %v836
  %v3829 = vunpack.c.l.b16 %v837
  %v3830 = vunpack.c.h.b16 %v837
  %v3831 = vunpack.c.l.b16 %v838
  %v3832 = vunpack.c.h.b16 %v838
  %v3833 = vunpack.c.l.b16 %v839
  %v3834 = vunpack.c.h.b16 %v839
  %v3835 = vunpack.c.l.b16 %v840
  %v3836 = vunpack.c.h.b16 %v840
  %v3837 = vunpack.c.l.b16 %v841
  %v3838 = vunpack.c.h.b16 %v841
  %v3839 = vunpack.c.l.b16 %v842
  %v3840 = vunpack.c.h.b16 %v842
  %v3841 = vunpack.c.l.b16 %v843
  %v3842 = vunpack.c.h.b16 %v843
  %v3843 = vunpack.c.l.b16 %v844
  %v3844 = vunpack.c.h.b16 %v844
  %v3845 = vunpack.c.l.b16 %v845
  %v3846 = vunpack.c.h.b16 %v845
  %v3847 = vunpack.c.l.b16 %v846
  %v3848 = vunpack.c.h.b16 %v846
  %v3849 = vunpack.c.l.b16 %v847
  %v3850 = vunpack.c.h.b16 %v847
  %v3851 = vunpack.c.l.b16 %v848
  %v3852 = vunpack.c.h.b16 %v848
  %v3853 = vunpack.c.l.b16 %v849
  %v3854 = vunpack.c.h.b16 %v849
  %v3855 = vunpack.c.l.b16 %v850
  %v3856 = vunpack.c.h.b16 %v850
  %v3857 = vunpack.c.l.b16 %v851
  %v3858 = vunpack.c.h.b16 %v851
  %v3859 = vunpack.c.l.b16 %v852
  %v3860 = vunpack.c.h.b16 %v852
  %v3861 = vunpack.c.l.b16 %v853
  %v3862 = vunpack.c.h.b16 %v853
  %v3863 = vunpack.c.l.b16 %v854
  %v3864 = vunpack.c.h.b16 %v854
  %v3865 = vunpack.c.l.b16 %v855
  %v3866 = vunpack.c.h.b16 %v855
  %v3867 = vunpack.c.l.b16 %v856
  %v3868 = vunpack.c.h.b16 %v856
  %v3869 = vunpack.c.l.b16 %v857
  %v3870 = vunpack.c.h.b16 %v857
  %v3871 = vunpack.c.l.b16 %v858
  %v3872 = vunpack.c.h.b16 %v858
  %v3873 = vunpack.c.l.b16 %v859
  %v3874 = vunpack.c.h.b16 %v859
  %v3875 = vunpack.c.l.b16 %v860
  %v3876 = vunpack.c.h.b16 %v860
  %v3877 = vunpack.c.l.b16 %v861
  %v3878 = vunpack.c.h.b16 %v861
  %v3879 = vunpack.c.l.b16 %v862
  %v3880 = vunpack.c.h.b16 %v862
  %v3881 = vunpack.c.l.b16 %v863
  %v3882 = vunpack.c.h.b16 %v863
  %v3883 = vunpack.c.l.b16 %v864
  %v3884 = vunpack.c.h.b16 %v864
  %v3885 = vunpack.c.l.b16 %v865
  %v3886 = vunpack.c.h.b16 %v865
  %v3887 = vunpack.c.l.b16 %v866
  %v3888 = vunpack.c.h.b16 %v866
  %v3889 = vunpack.c.l.b16 %v867
  %v3890 = vunpack.c.h.b16 %v867
  %v3891 = vunpack.c.l.b16 %v868
  %v3892 = vunpack.c.h.b16 %v868
  %v3893 = vunpack.c.l.b16 %v869
  %v3894 = vunpack.c.h.b16 %v869
  %v3895 = vunpack.c.l.b16 %v870
  %v3896 = vunpack.c.h.b16 %v870
  %v3897 = vunpack.c.l.b16 %v871
  %v3898 = vunpack.c.h.b16 %v871
  %v3899 = vunpack.c.l.b16 %v872
  %v3900 = vunpack.c.h.b16 %v872
  %v3901 = vunpack.c.l.b16 %v873
  %v3902 = vunpack.c.h.b16 %v873
  %v3903 = vunpack.c.l.b16 %v874
  %v3904 = vunpack.c.h.b16 %v874
  %v3905 = vunpack.c.l.b16 %v875
  %v3906 = vunpack.c.h.b16 %v875
  %v3907 = vunpack.c.l.b16 %v876
  %v3908 = vunpack.c.h.b16 %v876
  %v3909 = vunpack.c.l.b16 %v877
  %v3910 = vunpack.c.h.b16 %v877
  %v3911 = vunpack.c.l.b16 %v878
  %v3912 = vunpack.c.h.b16 %v878
  %v3913 = vunpack.c.l.b16 %v879
  %v3914 = vunpack.c.h.b16 %v879
  %v3915 = vunpack.c.l.b16 %v880
  %v3916 = vunpack.c.h.b16 %v880
  %v3917 = vunpack.c.l.b16 %v881
  %v3918 = vunpack.c.h.b16 %v881
  %v3919 = vunpack.c.l.b16 %v882
  %v3920 = vunpack.c.h.b16 %v882
  %v3921 = vunpack.c.l.b16 %v883
  %v3922 = vunpack.c.h.b16 %v883
  %v3923 = vunpack.c.l.b16 %v884
  %v3924 = vunpack.c.h.b16 %v884
  %v3925 = vunpack.c.l.b16 %v885
  %v3926 = vunpack.c.h.b16 %v885
  %v3927 = vunpack.c.l.b16 %v886
  %v3928 = vunpack.c.h.b16 %v886
  %v3929 = vunpack.c.l.b16 %v887
  %v3930 = vunpack.c.h.b16 %v887
  %v3931 = vunpack.c.l.b16 %v888
  %v3932 = vunpack.c.h.b16 %v888
  %v3933 = vunpack.c.l.b16 %v889
  %v3934 = vunpack.c.h.b16 %v889
  %v3935 = vunpack.c.l.b16 %v890
  %v3936 = vunpack.c.h.b16 %v890
  %v3937 = vunpack.c.l.b16 %v891
  %v3938 = vunpack.c.h.b16 %v891
  %v3939 = vunpack.c.l.b16 %v892
  %v3940 = vunpack.c.h.b16 %v892
  %v3941 = vunpack.c.l.b16 %v893
  %v3942 = vunpack.c.h.b16 %v893
  %v3943 = vunpack.c.l.b16 %v894
  %v3944 = vunpack.c.h.b16 %v894
  %v3945 = vunpack.c.l.b16 %v895
  %v3946 = vunpack.c.h.b16 %v895
  %v3947 = vunpack.c.l.b16 %v896
  %v3948 = vunpack.c.h.b16 %v896
  %v3949 = vunpack.c.l.b16 %v897
  %v3950 = vunpack.c.h.b16 %v897
  %v3951 = vunpack.c.l.b16 %v898
  %v3952 = vunpack.c.h.b16 %v898
  %v3953 = vunpack.c.l.b16 %v899
  %v3954 = vunpack.c.h.b16 %v899
  %v3955 = vunpack.c.l.b16 %v900
  %v3956 = vunpack.c.h.b16 %v900
  %v3957 = vunpack.c.l.b16 %v901
  %v3958 = vunpack.c.h.b16 %v901
  %v3959 = vunpack.c.l.b16 %v902
  %v3960 = vunpack.c.h.b16 %v902
  %v3961 = vunpack.c.l.b16 %v903
  %v3962 = vunpack.c.h.b16 %v903
  %v3963 = vunpack.c.l.b16 %v904
  %v3964 = vunpack.c.h.b16 %v904
  %v3965 = vunpack.c.l.b16 %v905
  %v3966 = vunpack.c.h.b16 %v905
  %v3967 = vunpack.c.l.b16 %v906
  %v3968 = vunpack.c.h.b16 %v906
  %v3969 = vunpack.c.l.b16 %v907
  %v3970 = vunpack.c.h.b16 %v907
  %v3971 = vunpack.c.l.b16 %v908
  %v3972 = vunpack.c.h.b16 %v908
  %v3973 = vunpack.c.l.b16 %v909
  %v3974 = vunpack.c.h.b16 %v909
  %v3975 = vunpack.c.l.b16 %v910
  %v3976 = vunpack.c.h.b16 %v910
  %v3977 = vunpack.c.l.b16 %v911
  %v3978 = vunpack.c.h.b16 %v911
  %v3979 = vunpack.c.l.b16 %v912
  %v3980 = vunpack.c.h.b16 %v912
  %v3981 = vunpack.c.l.b16 %v913
  %v3982 = vunpack.c.h.b16 %v913
  %v3983 = vunpack.c.l.b16 %v914
  %v3984 = vunpack.c.h.b16 %v914
  %v3985 = vunpack.c.l.b16 %v915
  %v3986 = vunpack.c.h.b16 %v915
  %v3987 = vunpack.c.l.b16 %v916
  %v3988 = vunpack.c.h.b16 %v916
  %v3989 = vunpack.c.l.b16 %v917
  %v3990 = vunpack.c.h.b16 %v917
  %v3991 = vunpack.c.l.b16 %v918
  %v3992 = vunpack.c.h.b16 %v918
  %v3993 = vunpack.c.l.b16 %v919
  %v3994 = vunpack.c.h.b16 %v919
  %v3995 = vunpack.c.l.b16 %v920
  %v3996 = vunpack.c.h.b16 %v920
  %v3997 = vunpack.c.l.b16 %v921
  %v3998 = vunpack.c.h.b16 %v921
  %v3999 = vunpack.c.l.b16 %v922
  %v4000 = vunpack.c.h.b16 %v922
  %v4001 = vunpack.c.l.b16 %v923
  %v4002 = vunpack.c.h.b16 %v923
  %v4003 = vunpack.c.l.b16 %v924
  %v4004 = vunpack.c.h.b16 %v924
  %v4005 = vunpack.c.l.b16 %v925
  %v4006 = vunpack.c.h.b16 %v925
  %v4007 = vunpack.c.l.b16 %v926
  %v4008 = vunpack.c.h.b16 %v926
  %v4009 = vunpack.c.l.b16 %v927
  %v4010 = vunpack.c.h.b16 %v927
  %v4011 = vunpack.c.l.b16 %v928
  %v4012 = vunpack.c.h.b16 %v928
  %v4013 = vunpack.c.l.b16 %v929
  %v4014 = vunpack.c.h.b16 %v929
  %v4015 = vunpack.c.l.b16 %v930
  %v4016 = vunpack.c.h.b16 %v930
  %v4017 = vunpack.c.l.b16 %v931
  %v4018 = vunpack.c.h.b16 %v931
  %v4019 = vunpack.c.l.b16 %v932
  %v4020 = vunpack.c.h.b16 %v932
  %v4021 = vunpack.c.l.b16 %v933
  %v4022 = vunpack.c.h.b16 %v933
  %v4023 = vunpack.c.l.b16 %v934
  %v4024 = vunpack.c.h.b16 %v934
  %v4025 = vunpack.c.l.b16 %v935
  %v4026 = vunpack.c.h.b16 %v935
  %v4027 = vunpack.c.l.b16 %v936
  %v4028 = vunpack.c.h.b16 %v936
  %v4029 = vunpack.c.l.b16 %v937
  %v4030 = vunpack.c.h.b16 %v937
  %v4031 = vunpack.c.l.b16 %v938
  %v4032 = vunpack.c.h.b16 %v938
  %v4033 = vunpack.c.l.b16 %v939
  %v4034 = vunpack.c.h.b16 %v939
  %v4035 = vunpack.c.l.b16 %v940
  %v4036 = vunpack.c.h.b16 %v940
  %v4037 = vunpack.c.l.b16 %v941
  %v4038 = vunpack.c.h.b16 %v941
  %v4039 = vunpack.c.l.b16 %v942
  %v4040 = vunpack.c.h.b16 %v942
  %v4041 = vunpack.c.l.b16 %v943
  %v4042 = vunpack.c.h.b16 %v943
  %v4043 = vunpack.c.l.b16 %v944
  %v4044 = vunpack.c.h.b16 %v944
  %v4045 = vunpack.c.l.b16 %v945
  %v4046 = vunpack.c.h.b16 %v945
  %v4047 = vunpack.c.l.b16 %v946
  %v4048 = vunpack.c.h.b16 %v946
  %v4049 = vunpack.c.l.b16 %v947
  %v4050 = vunpack.c.h.b16 %v947
  %v4051 = vunpack.c.l.b16 %v948
  %v4052 = vunpack.c.h.b16 %v948
  %v4053 = vunpack.c.l.b16 %v949
  %v4054 = vunpack.c.h.b16 %v949
  %v4055 = vunpack.c.l.b16 %v950
  %v4056 = vunpack.c.h.b16 %v950
  %v4057 = vunpack.c.l.b16 %v951
  %v4058 = vunpack.c.h.b16 %v951
  %v4059 = vunpack.c.l.b16 %v952
  %v4060 = vunpack.c.h.b16 %v952
  %v4061 = vunpack.c.l.b16 %v953
  %v4062 = vunpack.c.h.b16 %v953
  %v4063 = vunpack.c.l.b16 %v954
  %v4064 = vunpack.c.h.b16 %v954
  %v4065 = vunpack.c.l.b16 %v955
  %v4066 = vunpack.c.h.b16 %v955
  %v4067 = vunpack.c.l.b16 %v956
  %v4068 = vunpack.c.h.b16 %v956
  %v4069 = vunpack.c.l.b16 %v957
  %v4070 = vunpack.c.h.b16 %v957
  %v4071 = vunpack.c.l.b16 %v958
  %v4072 = vunpack.c.h.b16 %v958
  %v4073 = vunpack.c.l.b16 %v959
  %v4074 = vunpack.c.h.b16 %v959
  %v4075 = vunpack.c.l.b16 %v960
  %v4076 = vunpack.c.h.b16 %v960
  %v4077 = vunpack.c.l.b16 %v961
  %v4078 = vunpack.c.h.b16 %v961
  %v4079 = vunpack.c.l.b16 %v962
  %v4080 = vunpack.c.h.b16 %v962
  %v4081 = vunpack.c.l.b16 %v963
  %v4082 = vunpack.c.h.b16 %v963
  %v4083 = vunpack.c.l.b16 %v964
  %v4084 = vunpack.c.h.b16 %v964
  %v4085 = vunpack.c.l.b16 %v965
  %v4086 = vunpack.c.h.b16 %v965
  %v4087 = vunpack.c.l.b16 %v966
  %v4088 = vunpack.c.h.b16 %v966
  %v4089 = vunpack.c.l.b16 %v967
  %v4090 = vunpack.c.h.b16 %v967
  %v4091 = vunpack.c.l.b16 %v968
  %v4092 = vunpack.c.h.b16 %v968
  %v4093 = vunpack.c.l.b16 %v969
  %v4094 = vunpack.c.h.b16 %v969
  %v4095 = vunpack.c.l.b16 %v970
  %v4096 = vunpack.c.h.b16 %v970
  %v4097 = vunpack.c.l.b16 %v971
  %v4098 = vunpack.c.h.b16 %v971
  %v4099 = vunpack.c.l.b16 %v972
  %v4100 = vunpack.c.h.b16 %v972
  %v4101 = vunpack.c.l.b16 %v973
  %v4102 = vunpack.c.h.b16 %v973
  %v4103 = vunpack.c.l.b16 %v974
  %v4104 = vunpack.c.h.b16 %v974
  %v4105 = vunpack.c.l.b16 %v975
  %v4106 = vunpack.c.h.b16 %v975
  %v4107 = vunpack.c.l.b16 %v976
  %v4108 = vunpack.c.h.b16 %v976
  %v4109 = vunpack.c.l.b16 %v977
  %v4110 = vunpack.c.h.b16 %v977
  %v4111 = vunpack.c.l.b16 %v978
  %v4112 = vunpack.c.h.b16 %v978
  %v4113 = vunpack.c.l.b16 %v979
  %v4114 = vunpack.c.h.b16 %v979
  %v4115 = vunpack.c.l.b16 %v980
  %v4116 = vunpack.c.h.b16 %v980
  %v4117 = vunpack.c.l.b16 %v981
  %v4118 = vunpack.c.h.b16 %v981
  %v4119 = vunpack.c.l.b16 %v982
  %v4120 = vunpack.c.h.b16 %v982
  %v4121 = vunpack.c.l.b16 %v983
  %v4122 = vunpack.c.h.b16 %v983
  %v4123 = vunpack.c.l.b16 %v984
  %v4124 = vunpack.c.h.b16 %v984
  %v4125 = vunpack.c.l.b16 %v985
  %v4126 = vunpack.c.h.b16 %v985
  %v4127 = vunpack.c.l.b16 %v986
  %v4128 = vunpack.c.h.b16 %v986
  %v4129 = vunpack.c.l.b16 %v987
  %v4130 = vunpack.c.h.b16 %v987
  %v4131 = vunpack.c.l.b16 %v988
  %v4132 = vunpack.c.h.b16 %v988
  %v4133 = vunpack.c.l.b16 %v989
  %v4134 = vunpack.c.h.b16 %v989
  %v4135 = vunpack.c.l.b16 %v990
  %v4136 = vunpack.c.h.b16 %v990
  %v4137 = vunpack.c.l.b16 %v991
  %v4138 = vunpack.c.h.b16 %v991
  %v4139 = vunpack.c.l.b16 %v992
  %v4140 = vunpack.c.h.b16 %v992
  %v4141 = vunpack.c.l.b16 %v993
  %v4142 = vunpack.c.h.b16 %v993
  %v4143 = vunpack.c.l.b16 %v994
  %v4144 = vunpack.c.h.b16 %v994
  %v4145 = vunpack.c.l.b16 %v995
  %v4146 = vunpack.c.h.b16 %v995
  %v4147 = vunpack.c.l.b16 %v996
  %v4148 = vunpack.c.h.b16 %v996
  %v4149 = vunpack.c.l.b16 %v997
  %v4150 = vunpack.c.h.b16 %v997
  %v4151 = vunpack.c.l.b16 %v998
  %v4152 = vunpack.c.h.b16 %v998
  %v4153 = vunpack.c.l.b16 %v999
  %v4154 = vunpack.c.h.b16 %v999
  %v4155 = vunpack.c.l.b16 %v1000
  %v4156 = vunpack.c.h.b16 %v1000
  %v4157 = vunpack.c.l.b16 %v1001
  %v4158 = vunpack.c.h.b16 %v1001
  %v4159 = vunpack.c.l.b16 %v1002
  %v4160 = vunpack.c.h.b16 %v1002
  %v4161 = vunpack.c.l.b16 %v1003
  %v4162 = vunpack.c.h.b16 %v1003
  %v4163 = vunpack.c.l.b16 %v1004
  %v4164 = vunpack.c.h.b16 %v1004
  %v4165 = vunpack.c.l.b16 %v1005
  %v4166 = vunpack.c.h.b16 %v1005
  %v4167 = vunpack.c.l.b16 %v1006
  %v4168 = vunpack.c.h.b16 %v1006
  %v4169 = vunpack.c.l.b16 %v1007
  %v4170 = vunpack.c.h.b16 %v1007
  %v4171 = vunpack.c.l.b16 %v1008
  %v4172 = vunpack.c.h.b16 %v1008
  %v4173 = vunpack.c.l.b16 %v1009
  %v4174 = vunpack.c.h.b16 %v1009
  %v4175 = vunpack.c.l.b16 %v1010
  %v4176 = vunpack.c.h.b16 %v1010
  %v4177 = vunpack.c.l.b16 %v1011
  %v4178 = vunpack.c.h.b16 %v1011
  %v4179 = vunpack.c.l.b16 %v1012
  %v4180 = vunpack.c.h.b16 %v1012
  %v4181 = vunpack.c.l.b16 %v1013
  %v4182 = vunpack.c.h.b16 %v1013
  %v4183 = vunpack.c.l.b16 %v1014
  %v4184 = vunpack.c.h.b16 %v1014
  %v4185 = vunpack.c.l.b16 %v1015
  %v4186 = vunpack.c.h.b16 %v1015
  %v4187 = vunpack.c.l.b16 %v1016
  %v4188 = vunpack.c.h.b16 %v1016
  %v4189 = vunpack.c.l.b16 %v1017
  %v4190 = vunpack.c.h.b16 %v1017
  %v4191 = vunpack.c.l.b16 %v1018
  %v4192 = vunpack.c.h.b16 %v1018
  %v4193 = vunpack.c.l.b16 %v1019
  %v4194 = vunpack.c.h.b16 %v1019
  %v4195 = vunpack.c.l.b16 %v1020
  %v4196 = vunpack.c.h.b16 %v1020
  %v4197 = vunpack.c.l.b16 %v1021
  %v4198 = vunpack.c.h.b16 %v1021
  %v4199 = vunpack.c.l.b16 %v1022
  %v4200 = vunpack.c.h.b16 %v1022
  %v4201 = vunpack.c.l.b16 %v1023
  %v4202 = vunpack.c.h.b16 %v1023
  %v4203 = vunpack.c.l.b16 %v1024
  %v4204 = vunpack.c.h.b16 %v1024
  %v4205 = vunpack.c.l.b16 %v1025
  %v4206 = vunpack.c.h.b16 %v1025
  %v4207 = vunpack.c.l.b16 %v1026
  %v4208 = vunpack.c.h.b16 %v1026
  %v4209 = vunpack.c.l.b16 %v1027
  %v4210 = vunpack.c.h.b16 %v1027
  %v4211 = vunpack.c.l.b16 %v1028
  %v4212 = vunpack.c.h.b16 %v1028
  %v4213 = vunpack.c.l.b16 %v1029
  %v4214 = vunpack.c.h.b16 %v1029
  %v4215 = vunpack.c.l.b16 %v1030
  %v4216 = vunpack.c.h.b16 %v1030
  %v4217 = vunpack.c.l.b16 %v1031
  %v4218 = vunpack.c.h.b16 %v1031
  %v4219 = vunpack.c.l.b16 %v1032
  %v4220 = vunpack.c.h.b16 %v1032
  %v4221 = vunpack.c.l.b16 %v1033
  %v4222 = vunpack.c.h.b16 %v1033
  %v4223 = vunpack.c.l.b16 %v1034
  %v4224 = vunpack.c.h.b16 %v1034
  %v4225 = vunpack.c.l.b16 %v1035
  %v4226 = vunpack.c.h.b16 %v1035
  %v4227 = vunpack.c.l.b16 %v1036
  %v4228 = vunpack.c.h.b16 %v1036
  %v4229 = vunpack.c.l.b16 %v1037
  %v4230 = vunpack.c.h.b16 %v1037
  %v4231 = vunpack.c.l.b16 %v1038
  %v4232 = vunpack.c.h.b16 %v1038
  %v4233 = vunpack.c.l.b16 %v1039
  %v4234 = vunpack.c.h.b16 %v1039
  %v4235 = vunpack.c.l.b16 %v1040
  %v4236 = vunpack.c.h.b16 %v1040
  %v4237 = vunpack.c.l.b16 %v1041
  %v4238 = vunpack.c.h.b16 %v1041
  %v4239 = vunpack.c.l.b16 %v1042
  %v4240 = vunpack.c.h.b16 %v1042
  %v4241 = vunpack.c.l.b16 %v1043
  %v4242 = vunpack.c.h.b16 %v1043
  %v4243 = vunpack.c.l.b16 %v1044
  %v4244 = vunpack.c.h.b16 %v1044
  %v4245 = vunpack.c.l.b16 %v1045
  %v4246 = vunpack.c.h.b16 %v1045
  %v4247 = vunpack.c.l.b16 %v1046
  %v4248 = vunpack.c.h.b16 %v1046
  %v4249 = vunpack.c.l.b16 %v1047
  %v4250 = vunpack.c.h.b16 %v1047
  %v4251 = vunpack.c.l.b16 %v1048
  %v4252 = vunpack.c.h.b16 %v1048
  %v4253 = vunpack.c.l.b16 %v1049
  %v4254 = vunpack.c.h.b16 %v1049
  %v4255 = vunpack.c.l.b16 %v1050
  %v4256 = vunpack.c.h.b16 %v1050
  %v4257 = vunpack.c.l.b16 %v1051
  %v4258 = vunpack.c.h.b16 %v1051
  %v4259 = vunpack.c.l.b16 %v1052
  %v4260 = vunpack.c.h.b16 %v1052
  %v4261 = vunpack.c.l.b16 %v1053
  %v4262 = vunpack.c.h.b16 %v1053
  %v4263 = vunpack.c.l.b16 %v1054
  %v4264 = vunpack.c.h.b16 %v1054
  %v4265 = vunpack.c.l.b16 %v1055
  %v4266 = vunpack.c.h.b16 %v1055
  %v4267 = vunpack.c.l.b16 %v1056
  %v4268 = vunpack.c.h.b16 %v1056
  %v4269 = vunpack.c.l.b16 %v1057
  %v4270 = vunpack.c.h.b16 %v1057
  %v4271 = vunpack.c.l.b16 %v1058
  %v4272 = vunpack.c.h.b16 %v1058
  %v4273 = vunpack.c.l.b16 %v1059
  %v4274 = vunpack.c.h.b16 %v1059
  %v4275 = vunpack.c.l.b16 %v1060
  %v4276 = vunpack.c.h.b16 %v1060
  %v4277 = vunpack.c.l.b16 %v1061
  %v4278 = vunpack.c.h.b16 %v1061
  %v4279 = vunpack.c.l.b16 %v1062
  %v4280 = vunpack.c.h.b16 %v1062
  %v4281 = vunpack.c.l.b16 %v1063
  %v4282 = vunpack.c.h.b16 %v1063
  %v4283 = vunpack.c.l.b16 %v1064
  %v4284 = vunpack.c.h.b16 %v1064
  %v4285 = vunpack.c.l.b16 %v1065
  %v4286 = vunpack.c.h.b16 %v1065
  %v4287 = vunpack.c.l.b16 %v1066
  %v4288 = vunpack.c.h.b16 %v1066
  %v4289 = vunpack.c.l.b16 %v1067
  %v4290 = vunpack.c.h.b16 %v1067
  %v4291 = vunpack.c.l.b16 %v1068
  %v4292 = vunpack.c.h.b16 %v1068
  %v4293 = vunpack.c.l.b16 %v1069
  %v4294 = vunpack.c.h.b16 %v1069
  %v4295 = vunpack.c.l.b16 %v1070
  %v4296 = vunpack.c.h.b16 %v1070
  %v4297 = vunpack.c.l.b16 %v1071
  %v4298 = vunpack.c.h.b16 %v1071
  %v4299 = vunpack.c.l.b16 %v1072
  %v4300 = vunpack.c.h.b16 %v1072
  %v4301 = vunpack.c.l.b16 %v1073
  %v4302 = vunpack.c.h.b16 %v1073
  %v4303 = vunpack.c.l.b16 %v1074
  %v4304 = vunpack.c.h.b16 %v1074
  %v4305 = vunpack.c.l.b16 %v1075
  %v4306 = vunpack.c.h.b16 %v1075
  %v4307 = vunpack.c.l.b16 %v1076
  %v4308 = vunpack.c.h.b16 %v1076
  %v4309 = vunpack.c.l.b16 %v1077
  %v4310 = vunpack.c.h.b16 %v1077
  %v4311 = vunpack.c.l.b16 %v1078
  %v4312 = vunpack.c.h.b16 %v1078
  %v4313 = vunpack.c.l.b16 %v1079
  %v4314 = vunpack.c.h.b16 %v1079
  %v4315 = vunpack.c.l.b16 %v1080
  %v4316 = vunpack.c.h.b16 %v1080
  %v4317 = vunpack.c.l.b16 %v1081
  %v4318 = vunpack.c.h.b16 %v1081
  %v4319 = vunpack.c.l.b16 %v1082
  %v4320 = vunpack.c.h.b16 %v1082
  %v4321 = vunpack.c.l.b16 %v1083
  %v4322 = vunpack.c.h.b16 %v1083
  %v4323 = vunpack.c.l.b16 %v1084
  %v4324 = vunpack.c.h.b16 %v1084
  %v4325 = vunpack.c.l.b16 %v1085
  %v4326 = vunpack.c.h.b16 %v1085
  %v4327 = vunpack.c.l.b16 %v1086
  %v4328 = vunpack.c.h.b16 %v1086
  %v4329 = vunpack.c.l.b16 %v1087
  %v4330 = vunpack.c.h.b16 %v1087
  %v4331 = vunpack.c.l.b16 %v1088
  %v4332 = vunpack.c.h.b16 %v1088
  %v4333 = vunpack.c.l.b16 %v1089
  %v4334 = vunpack.c.h.b16 %v1089
  %v4335 = vunpack.c.l.b16 %v1090
  %v4336 = vunpack.c.h.b16 %v1090
  %v4337 = vunpack.c.l.b16 %v1091
  %v4338 = vunpack.c.h.b16 %v1091
  %v4339 = vunpack.c.l.b16 %v1092
  %v4340 = vunpack.c.h.b16 %v1092
  %v4341 = vunpack.c.l.b16 %v1093
  %v4342 = vunpack.c.h.b16 %v1093
  %v4343 = vunpack.c.l.b16 %v1094
  %v4344 = vunpack.c.h.b16 %v1094
  %v4345 = vunpack.c.l.b16 %v1095
  %v4346 = vunpack.c.h.b16 %v1095
  %v4347 = vunpack.c.l.b16 %v1096
  %v4348 = vunpack.c.h.b16 %v1096
  %v4349 = vunpack.c.l.b16 %v1097
  %v4350 = vunpack.c.h.b16 %v1097
  %v4351 = vunpack.c.l.b16 %v1098
  %v4352 = vunpack.c.h.b16 %v1098
  %v4353 = vunpack.c.l.b16 %v1099
  %v4354 = vunpack.c.h.b16 %v1099
  %v4355 = vunpack.c.l.b16 %v1100
  %v4356 = vunpack.c.h.b16 %v1100
  %v4357 = vunpack.c.l.b16 %v1101
  %v4358 = vunpack.c.h.b16 %v1101
  %v4359 = vunpack.c.l.b16 %v1102
  %v4360 = vunpack.c.h.b16 %v1102
  %v4361 = vunpack.c.l.b16 %v1103
  %v4362 = vunpack.c.h.b16 %v1103
  %v4363 = vunpack.c.l.b16 %v1104
  %v4364 = vunpack.c.h.b16 %v1104
  %v4365 = vunpack.c.l.b16 %v1105
  %v4366 = vunpack.c.h.b16 %v1105
  %v4367 = vunpack.c.l.b16 %v1106
  %v4368 = vunpack.c.h.b16 %v1106
  %v4369 = vunpack.c.l.b16 %v1107
  %v4370 = vunpack.c.h.b16 %v1107
  %v4371 = vunpack.c.l.b16 %v1108
  %v4372 = vunpack.c.h.b16 %v1108
  %v4373 = vunpack.c.l.b16 %v1109
  %v4374 = vunpack.c.h.b16 %v1109
  %v4375 = vunpack.c.l.b16 %v1110
  %v4376 = vunpack.c.h.b16 %v1110
  %v4377 = vunpack.c.l.b16 %v1111
  %v4378 = vunpack.c.h.b16 %v1111
  %v4379 = vunpack.c.l.b16 %v1112
  %v4380 = vunpack.c.h.b16 %v1112
  %v4381 = vunpack.c.l.b16 %v1113
  %v4382 = vunpack.c.h.b16 %v1113
  %v4383 = vunpack.c.l.b16 %v1114
  %v4384 = vunpack.c.h.b16 %v1114
  %v4385 = vunpack.c.l.b16 %v1115
  %v4386 = vunpack.c.h.b16 %v1115
  %v4387 = vunpack.c.l.b16 %v1116
  %v4388 = vunpack.c.h.b16 %v1116
  %v4389 = vunpack.c.l.b16 %v1117
  %v4390 = vunpack.c.h.b16 %v1117
  %v4391 = vunpack.c.l.b16 %v1118
  %v4392 = vunpack.c.h.b16 %v1118
  %v4393 = vunpack.c.l.b16 %v1119
  %v4394 = vunpack.c.h.b16 %v1119
  %v4395 = vunpack.c.l.b16 %v1120
  %v4396 = vunpack.c.h.b16 %v1120
  %v4397 = vunpack.c.l.b16 %v1121
  %v4398 = vunpack.c.h.b16 %v1121
  %v4399 = vunpack.c.l.b16 %v1122
  %v4400 = vunpack.c.h.b16 %v1122
  %v4401 = vunpack.c.l.b16 %v1123
  %v4402 = vunpack.c.h.b16 %v1123
  %v4403 = vunpack.c.l.b16 %v1124
  %v4404 = vunpack.c.h.b16 %v1124
  %v4405 = vunpack.c.l.b16 %v1125
  %v4406 = vunpack.c.h.b16 %v1125
  %v4407 = vunpack.c.l.b16 %v1126
  %v4408 = vunpack.c.h.b16 %v1126
  %v4409 = vunpack.c.l.b16 %v1127
  %v4410 = vunpack.c.h.b16 %v1127
  %v4411 = vunpack.c.l.b16 %v1128
  %v4412 = vunpack.c.h.b16 %v1128
  %v4413 = vunpack.c.l.b16 %v1129
  %v4414 = vunpack.c.h.b16 %v1129
  %v4415 = vunpack.c.l.b16 %v1130
  %v4416 = vunpack.c.h.b16 %v1130
  %v4417 = vunpack.c.l.b16 %v1131
  %v4418 = vunpack.c.h.b16 %v1131
  %v4419 = vunpack.c.l.b16 %v1132
  %v4420 = vunpack.c.h.b16 %v1132
  %v4421 = vunpack.c.l.b16 %v1133
  %v4422 = vunpack.c.h.b16 %v1133
  %v4423 = vunpack.c.l.b16 %v1134
  %v4424 = vunpack.c.h.b16 %v1134
  %v4425 = vunpack.c.l.b16 %v1135
  %v4426 = vunpack.c.h.b16 %v1135
  %v4427 = vunpack.c.l.b16 %v1136
  %v4428 = vunpack.c.h.b16 %v1136
  %v4429 = vunpack.c.l.b16 %v1137
  %v4430 = vunpack.c.h.b16 %v1137
  %v4431 = vunpack.c.l.b16 %v1138
  %v4432 = vunpack.c.h.b16 %v1138
  %v4433 = vunpack.c.l.b16 %v1139
  %v4434 = vunpack.c.h.b16 %v1139
  %v4435 = vunpack.c.l.b16 %v1140
  %v4436 = vunpack.c.h.b16 %v1140
  %v4437 = vunpack.c.l.b16 %v1141
  %v4438 = vunpack.c.h.b16 %v1141
  %v4439 = vunpack.c.l.b16 %v1142
  %v4440 = vunpack.c.h.b16 %v1142
  %v4441 = vunpack.c.l.b16 %v1143
  %v4442 = vunpack.c.h.b16 %v1143
  %v4443 = vunpack.c.l.b16 %v1144
  %v4444 = vunpack.c.h.b16 %v1144
  %v4445 = vunpack.c.l.b16 %v1145
  %v4446 = vunpack.c.h.b16 %v1145
  %v4447 = vunpack.c.l.b16 %v1146
  %v4448 = vunpack.c.h.b16 %v1146
  %v4449 = vunpack.c.l.b16 %v1147
  %v4450 = vunpack.c.h.b16 %v1147
  %v4451 = vunpack.c.l.b16 %v1148
  %v4452 = vunpack.c.h.b16 %v1148
  %v4453 = vunpack.c.l.b16 %v1149
  %v4454 = vunpack.c.h.b16 %v1149
  %v4455 = vunpack.c.l.b16 %v1150
  %v4456 = vunpack.c.h.b16 %v1150
  %v4457 = vpack.c.b16 %v2289, %v2281
  %v4458 = vpack.c.b16 %v2290, %v2282
  %v4459 = vpack.c.b16 %v2291, %v2283
  %v4460 = vpack.c.b16 %v2292, %v2284
  %v4461 = vpack.c.b16 %v2293, %v2285
  %v4462 = vpack.c.b16 %v2294, %v2286
  %v4463 = vpack.c.b16 %v2295, %v2287
  %v4464 = vpack.c.b16 %v2296, %v2288
  %v4465 = vpack.c.b16 %v2305, %v2297
  %v4466 = vpack.c.b16 %v2306, %v2298
  %v4467 = vpack.c.b16 %v2307, %v2299
  %v4468 = vpack.c.b16 %v2308, %v2300
  %v4469 = vpack.c.b16 %v2309, %v2301
  %v4470 = vpack.c.b16 %v2310, %v2302
  %v4471 = vpack.c.b16 %v2311, %v2303
  %v4472 = vpack.c.b16 %v2312, %v2304
  %v4473 = vpack.c.b16 %v2321, %v2313
  %v4474 = vpack.c.b16 %v2322, %v2314
  %v4475 = vpack.c.b16 %v2323, %v2315
  %v4476 = vpack.c.b16 %v2324, %v2316
  %v4477 = vpack.c.b16 %v2325, %v2317
  %v4478 = vpack.c.b16 %v2326, %v2318
  %v4479 = vpack.c.b16 %v2327, %v2319
  %v4480 = vpack.c.b16 %v2328, %v2320
  %v4481 = vpack.c.b16 %v2337, %v2329
  %v4482 = vpack.c.b16 %v2338, %v2330
  %v4483 = vpack.c.b16 %v2339, %v2331
  %v4484 = vpack.c.b16 %v2340, %v2332
  %v4485 = vpack.c.b16 %v2341, %v2333
  %v4486 = vpack.c.b16 %v2342, %v2334
  %v4487 = vpack.c.b16 %v2343, %v2335
  %v4488 = vpack.c.b16 %v2344, %v2336
  %v4489 = vpack.c.b16 %v2353, %v2345
  %v4490 = vpack.c.b16 %v2354, %v2346
  %v4491 = vpack.c.b16 %v2355, %v2347
  %v4492 = vpack.c.b16 %v2356, %v2348
  %v4493 = vpack.c.b16 %v2357, %v2349
  %v4494 = vpack.c.b16 %v2358, %v2350
  %v4495 = vpack.c.b16 %v2359, %v2351
  %v4496 = vpack.c.b16 %v2360, %v2352
  %v4497 = vpack.c.b16 %v2369, %v2361
  %v4498 = vpack.c.b16 %v2370, %v2362
  %v4499 = vpack.c.b16 %v2371, %v2363
  %v4500 = vpack.c.b16 %v2372, %v2364
  %v4501 = vpack.c.b16 %v2373, %v2365
  %v4502 = vpack.c.b16 %v2374, %v2366
  %v4503 = vpack.c.b16 %v2375, %v2367
  %v4504 = vpack.c.b16 %v2376, %v2368
  %v4505 = vpack.c.b16 %v2385, %v2377
  %v4506 = vpack.c.b16 %v2386, %v2378
  %v4507 = vpack.c.b16 %v2387, %v2379
  %v4508 = vpack.c.b16 %v2388, %v2380
  %v4509 = vpack.c.b16 %v2389, %v2381
  %v4510 = vpack.c.b16 %v2390, %v2382
  %v4511 = vpack.c.b16 %v2391, %v2383
  %v4512 = vpack.c.b16 %v2392, %v2384
  %v4513 = vpack.c.b16 %v2401, %v2393
  %v4514 = vpack.c.b16 %v2402, %v2394
  %v4515 = vpack.c.b16 %v2403, %v2395
  %v4516 = vpack.c.b16 %v2404, %v2396
  %v4517 = vpack.c.b16 %v2405, %v2397
  %v4518 = vpack.c.b16 %v2406, %v2398
  %v4519 = vpack.c.b16 %v2407, %v2399
  %v4520 = vpack.c.b16 %v2408, %v2400
  %v4521 = vpack.c.b16 %v2417, %v2409
  %v4522 = vpack.c.b16 %v2418, %v2410
  %v4523 = vpack.c.b16 %v2419, %v2411
  %v4524 = vpack.c.b16 %v2420, %v2412
  %v4525 = vpack.c.b16 %v2421, %v2413
  %v4526 = vpack.c.b16 %v2422, %v2414
  %v4527 = vpack.c.b16 %v2423, %v2415
  %v4528 = vpack.c.b16 %v2424, %v2416
  %v4529 = vpack.c.b16 %v2433, %v2425
  %v4530 = vpack.c.b16 %v2434, %v2426
  %v4531 = vpack.c.b16 %v2435, %v2427
  %v4532 = vpack.c.b16 %v2436, %v2428
  %v4533 = vpack.c.b16 %v2437, %v2429
  %v4534 = vpack.c.b16 %v2438, %v2430
  %v4535 = vpack.c.b16 %v2439, %v2431
  %v4536 = vpack.c.b16 %v2440, %v2432
  %v4537 = vpack.c.b16 %v2449, %v2441
  %v4538 = vpack.c.b16 %v2450, %v2442
  %v4539 = vpack.c.b16 %v2451, %v2443
  %v4540 = vpack.c.b16 %v2452, %v2444
  %v4541 = vpack.c.b16 %v2453, %v2445
  %v4542 = vpack.c.b16 %v2454, %v2446
  %v4543 = vpack.c.b16 %v2455, %v2447
  %v4544 = vpack.c.b16 %v2456, %v2448
  %v4545 = vpack.c.b16 %v2465, %v2457
  %v4546 = vpack.c.b16 %v2466, %v2458
  %v4547 = vpack.c.b16 %v2467, %v2459
  %v4548 = vpack.c.b16 %v2468, %v2460
  %v4549 = vpack.c.b16 %v2469, %v2461
  %v4550 = vpack.c.b16 %v2470, %v2462
  %v4551 = vpack.c.b16 %v2471, %v2463
  %v4552 = vpack.c.b16 %v2472, %v2464
  %v4553 = vpack.c.b16 %v2481, %v2473
  %v4554 = vpack.c.b16 %v2482, %v2474
  %v4555 = vpack.c.b16 %v2483, %v2475
  %v4556 = vpack.c.b16 %v2484, %v2476
  %v4557 = vpack.c.b16 %v2485, %v2477
  %v4558 = vpack.c.b16 %v2486, %v2478
  %v4559 = vpack.c.b16 %v2487, %v2479
  %v4560 = vpack.c.b16 %v2488, %v2480
  %v4561 = vpack.c.b16 %v2497, %v2489
  %v4562 = vpack.c.b16 %v2498, %v2490
  %v4563 = vpack.c.b16 %v2499, %v2491
  %v4564 = vpack.c.b16 %v2500, %v2492
  %v4565 = vpack.c.b16 %v2501, %v2493
  %v4566 = vpack.c.b16 %v2502, %v2494
  %v4567 = vpack.c.b16 %v2503, %v2495
  %v4568 = vpack.c.b16 %v2504, %v2496
  %v4569 = vpack.c.b16 %v2513, %v2505
  %v4570 = vpack.c.b16 %v2514, %v2506
  %v4571 = vpack.c.b16 %v2515, %v2507
  %v4572 = vpack.c.b16 %v2516, %v2508
  %v4573 = vpack.c.b16 %v2517, %v2509
  %v4574 = vpack.c.b16 %v2518, %v2510
  %v4575 = vpack.c.b16 %v2519, %v2511
  %v4576 = vpack.c.b16 %v2520, %v2512
  %v4577 = vpack.c.b16 %v2529, %v2521
  %v4578 = vpack.c.b16 %v2530, %v2522
  %v4579 = vpack.c.b16 %v2531, %v2523
  %v4580 = vpack.c.b16 %v2532, %v2524
  %v4581 = vpack.c.b16 %v2533, %v2525
  %v4582 = vpack.c.b16 %v2534, %v2526
  %v4583 = vpack.c.b16 %v2535, %v2527
  %v4584 = vpack.c.b16 %v2536, %v2528
  %v4585 = vpack.c.b16 %v2545, %v2537
  %v4586 = vpack.c.b16 %v2546, %v2538
  %v4587 = vpack.c.b16 %v2547, %v2539
  %v4588 = vpack.c.b16 %v2548, %v2540
  %v4589 = vpack.c.b16 %v2549, %v2541
  %v4590 = vpack.c.b16 %v2550, %v2542
  %v4591 = vpack.c.b16 %v2551, %v2543
  %v4592 = vpack.c.b16 %v2552, %v2544
  %v4593 = vpack.c.b16 %v2561, %v2553
  %v4594 = vpack.c.b16 %v2562, %v2554
  %v4595 = vpack.c.b16 %v2563, %v2555
  %v4596 = vpack.c.b16 %v2564, %v2556
  %v4597 = vpack.c.b16 %v2565, %v2557
  %v4598 = vpack.c.b16 %v2566, %v2558
  %v4599 = vpack.c.b16 %v2567, %v2559
  %v4600 = vpack.c.b16 %v2568, %v2560
  %v4601 = vpack.c.b16 %v2577, %v2569
  %v4602 = vpack.c.b16 %v2578, %v2570
  %v4603 = vpack.c.b16 %v2579, %v2571
  %v4604 = vpack.c.b16 %v2580, %v2572
  %v4605 = vpack.c.b16 %v2581, %v2573
  %v4606 = vpack.c.b16 %v2582, %v2574
  %v4607 = vpack.c.b16 %v2583, %v2575
  %v4608 = vpack.c.b16 %v2584, %v2576
  %v4609 = vpack.c.b16 %v2593, %v2585
  %v4610 = vpack.c.b16 %v2594, %v2586
  %v4611 = vpack.c.b16 %v2595, %v2587
  %v4612 = vpack.c.b16 %v2596, %v2588
  %v4613 = vpack.c.b16 %v2597, %v2589
  %v4614 = vpack.c.b16 %v2598, %v2590
  %v4615 = vpack.c.b16 %v2599, %v2591
  %v4616 = vpack.c.b16 %v2600, %v2592
  %v4617 = vpack.c.b16 %v2609, %v2601
  %v4618 = vpack.c.b16 %v2610, %v2602
  %v4619 = vpack.c.b16 %v2611, %v2603
  %v4620 = vpack.c.b16 %v2612, %v2604
  %v4621 = vpack.c.b16 %v2613, %v2605
  %v4622 = vpack.c.b16 %v2614, %v2606
  %v4623 = vpack.c.b16 %v2615, %v2607
  %v4624 = vpack.c.b16 %v2616, %v2608
  %v4625 = vpack.c.b16 %v2625, %v2617
  %v4626 = vpack.c.b16 %v2626, %v2618
  %v4627 = vpack.c.b16 %v2627, %v2619
  %v4628 = vpack.c.b16 %v2628, %v2620
  %v4629 = vpack.c.b16 %v2629, %v2621
  %v4630 = vpack.c.b16 %v2630, %v2622
  %v4631 = vpack.c.b16 %v2631, %v2623
  %v4632 = vpack.c.b16 %v2632, %v2624
  %v4633 = vpack.c.b16 %v2641, %v2633
  %v4634 = vpack.c.b16 %v2642, %v2634
  %v4635 = vpack.c.b16 %v2643, %v2635
  %v4636 = vpack.c.b16 %v2644, %v2636
  %v4637 = vpack.c.b16 %v2645, %v2637
  %v4638 = vpack.c.b16 %v2646, %v2638
  %v4639 = vpack.c.b16 %v2647, %v2639
  %v4640 = vpack.c.b16 %v2648, %v2640
  %v4641 = vpack.c.b16 %v2657, %v2649
  %v4642 = vpack.c.b16 %v2658, %v2650
  %v4643 = vpack.c.b16 %v2659, %v2651
  %v4644 = vpack.c.b16 %v2660, %v2652
  %v4645 = vpack.c.b16 %v2661, %v2653
  %v4646 = vpack.c.b16 %v2662, %v2654
  %v4647 = vpack.c.b16 %v2663, %v2655
  %v4648 = vpack.c.b16 %v2664, %v2656
  %v4649 = vpack.c.b16 %v2673, %v2665
  %v4650 = vpack.c.b16 %v2674, %v2666
  %v4651 = vpack.c.b16 %v2675, %v2667
  %v4652 = vpack.c.b16 %v2676, %v2668
  %v4653 = vpack.c.b16 %v2677, %v2669
  %v4654 = vpack.c.b16 %v2678, %v2670
  %v4655 = vpack.c.b16 %v2679, %v2671
  %v4656 = vpack.c.b16 %v2680, %v2672
  %v4657 = vpack.c.b16 %v2689, %v2681
  %v4658 = vpack.c.b16 %v2690, %v2682
  %v4659 = vpack.c.b16 %v2691, %v2683
  %v4660 = vpack.c.b16 %v2692, %v2684
  %v4661 = vpack.c.b16 %v2693, %v2685
  %v4662 = vpack.c.b16 %v2694, %v2686
  %v4663 = vpack.c.b16 %v2695, %v2687
  %v4664 = vpack.c.b16 %v2696, %v2688
  %v4665 = vpack.c.b16 %v2705, %v2697
  %v4666 = vpack.c.b16 %v2706, %v2698
  %v4667 = vpack.c.b16 %v2707, %v2699
  %v4668 = vpack.c.b16 %v2708, %v2700
  %v4669 = vpack.c.b16 %v2709, %v2701
  %v4670 = vpack.c.b16 %v2710, %v2702
  %v4671 = vpack.c.b16 %v2711, %v2703
  %v4672 = vpack.c.b16 %v2712, %v2704
  %v4673 = vpack.c.b16 %v2721, %v2713
  %v4674 = vpack.c.b16 %v2722, %v2714
  %v4675 = vpack.c.b16 %v2723, %v2715
  %v4676 = vpack.c.b16 %v2724, %v2716
  %v4677 = vpack.c.b16 %v2725, %v2717
  %v4678 = vpack.c.b16 %v2726, %v2718
  %v4679 = vpack.c.b16 %v2727, %v2719
  %v4680 = vpack.c.b16 %v2728, %v2720
  %v4681 = vpack.c.b16 %v2737, %v2729
  %v4682 = vpack.c.b16 %v2738, %v2730
  %v4683 = vpack.c.b16 %v2739, %v2731
  %v4684 = vpack.c.b16 %v2740, %v2732
  %v4685 = vpack.c.b16 %v2741, %v2733
  %v4686 = vpack.c.b16 %v2742, %v2734
  %v4687 = vpack.c.b16 %v2743, %v2735
  %v4688 = vpack.c.b16 %v2744, %v2736
  %v4689 = vpack.c.b16 %v2753, %v2745
  %v4690 = vpack.c.b16 %v2754, %v2746
  %v4691 = vpack.c.b16 %v2755, %v2747
  %v4692 = vpack.c.b16 %v2756, %v2748
  %v4693 = vpack.c.b16 %v2757, %v2749
  %v4694 = vpack.c.b16 %v2758, %v2750
  %v4695 = vpack.c.b16 %v2759, %v2751
  %v4696 = vpack.c.b16 %v2760, %v2752
  %v4697 = vpack.c.b16 %v2769, %v2761
  %v4698 = vpack.c.b16 %v2770, %v2762
  %v4699 = vpack.c.b16 %v2771, %v2763
  %v4700 = vpack.c.b16 %v2772, %v2764
  %v4701 = vpack.c.b16 %v2773, %v2765
  %v4702 = vpack.c.b16 %v2774, %v2766
  %v4703 = vpack.c.b16 %v2775, %v2767
  %v4704 = vpack.c.b16 %v2776, %v2768
  %v4705 = vpack.c.b16 %v2785, %v2777
  %v4706 = vpack.c.b16 %v2786, %v2778
  %v4707 = vpack.c.b16 %v2787, %v2779
  %v4708 = vpack.c.b16 %v2788, %v2780
  %v4709 = vpack.c.b16 %v2789, %v2781
  %v4710 = vpack.c.b16 %v2790, %v2782
  %v4711 = vpack.c.b16 %v2791, %v2783
  %v4712 = vpack.c.b16 %v2792, %v2784
  %v4713 = vpack.c.b16 %v2801, %v2793
  %v4714 = vpack.c.b16 %v2802, %v2794
  %v4715 = vpack.c.b16 %v2803, %v2795
  %v4716 = vpack.c.b16 %v2804, %v2796
  %v4717 = vpack.c.b16 %v2805, %v2797
  %v4718 = vpack.c.b16 %v2806, %v2798
  %v4719 = vpack.c.b16 %v2807, %v2799
  %v4720 = vpack.c.b16 %v2808, %v2800
  %v4721 = vpack.c.b16 %v2817, %v2809
  %v4722 = vpack.c.b16 %v2818, %v2810
  %v4723 = vpack.c.b16 %v2819, %v2811
  %v4724 = vpack.c.b16 %v2820, %v2812
  %v4725 = vpack.c.b16 %v2821, %v2813
  %v4726 = vpack.c.b16 %v2822, %v2814
  %v4727 = vpack.c.b16 %v2823, %v2815
  %v4728 = vpack.c.b16 %v2824, %v2816
  %v4729 = vpack.c.b16 %v2833, %v2825
  %v4730 = vpack.c.b16 %v2834, %v2826
  %v4731 = vpack.c.b16 %v2835, %v2827
  %v4732 = vpack.c.b16 %v2836, %v2828
  %v4733 = vpack.c.b16 %v2837, %v2829
  %v4734 = vpack.c.b16 %v2838, %v2830
  %v4735 = vpack.c.b16 %v2839, %v2831
  %v4736 = vpack.c.b16 %v2840, %v2832
  %v4737 = vpack.c.b16 %v2849, %v2841
  %v4738 = vpack.c.b16 %v2850, %v2842
  %v4739 = vpack.c.b16 %v2851, %v2843
  %v4740 = vpack.c.b16 %v2852, %v2844
  %v4741 = vpack.c.b16 %v2853, %v2845
  %v4742 = vpack.c.b16 %v2854, %v2846
  %v4743 = vpack.c.b16 %v2855, %v2847
  %v4744 = vpack.c.b16 %v2856, %v2848
  %v4745 = vpack.c.b16 %v2865, %v2857
  %v4746 = vpack.c.b16 %v2866, %v2858
  %v4747 = vpack.c.b16 %v2867, %v2859
  %v4748 = vpack.c.b16 %v2868, %v2860
  %v4749 = vpack.c.b16 %v2869, %v2861
  %v4750 = vpack.c.b16 %v2870, %v2862
  %v4751 = vpack.c.b16 %v2871, %v2863
  %v4752 = vpack.c.b16 %v2872, %v2864
  %v4753 = vpack.c.b16 %v2881, %v2873
  %v4754 = vpack.c.b16 %v2882, %v2874
  %v4755 = vpack.c.b16 %v2883, %v2875
  %v4756 = vpack.c.b16 %v2884, %v2876
  %v4757 = vpack.c.b16 %v2885, %v2877
  %v4758 = vpack.c.b16 %v2886, %v2878
  %v4759 = vpack.c.b16 %v2887, %v2879
  %v4760 = vpack.c.b16 %v2888, %v2880
  %v4761 = vpack.c.b16 %v2897, %v2889
  %v4762 = vpack.c.b16 %v2898, %v2890
  %v4763 = vpack.c.b16 %v2899, %v2891
  %v4764 = vpack.c.b16 %v2900, %v2892
  %v4765 = vpack.c.b16 %v2901, %v2893
  %v4766 = vpack.c.b16 %v2902, %v2894
  %v4767 = vpack.c.b16 %v2903, %v2895
  %v4768 = vpack.c.b16 %v2904, %v2896
  %v4769 = vpack.c.b16 %v2913, %v2905
  %v4770 = vpack.c.b16 %v2914, %v2906
  %v4771 = vpack.c.b16 %v2915, %v2907
  %v4772 = vpack.c.b16 %v2916, %v2908
  %v4773 = vpack.c.b16 %v2917, %v2909
  %v4774 = vpack.c.b16 %v2918, %v2910
  %v4775 = vpack.c.b16 %v2919, %v2911
  %v4776 = vpack.c.b16 %v2920, %v2912
  %v4777 = vpack.c.b16 %v2929, %v2921
  %v4778 = vpack.c.b16 %v2930, %v2922
  %v4779 = vpack.c.b16 %v2931, %v2923
  %v4780 = vpack.c.b16 %v2932, %v2924
  %v4781 = vpack.c.b16 %v2933, %v2925
  %v4782 = vpack.c.b16 %v2934, %v2926
  %v4783 = vpack.c.b16 %v2935, %v2927
  %v4784 = vpack.c.b16 %v2936, %v2928
  %v4785 = vpack.c.b16 %v2945, %v2937
  %v4786 = vpack.c.b16 %v2946, %v2938
  %v4787 = vpack.c.b16 %v2947, %v2939
  %v4788 = vpack.c.b16 %v2948, %v2940
  %v4789 = vpack.c.b16 %v2949, %v2941
  %v4790 = vpack.c.b16 %v2950, %v2942
  %v4791 = vpack.c.b16 %v2951, %v2943
  %v4792 = vpack.c.b16 %v2952, %v2944
  %v4793 = vpack.c.b16 %v2961, %v2953
  %v4794 = vpack.c.b16 %v2962, %v2954
  %v4795 = vpack.c.b16 %v2963, %v2955
  %v4796 = vpack.c.b16 %v2964, %v2956
  %v4797 = vpack.c.b16 %v2965, %v2957
  %v4798 = vpack.c.b16 %v2966, %v2958
  %v4799 = vpack.c.b16 %v2967, %v2959
  %v4800 = vpack.c.b16 %v2968, %v2960
  %v4801 = vpack.c.b16 %v2977, %v2969
  %v4802 = vpack.c.b16 %v2978, %v2970
  %v4803 = vpack.c.b16 %v2979, %v2971
  %v4804 = vpack.c.b16 %v2980, %v2972
  %v4805 = vpack.c.b16 %v2981, %v2973
  %v4806 = vpack.c.b16 %v2982, %v2974
  %v4807 = vpack.c.b16 %v2983, %v2975
  %v4808 = vpack.c.b16 %v2984, %v2976
  %v4809 = vpack.c.b16 %v2993, %v2985
  %v4810 = vpack.c.b16 %v2994, %v2986
  %v4811 = vpack.c.b16 %v2995, %v2987
  %v4812 = vpack.c.b16 %v2996, %v2988
  %v4813 = vpack.c.b16 %v2997, %v2989
  %v4814 = vpack.c.b16 %v2998, %v2990
  %v4815 = vpack.c.b16 %v2999, %v2991
  %v4816 = vpack.c.b16 %v3000, %v2992
  %v4817 = vpack.c.b16 %v3009, %v3001
  %v4818 = vpack.c.b16 %v3010, %v3002
  %v4819 = vpack.c.b16 %v3011, %v3003
  %v4820 = vpack.c.b16 %v3012, %v3004
  %v4821 = vpack.c.b16 %v3013, %v3005
  %v4822 = vpack.c.b16 %v3014, %v3006
  %v4823 = vpack.c.b16 %v3015, %v3007
  %v4824 = vpack.c.b16 %v3016, %v3008
  %v4825 = vpack.c.b16 %v3025, %v3017
  %v4826 = vpack.c.b16 %v3026, %v3018
  %v4827 = vpack.c.b16 %v3027, %v3019
  %v4828 = vpack.c.b16 %v3028, %v3020
  %v4829 = vpack.c.b16 %v3029, %v3021
  %v4830 = vpack.c.b16 %v3030, %v3022
  %v4831 = vpack.c.b16 %v3031, %v3023
  %v4832 = vpack.c.b16 %v3032, %v3024
  %v4833 = vpack.c.b16 %v3041, %v3033
  %v4834 = vpack.c.b16 %v3042, %v3034
  %v4835 = vpack.c.b16 %v3043, %v3035
  %v4836 = vpack.c.b16 %v3044, %v3036
  %v4837 = vpack.c.b16 %v3045, %v3037
  %v4838 = vpack.c.b16 %v3046, %v3038
  %v4839 = vpack.c.b16 %v3047, %v3039
  %v4840 = vpack.c.b16 %v3048, %v3040
  %v4841 = vpack.c.b16 %v3057, %v3049
  %v4842 = vpack.c.b16 %v3058, %v3050
  %v4843 = vpack.c.b16 %v3059, %v3051
  %v4844 = vpack.c.b16 %v3060, %v3052
  %v4845 = vpack.c.b16 %v3061, %v3053
  %v4846 = vpack.c.b16 %v3062, %v3054
  %v4847 = vpack.c.b16 %v3063, %v3055
  %v4848 = vpack.c.b16 %v3064, %v3056
  %v4849 = vpack.c.b16 %v3073, %v3065
  %v4850 = vpack.c.b16 %v3074, %v3066
  %v4851 = vpack.c.b16 %v3075, %v3067
  %v4852 = vpack.c.b16 %v3076, %v3068
  %v4853 = vpack.c.b16 %v3077, %v3069
  %v4854 = vpack.c.b16 %v3078, %v3070
  %v4855 = vpack.c.b16 %v3079, %v3071
  %v4856 = vpack.c.b16 %v3080, %v3072
  %v4857 = vpack.c.b16 %v3089, %v3081
  %v4858 = vpack.c.b16 %v3090, %v3082
  %v4859 = vpack.c.b16 %v3091, %v3083
  %v4860 = vpack.c.b16 %v3092, %v3084
  %v4861 = vpack.c.b16 %v3093, %v3085
  %v4862 = vpack.c.b16 %v3094, %v3086
  %v4863 = vpack.c.b16 %v3095, %v3087
  %v4864 = vpack.c.b16 %v3096, %v3088
  %v4865 = vpack.c.b16 %v3105, %v3097
  %v4866 = vpack.c.b16 %v3106, %v3098
  %v4867 = vpack.c.b16 %v3107, %v3099
  %v4868 = vpack.c.b16 %v3108, %v3100
  %v4869 = vpack.c.b16 %v3109, %v3101
  %v4870 = vpack.c.b16 %v3110, %v3102
  %v4871 = vpack.c.b16 %v3111, %v3103
  %v4872 = vpack.c.b16 %v3112, %v3104
  %v4873 = vpack.c.b16 %v3121, %v3113
  %v4874 = vpack.c.b16 %v3122, %v3114
  %v4875 = vpack.c.b16 %v3123, %v3115
  %v4876 = vpack.c.b16 %v3124, %v3116
  %v4877 = vpack.c.b16 %v3125, %v3117
  %v4878 = vpack.c.b16 %v3126, %v3118
  %v4879 = vpack.c.b16 %v3127, %v3119
  %v4880 = vpack.c.b16 %v3128, %v3120
  %v4881 = vpack.c.b16 %v3137, %v3129
  %v4882 = vpack.c.b16 %v3138, %v3130
  %v4883 = vpack.c.b16 %v3139, %v3131
  %v4884 = vpack.c.b16 %v3140, %v3132
  %v4885 = vpack.c.b16 %v3141, %v3133
  %v4886 = vpack.c.b16 %v3142, %v3134
  %v4887 = vpack.c.b16 %v3143, %v3135
  %v4888 = vpack.c.b16 %v3144, %v3136
  %v4889 = vpack.c.b16 %v3153, %v3145
  %v4890 = vpack.c.b16 %v3154, %v3146
  %v4891 = vpack.c.b16 %v3155, %v3147
  %v4892 = vpack.c.b16 %v3156, %v3148
  %v4893 = vpack.c.b16 %v3157, %v3149
  %v4894 = vpack.c.b16 %v3158, %v3150
  %v4895 = vpack.c.b16 %v3159, %v3151
  %v4896 = vpack.c.b16 %v3160, %v3152
  %v4897 = vpack.c.b16 %v3169, %v3161
  %v4898 = vpack.c.b16 %v3170, %v3162
  %v4899 = vpack.c.b16 %v3171, %v3163
  %v4900 = vpack.c.b16 %v3172, %v3164
  %v4901 = vpack.c.b16 %v3173, %v3165
  %v4902 = vpack.c.b16 %v3174, %v3166
  %v4903 = vpack.c.b16 %v3175, %v3167
  %v4904 = vpack.c.b16 %v3176, %v3168
  %v4905 = vpack.c.b16 %v3185, %v3177
  %v4906 = vpack.c.b16 %v3186, %v3178
  %v4907 = vpack.c.b16 %v3187, %v3179
  %v4908 = vpack.c.b16 %v3188, %v3180
  %v4909 = vpack.c.b16 %v3189, %v3181
  %v4910 = vpack.c.b16 %v3190, %v3182
  %v4911 = vpack.c.b16 %v3191, %v3183
  %v4912 = vpack.c.b16 %v3192, %v3184
  %v4913 = vpack.c.b16 %v3201, %v3193
  %v4914 = vpack.c.b16 %v3202, %v3194
  %v4915 = vpack.c.b16 %v3203, %v3195
  %v4916 = vpack.c.b16 %v3204, %v3196
  %v4917 = vpack.c.b16 %v3205, %v3197
  %v4918 = vpack.c.b16 %v3206, %v3198
  %v4919 = vpack.c.b16 %v3207, %v3199
  %v4920 = vpack.c.b16 %v3208, %v3200
  %v4921 = vpack.c.b16 %v3217, %v3209
  %v4922 = vpack.c.b16 %v3218, %v3210
  %v4923 = vpack.c.b16 %v3219, %v3211
  %v4924 = vpack.c.b16 %v3220, %v3212
  %v4925 = vpack.c.b16 %v3221, %v3213
  %v4926 = vpack.c.b16 %v3222, %v3214
  %v4927 = vpack.c.b16 %v3223, %v3215
  %v4928 = vpack.c.b16 %v3224, %v3216
  %v4929 = vpack.c.b16 %v3233, %v3225
  %v4930 = vpack.c.b16 %v3234, %v3226
  %v4931 = vpack.c.b16 %v3235, %v3227
  %v4932 = vpack.c.b16 %v3236, %v3228
  %v4933 = vpack.c.b16 %v3237, %v3229
  %v4934 = vpack.c.b16 %v3238, %v3230
  %v4935 = vpack.c.b16 %v3239, %v3231
  %v4936 = vpack.c.b16 %v3240, %v3232
  %v4937 = vpack.c.b16 %v3249, %v3241
  %v4938 = vpack.c.b16 %v3250, %v3242
  %v4939 = vpack.c.b16 %v3251, %v3243
  %v4940 = vpack.c.b16 %v3252, %v3244
  %v4941 = vpack.c.b16 %v3253, %v3245
  %v4942 = vpack.c.b16 %v3254, %v3246
  %v4943 = vpack.c.b16 %v3255, %v3247
  %v4944 = vpack.c.b16 %v3256, %v3248
  %v4945 = vpack.c.b16 %v3265, %v3257
  %v4946 = vpack.c.b16 %v3266, %v3258
  %v4947 = vpack.c.b16 %v3267, %v3259
  %v4948 = vpack.c.b16 %v3268, %v3260
  %v4949 = vpack.c.b16 %v3269, %v3261
  %v4950 = vpack.c.b16 %v3270, %v3262
  %v4951 = vpack.c.b16 %v3271, %v3263
  %v4952 = vpack.c.b16 %v3272, %v3264
  %v4953 = vpack.c.b16 %v3281, %v3273
  %v4954 = vpack.c.b16 %v3282, %v3274
  %v4955 = vpack.c.b16 %v3283, %v3275
  %v4956 = vpack.c.b16 %v3284, %v3276
  %v4957 = vpack.c.b16 %v3285, %v3277
  %v4958 = vpack.c.b16 %v3286, %v3278
  %v4959 = vpack.c.b16 %v3287, %v3279
  %v4960 = vpack.c.b16 %v3288, %v3280
  %v4961 = vpack.c.b16 %v3297, %v3289
  %v4962 = vpack.c.b16 %v3298, %v3290
  %v4963 = vpack.c.b16 %v3299, %v3291
  %v4964 = vpack.c.b16 %v3300, %v3292
  %v4965 = vpack.c.b16 %v3301, %v3293
  %v4966 = vpack.c.b16 %v3302, %v3294
  %v4967 = vpack.c.b16 %v3303, %v3295
  %v4968 = vpack.c.b16 %v3304, %v3296
  %v4969 = vpack.c.b16 %v3313, %v3305
  %v4970 = vpack.c.b16 %v3314, %v3306
  %v4971 = vpack.c.b16 %v3315, %v3307
  %v4972 = vpack.c.b16 %v3316, %v3308
  %v4973 = vpack.c.b16 %v3317, %v3309
  %v4974 = vpack.c.b16 %v3318, %v3310
  %v4975 = vpack.c.b16 %v3319, %v3311
  %v4976 = vpack.c.b16 %v3320, %v3312
  %v4977 = vpack.c.b16 %v3329, %v3321
  %v4978 = vpack.c.b16 %v3330, %v3322
  %v4979 = vpack.c.b16 %v3331, %v3323
  %v4980 = vpack.c.b16 %v3332, %v3324
  %v4981 = vpack.c.b16 %v3333, %v3325
  %v4982 = vpack.c.b16 %v3334, %v3326
  %v4983 = vpack.c.b16 %v3335, %v3327
  %v4984 = vpack.c.b16 %v3336, %v3328
  %v4985 = vpack.c.b16 %v3345, %v3337
  %v4986 = vpack.c.b16 %v3346, %v3338
  %v4987 = vpack.c.b16 %v3347, %v3339
  %v4988 = vpack.c.b16 %v3348, %v3340
  %v4989 = vpack.c.b16 %v3349, %v3341
  %v4990 = vpack.c.b16 %v3350, %v3342
  %v4991 = vpack.c.b16 %v3351, %v3343
  %v4992 = vpack.c.b16 %v3352, %v3344
  %v4993 = vpack.c.b16 %v3361, %v3353
  %v4994 = vpack.c.b16 %v3362, %v3354
  %v4995 = vpack.c.b16 %v3363, %v3355
  %v4996 = vpack.c.b16 %v3364, %v3356
  %v4997 = vpack.c.b16 %v3365, %v3357
  %v4998 = vpack.c.b16 %v3366, %v3358
  %v4999 = vpack.c.b16 %v3367, %v3359
  %v5000 = vpack.c.b16 %v3368, %v3360
  %v5001 = vpack.c.b16 %v3377, %v3369
  %v5002 = vpack.c.b16 %v3378, %v3370
  %v5003 = vpack.c.b16 %v3379, %v3371
  %v5004 = vpack.c.b16 %v3380, %v3372
  %v5005 = vpack.c.b16 %v3381, %v3373
  %v5006 = vpack.c.b16 %v3382, %v3374
  %v5007 = vpack.c.b16 %v3383, %v3375
  %v5008 = vpack.c.b16 %v3384, %v3376
  %v5009 = vpack.c.b16 %v3393, %v3385
  %v5010 = vpack.c.b16 %v3394, %v3386
  %v5011 = vpack.c.b16 %v3395, %v3387
  %v5012 = vpack.c.b16 %v3396, %v3388
  %v5013 = vpack.c.b16 %v3397, %v3389
  %v5014 = vpack.c.b16 %v3398, %v3390
  %v5015 = vpack.c.b16 %v3399, %v3391
  %v5016 = vpack.c.b16 %v3400, %v3392
  %v5017 = vpack.c.b16 %v3409, %v3401
  %v5018 = vpack.c.b16 %v3410, %v3402
  %v5019 = vpack.c.b16 %v3411, %v3403
  %v5020 = vpack.c.b16 %v3412, %v3404
  %v5021 = vpack.c.b16 %v3413, %v3405
  %v5022 = vpack.c.b16 %v3414, %v3406
  %v5023 = vpack.c.b16 %v3415, %v3407
  %v5024 = vpack.c.b16 %v3416, %v3408
  %v5025 = vpack.c.b16 %v3425, %v3417
  %v5026 = vpack.c.b16 %v3426, %v3418
  %v5027 = vpack.c.b16 %v3427, %v3419
  %v5028 = vpack.c.b16 %v3428, %v3420
  %v5029 = vpack.c.b16 %v3429, %v3421
  %v5030 = vpack.c.b16 %v3430, %v3422
  %v5031 = vpack.c.b16 %v3431, %v3423
  %v5032 = vpack.c.b16 %v3432, %v3424
  %v5033 = vpack.c.b16 %v3441, %v3433
  %v5034 = vpack.c.b16 %v3442, %v3434
  %v5035 = vpack.c.b16 %v3443, %v3435
  %v5036 = vpack.c.b16 %v3444, %v3436
  %v5037 = vpack.c.b16 %v3445, %v3437
  %v5038 = vpack.c.b16 %v3446, %v3438
  %v5039 = vpack.c.b16 %v3447, %v3439
  %v5040 = vpack.c.b16 %v3448, %v3440
  %v5041 = vpack.c.b16 %v3457, %v3449
  %v5042 = vpack.c.b16 %v3458, %v3450
  %v5043 = vpack.c.b16 %v3459, %v3451
  %v5044 = vpack.c.b16 %v3460, %v3452
  %v5045 = vpack.c.b16 %v3461, %v3453
  %v5046 = vpack.c.b16 %v3462, %v3454
  %v5047 = vpack.c.b16 %v3463, %v3455
  %v5048 = vpack.c.b16 %v3464, %v3456
  %v5049 = vpack.c.b16 %v3473, %v3465
  %v5050 = vpack.c.b16 %v3474, %v3466
  %v5051 = vpack.c.b16 %v3475, %v3467
  %v5052 = vpack.c.b16 %v3476, %v3468
  %v5053 = vpack.c.b16 %v3477, %v3469
  %v5054 = vpack.c.b16 %v3478, %v3470
  %v5055 = vpack.c.b16 %v3479, %v3471
  %v5056 = vpack.c.b16 %v3480, %v3472
  %v5057 = vpack.c.b16 %v3489, %v3481
  %v5058 = vpack.c.b16 %v3490, %v3482
  %v5059 = vpack.c.b16 %v3491, %v3483
  %v5060 = vpack.c.b16 %v3492, %v3484
  %v5061 = vpack.c.b16 %v3493, %v3485
  %v5062 = vpack.c.b16 %v3494, %v3486
  %v5063 = vpack.c.b16 %v3495, %v3487
  %v5064 = vpack.c.b16 %v3496, %v3488
  %v5065 = vpack.c.b16 %v3505, %v3497
  %v5066 = vpack.c.b16 %v3506, %v3498
  %v5067 = vpack.c.b16 %v3507, %v3499
  %v5068 = vpack.c.b16 %v3508, %v3500
  %v5069 = vpack.c.b16 %v3509, %v3501
  %v5070 = vpack.c.b16 %v3510, %v3502
  %v5071 = vpack.c.b16 %v3511, %v3503
  %v5072 = vpack.c.b16 %v3512, %v3504
  %v5073 = vpack.c.b16 %v3521, %v3513
  %v5074 = vpack.c.b16 %v3522, %v3514
  %v5075 = vpack.c.b16 %v3523, %v3515
  %v5076 = vpack.c.b16 %v3524, %v3516
  %v5077 = vpack.c.b16 %v3525, %v3517
  %v5078 = vpack.c.b16 %v3526, %v3518
  %v5079 = vpack.c.b16 %v3527, %v3519
  %v5080 = vpack.c.b16 %v3528, %v3520
  %v5081 = vpack.c.b16 %v3537, %v3529
  %v5082 = vpack.c.b16 %v3538, %v3530
  %v5083 = vpack.c.b16 %v3539, %v3531
  %v5084 = vpack.c.b16 %v3540, %v3532
  %v5085 = vpack.c.b16 %v3541, %v3533
  %v5086 = vpack.c.b16 %v3542, %v3534
  %v5087 = vpack.c.b16 %v3543, %v3535
  %v5088 = vpack.c.b16 %v3544, %v3536
  %v5089 = vpack.c.b16 %v3553, %v3545
  %v5090 = vpack.c.b16 %v3554, %v3546
  %v5091 = vpack.c.b16 %v3555, %v3547
  %v5092 = vpack.c.b16 %v3556, %v3548
  %v5093 = vpack.c.b16 %v3557, %v3549
  %v5094 = vpack.c.b16 %v3558, %v3550
  %v5095 = vpack.c.b16 %v3559, %v3551
  %v5096 = vpack.c.b16 %v3560, %v3552
  %v5097 = vpack.c.b16 %v3569, %v3561
  %v5098 = vpack.c.b16 %v3570, %v3562
  %v5099 = vpack.c.b16 %v3571, %v3563
  %v5100 = vpack.c.b16 %v3572, %v3564
  %v5101 = vpack.c.b16 %v3573, %v3565
  %v5102 = vpack.c.b16 %v3574, %v3566
  %v5103 = vpack.c.b16 %v3575, %v3567
  %v5104 = vpack.c.b16 %v3576, %v3568
  %v5105 = vpack.c.b16 %v3585, %v3577
  %v5106 = vpack.c.b16 %v3586, %v3578
  %v5107 = vpack.c.b16 %v3587, %v3579
  %v5108 = vpack.c.b16 %v3588, %v3580
  %v5109 = vpack.c.b16 %v3589, %v3581
  %v5110 = vpack.c.b16 %v3590, %v3582
  %v5111 = vpack.c.b16 %v3591, %v3583
  %v5112 = vpack.c.b16 %v3592, %v3584
  %v5113 = vpack.c.b16 %v3601, %v3593
  %v5114 = vpack.c.b16 %v3602, %v3594
  %v5115 = vpack.c.b16 %v3603, %v3595
  %v5116 = vpack.c.b16 %v3604, %v3596
  %v5117 = vpack.c.b16 %v3605, %v3597
  %v5118 = vpack.c.b16 %v3606, %v3598
  %v5119 = vpack.c.b16 %v3607, %v3599
  %v5120 = vpack.c.b16 %v3608, %v3600
  %v5121 = vpack.c.b16 %v3617, %v3609
  %v5122 = vpack.c.b16 %v3618, %v3610
  %v5123 = vpack.c.b16 %v3619, %v3611
  %v5124 = vpack.c.b16 %v3620, %v3612
  %v5125 = vpack.c.b16 %v3621, %v3613
  %v5126 = vpack.c.b16 %v3622, %v3614
  %v5127 = vpack.c.b16 %v3623, %v3615
  %v5128 = vpack.c.b16 %v3624, %v3616
  %v5129 = vpack.c.b16 %v3633, %v3625
  %v5130 = vpack.c.b16 %v3634, %v3626
  %v5131 = vpack.c.b16 %v3635, %v3627
  %v5132 = vpack.c.b16 %v3636, %v3628
  %v5133 = vpack.c.b16 %v3637, %v3629
  %v5134 = vpack.c.b16 %v3638, %v3630
  %v5135 = vpack.c.b16 %v3639, %v3631
  %v5136 = vpack.c.b16 %v3640, %v3632
  %v5137 = vpack.c.b16 %v3649, %v3641
  %v5138 = vpack.c.b16 %v3650, %v3642
  %v5139 = vpack.c.b16 %v3651, %v3643
  %v5140 = vpack.c.b16 %v3652, %v3644
  %v5141 = vpack.c.b16 %v3653, %v3645
  %v5142 = vpack.c.b16 %v3654, %v3646
  %v5143 = vpack.c.b16 %v3655, %v3647
  %v5144 = vpack.c.b16 %v3656, %v3648
  %v5145 = vpack.c.b16 %v3665, %v3657
  %v5146 = vpack.c.b16 %v3666, %v3658
  %v5147 = vpack.c.b16 %v3667, %v3659
  %v5148 = vpack.c.b16 %v3668, %v3660
  %v5149 = vpack.c.b16 %v3669, %v3661
  %v5150 = vpack.c.b16 %v3670, %v3662
  %v5151 = vpack.c.b16 %v3671, %v3663
  %v5152 = vpack.c.b16 %v3672, %v3664
  %v5153 = vpack.c.b16 %v3681, %v3673
  %v5154 = vpack.c.b16 %v3682, %v3674
  %v5155 = vpack.c.b16 %v3683, %v3675
  %v5156 = vpack.c.b16 %v3684, %v3676
  %v5157 = vpack.c.b16 %v3685, %v3677
  %v5158 = vpack.c.b16 %v3686, %v3678
  %v5159 = vpack.c.b16 %v3687, %v3679
  %v5160 = vpack.c.b16 %v3688, %v3680
  %v5161 = vpack.c.b16 %v3697, %v3689
  %v5162 = vpack.c.b16 %v3698, %v3690
  %v5163 = vpack.c.b16 %v3699, %v3691
  %v5164 = vpack.c.b16 %v3700, %v3692
  %v5165 = vpack.c.b16 %v3701, %v3693
  %v5166 = vpack.c.b16 %v3702, %v3694
  %v5167 = vpack.c.b16 %v3703, %v3695
  %v5168 = vpack.c.b16 %v3704, %v3696
  %v5169 = vpack.c.b16 %v3713, %v3705
  %v5170 = vpack.c.b16 %v3714, %v3706
  %v5171 = vpack.c.b16 %v3715, %v3707
  %v5172 = vpack.c.b16 %v3716, %v3708
  %v5173 = vpack.c.b16 %v3717, %v3709
  %v5174 = vpack.c.b16 %v3718, %v3710
  %v5175 = vpack.c.b16 %v3719, %v3711
  %v5176 = vpack.c.b16 %v3720, %v3712
  %v5177 = vpack.c.b16 %v3729, %v3721
  %v5178 = vpack.c.b16 %v3730, %v3722
  %v5179 = vpack.c.b16 %v3731, %v3723
  %v5180 = vpack.c.b16 %v3732, %v3724
  %v5181 = vpack.c.b16 %v3733, %v3725
  %v5182 = vpack.c.b16 %v3734, %v3726
  %v5183 = vpack.c.b16 %v3735, %v3727
  %v5184 = vpack.c.b16 %v3736, %v3728
  %v5185 = vpack.c.b16 %v3745, %v3737
  %v5186 = vpack.c.b16 %v3746, %v3738
  %v5187 = vpack.c.b16 %v3747, %v3739
  %v5188 = vpack.c.b16 %v3748, %v3740
  %v5189 = vpack.c.b16 %v3749, %v3741
  %v5190 = vpack.c.b16 %v3750, %v3742
  %v5191 = vpack.c.b16 %v3751, %v3743
  %v5192 = vpack.c.b16 %v3752, %v3744
  %v5193 = vpack.c.b16 %v3761, %v3753
  %v5194 = vpack.c.b16 %v3762, %v3754
  %v5195 = vpack.c.b16 %v3763, %v3755
  %v5196 = vpack.c.b16 %v3764, %v3756
  %v5197 = vpack.c.b16 %v3765, %v3757
  %v5198 = vpack.c.b16 %v3766, %v3758
  %v5199 = vpack.c.b16 %v3767, %v3759
  %v5200 = vpack.c.b16 %v3768, %v3760
  %v5201 = vpack.c.b16 %v3777, %v3769
  %v5202 = vpack.c.b16 %v3778, %v3770
  %v5203 = vpack.c.b16 %v3779, %v3771
  %v5204 = vpack.c.b16 %v3780, %v3772
  %v5205 = vpack.c.b16 %v3781, %v3773
  %v5206 = vpack.c.b16 %v3782, %v3774
  %v5207 = vpack.c.b16 %v3783, %v3775
  %v5208 = vpack.c.b16 %v3784, %v3776
  %v5209 = vpack.c.b16 %v3793, %v3785
  %v5210 = vpack.c.b16 %v3794, %v3786
  %v5211 = vpack.c.b16 %v3795, %v3787
  %v5212 = vpack.c.b16 %v3796, %v3788
  %v5213 = vpack.c.b16 %v3797, %v3789
  %v5214 = vpack.c.b16 %v3798, %v3790
  %v5215 = vpack.c.b16 %v3799, %v3791
  %v5216 = vpack.c.b16 %v3800, %v3792
  %v5217 = vpack.c.b16 %v3809, %v3801
  %v5218 = vpack.c.b16 %v3810, %v3802
  %v5219 = vpack.c.b16 %v3811, %v3803
  %v5220 = vpack.c.b16 %v3812, %v3804
  %v5221 = vpack.c.b16 %v3813, %v3805
  %v5222 = vpack.c.b16 %v3814, %v3806
  %v5223 = vpack.c.b16 %v3815, %v3807
  %v5224 = vpack.c.b16 %v3816, %v3808
  %v5225 = vpack.c.b16 %v3825, %v3817
  %v5226 = vpack.c.b16 %v3826, %v3818
  %v5227 = vpack.c.b16 %v3827, %v3819
  %v5228 = vpack.c.b16 %v3828, %v3820
  %v5229 = vpack.c.b16 %v3829, %v3821
  %v5230 = vpack.c.b16 %v3830, %v3822
  %v5231 = vpack.c.b16 %v3831, %v3823
  %v5232 = vpack.c.b16 %v3832, %v3824
  %v5233 = vpack.c.b16 %v3841, %v3833
  %v5234 = vpack.c.b16 %v3842, %v3834
  %v5235 = vpack.c.b16 %v3843, %v3835
  %v5236 = vpack.c.b16 %v3844, %v3836
  %v5237 = vpack.c.b16 %v3845, %v3837
  %v5238 = vpack.c.b16 %v3846, %v3838
  %v5239 = vpack.c.b16 %v3847, %v3839
  %v5240 = vpack.c.b16 %v3848, %v3840
  %v5241 = vpack.c.b16 %v3857, %v3849
  %v5242 = vpack.c.b16 %v3858, %v3850
  %v5243 = vpack.c.b16 %v3859, %v3851
  %v5244 = vpack.c.b16 %v3860, %v3852
  %v5245 = vpack.c.b16 %v3861, %v3853
  %v5246 = vpack.c.b16 %v3862, %v3854
  %v5247 = vpack.c.b16 %v3863, %v3855
  %v5248 = vpack.c.b16 %v3864, %v3856
  %v5249 = vpack.c.b16 %v3873, %v3865
  %v5250 = vpack.c.b16 %v3874, %v3866
  %v5251 = vpack.c.b16 %v3875, %v3867
  %v5252 = vpack.c.b16 %v3876, %v3868
  %v5253 = vpack.c.b16 %v3877, %v3869
  %v5254 = vpack.c.b16 %v3878, %v3870
  %v5255 = vpack.c.b16 %v3879, %v3871
  %v5256 = vpack.c.b16 %v3880, %v3872
  %v5257 = vpack.c.b16 %v3889, %v3881
  %v5258 = vpack.c.b16 %v3890, %v3882
  %v5259 = vpack.c.b16 %v3891, %v3883
  %v5260 = vpack.c.b16 %v3892, %v3884
  %v5261 = vpack.c.b16 %v3893, %v3885
  %v5262 = vpack.c.b16 %v3894, %v3886
  %v5263 = vpack.c.b16 %v3895, %v3887
  %v5264 = vpack.c.b16 %v3896, %v3888
  %v5265 = vpack.c.b16 %v3905, %v3897
  %v5266 = vpack.c.b16 %v3906, %v3898
  %v5267 = vpack.c.b16 %v3907, %v3899
  %v5268 = vpack.c.b16 %v3908, %v3900
  %v5269 = vpack.c.b16 %v3909, %v3901
  %v5270 = vpack.c.b16 %v3910, %v3902
  %v5271 = vpack.c.b16 %v3911, %v3903
  %v5272 = vpack.c.b16 %v3912, %v3904
  %v5273 = vpack.c.b16 %v3921, %v3913
  %v5274 = vpack.c.b16 %v3922, %v3914
  %v5275 = vpack.c.b16 %v3923, %v3915
  %v5276 = vpack.c.b16 %v3924, %v3916
  %v5277 = vpack.c.b16 %v3925, %v3917
  %v5278 = vpack.c.b16 %v3926, %v3918
  %v5279 = vpack.c.b16 %v3927, %v3919
  %v5280 = vpack.c.b16 %v3928, %v3920
  %v5281 = vpack.c.b16 %v3937, %v3929
  %v5282 = vpack.c.b16 %v3938, %v3930
  %v5283 = vpack.c.b16 %v3939, %v3931
  %v5284 = vpack.c.b16 %v3940, %v3932
  %v5285 = vpack.c.b16 %v3941, %v3933
  %v5286 = vpack.c.b16 %v3942, %v3934
  %v5287 = vpack.c.b16 %v3943, %v3935
  %v5288 = vpack.c.b16 %v3944, %v3936
  %v5289 = vpack.c.b16 %v3953, %v3945
  %v5290 = vpack.c.b16 %v3954, %v3946
  %v5291 = vpack.c.b16 %v3955, %v3947
  %v5292 = vpack.c.b16 %v3956, %v3948
  %v5293 = vpack.c.b16 %v3957, %v3949
  %v5294 = vpack.c.b16 %v3958, %v3950
  %v5295 = vpack.c.b16 %v3959, %v3951
  %v5296 = vpack.c.b16 %v3960, %v3952
  %v5297 = vpack.c.b16 %v3969, %v3961
  %v5298 = vpack.c.b16 %v3970, %v3962
  %v5299 = vpack.c.b16 %v3971, %v3963
  %v5300 = vpack.c.b16 %v3972, %v3964
  %v5301 = vpack.c.b16 %v3973, %v3965
  %v5302 = vpack.c.b16 %v3974, %v3966
  %v5303 = vpack.c.b16 %v3975, %v3967
  %v5304 = vpack.c.b16 %v3976, %v3968
  %v5305 = vpack.c.b16 %v3985, %v3977
  %v5306 = vpack.c.b16 %v3986, %v3978
  %v5307 = vpack.c.b16 %v3987, %v3979
  %v5308 = vpack.c.b16 %v3988, %v3980
  %v5309 = vpack.c.b16 %v3989, %v3981
  %v5310 = vpack.c.b16 %v3990, %v3982
  %v5311 = vpack.c.b16 %v3991, %v3983
  %v5312 = vpack.c.b16 %v3992, %v3984
  %v5313 = vpack.c.b16 %v4001, %v3993
  %v5314 = vpack.c.b16 %v4002, %v3994
  %v5315 = vpack.c.b16 %v4003, %v3995
  %v5316 = vpack.c.b16 %v4004, %v3996
  %v5317 = vpack.c.b16 %v4005, %v3997
  %v5318 = vpack.c.b16 %v4006, %v3998
  %v5319 = vpack.c.b16 %v4007, %v3999
  %v5320 = vpack.c.b16 %v4008, %v4000
  %v5321 = vpack.c.b16 %v4017, %v4009
  %v5322 = vpack.c.b16 %v4018, %v4010
  %v5323 = vpack.c.b16 %v4019, %v4011
  %v5324 = vpack.c.b16 %v4020, %v4012
  %v5325 = vpack.c.b16 %v4021, %v4013
  %v5326 = vpack.c.b16 %v4022, %v4014
  %v5327 = vpack.c.b16 %v4023, %v4015
  %v5328 = vpack.c.b16 %v4024, %v4016
  %v5329 = vpack.c.b16 %v4033, %v4025
  %v5330 = vpack.c.b16 %v4034, %v4026
  %v5331 = vpack.c.b16 %v4035, %v4027
  %v5332 = vpack.c.b16 %v4036, %v4028
  %v5333 = vpack.c.b16 %v4037, %v4029
  %v5334 = vpack.c.b16 %v4038, %v4030
  %v5335 = vpack.c.b16 %v4039, %v4031
  %v5336 = vpack.c.b16 %v4040, %v4032
  %v5337 = vpack.c.b16 %v4049, %v4041
  %v5338 = vpack.c.b16 %v4050, %v4042
  %v5339 = vpack.c.b16 %v4051, %v4043
  %v5340 = vpack.c.b16 %v4052, %v4044
  %v5341 = vpack.c.b16 %v4053, %v4045
  %v5342 = vpack.c.b16 %v4054, %v4046
  %v5343 = vpack.c.b16 %v4055, %v4047
  %v5344 = vpack.c.b16 %v4056, %v4048
  %v5345 = vpack.c.b16 %v4065, %v4057
  %v5346 = vpack.c.b16 %v4066, %v4058
  %v5347 = vpack.c.b16 %v4067, %v4059
  %v5348 = vpack.c.b16 %v4068, %v4060
  %v5349 = vpack.c.b16 %v4069, %v4061
  %v5350 = vpack.c.b16 %v4070, %v4062
  %v5351 = vpack.c.b16 %v4071, %v4063
  %v5352 = vpack.c.b16 %v4072, %v4064
  %v5353 = vpack.c.b16 %v4081, %v4073
  %v5354 = vpack.c.b16 %v4082, %v4074
  %v5355 = vpack.c.b16 %v4083, %v4075
  %v5356 = vpack.c.b16 %v4084, %v4076
  %v5357 = vpack.c.b16 %v4085, %v4077
  %v5358 = vpack.c.b16 %v4086, %v4078
  %v5359 = vpack.c.b16 %v4087, %v4079
  %v5360 = vpack.c.b16 %v4088, %v4080
  %v5361 = vpack.c.b16 %v4097, %v4089
  %v5362 = vpack.c.b16 %v4098, %v4090
  %v5363 = vpack.c.b16 %v4099, %v4091
  %v5364 = vpack.c.b16 %v4100, %v4092
  %v5365 = vpack.c.b16 %v4101, %v4093
  %v5366 = vpack.c.b16 %v4102, %v4094
  %v5367 = vpack.c.b16 %v4103, %v4095
  %v5368 = vpack.c.b16 %v4104, %v4096
  %v5369 = vpack.c.b16 %v4113, %v4105
  %v5370 = vpack.c.b16 %v4114, %v4106
  %v5371 = vpack.c.b16 %v4115, %v4107
  %v5372 = vpack.c.b16 %v4116, %v4108
  %v5373 = vpack.c.b16 %v4117, %v4109
  %v5374 = vpack.c.b16 %v4118, %v4110
  %v5375 = vpack.c.b16 %v4119, %v4111
  %v5376 = vpack.c.b16 %v4120, %v4112
  %v5377 = vpack.c.b16 %v4129, %v4121
  %v5378 = vpack.c.b16 %v4130, %v4122
  %v5379 = vpack.c.b16 %v4131, %v4123
  %v5380 = vpack.c.b16 %v4132, %v4124
  %v5381 = vpack.c.b16 %v4133, %v4125
  %v5382 = vpack.c.b16 %v4134, %v4126
  %v5383 = vpack.c.b16 %v4135, %v4127
  %v5384 = vpack.c.b16 %v4136, %v4128
  %v5385 = vpack.c.b16 %v4145, %v4137
  %v5386 = vpack.c.b16 %v4146, %v4138
  %v5387 = vpack.c.b16 %v4147, %v4139
  %v5388 = vpack.c.b16 %v4148, %v4140
  %v5389 = vpack.c.b16 %v4149, %v4141
  %v5390 = vpack.c.b16 %v4150, %v4142
  %v5391 = vpack.c.b16 %v4151, %v4143
  %v5392 = vpack.c.b16 %v4152, %v4144
  %v5393 = vpack.c.b16 %v4161, %v4153
  %v5394 = vpack.c.b16 %v4162, %v4154
  %v5395 = vpack.c.b16 %v4163, %v4155
  %v5396 = vpack.c.b16 %v4164, %v4156
  %v5397 = vpack.c.b16 %v4165, %v4157
  %v5398 = vpack.c.b16 %v4166, %v4158
  %v5399 = vpack.c.b16 %v4167, %v4159
  %v5400 = vpack.c.b16 %v4168, %v4160
  %v5401 = vpack.c.b16 %v4177, %v4169
  %v5402 = vpack.c.b16 %v4178, %v4170
  %v5403 = vpack.c.b16 %v4179, %v4171
  %v5404 = vpack.c.b16 %v4180, %v4172
  %v5405 = vpack.c.b16 %v4181, %v4173
  %v5406 = vpack.c.b16 %v4182, %v4174
  %v5407 = vpack.c.b16 %v4183, %v4175
  %v5408 = vpack.c.b16 %v4184, %v4176
  %v5409 = vpack.c.b16 %v4193, %v4185
  %v5410 = vpack.c.b16 %v4194, %v4186
  %v5411 = vpack.c.b16 %v4195, %v4187
  %v5412 = vpack.c.b16 %v4196, %v4188
  %v5413 = vpack.c.b16 %v4197, %v4189
  %v5414 = vpack.c.b16 %v4198, %v4190
  %v5415 = vpack.c.b16 %v4199, %v4191
  %v5416 = vpack.c.b16 %v4200, %v4192
  %v5417 = vpack.c.b16 %v4209, %v4201
  %v5418 = vpack.c.b16 %v4210, %v4202
  %v5419 = vpack.c.b16 %v4211, %v4203
  %v5420 = vpack.c.b16 %v4212, %v4204
  %v5421 = vpack.c.b16 %v4213, %v4205
  %v5422 = vpack.c.b16 %v4214, %v4206
  %v5423 = vpack.c.b16 %v4215, %v4207
  %v5424 = vpack.c.b16 %v4216, %v4208
  %v5425 = vpack.c.b16 %v4225, %v4217
  %v5426 = vpack.c.b16 %v4226, %v4218
  %v5427 = vpack.c.b16 %v4227, %v4219
  %v5428 = vpack.c.b16 %v4228, %v4220
  %v5429 = vpack.c.b16 %v4229, %v4221
  %v5430 = vpack.c.b16 %v4230, %v4222
  %v5431 = vpack.c.b16 %v4231, %v4223
  %v5432 = vpack.c.b16 %v4232, %v4224
  %v5433 = vpack.c.b16 %v4241, %v4233
  %v5434 = vpack.c.b16 %v4242, %v4234
  %v5435 = vpack.c.b16 %v4243, %v4235
  %v5436 = vpack.c.b16 %v4244, %v4236
  %v5437 = vpack.c.b16 %v4245, %v4237
  %v5438 = vpack.c.b16 %v4246, %v4238
  %v5439 = vpack.c.b16 %v4247, %v4239
  %v5440 = vpack.c.b16 %v4248, %v4240
  %v5441 = vpack.c.b16 %v4257, %v4249
  %v5442 = vpack.c.b16 %v4258, %v4250
  %v5443 = vpack.c.b16 %v4259, %v4251
  %v5444 = vpack.c.b16 %v4260, %v4252
  %v5445 = vpack.c.b16 %v4261, %v4253
  %v5446 = vpack.c.b16 %v4262, %v4254
  %v5447 = vpack.c.b16 %v4263, %v4255
  %v5448 = vpack.c.b16 %v4264, %v4256
  %v5449 = vpack.c.b16 %v4273, %v4265
  %v5450 = vpack.c.b16 %v4274, %v4266
  %v5451 = vpack.c.b16 %v4275, %v4267
  %v5452 = vpack.c.b16 %v4276, %v4268
  %v5453 = vpack.c.b16 %v4277, %v4269
  %v5454 = vpack.c.b16 %v4278, %v4270
  %v5455 = vpack.c.b16 %v4279, %v4271
  %v5456 = vpack.c.b16 %v4280, %v4272
  %v5457 = vpack.c.b16 %v4289, %v4281
  %v5458 = vpack.c.b16 %v4290, %v4282
  %v5459 = vpack.c.b16 %v4291, %v4283
  %v5460 = vpack.c.b16 %v4292, %v4284
  %v5461 = vpack.c.b16 %v4293, %v4285
  %v5462 = vpack.c.b16 %v4294, %v4286
  %v5463 = vpack.c.b16 %v4295, %v4287
  %v5464 = vpack.c.b16 %v4296, %v4288
  %v5465 = vpack.c.b16 %v4305, %v4297
  %v5466 = vpack.c.b16 %v4306, %v4298
  %v5467 = vpack.c.b16 %v4307, %v4299
  %v5468 = vpack.c.b16 %v4308, %v4300
  %v5469 = vpack.c.b16 %v4309, %v4301
  %v5470 = vpack.c.b16 %v4310, %v4302
  %v5471 = vpack.c.b16 %v4311, %v4303
  %v5472 = vpack.c.b16 %v4312, %v4304
  %v5473 = vpack.c.b16 %v4321, %v4313
  %v5474 = vpack.c.b16 %v4322, %v4314
  %v5475 = vpack.c.b16 %v4323, %v4315
  %v5476 = vpack.c.b16 %v4324, %v4316
  %v5477 = vpack.c.b16 %v4325, %v4317
  %v5478 = vpack.c.b16 %v4326, %v4318
  %v5479 = vpack.c.b16 %v4327, %v4319
  %v5480 = vpack.c.b16 %v4328, %v4320
  %v5481 = vpack.c.b16 %v4337, %v4329
  %v5482 = vpack.c.b16 %v4338, %v4330
  %v5483 = vpack.c.b16 %v4339, %v4331
  %v5484 = vpack.c.b16 %v4340, %v4332
  %v5485 = vpack.c.b16 %v4341, %v4333
  %v5486 = vpack.c.b16 %v4342, %v4334
  %v5487 = vpack.c.b16 %v4343, %v4335
  %v5488 = vpack.c.b16 %v4344, %v4336
  %v5489 = vpack.c.b16 %v4353, %v4345
  %v5490 = vpack.c.b16 %v4354, %v4346
  %v5491 = vpack.c.b16 %v4355, %v4347
  %v5492 = vpack.c.b16 %v4356, %v4348
  %v5493 = vpack.c.b16 %v4357, %v4349
  %v5494 = vpack.c.b16 %v4358, %v4350
  %v5495 = vpack.c.b16 %v4359, %v4351
  %v5496 = vpack.c.b16 %v4360, %v4352
  %v5497 = vpack.c.b16 %v4369, %v4361
  %v5498 = vpack.c.b16 %v4370, %v4362
  %v5499 = vpack.c.b16 %v4371, %v4363
  %v5500 = vpack.c.b16 %v4372, %v4364
  %v5501 = vpack.c.b16 %v4373, %v4365
  %v5502 = vpack.c.b16 %v4374, %v4366
  %v5503 = vpack.c.b16 %v4375, %v4367
  %v5504 = vpack.c.b16 %v4376, %v4368
  %v5505 = vpack.c.b16 %v4385, %v4377
  %v5506 = vpack.c.b16 %v4386, %v4378
  %v5507 = vpack.c.b16 %v4387, %v4379
  %v5508 = vpack.c.b16 %v4388, %v4380
  %v5509 = vpack.c.b16 %v4389, %v4381
  %v5510 = vpack.c.b16 %v4390, %v4382
  %v5511 = vpack.c.b16 %v4391, %v4383
  %v5512 = vpack.c.b16 %v4392, %v4384
  %v5513 = vpack.c.b16 %v4401, %v4393
  %v5514 = vpack.c.b16 %v4402, %v4394
  %v5515 = vpack.c.b16 %v4403, %v4395
  %v5516 = vpack.c.b16 %v4404, %v4396
  %v5517 = vpack.c.b16 %v4405, %v4397
  %v5518 = vpack.c.b16 %v4406, %v4398
  %v5519 = vpack.c.b16 %v4407, %v4399
  %v5520 = vpack.c.b16 %v4408, %v4400
  %v5521 = vpack.c.b16 %v4417, %v4409
  %v5522 = vpack.c.b16 %v4418, %v4410
  %v5523 = vpack.c.b16 %v4419, %v4411
  %v5524 = vpack.c.b16 %v4420, %v4412
  %v5525 = vpack.c.b16 %v4421, %v4413
  %v5526 = vpack.c.b16 %v4422, %v4414
  %v5527 = vpack.c.b16 %v4423, %v4415
  %v5528 = vpack.c.b16 %v4424, %v4416
  %v5529 = vpack.c.b16 %v4433, %v4425
  %v5530 = vpack.c.b16 %v4434, %v4426
  %v5531 = vpack.c.b16 %v4435, %v4427
  %v5532 = vpack.c.b16 %v4436, %v4428
  %v5533 = vpack.c.b16 %v4437, %v4429
  %v5534 = vpack.c.b16 %v4438, %v4430
  %v5535 = vpack.c.b16 %v4439, %v4431
  %v5536 = vpack.c.b16 %v4440, %v4432
  %v5537 = vpack.c.b16 %v4449, %v4441
  %v5538 = vpack.c.b16 %v4450, %v4442
  %v5539 = vpack.c.b16 %v4451, %v4443
  %v5540 = vpack.c.b16 %v4452, %v4444
  %v5541 = vpack.c.b16 %v4453, %v4445
  %v5542 = vpack.c.b16 %v4454, %v4446
  %v5543 = vpack.c.b16 %v4455, %v4447
  %v5544 = vpack.c.b16 %v4456, %v4448
  %6633 = vmatprep.subr.bf16.mxu0 %v4458
  %6634 = vmatpush1.bf16.msra.mxu0 %v4457
  %6635 = vmatprep.subr.bf16.mxu0 %v4466
  %6636 = vmatpush1.bf16.msra.mxu0 %v4465
  %6637 = vmatprep.subr.bf16.mxu0 %v4474
  %6638 = vmatpush1.bf16.msra.mxu0 %v4473
  %6639 = vmatprep.subr.bf16.mxu0 %v4482
  %6640 = vmatpush1.bf16.msra.mxu0 %v4481
  %6641 = vmatprep.subr.bf16.mxu0 %v4490
  %6642 = vmatpush1.bf16.msra.mxu0 %v4489
  %6643 = vmatprep.subr.bf16.mxu0 %v4498
  %6644 = vmatpush1.bf16.msra.mxu0 %v4497
  %6645 = vmatprep.subr.bf16.mxu0 %v4506
  %6646 = vmatpush1.bf16.msra.mxu0 %v4505
  %6647 = vmatprep.subr.bf16.mxu0 %v4514
  %6648 = vmatpush1.bf16.msra.mxu0 %v4513
  %6649 = vmatprep.subr.bf16.mxu0 %v4522
  %6650 = vmatpush1.bf16.msra.mxu0 %v4521
  %6651 = vmatprep.subr.bf16.mxu0 %v4530
  %6652 = vmatpush1.bf16.msra.mxu0 %v4529
  %6653 = vmatprep.subr.bf16.mxu0 %v4538
  %6654 = vmatpush1.bf16.msra.mxu0 %v4537
  %6655 = vmatprep.subr.bf16.mxu0 %v4546
  %6656 = vmatpush1.bf16.msra.mxu0 %v4545
  %6657 = vmatprep.subr.bf16.mxu0 %v4554
  %6658 = vmatpush1.bf16.msra.mxu0 %v4553
  %6659 = vmatprep.subr.bf16.mxu0 %v4562
  %6660 = vmatpush1.bf16.msra.mxu0 %v4561
  %6661 = vmatprep.subr.bf16.mxu0 %v4570
  %6662 = vmatpush1.bf16.msra.mxu0 %v4569
  %6663 = vmatprep.subr.bf16.mxu0 %v4578
  %6664 = vmatpush1.bf16.msra.mxu0 %v4577
  %6665 = vmatprep.mubr.bf16.mxu0 %v47
  %6666 = vmatmul.mubr.bf16.gmra.mrb[0].mxu0 %v46
  %v6667 = vpop.f32.mrb[0].mxu0
  %v6668 = vadd.f32 %v1156, %v6667
  %v6669 = vpop.f32.mrb[0].mxu0
  %v6670 = vadd.f32 %v1160, %v6669
  %v6671 = vpop.f32.mrb[0].mxu0
  %v6672 = vpop.f32.mrb[0].mxu0
  %6673 = vdwg.mxu0
  %6674 = vmatprep.subr.bf16.mxu0 %v4586
  %6675 = vmatpush1.bf16.msra.mxu0 %v4585
  %6676 = vmatprep.subr.bf16.mxu0 %v4594
  %6677 = vmatpush1.bf16.msra.mxu0 %v4593
  %6678 = vmatprep.subr.bf16.mxu0 %v4602
  %6679 = vmatpush1.bf16.msra.mxu0 %v4601
  %6680 = vmatprep.subr.bf16.mxu0 %v4610
  %6681 = vmatpush1.bf16.msra.mxu0 %v4609
  %6682 = vmatprep.subr.bf16.mxu0 %v4618
  %6683 = vmatpush1.bf16.msra.mxu0 %v4617
  %6684 = vmatprep.subr.bf16.mxu0 %v4626
  %6685 = vmatpush1.bf16.msra.mxu0 %v4625
  %6686 = vmatprep.subr.bf16.mxu0 %v4634
  %6687 = vmatpush1.bf16.msra.mxu0 %v4633
  %6688 = vmatprep.subr.bf16.mxu0 %v4642
  %6689 = vmatpush1.bf16.msra.mxu0 %v4641
  %6690 = vmatprep.subr.bf16.mxu0 %v4650
  %6691 = vmatpush1.bf16.msra.mxu0 %v4649
  %6692 = vmatprep.subr.bf16.mxu0 %v4658
  %6693 = vmatpush1.bf16.msra.mxu0 %v4657
  %6694 = vmatprep.subr.bf16.mxu0 %v4666
  %6695 = vmatpush1.bf16.msra.mxu0 %v4665
  %6696 = vmatprep.subr.bf16.mxu0 %v4674
  %6697 = vmatpush1.bf16.msra.mxu0 %v4673
  %6698 = vmatprep.subr.bf16.mxu0 %v4682
  %6699 = vmatpush1.bf16.msra.mxu0 %v4681
  %6700 = vmatprep.subr.bf16.mxu0 %v4690
  %6701 = vmatpush1.bf16.msra.mxu0 %v4689
  %6702 = vmatprep.subr.bf16.mxu0 %v4698
  %6703 = vmatpush1.bf16.msra.mxu0 %v4697
  %6704 = vmatprep.subr.bf16.mxu0 %v4706
  %6705 = vmatpush1.bf16.msra.mxu0 %v4705
  %6706 = vmatprep.mubr.bf16.mxu0 %v49
  %6707 = vmatmul.mubr.bf16.gmra.mrb[0].mxu0 %v48
  %v6708 = vpop.f32.mrb[0].mxu0
  %v6709 = vadd.f32 %v6668, %v6708
  %v6710 = vpop.f32.mrb[0].mxu0
  %v6711 = vadd.f32 %v6670, %v6710
  %v6712 = vpop.f32.mrb[0].mxu0
  %v6713 = vpop.f32.mrb[0].mxu0
  %6714 = vdwg.mxu0
  %6715 = vmatprep.subr.bf16.mxu0 %v4714
  %6716 = vmatpush1.bf16.msra.mxu0 %v4713
  %6717 = vmatprep.subr.bf16.mxu0 %v4722
  %6718 = vmatpush1.bf16.msra.mxu0 %v4721
  %6719 = vmatprep.subr.bf16.mxu0 %v4730
  %6720 = vmatpush1.bf16.msra.mxu0 %v4729
  %6721 = vmatprep.subr.bf16.mxu0 %v4738
  %6722 = vmatpush1.bf16.msra.mxu0 %v4737
  %6723 = vmatprep.subr.bf16.mxu0 %v4746
  %6724 = vmatpush1.bf16.msra.mxu0 %v4745
  %6725 = vmatprep.subr.bf16.mxu0 %v4754
  %6726 = vmatpush1.bf16.msra.mxu0 %v4753
  %6727 = vmatprep.subr.bf16.mxu0 %v4762
  %6728 = vmatpush1.bf16.msra.mxu0 %v4761
  %6729 = vmatprep.subr.bf16.mxu0 %v4770
  %6730 = vmatpush1.bf16.msra.mxu0 %v4769
  %6731 = vmatprep.subr.bf16.mxu0 %v4778
  %6732 = vmatpush1.bf16.msra.mxu0 %v4777
  %6733 = vmatprep.subr.bf16.mxu0 %v4786
  %6734 = vmatpush1.bf16.msra.mxu0 %v4785
  %6735 = vmatprep.subr.bf16.mxu0 %v4794
  %6736 = vmatpush1.bf16.msra.mxu0 %v4793
  %6737 = vmatprep.subr.bf16.mxu0 %v4802
  %6738 = vmatpush1.bf16.msra.mxu0 %v4801
  %6739 = vmatprep.subr.bf16.mxu0 %v4810
  %6740 = vmatpush1.bf16.msra.mxu0 %v4809
  %6741 = vmatprep.subr.bf16.mxu0 %v4818
  %6742 = vmatpush1.bf16.msra.mxu0 %v4817
  %6743 = vmatprep.subr.bf16.mxu0 %v4826
  %6744 = vmatpush1.bf16.msra.mxu0 %v4825
  %6745 = vmatprep.subr.bf16.mxu0 %v4834
  %6746 = vmatpush1.bf16.msra.mxu0 %v4833
  %6747 = vmatprep.mubr.bf16.mxu0 %v51
  %6748 = vmatmul.mubr.bf16.gmra.mrb[0].mxu0 %v50
  %v6749 = vpop.f32.mrb[0].mxu0
  %v6750 = vadd.f32 %v6709, %v6749
  %v6751 = vpop.f32.mrb[0].mxu0
  %v6752 = vadd.f32 %v6711, %v6751
  %v6753 = vpop.f32.mrb[0].mxu0
  %v6754 = vpop.f32.mrb[0].mxu0
  %6755 = vdwg.mxu0
  %6756 = vmatprep.subr.bf16.mxu0 %v4842
  %6757 = vmatpush1.bf16.msra.mxu0 %v4841
  %6758 = vmatprep.subr.bf16.mxu0 %v4850
  %6759 = vmatpush1.bf16.msra.mxu0 %v4849
  %6760 = vmatprep.subr.bf16.mxu0 %v4858
  %6761 = vmatpush1.bf16.msra.mxu0 %v4857
  %6762 = vmatprep.subr.bf16.mxu0 %v4866
  %6763 = vmatpush1.bf16.msra.mxu0 %v4865
  %6764 = vmatprep.subr.bf16.mxu0 %v4874
  %6765 = vmatpush1.bf16.msra.mxu0 %v4873
  %6766 = vmatprep.subr.bf16.mxu0 %v4882
  %6767 = vmatpush1.bf16.msra.mxu0 %v4881
  %6768 = vmatprep.subr.bf16.mxu0 %v4890
  %6769 = vmatpush1.bf16.msra.mxu0 %v4889
  %6770 = vmatprep.subr.bf16.mxu0 %v4898
  %6771 = vmatpush1.bf16.msra.mxu0 %v4897
  %6772 = vmatprep.subr.bf16.mxu0 %v4906
  %6773 = vmatpush1.bf16.msra.mxu0 %v4905
  %6774 = vmatprep.subr.bf16.mxu0 %v4914
  %6775 = vmatpush1.bf16.msra.mxu0 %v4913
  %6776 = vmatprep.subr.bf16.mxu0 %v4922
  %6777 = vmatpush1.bf16.msra.mxu0 %v4921
  %6778 = vmatprep.subr.bf16.mxu0 %v4930
  %6779 = vmatpush1.bf16.msra.mxu0 %v4929
  %6780 = vmatprep.subr.bf16.mxu0 %v4938
  %6781 = vmatpush1.bf16.msra.mxu0 %v4937
  %6782 = vmatprep.subr.bf16.mxu0 %v4946
  %6783 = vmatpush1.bf16.msra.mxu0 %v4945
  %6784 = vmatprep.subr.bf16.mxu0 %v4954
  %6785 = vmatpush1.bf16.msra.mxu0 %v4953
  %6786 = vmatprep.subr.bf16.mxu0 %v4962
  %6787 = vmatpush1.bf16.msra.mxu0 %v4961
  %6788 = vmatprep.mubr.bf16.mxu0 %v53
  %6789 = vmatmul.mubr.bf16.gmra.mrb[0].mxu0 %v52
  %v6790 = vpop.f32.mrb[0].mxu0
  %v6791 = vadd.f32 %v6750, %v6790
  %v6792 = vpop.f32.mrb[0].mxu0
  %v6793 = vadd.f32 %v6752, %v6792
  %v6794 = vpop.f32.mrb[0].mxu0
  %v6795 = vpop.f32.mrb[0].mxu0
  %6796 = vdwg.mxu0
  %6797 = vmatprep.subr.bf16.mxu0 %v4970
  %6798 = vmatpush1.bf16.msra.mxu0 %v4969
  %6799 = vmatprep.subr.bf16.mxu0 %v4978
  %6800 = vmatpush1.bf16.msra.mxu0 %v4977
  %6801 = vmatprep.subr.bf16.mxu0 %v4986
  %6802 = vmatpush1.bf16.msra.mxu0 %v4985
  %6803 = vmatprep.subr.bf16.mxu0 %v4994
  %6804 = vmatpush1.bf16.msra.mxu0 %v4993
  %6805 = vmatprep.subr.bf16.mxu0 %v5002
  %6806 = vmatpush1.bf16.msra.mxu0 %v5001
  %6807 = vmatprep.subr.bf16.mxu0 %v5010
  %6808 = vmatpush1.bf16.msra.mxu0 %v5009
  %6809 = vmatprep.subr.bf16.mxu0 %v5018
  %6810 = vmatpush1.bf16.msra.mxu0 %v5017
  %6811 = vmatprep.subr.bf16.mxu0 %v5026
  %6812 = vmatpush1.bf16.msra.mxu0 %v5025
  %6813 = vmatprep.subr.bf16.mxu0 %v5034
  %6814 = vmatpush1.bf16.msra.mxu0 %v5033
  %6815 = vmatprep.subr.bf16.mxu0 %v5042
  %6816 = vmatpush1.bf16.msra.mxu0 %v5041
  %6817 = vmatprep.subr.bf16.mxu0 %v5050
  %6818 = vmatpush1.bf16.msra.mxu0 %v5049
  %6819 = vmatprep.subr.bf16.mxu0 %v5058
  %6820 = vmatpush1.bf16.msra.mxu0 %v5057
  %6821 = vmatprep.subr.bf16.mxu0 %v5066
  %6822 = vmatpush1.bf16.msra.mxu0 %v5065
  %6823 = vmatprep.subr.bf16.mxu0 %v5074
  %6824 = vmatpush1.bf16.msra.mxu0 %v5073
  %6825 = vmatprep.subr.bf16.mxu0 %v5082
  %6826 = vmatpush1.bf16.msra.mxu0 %v5081
  %6827 = vmatprep.subr.bf16.mxu0 %v5090
  %6828 = vmatpush1.bf16.msra.mxu0 %v5089
  %6829 = vmatprep.mubr.bf16.mxu0 %v55
  %6830 = vmatmul.mubr.bf16.gmra.mrb[0].mxu0 %v54
  %v6831 = vpop.f32.mrb[0].mxu0
  %v6832 = vadd.f32 %v6791, %v6831
  %v6833 = vpop.f32.mrb[0].mxu0
  %v6834 = vadd.f32 %v6793, %v6833
  %v6835 = vpop.f32.mrb[0].mxu0
  %v6836 = vpop.f32.mrb[0].mxu0
  %6837 = vdwg.mxu0
  %6838 = vmatprep.subr.bf16.mxu0 %v5098
  %6839 = vmatpush1.bf16.msra.mxu0 %v5097
  %6840 = vmatprep.subr.bf16.mxu0 %v5106
  %6841 = vmatpush1.bf16.msra.mxu0 %v5105
  %6842 = vmatprep.subr.bf16.mxu0 %v5114
  %6843 = vmatpush1.bf16.msra.mxu0 %v5113
  %6844 = vmatprep.subr.bf16.mxu0 %v5122
  %6845 = vmatpush1.bf16.msra.mxu0 %v5121
  %6846 = vmatprep.subr.bf16.mxu0 %v5130
  %6847 = vmatpush1.bf16.msra.mxu0 %v5129
  %6848 = vmatprep.subr.bf16.mxu0 %v5138
  %6849 = vmatpush1.bf16.msra.mxu0 %v5137
  %6850 = vmatprep.subr.bf16.mxu0 %v5146
  %6851 = vmatpush1.bf16.msra.mxu0 %v5145
  %6852 = vmatprep.subr.bf16.mxu0 %v5154
  %6853 = vmatpush1.bf16.msra.mxu0 %v5153
  %6854 = vmatprep.subr.bf16.mxu0 %v5162
  %6855 = vmatpush1.bf16.msra.mxu0 %v5161
  %6856 = vmatprep.subr.bf16.mxu0 %v5170
  %6857 = vmatpush1.bf16.msra.mxu0 %v5169
  %6858 = vmatprep.subr.bf16.mxu0 %v5178
  %6859 = vmatpush1.bf16.msra.mxu0 %v5177
  %6860 = vmatprep.subr.bf16.mxu0 %v5186
  %6861 = vmatpush1.bf16.msra.mxu0 %v5185
  %6862 = vmatprep.subr.bf16.mxu0 %v5194
  %6863 = vmatpush1.bf16.msra.mxu0 %v5193
  %6864 = vmatprep.subr.bf16.mxu0 %v5202
  %6865 = vmatpush1.bf16.msra.mxu0 %v5201
  %6866 = vmatprep.subr.bf16.mxu0 %v5210
  %6867 = vmatpush1.bf16.msra.mxu0 %v5209
  %6868 = vmatprep.subr.bf16.mxu0 %v5218
  %6869 = vmatpush1.bf16.msra.mxu0 %v5217
  %6870 = vmatprep.mubr.bf16.mxu0 %v57
  %6871 = vmatmul.mubr.bf16.gmra.mrb[0].mxu0 %v56
  %v6872 = vpop.f32.mrb[0].mxu0
  %v6873 = vadd.f32 %v6832, %v6872
  %v6874 = vpop.f32.mrb[0].mxu0
  %v6875 = vadd.f32 %v6834, %v6874
  %v6876 = vpop.f32.mrb[0].mxu0
  %v6877 = vpop.f32.mrb[0].mxu0
  %6878 = vdwg.mxu0
  %6879 = vmatprep.subr.bf16.mxu0 %v5226
  %6880 = vmatpush1.bf16.msra.mxu0 %v5225
  %6881 = vmatprep.subr.bf16.mxu0 %v5234
  %6882 = vmatpush1.bf16.msra.mxu0 %v5233
  %6883 = vmatprep.subr.bf16.mxu0 %v5242
  %6884 = vmatpush1.bf16.msra.mxu0 %v5241
  %6885 = vmatprep.subr.bf16.mxu0 %v5250
  %6886 = vmatpush1.bf16.msra.mxu0 %v5249
  %6887 = vmatprep.subr.bf16.mxu0 %v5258
  %6888 = vmatpush1.bf16.msra.mxu0 %v5257
  %6889 = vmatprep.subr.bf16.mxu0 %v5266
  %6890 = vmatpush1.bf16.msra.mxu0 %v5265
  %6891 = vmatprep.subr.bf16.mxu0 %v5274
  %6892 = vmatpush1.bf16.msra.mxu0 %v5273
  %6893 = vmatprep.subr.bf16.mxu0 %v5282
  %6894 = vmatpush1.bf16.msra.mxu0 %v5281
  %6895 = vmatprep.subr.bf16.mxu0 %v5290
  %6896 = vmatpush1.bf16.msra.mxu0 %v5289
  %6897 = vmatprep.subr.bf16.mxu0 %v5298
  %6898 = vmatpush1.bf16.msra.mxu0 %v5297
  %6899 = vmatprep.subr.bf16.mxu0 %v5306
  %6900 = vmatpush1.bf16.msra.mxu0 %v5305
  %6901 = vmatprep.subr.bf16.mxu0 %v5314
  %6902 = vmatpush1.bf16.msra.mxu0 %v5313
  %6903 = vmatprep.subr.bf16.mxu0 %v5322
  %6904 = vmatpush1.bf16.msra.mxu0 %v5321
  %6905 = vmatprep.subr.bf16.mxu0 %v5330
  %6906 = vmatpush1.bf16.msra.mxu0 %v5329
  %6907 = vmatprep.subr.bf16.mxu0 %v5338
  %6908 = vmatpush1.bf16.msra.mxu0 %v5337
  %6909 = vmatprep.subr.bf16.mxu0 %v5346
  %6910 = vmatpush1.bf16.msra.mxu0 %v5345
  %6911 = vmatprep.mubr.bf16.mxu0 %v59
  %6912 = vmatmul.mubr.bf16.gmra.mrb[0].mxu0 %v58
  %v6913 = vpop.f32.mrb[0].mxu0
  %v6914 = vadd.f32 %v6873, %v6913
  %v6915 = vpop.f32.mrb[0].mxu0
  %v6916 = vadd.f32 %v6875, %v6915
  %v6917 = vpop.f32.mrb[0].mxu0
  %v6918 = vpop.f32.mrb[0].mxu0
  %6919 = vdwg.mxu0
  %6920 = vmatprep.subr.bf16.mxu0 %v5354
  %6921 = vmatpush1.bf16.msra.mxu0 %v5353
  %6922 = vmatprep.subr.bf16.mxu0 %v5362
  %6923 = vmatpush1.bf16.msra.mxu0 %v5361
  %6924 = vmatprep.subr.bf16.mxu0 %v5370
  %6925 = vmatpush1.bf16.msra.mxu0 %v5369
  %6926 = vmatprep.subr.bf16.mxu0 %v5378
  %6927 = vmatpush1.bf16.msra.mxu0 %v5377
  %6928 = vmatprep.subr.bf16.mxu0 %v5386
  %6929 = vmatpush1.bf16.msra.mxu0 %v5385
  %6930 = vmatprep.subr.bf16.mxu0 %v5394
  %6931 = vmatpush1.bf16.msra.mxu0 %v5393
  %6932 = vmatprep.subr.bf16.mxu0 %v5402
  %6933 = vmatpush1.bf16.msra.mxu0 %v5401
  %6934 = vmatprep.subr.bf16.mxu0 %v5410
  %6935 = vmatpush1.bf16.msra.mxu0 %v5409
  %6936 = vmatprep.subr.bf16.mxu0 %v5418
  %6937 = vmatpush1.bf16.msra.mxu0 %v5417
  %6938 = vmatprep.subr.bf16.mxu0 %v5426
  %6939 = vmatpush1.bf16.msra.mxu0 %v5425
  %6940 = vmatprep.subr.bf16.mxu0 %v5434
  %6941 = vmatpush1.bf16.msra.mxu0 %v5433
  %6942 = vmatprep.subr.bf16.mxu0 %v5442
  %6943 = vmatpush1.bf16.msra.mxu0 %v5441
  %6944 = vmatprep.subr.bf16.mxu0 %v5450
  %6945 = vmatpush1.bf16.msra.mxu0 %v5449
  %6946 = vmatprep.subr.bf16.mxu0 %v5458
  %6947 = vmatpush1.bf16.msra.mxu0 %v5457
  %6948 = vmatprep.subr.bf16.mxu0 %v5466
  %6949 = vmatpush1.bf16.msra.mxu0 %v5465
  %6950 = vmatprep.subr.bf16.mxu0 %v5474
  %6951 = vmatpush1.bf16.msra.mxu0 %v5473
  %6952 = vmatprep.mubr.bf16.mxu0 %v61
  %6953 = vmatmul.mubr.bf16.gmra.mrb[0].mxu0 %v60
  %v6954 = vpop.f32.mrb[0].mxu0
  %v6955 = vadd.f32 %v6914, %v6954
  %v6956 = vpop.f32.mrb[0].mxu0
  %v6957 = vadd.f32 %v6916, %v6956
  %v6958 = vpop.f32.mrb[0].mxu0
  %v6959 = vpop.f32.mrb[0].mxu0
  %6960 = vdwg.mxu0
  %6961 = vmatprep.subr.bf16.mxu0 %v5482
  %6962 = vmatpush1.bf16.msra.mxu0 %v5481
  %6963 = vmatprep.subr.bf16.mxu0 %v5490
  %6964 = vmatpush1.bf16.msra.mxu0 %v5489
  %6965 = vmatprep.subr.bf16.mxu0 %v5498
  %6966 = vmatpush1.bf16.msra.mxu0 %v5497
  %6967 = vmatprep.subr.bf16.mxu0 %v5506
  %6968 = vmatpush1.bf16.msra.mxu0 %v5505
  %6969 = vmatprep.subr.bf16.mxu0 %v5514
  %6970 = vmatpush1.bf16.msra.mxu0 %v5513
  %6971 = vmatprep.subr.bf16.mxu0 %v5522
  %6972 = vmatpush1.bf16.msra.mxu0 %v5521
  %6973 = vmatprep.subr.bf16.mxu0 %v5530
  %6974 = vmatpush1.bf16.msra.mxu0 %v5529
  %6975 = vmatprep.subr.bf16.mxu0 %v5538
  %6976 = vmatpush1.bf16.msra.mxu0 %v5537
  %6977 = vmatprep.subr.bf16.mxu0 0
  %6978 = vmatpush1.bf16.msra.mxu0 0
  %6979 = vmatprep.subr.bf16.mxu0 0
  %6980 = vmatpush1.bf16.msra.mxu0 0
  %6981 = vmatprep.subr.bf16.mxu0 0
  %6982 = vmatpush1.bf16.msra.mxu0 0
  %6983 = vmatprep.subr.bf16.mxu0 0
  %6984 = vmatpush1.bf16.msra.mxu0 0
  %6985 = vmatprep.subr.bf16.mxu0 0
  %6986 = vmatpush1.bf16.msra.mxu0 0
  %6987 = vmatprep.subr.bf16.mxu0 0
  %6988 = vmatpush1.bf16.msra.mxu0 0
  %6989 = vmatprep.subr.bf16.mxu0 0
  %6990 = vmatpush1.bf16.msra.mxu0 0
  %6991 = vmatprep.subr.bf16.mxu0 0
  %6992 = vmatpush1.bf16.msra.mxu0 0
  %6993 = vmatprep.mubr.bf16.mxu0 0
  %6994 = vmatmul.mubr.bf16.gmra.mrb[0].mxu0 %v62
  %v6995 = vpop.f32.mrb[0].mxu0
  %v6996 = vadd.f32 %v6955, %v6995
  %v6997 = vpop.f32.mrb[0].mxu0
  %v6998 = vadd.f32 %v6957, %v6997
  %v6999 = vpop.f32.mrb[0].mxu0
  %v7000 = vpop.f32.mrb[0].mxu0
  %7001 = vdwg.mxu0
  %7002 = vmatprep.subr.bf16.mxu0 %v4460
  %7003 = vmatpush1.bf16.msra.mxu0 %v4459
  %7004 = vmatprep.subr.bf16.mxu0 %v4468
  %7005 = vmatpush1.bf16.msra.mxu0 %v4467
  %7006 = vmatprep.subr.bf16.mxu0 %v4476
  %7007 = vmatpush1.bf16.msra.mxu0 %v4475
  %7008 = vmatprep.subr.bf16.mxu0 %v4484
  %7009 = vmatpush1.bf16.msra.mxu0 %v4483
  %7010 = vmatprep.subr.bf16.mxu0 %v4492
  %7011 = vmatpush1.bf16.msra.mxu0 %v4491
  %7012 = vmatprep.subr.bf16.mxu0 %v4500
  %7013 = vmatpush1.bf16.msra.mxu0 %v4499
  %7014 = vmatprep.subr.bf16.mxu0 %v4508
  %7015 = vmatpush1.bf16.msra.mxu0 %v4507
  %7016 = vmatprep.subr.bf16.mxu0 %v4516
  %7017 = vmatpush1.bf16.msra.mxu0 %v4515
  %7018 = vmatprep.subr.bf16.mxu0 %v4524
  %7019 = vmatpush1.bf16.msra.mxu0 %v4523
  %7020 = vmatprep.subr.bf16.mxu0 %v4532
  %7021 = vmatpush1.bf16.msra.mxu0 %v4531
  %7022 = vmatprep.subr.bf16.mxu0 %v4540
  %7023 = vmatpush1.bf16.msra.mxu0 %v4539
  %7024 = vmatprep.subr.bf16.mxu0 %v4548
  %7025 = vmatpush1.bf16.msra.mxu0 %v4547
  %7026 = vmatprep.subr.bf16.mxu0 %v4556
  %7027 = vmatpush1.bf16.msra.mxu0 %v4555
  %7028 = vmatprep.subr.bf16.mxu0 %v4564
  %7029 = vmatpush1.bf16.msra.mxu0 %v4563
  %7030 = vmatprep.subr.bf16.mxu0 %v4572
  %7031 = vmatpush1.bf16.msra.mxu0 %v4571
  %7032 = vmatprep.subr.bf16.mxu0 %v4580
  %7033 = vmatpush1.bf16.msra.mxu0 %v4579
  %7034 = vmatprep.mubr.bf16.mxu0 %v47
  %7035 = vmatmul.mubr.bf16.gmra.mrb[0].mxu0 %v46
  %v7036 = vpop.f32.mrb[0].mxu0
  %v7037 = vadd.f32 %v1164, %v7036
  %v7038 = vpop.f32.mrb[0].mxu0
  %v7039 = vadd.f32 %v1168, %v7038
  %v7040 = vpop.f32.mrb[0].mxu0
  %v7041 = vpop.f32.mrb[0].mxu0
  %7042 = vdwg.mxu0
  %7043 = vmatprep.subr.bf16.mxu0 %v4588
  %7044 = vmatpush1.bf16.msra.mxu0 %v4587
  %7045 = vmatprep.subr.bf16.mxu0 %v4596
  %7046 = vmatpush1.bf16.msra.mxu0 %v4595
  %7047 = vmatprep.subr.bf16.mxu0 %v4604
  %7048 = vmatpush1.bf16.msra.mxu0 %v4603
  %7049 = vmatprep.subr.bf16.mxu0 %v4612
  %7050 = vmatpush1.bf16.msra.mxu0 %v4611
  %7051 = vmatprep.subr.bf16.mxu0 %v4620
  %7052 = vmatpush1.bf16.msra.mxu0 %v4619
  %7053 = vmatprep.subr.bf16.mxu0 %v4628
  %7054 = vmatpush1.bf16.msra.mxu0 %v4627
  %7055 = vmatprep.subr.bf16.mxu0 %v4636
  %7056 = vmatpush1.bf16.msra.mxu0 %v4635
  %7057 = vmatprep.subr.bf16.mxu0 %v4644
  %7058 = vmatpush1.bf16.msra.mxu0 %v4643
  %7059 = vmatprep.subr.bf16.mxu0 %v4652
  %7060 = vmatpush1.bf16.msra.mxu0 %v4651
  %7061 = vmatprep.subr.bf16.mxu0 %v4660
  %7062 = vmatpush1.bf16.msra.mxu0 %v4659
  %7063 = vmatprep.subr.bf16.mxu0 %v4668
  %7064 = vmatpush1.bf16.msra.mxu0 %v4667
  %7065 = vmatprep.subr.bf16.mxu0 %v4676
  %7066 = vmatpush1.bf16.msra.mxu0 %v4675
  %7067 = vmatprep.subr.bf16.mxu0 %v4684
  %7068 = vmatpush1.bf16.msra.mxu0 %v4683
  %7069 = vmatprep.subr.bf16.mxu0 %v4692
  %7070 = vmatpush1.bf16.msra.mxu0 %v4691
  %7071 = vmatprep.subr.bf16.mxu0 %v4700
  %7072 = vmatpush1.bf16.msra.mxu0 %v4699
  %7073 = vmatprep.subr.bf16.mxu0 %v4708
  %7074 = vmatpush1.bf16.msra.mxu0 %v4707
  %7075 = vmatprep.mubr.bf16.mxu0 %v49
  %7076 = vmatmul.mubr.bf16.gmra.mrb[0].mxu0 %v48
  %v7077 = vpop.f32.mrb[0].mxu0
  %v7078 = vadd.f32 %v7037, %v7077
  %v7079 = vpop.f32.mrb[0].mxu0
  %v7080 = vadd.f32 %v7039, %v7079
  %v7081 = vpop.f32.mrb[0].mxu0
  %v7082 = vpop.f32.mrb[0].mxu0
  %7083 = vdwg.mxu0
  %7084 = vmatprep.subr.bf16.mxu0 %v4716
  %7085 = vmatpush1.bf16.msra.mxu0 %v4715
  %7086 = vmatprep.subr.bf16.mxu0 %v4724
  %7087 = vmatpush1.bf16.msra.mxu0 %v4723
  %7088 = vmatprep.subr.bf16.mxu0 %v4732
  %7089 = vmatpush1.bf16.msra.mxu0 %v4731
  %7090 = vmatprep.subr.bf16.mxu0 %v4740
  %7091 = vmatpush1.bf16.msra.mxu0 %v4739
  %7092 = vmatprep.subr.bf16.mxu0 %v4748
  %7093 = vmatpush1.bf16.msra.mxu0 %v4747
  %7094 = vmatprep.subr.bf16.mxu0 %v4756
  %7095 = vmatpush1.bf16.msra.mxu0 %v4755
  %7096 = vmatprep.subr.bf16.mxu0 %v4764
  %7097 = vmatpush1.bf16.msra.mxu0 %v4763
  %7098 = vmatprep.subr.bf16.mxu0 %v4772
  %7099 = vmatpush1.bf16.msra.mxu0 %v4771
  %7100 = vmatprep.subr.bf16.mxu0 %v4780
  %7101 = vmatpush1.bf16.msra.mxu0 %v4779
  %7102 = vmatprep.subr.bf16.mxu0 %v4788
  %7103 = vmatpush1.bf16.msra.mxu0 %v4787
  %7104 = vmatprep.subr.bf16.mxu0 %v4796
  %7105 = vmatpush1.bf16.msra.mxu0 %v4795
  %7106 = vmatprep.subr.bf16.mxu0 %v4804
  %7107 = vmatpush1.bf16.msra.mxu0 %v4803
  %7108 = vmatprep.subr.bf16.mxu0 %v4812
  %7109 = vmatpush1.bf16.msra.mxu0 %v4811
  %7110 = vmatprep.subr.bf16.mxu0 %v4820
  %7111 = vmatpush1.bf16.msra.mxu0 %v4819
  %7112 = vmatprep.subr.bf16.mxu0 %v4828
  %7113 = vmatpush1.bf16.msra.mxu0 %v4827
  %7114 = vmatprep.subr.bf16.mxu0 %v4836
  %7115 = vmatpush1.bf16.msra.mxu0 %v4835
  %7116 = vmatprep.mubr.bf16.mxu0 %v51
  %7117 = vmatmul.mubr.bf16.gmra.mrb[0].mxu0 %v50
  %v7118 = vpop.f32.mrb[0].mxu0
  %v7119 = vadd.f32 %v7078, %v7118
  %v7120 = vpop.f32.mrb[0].mxu0
  %v7121 = vadd.f32 %v7080, %v7120
  %v7122 = vpop.f32.mrb[0].mxu0
  %v7123 = vpop.f32.mrb[0].mxu0
  %7124 = vdwg.mxu0
  %7125 = vmatprep.subr.bf16.mxu0 %v4844
  %7126 = vmatpush1.bf16.msra.mxu0 %v4843
  %7127 = vmatprep.subr.bf16.mxu0 %v4852
  %7128 = vmatpush1.bf16.msra.mxu0 %v4851
  %7129 = vmatprep.subr.bf16.mxu0 %v4860
  %7130 = vmatpush1.bf16.msra.mxu0 %v4859
  %7131 = vmatprep.subr.bf16.mxu0 %v4868
  %7132 = vmatpush1.bf16.msra.mxu0 %v4867
  %7133 = vmatprep.subr.bf16.mxu0 %v4876
  %7134 = vmatpush1.bf16.msra.mxu0 %v4875
  %7135 = vmatprep.subr.bf16.mxu0 %v4884
  %7136 = vmatpush1.bf16.msra.mxu0 %v4883
  %7137 = vmatprep.subr.bf16.mxu0 %v4892
  %7138 = vmatpush1.bf16.msra.mxu0 %v4891
  %7139 = vmatprep.subr.bf16.mxu0 %v4900
  %7140 = vmatpush1.bf16.msra.mxu0 %v4899
  %7141 = vmatprep.subr.bf16.mxu0 %v4908
  %7142 = vmatpush1.bf16.msra.mxu0 %v4907
  %7143 = vmatprep.subr.bf16.mxu0 %v4916
  %7144 = vmatpush1.bf16.msra.mxu0 %v4915
  %7145 = vmatprep.subr.bf16.mxu0 %v4924
  %7146 = vmatpush1.bf16.msra.mxu0 %v4923
  %7147 = vmatprep.subr.bf16.mxu0 %v4932
  %7148 = vmatpush1.bf16.msra.mxu0 %v4931
  %7149 = vmatprep.subr.bf16.mxu0 %v4940
  %7150 = vmatpush1.bf16.msra.mxu0 %v4939
  %7151 = vmatprep.subr.bf16.mxu0 %v4948
  %7152 = vmatpush1.bf16.msra.mxu0 %v4947
  %7153 = vmatprep.subr.bf16.mxu0 %v4956
  %7154 = vmatpush1.bf16.msra.mxu0 %v4955
  %7155 = vmatprep.subr.bf16.mxu0 %v4964
  %7156 = vmatpush1.bf16.msra.mxu0 %v4963
  %7157 = vmatprep.mubr.bf16.mxu0 %v53
  %7158 = vmatmul.mubr.bf16.gmra.mrb[0].mxu0 %v52
  %v7159 = vpop.f32.mrb[0].mxu0
  %v7160 = vadd.f32 %v7119, %v7159
  %v7161 = vpop.f32.mrb[0].mxu0
  %v7162 = vadd.f32 %v7121, %v7161
  %v7163 = vpop.f32.mrb[0].mxu0
  %v7164 = vpop.f32.mrb[0].mxu0
  %7165 = vdwg.mxu0
  %7166 = vmatprep.subr.bf16.mxu0 %v4972
  %7167 = vmatpush1.bf16.msra.mxu0 %v4971
  %7168 = vmatprep.subr.bf16.mxu0 %v4980
  %7169 = vmatpush1.bf16.msra.mxu0 %v4979
  %7170 = vmatprep.subr.bf16.mxu0 %v4988
  %7171 = vmatpush1.bf16.msra.mxu0 %v4987
  %7172 = vmatprep.subr.bf16.mxu0 %v4996
  %7173 = vmatpush1.bf16.msra.mxu0 %v4995
  %7174 = vmatprep.subr.bf16.mxu0 %v5004
  %7175 = vmatpush1.bf16.msra.mxu0 %v5003
  %7176 = vmatprep.subr.bf16.mxu0 %v5012
  %7177 = vmatpush1.bf16.msra.mxu0 %v5011
  %7178 = vmatprep.subr.bf16.mxu0 %v5020
  %7179 = vmatpush1.bf16.msra.mxu0 %v5019
  %7180 = vmatprep.subr.bf16.mxu0 %v5028
  %7181 = vmatpush1.bf16.msra.mxu0 %v5027
  %7182 = vmatprep.subr.bf16.mxu0 %v5036
  %7183 = vmatpush1.bf16.msra.mxu0 %v5035
  %7184 = vmatprep.subr.bf16.mxu0 %v5044
  %7185 = vmatpush1.bf16.msra.mxu0 %v5043
  %7186 = vmatprep.subr.bf16.mxu0 %v5052
  %7187 = vmatpush1.bf16.msra.mxu0 %v5051
  %7188 = vmatprep.subr.bf16.mxu0 %v5060
  %7189 = vmatpush1.bf16.msra.mxu0 %v5059
  %7190 = vmatprep.subr.bf16.mxu0 %v5068
  %7191 = vmatpush1.bf16.msra.mxu0 %v5067
  %7192 = vmatprep.subr.bf16.mxu0 %v5076
  %7193 = vmatpush1.bf16.msra.mxu0 %v5075
  %7194 = vmatprep.subr.bf16.mxu0 %v5084
  %7195 = vmatpush1.bf16.msra.mxu0 %v5083
  %7196 = vmatprep.subr.bf16.mxu0 %v5092
  %7197 = vmatpush1.bf16.msra.mxu0 %v5091
  %7198 = vmatprep.mubr.bf16.mxu0 %v55
  %7199 = vmatmul.mubr.bf16.gmra.mrb[0].mxu0 %v54
  %v7200 = vpop.f32.mrb[0].mxu0
  %v7201 = vadd.f32 %v7160, %v7200
  %v7202 = vpop.f32.mrb[0].mxu0
  %v7203 = vadd.f32 %v7162, %v7202
  %v7204 = vpop.f32.mrb[0].mxu0
  %v7205 = vpop.f32.mrb[0].mxu0
  %7206 = vdwg.mxu0
  %7207 = vmatprep.subr.bf16.mxu0 %v5100
  %7208 = vmatpush1.bf16.msra.mxu0 %v5099
  %7209 = vmatprep.subr.bf16.mxu0 %v5108
  %7210 = vmatpush1.bf16.msra.mxu0 %v5107
  %7211 = vmatprep.subr.bf16.mxu0 %v5116
  %7212 = vmatpush1.bf16.msra.mxu0 %v5115
  %7213 = vmatprep.subr.bf16.mxu0 %v5124
  %7214 = vmatpush1.bf16.msra.mxu0 %v5123
  %7215 = vmatprep.subr.bf16.mxu0 %v5132
  %7216 = vmatpush1.bf16.msra.mxu0 %v5131
  %7217 = vmatprep.subr.bf16.mxu0 %v5140
  %7218 = vmatpush1.bf16.msra.mxu0 %v5139
  %7219 = vmatprep.subr.bf16.mxu0 %v5148
  %7220 = vmatpush1.bf16.msra.mxu0 %v5147
  %7221 = vmatprep.subr.bf16.mxu0 %v5156
  %7222 = vmatpush1.bf16.msra.mxu0 %v5155
  %7223 = vmatprep.subr.bf16.mxu0 %v5164
  %7224 = vmatpush1.bf16.msra.mxu0 %v5163
  %7225 = vmatprep.subr.bf16.mxu0 %v5172
  %7226 = vmatpush1.bf16.msra.mxu0 %v5171
  %7227 = vmatprep.subr.bf16.mxu0 %v5180
  %7228 = vmatpush1.bf16.msra.mxu0 %v5179
  %7229 = vmatprep.subr.bf16.mxu0 %v5188
  %7230 = vmatpush1.bf16.msra.mxu0 %v5187
  %7231 = vmatprep.subr.bf16.mxu0 %v5196
  %7232 = vmatpush1.bf16.msra.mxu0 %v5195
  %7233 = vmatprep.subr.bf16.mxu0 %v5204
  %7234 = vmatpush1.bf16.msra.mxu0 %v5203
  %7235 = vmatprep.subr.bf16.mxu0 %v5212
  %7236 = vmatpush1.bf16.msra.mxu0 %v5211
  %7237 = vmatprep.subr.bf16.mxu0 %v5220
  %7238 = vmatpush1.bf16.msra.mxu0 %v5219
  %7239 = vmatprep.mubr.bf16.mxu0 %v57
  %7240 = vmatmul.mubr.bf16.gmra.mrb[0].mxu0 %v56
  %v7241 = vpop.f32.mrb[0].mxu0
  %v7242 = vadd.f32 %v7201, %v7241
  %v7243 = vpop.f32.mrb[0].mxu0
  %v7244 = vadd.f32 %v7203, %v7243
  %v7245 = vpop.f32.mrb[0].mxu0
  %v7246 = vpop.f32.mrb[0].mxu0
  %7247 = vdwg.mxu0
  %7248 = vmatprep.subr.bf16.mxu0 %v5228
  %7249 = vmatpush1.bf16.msra.mxu0 %v5227
  %7250 = vmatprep.subr.bf16.mxu0 %v5236
  %7251 = vmatpush1.bf16.msra.mxu0 %v5235
  %7252 = vmatprep.subr.bf16.mxu0 %v5244
  %7253 = vmatpush1.bf16.msra.mxu0 %v5243
  %7254 = vmatprep.subr.bf16.mxu0 %v5252
  %7255 = vmatpush1.bf16.msra.mxu0 %v5251
  %7256 = vmatprep.subr.bf16.mxu0 %v5260
  %7257 = vmatpush1.bf16.msra.mxu0 %v5259
  %7258 = vmatprep.subr.bf16.mxu0 %v5268
  %7259 = vmatpush1.bf16.msra.mxu0 %v5267
  %7260 = vmatprep.subr.bf16.mxu0 %v5276
  %7261 = vmatpush1.bf16.msra.mxu0 %v5275
  %7262 = vmatprep.subr.bf16.mxu0 %v5284
  %7263 = vmatpush1.bf16.msra.mxu0 %v5283
  %7264 = vmatprep.subr.bf16.mxu0 %v5292
  %7265 = vmatpush1.bf16.msra.mxu0 %v5291
  %7266 = vmatprep.subr.bf16.mxu0 %v5300
  %7267 = vmatpush1.bf16.msra.mxu0 %v5299
  %7268 = vmatprep.subr.bf16.mxu0 %v5308
  %7269 = vmatpush1.bf16.msra.mxu0 %v5307
  %7270 = vmatprep.subr.bf16.mxu0 %v5316
  %7271 = vmatpush1.bf16.msra.mxu0 %v5315
  %7272 = vmatprep.subr.bf16.mxu0 %v5324
  %7273 = vmatpush1.bf16.msra.mxu0 %v5323
  %7274 = vmatprep.subr.bf16.mxu0 %v5332
  %7275 = vmatpush1.bf16.msra.mxu0 %v5331
  %7276 = vmatprep.subr.bf16.mxu0 %v5340
  %7277 = vmatpush1.bf16.msra.mxu0 %v5339
  %7278 = vmatprep.subr.bf16.mxu0 %v5348
  %7279 = vmatpush1.bf16.msra.mxu0 %v5347
  %7280 = vmatprep.mubr.bf16.mxu0 %v59
  %7281 = vmatmul.mubr.bf16.gmra.mrb[0].mxu0 %v58
  %v7282 = vpop.f32.mrb[0].mxu0
  %v7283 = vadd.f32 %v7242, %v7282
  %v7284 = vpop.f32.mrb[0].mxu0
  %v7285 = vadd.f32 %v7244, %v7284
  %v7286 = vpop.f32.mrb[0].mxu0
  %v7287 = vpop.f32.mrb[0].mxu0
  %7288 = vdwg.mxu0
  %7289 = vmatprep.subr.bf16.mxu0 %v5356
  %7290 = vmatpush1.bf16.msra.mxu0 %v5355
  %7291 = vmatprep.subr.bf16.mxu0 %v5364
  %7292 = vmatpush1.bf16.msra.mxu0 %v5363
  %7293 = vmatprep.subr.bf16.mxu0 %v5372
  %7294 = vmatpush1.bf16.msra.mxu0 %v5371
  %7295 = vmatprep.subr.bf16.mxu0 %v5380
  %7296 = vmatpush1.bf16.msra.mxu0 %v5379
  %7297 = vmatprep.subr.bf16.mxu0 %v5388
  %7298 = vmatpush1.bf16.msra.mxu0 %v5387
  %7299 = vmatprep.subr.bf16.mxu0 %v5396
  %7300 = vmatpush1.bf16.msra.mxu0 %v5395
  %7301 = vmatprep.subr.bf16.mxu0 %v5404
  %7302 = vmatpush1.bf16.msra.mxu0 %v5403
  %7303 = vmatprep.subr.bf16.mxu0 %v5412
  %7304 = vmatpush1.bf16.msra.mxu0 %v5411
  %7305 = vmatprep.subr.bf16.mxu0 %v5420
  %7306 = vmatpush1.bf16.msra.mxu0 %v5419
  %7307 = vmatprep.subr.bf16.mxu0 %v5428
  %7308 = vmatpush1.bf16.msra.mxu0 %v5427
  %7309 = vmatprep.subr.bf16.mxu0 %v5436
  %7310 = vmatpush1.bf16.msra.mxu0 %v5435
  %7311 = vmatprep.subr.bf16.mxu0 %v5444
  %7312 = vmatpush1.bf16.msra.mxu0 %v5443
  %7313 = vmatprep.subr.bf16.mxu0 %v5452
  %7314 = vmatpush1.bf16.msra.mxu0 %v5451
  %7315 = vmatprep.subr.bf16.mxu0 %v5460
  %7316 = vmatpush1.bf16.msra.mxu0 %v5459
  %7317 = vmatprep.subr.bf16.mxu0 %v5468
  %7318 = vmatpush1.bf16.msra.mxu0 %v5467
  %7319 = vmatprep.subr.bf16.mxu0 %v5476
  %7320 = vmatpush1.bf16.msra.mxu0 %v5475
  %7321 = vmatprep.mubr.bf16.mxu0 %v61
  %7322 = vmatmul.mubr.bf16.gmra.mrb[0].mxu0 %v60
  %v7323 = vpop.f32.mrb[0].mxu0
  %v7324 = vadd.f32 %v7283, %v7323
  %v7325 = vpop.f32.mrb[0].mxu0
  %v7326 = vadd.f32 %v7285, %v7325
  %v7327 = vpop.f32.mrb[0].mxu0
  %v7328 = vpop.f32.mrb[0].mxu0
  %7329 = vdwg.mxu0
  %7330 = vmatprep.subr.bf16.mxu0 %v5484
  %7331 = vmatpush1.bf16.msra.mxu0 %v5483
  %7332 = vmatprep.subr.bf16.mxu0 %v5492
  %7333 = vmatpush1.bf16.msra.mxu0 %v5491
  %7334 = vmatprep.subr.bf16.mxu0 %v5500
  %7335 = vmatpush1.bf16.msra.mxu0 %v5499
  %7336 = vmatprep.subr.bf16.mxu0 %v5508
  %7337 = vmatpush1.bf16.msra.mxu0 %v5507
  %7338 = vmatprep.subr.bf16.mxu0 %v5516
  %7339 = vmatpush1.bf16.msra.mxu0 %v5515
  %7340 = vmatprep.subr.bf16.mxu0 %v5524
  %7341 = vmatpush1.bf16.msra.mxu0 %v5523
  %7342 = vmatprep.subr.bf16.mxu0 %v5532
  %7343 = vmatpush1.bf16.msra.mxu0 %v5531
  %7344 = vmatprep.subr.bf16.mxu0 %v5540
  %7345 = vmatpush1.bf16.msra.mxu0 %v5539
  %7346 = vmatprep.subr.bf16.mxu0 0
  %7347 = vmatpush1.bf16.msra.mxu0 0
  %7348 = vmatprep.subr.bf16.mxu0 0
  %7349 = vmatpush1.bf16.msra.mxu0 0
  %7350 = vmatprep.subr.bf16.mxu0 0
  %7351 = vmatpush1.bf16.msra.mxu0 0
  %7352 = vmatprep.subr.bf16.mxu0 0
  %7353 = vmatpush1.bf16.msra.mxu0 0
  %7354 = vmatprep.subr.bf16.mxu0 0
  %7355 = vmatpush1.bf16.msra.mxu0 0
  %7356 = vmatprep.subr.bf16.mxu0 0
  %7357 = vmatpush1.bf16.msra.mxu0 0
  %7358 = vmatprep.subr.bf16.mxu0 0
  %7359 = vmatpush1.bf16.msra.mxu0 0
  %7360 = vmatprep.subr.bf16.mxu0 0
  %7361 = vmatpush1.bf16.msra.mxu0 0
  %7362 = vmatprep.mubr.bf16.mxu0 0
  %7363 = vmatmul.mubr.bf16.gmra.mrb[0].mxu0 %v62
  %v7364 = vpop.f32.mrb[0].mxu0
  %v7365 = vadd.f32 %v7324, %v7364
  %v7366 = vpop.f32.mrb[0].mxu0
  %v7367 = vadd.f32 %v7326, %v7366
  %v7368 = vpop.f32.mrb[0].mxu0
  %v7369 = vpop.f32.mrb[0].mxu0
  %7370 = vdwg.mxu0
  %7371 = vmatprep.subr.bf16.mxu0 %v4462
  %7372 = vmatpush1.bf16.msra.mxu0 %v4461
  %7373 = vmatprep.subr.bf16.mxu0 %v4470
  %7374 = vmatpush1.bf16.msra.mxu0 %v4469
  %7375 = vmatprep.subr.bf16.mxu0 %v4478
  %7376 = vmatpush1.bf16.msra.mxu0 %v4477
  %7377 = vmatprep.subr.bf16.mxu0 %v4486
  %7378 = vmatpush1.bf16.msra.mxu0 %v4485
  %7379 = vmatprep.subr.bf16.mxu0 %v4494
  %7380 = vmatpush1.bf16.msra.mxu0 %v4493
  %7381 = vmatprep.subr.bf16.mxu0 %v4502
  %7382 = vmatpush1.bf16.msra.mxu0 %v4501
  %7383 = vmatprep.subr.bf16.mxu0 %v4510
  %7384 = vmatpush1.bf16.msra.mxu0 %v4509
  %7385 = vmatprep.subr.bf16.mxu0 %v4518
  %7386 = vmatpush1.bf16.msra.mxu0 %v4517
  %7387 = vmatprep.subr.bf16.mxu0 %v4526
  %7388 = vmatpush1.bf16.msra.mxu0 %v4525
  %7389 = vmatprep.subr.bf16.mxu0 %v4534
  %7390 = vmatpush1.bf16.msra.mxu0 %v4533
  %7391 = vmatprep.subr.bf16.mxu0 %v4542
  %7392 = vmatpush1.bf16.msra.mxu0 %v4541
  %7393 = vmatprep.subr.bf16.mxu0 %v4550
  %7394 = vmatpush1.bf16.msra.mxu0 %v4549
  %7395 = vmatprep.subr.bf16.mxu0 %v4558
  %7396 = vmatpush1.bf16.msra.mxu0 %v4557
  %7397 = vmatprep.subr.bf16.mxu0 %v4566
  %7398 = vmatpush1.bf16.msra.mxu0 %v4565
  %7399 = vmatprep.subr.bf16.mxu0 %v4574
  %7400 = vmatpush1.bf16.msra.mxu0 %v4573
  %7401 = vmatprep.subr.bf16.mxu0 %v4582
  %7402 = vmatpush1.bf16.msra.mxu0 %v4581
  %7403 = vmatprep.mubr.bf16.mxu0 %v47
  %7404 = vmatmul.mubr.bf16.gmra.mrb[0].mxu0 %v46
  %v7405 = vpop.f32.mrb[0].mxu0
  %v7406 = vadd.f32 %v1172, %v7405
  %v7407 = vpop.f32.mrb[0].mxu0
  %v7408 = vadd.f32 %v1176, %v7407
  %v7409 = vpop.f32.mrb[0].mxu0
  %v7410 = vpop.f32.mrb[0].mxu0
  %7411 = vdwg.mxu0
  %7412 = vmatprep.subr.bf16.mxu0 %v4590
  %7413 = vmatpush1.bf16.msra.mxu0 %v4589
  %7414 = vmatprep.subr.bf16.mxu0 %v4598
  %7415 = vmatpush1.bf16.msra.mxu0 %v4597
  %7416 = vmatprep.subr.bf16.mxu0 %v4606
  %7417 = vmatpush1.bf16.msra.mxu0 %v4605
  %7418 = vmatprep.subr.bf16.mxu0 %v4614
  %7419 = vmatpush1.bf16.msra.mxu0 %v4613
  %7420 = vmatprep.subr.bf16.mxu0 %v4622
  %7421 = vmatpush1.bf16.msra.mxu0 %v4621
  %7422 = vmatprep.subr.bf16.mxu0 %v4630
  %7423 = vmatpush1.bf16.msra.mxu0 %v4629
  %7424 = vmatprep.subr.bf16.mxu0 %v4638
  %7425 = vmatpush1.bf16.msra.mxu0 %v4637
  %7426 = vmatprep.subr.bf16.mxu0 %v4646
  %7427 = vmatpush1.bf16.msra.mxu0 %v4645
  %7428 = vmatprep.subr.bf16.mxu0 %v4654
  %7429 = vmatpush1.bf16.msra.mxu0 %v4653
  %7430 = vmatprep.subr.bf16.mxu0 %v4662
  %7431 = vmatpush1.bf16.msra.mxu0 %v4661
  %7432 = vmatprep.subr.bf16.mxu0 %v4670
  %7433 = vmatpush1.bf16.msra.mxu0 %v4669
  %7434 = vmatprep.subr.bf16.mxu0 %v4678
  %7435 = vmatpush1.bf16.msra.mxu0 %v4677
  %7436 = vmatprep.subr.bf16.mxu0 %v4686
  %7437 = vmatpush1.bf16.msra.mxu0 %v4685
  %7438 = vmatprep.subr.bf16.mxu0 %v4694
  %7439 = vmatpush1.bf16.msra.mxu0 %v4693
  %7440 = vmatprep.subr.bf16.mxu0 %v4702
  %7441 = vmatpush1.bf16.msra.mxu0 %v4701
  %7442 = vmatprep.subr.bf16.mxu0 %v4710
  %7443 = vmatpush1.bf16.msra.mxu0 %v4709
  %7444 = vmatprep.mubr.bf16.mxu0 %v49
  %7445 = vmatmul.mubr.bf16.gmra.mrb[0].mxu0 %v48
  %v7446 = vpop.f32.mrb[0].mxu0
  %v7447 = vadd.f32 %v7406, %v7446
  %v7448 = vpop.f32.mrb[0].mxu0
  %v7449 = vadd.f32 %v7408, %v7448
  %v7450 = vpop.f32.mrb[0].mxu0
  %v7451 = vpop.f32.mrb[0].mxu0
  %7452 = vdwg.mxu0
  %7453 = vmatprep.subr.bf16.mxu0 %v4718
  %7454 = vmatpush1.bf16.msra.mxu0 %v4717
  %7455 = vmatprep.subr.bf16.mxu0 %v4726
  %7456 = vmatpush1.bf16.msra.mxu0 %v4725
  %7457 = vmatprep.subr.bf16.mxu0 %v4734
  %7458 = vmatpush1.bf16.msra.mxu0 %v4733
  %7459 = vmatprep.subr.bf16.mxu0 %v4742
  %7460 = vmatpush1.bf16.msra.mxu0 %v4741
  %7461 = vmatprep.subr.bf16.mxu0 %v4750
  %7462 = vmatpush1.bf16.msra.mxu0 %v4749
  %7463 = vmatprep.subr.bf16.mxu0 %v4758
  %7464 = vmatpush1.bf16.msra.mxu0 %v4757
  %7465 = vmatprep.subr.bf16.mxu0 %v4766
  %7466 = vmatpush1.bf16.msra.mxu0 %v4765
  %7467 = vmatprep.subr.bf16.mxu0 %v4774
  %7468 = vmatpush1.bf16.msra.mxu0 %v4773
  %7469 = vmatprep.subr.bf16.mxu0 %v4782
  %7470 = vmatpush1.bf16.msra.mxu0 %v4781
  %7471 = vmatprep.subr.bf16.mxu0 %v4790
  %7472 = vmatpush1.bf16.msra.mxu0 %v4789
  %7473 = vmatprep.subr.bf16.mxu0 %v4798
  %7474 = vmatpush1.bf16.msra.mxu0 %v4797
  %7475 = vmatprep.subr.bf16.mxu0 %v4806
  %7476 = vmatpush1.bf16.msra.mxu0 %v4805
  %7477 = vmatprep.subr.bf16.mxu0 %v4814
  %7478 = vmatpush1.bf16.msra.mxu0 %v4813
  %7479 = vmatprep.subr.bf16.mxu0 %v4822
  %7480 = vmatpush1.bf16.msra.mxu0 %v4821
  %7481 = vmatprep.subr.bf16.mxu0 %v4830
  %7482 = vmatpush1.bf16.msra.mxu0 %v4829
  %7483 = vmatprep.subr.bf16.mxu0 %v4838
  %7484 = vmatpush1.bf16.msra.mxu0 %v4837
  %7485 = vmatprep.mubr.bf16.mxu0 %v51
  %7486 = vmatmul.mubr.bf16.gmra.mrb[0].mxu0 %v50
  %v7487 = vpop.f32.mrb[0].mxu0
  %v7488 = vadd.f32 %v7447, %v7487
  %v7489 = vpop.f32.mrb[0].mxu0
  %v7490 = vadd.f32 %v7449, %v7489
  %v7491 = vpop.f32.mrb[0].mxu0
  %v7492 = vpop.f32.mrb[0].mxu0
  %7493 = vdwg.mxu0
  %7494 = vmatprep.subr.bf16.mxu0 %v4846
  %7495 = vmatpush1.bf16.msra.mxu0 %v4845
  %7496 = vmatprep.subr.bf16.mxu0 %v4854
  %7497 = vmatpush1.bf16.msra.mxu0 %v4853
  %7498 = vmatprep.subr.bf16.mxu0 %v4862
  %7499 = vmatpush1.bf16.msra.mxu0 %v4861
  %7500 = vmatprep.subr.bf16.mxu0 %v4870
  %7501 = vmatpush1.bf16.msra.mxu0 %v4869
  %7502 = vmatprep.subr.bf16.mxu0 %v4878
  %7503 = vmatpush1.bf16.msra.mxu0 %v4877
  %7504 = vmatprep.subr.bf16.mxu0 %v4886
  %7505 = vmatpush1.bf16.msra.mxu0 %v4885
  %7506 = vmatprep.subr.bf16.mxu0 %v4894
  %7507 = vmatpush1.bf16.msra.mxu0 %v4893
  %7508 = vmatprep.subr.bf16.mxu0 %v4902
  %7509 = vmatpush1.bf16.msra.mxu0 %v4901
  %7510 = vmatprep.subr.bf16.mxu0 %v4910
  %7511 = vmatpush1.bf16.msra.mxu0 %v4909
  %7512 = vmatprep.subr.bf16.mxu0 %v4918
  %7513 = vmatpush1.bf16.msra.mxu0 %v4917
  %7514 = vmatprep.subr.bf16.mxu0 %v4926
  %7515 = vmatpush1.bf16.msra.mxu0 %v4925
  %7516 = vmatprep.subr.bf16.mxu0 %v4934
  %7517 = vmatpush1.bf16.msra.mxu0 %v4933
  %7518 = vmatprep.subr.bf16.mxu0 %v4942
  %7519 = vmatpush1.bf16.msra.mxu0 %v4941
  %7520 = vmatprep.subr.bf16.mxu0 %v4950
  %7521 = vmatpush1.bf16.msra.mxu0 %v4949
  %7522 = vmatprep.subr.bf16.mxu0 %v4958
  %7523 = vmatpush1.bf16.msra.mxu0 %v4957
  %7524 = vmatprep.subr.bf16.mxu0 %v4966
  %7525 = vmatpush1.bf16.msra.mxu0 %v4965
  %7526 = vmatprep.mubr.bf16.mxu0 %v53
  %7527 = vmatmul.mubr.bf16.gmra.mrb[0].mxu0 %v52
  %v7528 = vpop.f32.mrb[0].mxu0
  %v7529 = vadd.f32 %v7488, %v7528
  %v7530 = vpop.f32.mrb[0].mxu0
  %v7531 = vadd.f32 %v7490, %v7530
  %v7532 = vpop.f32.mrb[0].mxu0
  %v7533 = vpop.f32.mrb[0].mxu0
  %7534 = vdwg.mxu0
  %7535 = vmatprep.subr.bf16.mxu0 %v4974
  %7536 = vmatpush1.bf16.msra.mxu0 %v4973
  %7537 = vmatprep.subr.bf16.mxu0 %v4982
  %7538 = vmatpush1.bf16.msra.mxu0 %v4981
  %7539 = vmatprep.subr.bf16.mxu0 %v4990
  %7540 = vmatpush1.bf16.msra.mxu0 %v4989
  %7541 = vmatprep.subr.bf16.mxu0 %v4998
  %7542 = vmatpush1.bf16.msra.mxu0 %v4997
  %7543 = vmatprep.subr.bf16.mxu0 %v5006
  %7544 = vmatpush1.bf16.msra.mxu0 %v5005
  %7545 = vmatprep.subr.bf16.mxu0 %v5014
  %7546 = vmatpush1.bf16.msra.mxu0 %v5013
  %7547 = vmatprep.subr.bf16.mxu0 %v5022
  %7548 = vmatpush1.bf16.msra.mxu0 %v5021
  %7549 = vmatprep.subr.bf16.mxu0 %v5030
  %7550 = vmatpush1.bf16.msra.mxu0 %v5029
  %7551 = vmatprep.subr.bf16.mxu0 %v5038
  %7552 = vmatpush1.bf16.msra.mxu0 %v5037
  %7553 = vmatprep.subr.bf16.mxu0 %v5046
  %7554 = vmatpush1.bf16.msra.mxu0 %v5045
  %7555 = vmatprep.subr.bf16.mxu0 %v5054
  %7556 = vmatpush1.bf16.msra.mxu0 %v5053
  %7557 = vmatprep.subr.bf16.mxu0 %v5062
  %7558 = vmatpush1.bf16.msra.mxu0 %v5061
  %7559 = vmatprep.subr.bf16.mxu0 %v5070
  %7560 = vmatpush1.bf16.msra.mxu0 %v5069
  %7561 = vmatprep.subr.bf16.mxu0 %v5078
  %7562 = vmatpush1.bf16.msra.mxu0 %v5077
  %7563 = vmatprep.subr.bf16.mxu0 %v5086
  %7564 = vmatpush1.bf16.msra.mxu0 %v5085
  %7565 = vmatprep.subr.bf16.mxu0 %v5094
  %7566 = vmatpush1.bf16.msra.mxu0 %v5093
  %7567 = vmatprep.mubr.bf16.mxu0 %v55
  %7568 = vmatmul.mubr.bf16.gmra.mrb[0].mxu0 %v54
  %v7569 = vpop.f32.mrb[0].mxu0
  %v7570 = vadd.f32 %v7529, %v7569
  %v7571 = vpop.f32.mrb[0].mxu0
  %v7572 = vadd.f32 %v7531, %v7571
  %v7573 = vpop.f32.mrb[0].mxu0
  %v7574 = vpop.f32.mrb[0].mxu0
  %7575 = vdwg.mxu0
  %7576 = vmatprep.subr.bf16.mxu0 %v5102
  %7577 = vmatpush1.bf16.msra.mxu0 %v5101
  %7578 = vmatprep.subr.bf16.mxu0 %v5110
  %7579 = vmatpush1.bf16.msra.mxu0 %v5109
  %7580 = vmatprep.subr.bf16.mxu0 %v5118
  %7581 = vmatpush1.bf16.msra.mxu0 %v5117
  %7582 = vmatprep.subr.bf16.mxu0 %v5126
  %7583 = vmatpush1.bf16.msra.mxu0 %v5125
  %7584 = vmatprep.subr.bf16.mxu0 %v5134
  %7585 = vmatpush1.bf16.msra.mxu0 %v5133
  %7586 = vmatprep.subr.bf16.mxu0 %v5142
  %7587 = vmatpush1.bf16.msra.mxu0 %v5141
  %7588 = vmatprep.subr.bf16.mxu0 %v5150
  %7589 = vmatpush1.bf16.msra.mxu0 %v5149
  %7590 = vmatprep.subr.bf16.mxu0 %v5158
  %7591 = vmatpush1.bf16.msra.mxu0 %v5157
  %7592 = vmatprep.subr.bf16.mxu0 %v5166
  %7593 = vmatpush1.bf16.msra.mxu0 %v5165
  %7594 = vmatprep.subr.bf16.mxu0 %v5174
  %7595 = vmatpush1.bf16.msra.mxu0 %v5173
  %7596 = vmatprep.subr.bf16.mxu0 %v5182
  %7597 = vmatpush1.bf16.msra.mxu0 %v5181
  %7598 = vmatprep.subr.bf16.mxu0 %v5190
  %7599 = vmatpush1.bf16.msra.mxu0 %v5189
  %7600 = vmatprep.subr.bf16.mxu0 %v5198
  %7601 = vmatpush1.bf16.msra.mxu0 %v5197
  %7602 = vmatprep.subr.bf16.mxu0 %v5206
  %7603 = vmatpush1.bf16.msra.mxu0 %v5205
  %7604 = vmatprep.subr.bf16.mxu0 %v5214
  %7605 = vmatpush1.bf16.msra.mxu0 %v5213
  %7606 = vmatprep.subr.bf16.mxu0 %v5222
  %7607 = vmatpush1.bf16.msra.mxu0 %v5221
  %7608 = vmatprep.mubr.bf16.mxu0 %v57
  %7609 = vmatmul.mubr.bf16.gmra.mrb[0].mxu0 %v56
  %v7610 = vpop.f32.mrb[0].mxu0
  %v7611 = vadd.f32 %v7570, %v7610
  %v7612 = vpop.f32.mrb[0].mxu0
  %v7613 = vadd.f32 %v7572, %v7612
  %v7614 = vpop.f32.mrb[0].mxu0
  %v7615 = vpop.f32.mrb[0].mxu0
  %7616 = vdwg.mxu0
  %7617 = vmatprep.subr.bf16.mxu0 %v5230
  %7618 = vmatpush1.bf16.msra.mxu0 %v5229
  %7619 = vmatprep.subr.bf16.mxu0 %v5238
  %7620 = vmatpush1.bf16.msra.mxu0 %v5237
  %7621 = vmatprep.subr.bf16.mxu0 %v5246
  %7622 = vmatpush1.bf16.msra.mxu0 %v5245
  %7623 = vmatprep.subr.bf16.mxu0 %v5254
  %7624 = vmatpush1.bf16.msra.mxu0 %v5253
  %7625 = vmatprep.subr.bf16.mxu0 %v5262
  %7626 = vmatpush1.bf16.msra.mxu0 %v5261
  %7627 = vmatprep.subr.bf16.mxu0 %v5270
  %7628 = vmatpush1.bf16.msra.mxu0 %v5269
  %7629 = vmatprep.subr.bf16.mxu0 %v5278
  %7630 = vmatpush1.bf16.msra.mxu0 %v5277
  %7631 = vmatprep.subr.bf16.mxu0 %v5286
  %7632 = vmatpush1.bf16.msra.mxu0 %v5285
  %7633 = vmatprep.subr.bf16.mxu0 %v5294
  %7634 = vmatpush1.bf16.msra.mxu0 %v5293
  %7635 = vmatprep.subr.bf16.mxu0 %v5302
  %7636 = vmatpush1.bf16.msra.mxu0 %v5301
  %7637 = vmatprep.subr.bf16.mxu0 %v5310
  %7638 = vmatpush1.bf16.msra.mxu0 %v5309
  %7639 = vmatprep.subr.bf16.mxu0 %v5318
  %7640 = vmatpush1.bf16.msra.mxu0 %v5317
  %7641 = vmatprep.subr.bf16.mxu0 %v5326
  %7642 = vmatpush1.bf16.msra.mxu0 %v5325
  %7643 = vmatprep.subr.bf16.mxu0 %v5334
  %7644 = vmatpush1.bf16.msra.mxu0 %v5333
  %7645 = vmatprep.subr.bf16.mxu0 %v5342
  %7646 = vmatpush1.bf16.msra.mxu0 %v5341
  %7647 = vmatprep.subr.bf16.mxu0 %v5350
  %7648 = vmatpush1.bf16.msra.mxu0 %v5349
  %7649 = vmatprep.mubr.bf16.mxu0 %v59
  %7650 = vmatmul.mubr.bf16.gmra.mrb[0].mxu0 %v58
  %v7651 = vpop.f32.mrb[0].mxu0
  %v7652 = vadd.f32 %v7611, %v7651
  %v7653 = vpop.f32.mrb[0].mxu0
  %v7654 = vadd.f32 %v7613, %v7653
  %v7655 = vpop.f32.mrb[0].mxu0
  %v7656 = vpop.f32.mrb[0].mxu0
  %7657 = vdwg.mxu0
  %7658 = vmatprep.subr.bf16.mxu0 %v5358
  %7659 = vmatpush1.bf16.msra.mxu0 %v5357
  %7660 = vmatprep.subr.bf16.mxu0 %v5366
  %7661 = vmatpush1.bf16.msra.mxu0 %v5365
  %7662 = vmatprep.subr.bf16.mxu0 %v5374
  %7663 = vmatpush1.bf16.msra.mxu0 %v5373
  %7664 = vmatprep.subr.bf16.mxu0 %v5382
  %7665 = vmatpush1.bf16.msra.mxu0 %v5381
  %7666 = vmatprep.subr.bf16.mxu0 %v5390
  %7667 = vmatpush1.bf16.msra.mxu0 %v5389
  %7668 = vmatprep.subr.bf16.mxu0 %v5398
  %7669 = vmatpush1.bf16.msra.mxu0 %v5397
  %7670 = vmatprep.subr.bf16.mxu0 %v5406
  %7671 = vmatpush1.bf16.msra.mxu0 %v5405
  %7672 = vmatprep.subr.bf16.mxu0 %v5414
  %7673 = vmatpush1.bf16.msra.mxu0 %v5413
  %7674 = vmatprep.subr.bf16.mxu0 %v5422
  %7675 = vmatpush1.bf16.msra.mxu0 %v5421
  %7676 = vmatprep.subr.bf16.mxu0 %v5430
  %7677 = vmatpush1.bf16.msra.mxu0 %v5429
  %7678 = vmatprep.subr.bf16.mxu0 %v5438
  %7679 = vmatpush1.bf16.msra.mxu0 %v5437
  %7680 = vmatprep.subr.bf16.mxu0 %v5446
  %7681 = vmatpush1.bf16.msra.mxu0 %v5445
  %7682 = vmatprep.subr.bf16.mxu0 %v5454
  %7683 = vmatpush1.bf16.msra.mxu0 %v5453
  %7684 = vmatprep.subr.bf16.mxu0 %v5462
  %7685 = vmatpush1.bf16.msra.mxu0 %v5461
  %7686 = vmatprep.subr.bf16.mxu0 %v5470
  %7687 = vmatpush1.bf16.msra.mxu0 %v5469
  %7688 = vmatprep.subr.bf16.mxu0 %v5478
  %7689 = vmatpush1.bf16.msra.mxu0 %v5477
  %7690 = vmatprep.mubr.bf16.mxu0 %v61
  %7691 = vmatmul.mubr.bf16.gmra.mrb[0].mxu0 %v60
  %v7692 = vpop.f32.mrb[0].mxu0
  %v7693 = vadd.f32 %v7652, %v7692
  %v7694 = vpop.f32.mrb[0].mxu0
  %v7695 = vadd.f32 %v7654, %v7694
  %v7696 = vpop.f32.mrb[0].mxu0
  %v7697 = vpop.f32.mrb[0].mxu0
  %7698 = vdwg.mxu0
  %7699 = vmatprep.subr.bf16.mxu0 %v5486
  %7700 = vmatpush1.bf16.msra.mxu0 %v5485
  %7701 = vmatprep.subr.bf16.mxu0 %v5494
  %7702 = vmatpush1.bf16.msra.mxu0 %v5493
  %7703 = vmatprep.subr.bf16.mxu0 %v5502
  %7704 = vmatpush1.bf16.msra.mxu0 %v5501
  %7705 = vmatprep.subr.bf16.mxu0 %v5510
  %7706 = vmatpush1.bf16.msra.mxu0 %v5509
  %7707 = vmatprep.subr.bf16.mxu0 %v5518
  %7708 = vmatpush1.bf16.msra.mxu0 %v5517
  %7709 = vmatprep.subr.bf16.mxu0 %v5526
  %7710 = vmatpush1.bf16.msra.mxu0 %v5525
  %7711 = vmatprep.subr.bf16.mxu0 %v5534
  %7712 = vmatpush1.bf16.msra.mxu0 %v5533
  %7713 = vmatprep.subr.bf16.mxu0 %v5542
  %7714 = vmatpush1.bf16.msra.mxu0 %v5541
  %7715 = vmatprep.subr.bf16.mxu0 0
  %7716 = vmatpush1.bf16.msra.mxu0 0
  %7717 = vmatprep.subr.bf16.mxu0 0
  %7718 = vmatpush1.bf16.msra.mxu0 0
  %7719 = vmatprep.subr.bf16.mxu0 0
  %7720 = vmatpush1.bf16.msra.mxu0 0
  %7721 = vmatprep.subr.bf16.mxu0 0
  %7722 = vmatpush1.bf16.msra.mxu0 0
  %7723 = vmatprep.subr.bf16.mxu0 0
  %7724 = vmatpush1.bf16.msra.mxu0 0
  %7725 = vmatprep.subr.bf16.mxu0 0
  %7726 = vmatpush1.bf16.msra.mxu0 0
  %7727 = vmatprep.subr.bf16.mxu0 0
  %7728 = vmatpush1.bf16.msra.mxu0 0
  %7729 = vmatprep.subr.bf16.mxu0 0
  %7730 = vmatpush1.bf16.msra.mxu0 0
  %7731 = vmatprep.mubr.bf16.mxu0 0
  %7732 = vmatmul.mubr.bf16.gmra.mrb[0].mxu0 %v62
  %v7733 = vpop.f32.mrb[0].mxu0
  %v7734 = vadd.f32 %v7693, %v7733
  %v7735 = vpop.f32.mrb[0].mxu0
  %v7736 = vadd.f32 %v7695, %v7735
  %v7737 = vpop.f32.mrb[0].mxu0
  %v7738 = vpop.f32.mrb[0].mxu0
  %7739 = vdwg.mxu0
  %7740 = vmatprep.subr.bf16.mxu0 %v4464
  %7741 = vmatpush1.bf16.msra.mxu0 %v4463
  %7742 = vmatprep.subr.bf16.mxu0 %v4472
  %7743 = vmatpush1.bf16.msra.mxu0 %v4471
  %7744 = vmatprep.subr.bf16.mxu0 %v4480
  %7745 = vmatpush1.bf16.msra.mxu0 %v4479
  %7746 = vmatprep.subr.bf16.mxu0 %v4488
  %7747 = vmatpush1.bf16.msra.mxu0 %v4487
  %7748 = vmatprep.subr.bf16.mxu0 %v4496
  %7749 = vmatpush1.bf16.msra.mxu0 %v4495
  %7750 = vmatprep.subr.bf16.mxu0 %v4504
  %7751 = vmatpush1.bf16.msra.mxu0 %v4503
  %7752 = vmatprep.subr.bf16.mxu0 %v4512
  %7753 = vmatpush1.bf16.msra.mxu0 %v4511
  %7754 = vmatprep.subr.bf16.mxu0 %v4520
  %7755 = vmatpush1.bf16.msra.mxu0 %v4519
  %7756 = vmatprep.subr.bf16.mxu0 %v4528
  %7757 = vmatpush1.bf16.msra.mxu0 %v4527
  %7758 = vmatprep.subr.bf16.mxu0 %v4536
  %7759 = vmatpush1.bf16.msra.mxu0 %v4535
  %7760 = vmatprep.subr.bf16.mxu0 %v4544
  %7761 = vmatpush1.bf16.msra.mxu0 %v4543
  %7762 = vmatprep.subr.bf16.mxu0 %v4552
  %7763 = vmatpush1.bf16.msra.mxu0 %v4551
  %7764 = vmatprep.subr.bf16.mxu0 %v4560
  %7765 = vmatpush1.bf16.msra.mxu0 %v4559
  %7766 = vmatprep.subr.bf16.mxu0 %v4568
  %7767 = vmatpush1.bf16.msra.mxu0 %v4567
  %7768 = vmatprep.subr.bf16.mxu0 %v4576
  %7769 = vmatpush1.bf16.msra.mxu0 %v4575
  %7770 = vmatprep.subr.bf16.mxu0 %v4584
  %7771 = vmatpush1.bf16.msra.mxu0 %v4583
  %7772 = vmatprep.mubr.bf16.mxu0 %v47
  %7773 = vmatmul.mubr.bf16.gmra.mrb[0].mxu0 %v46
  %v7774 = vpop.f32.mrb[0].mxu0
  %v7775 = vadd.f32 %v1180, %v7774
  %v7776 = vpop.f32.mrb[0].mxu0
  %v7777 = vadd.f32 %v1184, %v7776
  %v7778 = vpop.f32.mrb[0].mxu0
  %v7779 = vpop.f32.mrb[0].mxu0
  %7780 = vdwg.mxu0
  %7781 = vmatprep.subr.bf16.mxu0 %v4592
  %7782 = vmatpush1.bf16.msra.mxu0 %v4591
  %7783 = vmatprep.subr.bf16.mxu0 %v4600
  %7784 = vmatpush1.bf16.msra.mxu0 %v4599
  %7785 = vmatprep.subr.bf16.mxu0 %v4608
  %7786 = vmatpush1.bf16.msra.mxu0 %v4607
  %7787 = vmatprep.subr.bf16.mxu0 %v4616
  %7788 = vmatpush1.bf16.msra.mxu0 %v4615
  %7789 = vmatprep.subr.bf16.mxu0 %v4624
  %7790 = vmatpush1.bf16.msra.mxu0 %v4623
  %7791 = vmatprep.subr.bf16.mxu0 %v4632
  %7792 = vmatpush1.bf16.msra.mxu0 %v4631
  %7793 = vmatprep.subr.bf16.mxu0 %v4640
  %7794 = vmatpush1.bf16.msra.mxu0 %v4639
  %7795 = vmatprep.subr.bf16.mxu0 %v4648
  %7796 = vmatpush1.bf16.msra.mxu0 %v4647
  %7797 = vmatprep.subr.bf16.mxu0 %v4656
  %7798 = vmatpush1.bf16.msra.mxu0 %v4655
  %7799 = vmatprep.subr.bf16.mxu0 %v4664
  %7800 = vmatpush1.bf16.msra.mxu0 %v4663
  %7801 = vmatprep.subr.bf16.mxu0 %v4672
  %7802 = vmatpush1.bf16.msra.mxu0 %v4671
  %7803 = vmatprep.subr.bf16.mxu0 %v4680
  %7804 = vmatpush1.bf16.msra.mxu0 %v4679
  %7805 = vmatprep.subr.bf16.mxu0 %v4688
  %7806 = vmatpush1.bf16.msra.mxu0 %v4687
  %7807 = vmatprep.subr.bf16.mxu0 %v4696
  %7808 = vmatpush1.bf16.msra.mxu0 %v4695
  %7809 = vmatprep.subr.bf16.mxu0 %v4704
  %7810 = vmatpush1.bf16.msra.mxu0 %v4703
  %7811 = vmatprep.subr.bf16.mxu0 %v4712
  %7812 = vmatpush1.bf16.msra.mxu0 %v4711
  %7813 = vmatprep.mubr.bf16.mxu0 %v49
  %7814 = vmatmul.mubr.bf16.gmra.mrb[0].mxu0 %v48
  %v7815 = vpop.f32.mrb[0].mxu0
  %v7816 = vadd.f32 %v7775, %v7815
  %v7817 = vpop.f32.mrb[0].mxu0
  %v7818 = vadd.f32 %v7777, %v7817
  %v7819 = vpop.f32.mrb[0].mxu0
  %v7820 = vpop.f32.mrb[0].mxu0
  %7821 = vdwg.mxu0
  %7822 = vmatprep.subr.bf16.mxu0 %v4720
  %7823 = vmatpush1.bf16.msra.mxu0 %v4719
  %7824 = vmatprep.subr.bf16.mxu0 %v4728
  %7825 = vmatpush1.bf16.msra.mxu0 %v4727
  %7826 = vmatprep.subr.bf16.mxu0 %v4736
  %7827 = vmatpush1.bf16.msra.mxu0 %v4735
  %7828 = vmatprep.subr.bf16.mxu0 %v4744
  %7829 = vmatpush1.bf16.msra.mxu0 %v4743
  %7830 = vmatprep.subr.bf16.mxu0 %v4752
  %7831 = vmatpush1.bf16.msra.mxu0 %v4751
  %7832 = vmatprep.subr.bf16.mxu0 %v4760
  %7833 = vmatpush1.bf16.msra.mxu0 %v4759
  %7834 = vmatprep.subr.bf16.mxu0 %v4768
  %7835 = vmatpush1.bf16.msra.mxu0 %v4767
  %7836 = vmatprep.subr.bf16.mxu0 %v4776
  %7837 = vmatpush1.bf16.msra.mxu0 %v4775
  %7838 = vmatprep.subr.bf16.mxu0 %v4784
  %7839 = vmatpush1.bf16.msra.mxu0 %v4783
  %7840 = vmatprep.subr.bf16.mxu0 %v4792
  %7841 = vmatpush1.bf16.msra.mxu0 %v4791
  %7842 = vmatprep.subr.bf16.mxu0 %v4800
  %7843 = vmatpush1.bf16.msra.mxu0 %v4799
  %7844 = vmatprep.subr.bf16.mxu0 %v4808
  %7845 = vmatpush1.bf16.msra.mxu0 %v4807
  %7846 = vmatprep.subr.bf16.mxu0 %v4816
  %7847 = vmatpush1.bf16.msra.mxu0 %v4815
  %7848 = vmatprep.subr.bf16.mxu0 %v4824
  %7849 = vmatpush1.bf16.msra.mxu0 %v4823
  %7850 = vmatprep.subr.bf16.mxu0 %v4832
  %7851 = vmatpush1.bf16.msra.mxu0 %v4831
  %7852 = vmatprep.subr.bf16.mxu0 %v4840
  %7853 = vmatpush1.bf16.msra.mxu0 %v4839
  %7854 = vmatprep.mubr.bf16.mxu0 %v51
  %7855 = vmatmul.mubr.bf16.gmra.mrb[0].mxu0 %v50
  %v7856 = vpop.f32.mrb[0].mxu0
  %v7857 = vadd.f32 %v7816, %v7856
  %v7858 = vpop.f32.mrb[0].mxu0
  %v7859 = vadd.f32 %v7818, %v7858
  %v7860 = vpop.f32.mrb[0].mxu0
  %v7861 = vpop.f32.mrb[0].mxu0
  %7862 = vdwg.mxu0
  %7863 = vmatprep.subr.bf16.mxu0 %v4848
  %7864 = vmatpush1.bf16.msra.mxu0 %v4847
  %7865 = vmatprep.subr.bf16.mxu0 %v4856
  %7866 = vmatpush1.bf16.msra.mxu0 %v4855
  %7867 = vmatprep.subr.bf16.mxu0 %v4864
  %7868 = vmatpush1.bf16.msra.mxu0 %v4863
  %7869 = vmatprep.subr.bf16.mxu0 %v4872
  %7870 = vmatpush1.bf16.msra.mxu0 %v4871
  %7871 = vmatprep.subr.bf16.mxu0 %v4880
  %7872 = vmatpush1.bf16.msra.mxu0 %v4879
  %7873 = vmatprep.subr.bf16.mxu0 %v4888
  %7874 = vmatpush1.bf16.msra.mxu0 %v4887
  %7875 = vmatprep.subr.bf16.mxu0 %v4896
  %7876 = vmatpush1.bf16.msra.mxu0 %v4895
  %7877 = vmatprep.subr.bf16.mxu0 %v4904
  %7878 = vmatpush1.bf16.msra.mxu0 %v4903
  %7879 = vmatprep.subr.bf16.mxu0 %v4912
  %7880 = vmatpush1.bf16.msra.mxu0 %v4911
  %7881 = vmatprep.subr.bf16.mxu0 %v4920
  %7882 = vmatpush1.bf16.msra.mxu0 %v4919
  %7883 = vmatprep.subr.bf16.mxu0 %v4928
  %7884 = vmatpush1.bf16.msra.mxu0 %v4927
  %7885 = vmatprep.subr.bf16.mxu0 %v4936
  %7886 = vmatpush1.bf16.msra.mxu0 %v4935
  %7887 = vmatprep.subr.bf16.mxu0 %v4944
  %7888 = vmatpush1.bf16.msra.mxu0 %v4943
  %7889 = vmatprep.subr.bf16.mxu0 %v4952
  %7890 = vmatpush1.bf16.msra.mxu0 %v4951
  %7891 = vmatprep.subr.bf16.mxu0 %v4960
  %7892 = vmatpush1.bf16.msra.mxu0 %v4959
  %7893 = vmatprep.subr.bf16.mxu0 %v4968
  %7894 = vmatpush1.bf16.msra.mxu0 %v4967
  %7895 = vmatprep.mubr.bf16.mxu0 %v53
  %7896 = vmatmul.mubr.bf16.gmra.mrb[0].mxu0 %v52
  %v7897 = vpop.f32.mrb[0].mxu0
  %v7898 = vadd.f32 %v7857, %v7897
  %v7899 = vpop.f32.mrb[0].mxu0
  %v7900 = vadd.f32 %v7859, %v7899
  %v7901 = vpop.f32.mrb[0].mxu0
  %v7902 = vpop.f32.mrb[0].mxu0
  %7903 = vdwg.mxu0
  %7904 = vmatprep.subr.bf16.mxu0 %v4976
  %7905 = vmatpush1.bf16.msra.mxu0 %v4975
  %7906 = vmatprep.subr.bf16.mxu0 %v4984
  %7907 = vmatpush1.bf16.msra.mxu0 %v4983
  %7908 = vmatprep.subr.bf16.mxu0 %v4992
  %7909 = vmatpush1.bf16.msra.mxu0 %v4991
  %7910 = vmatprep.subr.bf16.mxu0 %v5000
  %7911 = vmatpush1.bf16.msra.mxu0 %v4999
  %7912 = vmatprep.subr.bf16.mxu0 %v5008
  %7913 = vmatpush1.bf16.msra.mxu0 %v5007
  %7914 = vmatprep.subr.bf16.mxu0 %v5016
  %7915 = vmatpush1.bf16.msra.mxu0 %v5015
  %7916 = vmatprep.subr.bf16.mxu0 %v5024
  %7917 = vmatpush1.bf16.msra.mxu0 %v5023
  %7918 = vmatprep.subr.bf16.mxu0 %v5032
  %7919 = vmatpush1.bf16.msra.mxu0 %v5031
  %7920 = vmatprep.subr.bf16.mxu0 %v5040
  %7921 = vmatpush1.bf16.msra.mxu0 %v5039
  %7922 = vmatprep.subr.bf16.mxu0 %v5048
  %7923 = vmatpush1.bf16.msra.mxu0 %v5047
  %7924 = vmatprep.subr.bf16.mxu0 %v5056
  %7925 = vmatpush1.bf16.msra.mxu0 %v5055
  %7926 = vmatprep.subr.bf16.mxu0 %v5064
  %7927 = vmatpush1.bf16.msra.mxu0 %v5063
  %7928 = vmatprep.subr.bf16.mxu0 %v5072
  %7929 = vmatpush1.bf16.msra.mxu0 %v5071
  %7930 = vmatprep.subr.bf16.mxu0 %v5080
  %7931 = vmatpush1.bf16.msra.mxu0 %v5079
  %7932 = vmatprep.subr.bf16.mxu0 %v5088
  %7933 = vmatpush1.bf16.msra.mxu0 %v5087
  %7934 = vmatprep.subr.bf16.mxu0 %v5096
  %7935 = vmatpush1.bf16.msra.mxu0 %v5095
  %7936 = vmatprep.mubr.bf16.mxu0 %v55
  %7937 = vmatmul.mubr.bf16.gmra.mrb[0].mxu0 %v54
  %v7938 = vpop.f32.mrb[0].mxu0
  %v7939 = vadd.f32 %v7898, %v7938
  %v7940 = vpop.f32.mrb[0].mxu0
  %v7941 = vadd.f32 %v7900, %v7940
  %v7942 = vpop.f32.mrb[0].mxu0
  %v7943 = vpop.f32.mrb[0].mxu0
  %7944 = vdwg.mxu0
  %7945 = vmatprep.subr.bf16.mxu0 %v5104
  %7946 = vmatpush1.bf16.msra.mxu0 %v5103
  %7947 = vmatprep.subr.bf16.mxu0 %v5112
  %7948 = vmatpush1.bf16.msra.mxu0 %v5111
  %7949 = vmatprep.subr.bf16.mxu0 %v5120
  %7950 = vmatpush1.bf16.msra.mxu0 %v5119
  %7951 = vmatprep.subr.bf16.mxu0 %v5128
  %7952 = vmatpush1.bf16.msra.mxu0 %v5127
  %7953 = vmatprep.subr.bf16.mxu0 %v5136
  %7954 = vmatpush1.bf16.msra.mxu0 %v5135
  %7955 = vmatprep.subr.bf16.mxu0 %v5144
  %7956 = vmatpush1.bf16.msra.mxu0 %v5143
  %7957 = vmatprep.subr.bf16.mxu0 %v5152
  %7958 = vmatpush1.bf16.msra.mxu0 %v5151
  %7959 = vmatprep.subr.bf16.mxu0 %v5160
  %7960 = vmatpush1.bf16.msra.mxu0 %v5159
  %7961 = vmatprep.subr.bf16.mxu0 %v5168
  %7962 = vmatpush1.bf16.msra.mxu0 %v5167
  %7963 = vmatprep.subr.bf16.mxu0 %v5176
  %7964 = vmatpush1.bf16.msra.mxu0 %v5175
  %7965 = vmatprep.subr.bf16.mxu0 %v5184
  %7966 = vmatpush1.bf16.msra.mxu0 %v5183
  %7967 = vmatprep.subr.bf16.mxu0 %v5192
  %7968 = vmatpush1.bf16.msra.mxu0 %v5191
  %7969 = vmatprep.subr.bf16.mxu0 %v5200
  %7970 = vmatpush1.bf16.msra.mxu0 %v5199
  %7971 = vmatprep.subr.bf16.mxu0 %v5208
  %7972 = vmatpush1.bf16.msra.mxu0 %v5207
  %7973 = vmatprep.subr.bf16.mxu0 %v5216
  %7974 = vmatpush1.bf16.msra.mxu0 %v5215
  %7975 = vmatprep.subr.bf16.mxu0 %v5224
  %7976 = vmatpush1.bf16.msra.mxu0 %v5223
  %7977 = vmatprep.mubr.bf16.mxu0 %v57
  %7978 = vmatmul.mubr.bf16.gmra.mrb[0].mxu0 %v56
  %v7979 = vpop.f32.mrb[0].mxu0
  %v7980 = vadd.f32 %v7939, %v7979
  %v7981 = vpop.f32.mrb[0].mxu0
  %v7982 = vadd.f32 %v7941, %v7981
  %v7983 = vpop.f32.mrb[0].mxu0
  %v7984 = vpop.f32.mrb[0].mxu0
  %7985 = vdwg.mxu0
  %7986 = vmatprep.subr.bf16.mxu0 %v5232
  %7987 = vmatpush1.bf16.msra.mxu0 %v5231
  %7988 = vmatprep.subr.bf16.mxu0 %v5240
  %7989 = vmatpush1.bf16.msra.mxu0 %v5239
  %7990 = vmatprep.subr.bf16.mxu0 %v5248
  %7991 = vmatpush1.bf16.msra.mxu0 %v5247
  %7992 = vmatprep.subr.bf16.mxu0 %v5256
  %7993 = vmatpush1.bf16.msra.mxu0 %v5255
  %7994 = vmatprep.subr.bf16.mxu0 %v5264
  %7995 = vmatpush1.bf16.msra.mxu0 %v5263
  %7996 = vmatprep.subr.bf16.mxu0 %v5272
  %7997 = vmatpush1.bf16.msra.mxu0 %v5271
  %7998 = vmatprep.subr.bf16.mxu0 %v5280
  %7999 = vmatpush1.bf16.msra.mxu0 %v5279
  %8000 = vmatprep.subr.bf16.mxu0 %v5288
  %8001 = vmatpush1.bf16.msra.mxu0 %v5287
  %8002 = vmatprep.subr.bf16.mxu0 %v5296
  %8003 = vmatpush1.bf16.msra.mxu0 %v5295
  %8004 = vmatprep.subr.bf16.mxu0 %v5304
  %8005 = vmatpush1.bf16.msra.mxu0 %v5303
  %8006 = vmatprep.subr.bf16.mxu0 %v5312
  %8007 = vmatpush1.bf16.msra.mxu0 %v5311
  %8008 = vmatprep.subr.bf16.mxu0 %v5320
  %8009 = vmatpush1.bf16.msra.mxu0 %v5319
  %8010 = vmatprep.subr.bf16.mxu0 %v5328
  %8011 = vmatpush1.bf16.msra.mxu0 %v5327
  %8012 = vmatprep.subr.bf16.mxu0 %v5336
  %8013 = vmatpush1.bf16.msra.mxu0 %v5335
  %8014 = vmatprep.subr.bf16.mxu0 %v5344
  %8015 = vmatpush1.bf16.msra.mxu0 %v5343
  %8016 = vmatprep.subr.bf16.mxu0 %v5352
  %8017 = vmatpush1.bf16.msra.mxu0 %v5351
  %8018 = vmatprep.mubr.bf16.mxu0 %v59
  %8019 = vmatmul.mubr.bf16.gmra.mrb[0].mxu0 %v58
  %v8020 = vpop.f32.mrb[0].mxu0
  %v8021 = vadd.f32 %v7980, %v8020
  %v8022 = vpop.f32.mrb[0].mxu0
  %v8023 = vadd.f32 %v7982, %v8022
  %v8024 = vpop.f32.mrb[0].mxu0
  %v8025 = vpop.f32.mrb[0].mxu0
  %8026 = vdwg.mxu0
  %8027 = vmatprep.subr.bf16.mxu0 %v5360
  %8028 = vmatpush1.bf16.msra.mxu0 %v5359
  %8029 = vmatprep.subr.bf16.mxu0 %v5368
  %8030 = vmatpush1.bf16.msra.mxu0 %v5367
  %8031 = vmatprep.subr.bf16.mxu0 %v5376
  %8032 = vmatpush1.bf16.msra.mxu0 %v5375
  %8033 = vmatprep.subr.bf16.mxu0 %v5384
  %8034 = vmatpush1.bf16.msra.mxu0 %v5383
  %8035 = vmatprep.subr.bf16.mxu0 %v5392
  %8036 = vmatpush1.bf16.msra.mxu0 %v5391
  %8037 = vmatprep.subr.bf16.mxu0 %v5400
  %8038 = vmatpush1.bf16.msra.mxu0 %v5399
  %8039 = vmatprep.subr.bf16.mxu0 %v5408
  %8040 = vmatpush1.bf16.msra.mxu0 %v5407
  %8041 = vmatprep.subr.bf16.mxu0 %v5416
  %8042 = vmatpush1.bf16.msra.mxu0 %v5415
  %8043 = vmatprep.subr.bf16.mxu0 %v5424
  %8044 = vmatpush1.bf16.msra.mxu0 %v5423
  %8045 = vmatprep.subr.bf16.mxu0 %v5432
  %8046 = vmatpush1.bf16.msra.mxu0 %v5431
  %8047 = vmatprep.subr.bf16.mxu0 %v5440
  %8048 = vmatpush1.bf16.msra.mxu0 %v5439
  %8049 = vmatprep.subr.bf16.mxu0 %v5448
  %8050 = vmatpush1.bf16.msra.mxu0 %v5447
  %8051 = vmatprep.subr.bf16.mxu0 %v5456
  %8052 = vmatpush1.bf16.msra.mxu0 %v5455
  %8053 = vmatprep.subr.bf16.mxu0 %v5464
  %8054 = vmatpush1.bf16.msra.mxu0 %v5463
  %8055 = vmatprep.subr.bf16.mxu0 %v5472
  %8056 = vmatpush1.bf16.msra.mxu0 %v5471
  %8057 = vmatprep.subr.bf16.mxu0 %v5480
  %8058 = vmatpush1.bf16.msra.mxu0 %v5479
  %8059 = vmatprep.mubr.bf16.mxu0 %v61
  %8060 = vmatmul.mubr.bf16.gmra.mrb[0].mxu0 %v60
  %v8061 = vpop.f32.mrb[0].mxu0
  %v8062 = vadd.f32 %v8021, %v8061
  %v8063 = vpop.f32.mrb[0].mxu0
  %v8064 = vadd.f32 %v8023, %v8063
  %v8065 = vpop.f32.mrb[0].mxu0
  %v8066 = vpop.f32.mrb[0].mxu0
  %8067 = vdwg.mxu0
  %8068 = vmatprep.subr.bf16.mxu0 %v5488
  %8069 = vmatpush1.bf16.msra.mxu0 %v5487
  %8070 = vmatprep.subr.bf16.mxu0 %v5496
  %8071 = vmatpush1.bf16.msra.mxu0 %v5495
  %8072 = vmatprep.subr.bf16.mxu0 %v5504
  %8073 = vmatpush1.bf16.msra.mxu0 %v5503
  %8074 = vmatprep.subr.bf16.mxu0 %v5512
  %8075 = vmatpush1.bf16.msra.mxu0 %v5511
  %8076 = vmatprep.subr.bf16.mxu0 %v5520
  %8077 = vmatpush1.bf16.msra.mxu0 %v5519
  %8078 = vmatprep.subr.bf16.mxu0 %v5528
  %8079 = vmatpush1.bf16.msra.mxu0 %v5527
  %8080 = vmatprep.subr.bf16.mxu0 %v5536
  %8081 = vmatpush1.bf16.msra.mxu0 %v5535
  %8082 = vmatprep.subr.bf16.mxu0 %v5544
  %8083 = vmatpush1.bf16.msra.mxu0 %v5543
  %8084 = vmatprep.subr.bf16.mxu0 0
  %8085 = vmatpush1.bf16.msra.mxu0 0
  %8086 = vmatprep.subr.bf16.mxu0 0
  %8087 = vmatpush1.bf16.msra.mxu0 0
  %8088 = vmatprep.subr.bf16.mxu0 0
  %8089 = vmatpush1.bf16.msra.mxu0 0
  %8090 = vmatprep.subr.bf16.mxu0 0
  %8091 = vmatpush1.bf16.msra.mxu0 0
  %8092 = vmatprep.subr.bf16.mxu0 0
  %8093 = vmatpush1.bf16.msra.mxu0 0
  %8094 = vmatprep.subr.bf16.mxu0 0
  %8095 = vmatpush1.bf16.msra.mxu0 0
  %8096 = vmatprep.subr.bf16.mxu0 0
  %8097 = vmatpush1.bf16.msra.mxu0 0
  %8098 = vmatprep.subr.bf16.mxu0 0
  %8099 = vmatpush1.bf16.msra.mxu0 0
  %8100 = vmatprep.mubr.bf16.mxu0 0
  %8101 = vmatmul.mubr.bf16.gmra.mrb[0].mxu0 %v62
  %v8102 = vpop.f32.mrb[0].mxu0
  %v8103 = vadd.f32 %v8062, %v8102
  %v8104 = vpop.f32.mrb[0].mxu0
  %v8105 = vadd.f32 %v8064, %v8104
  %v8106 = vpop.f32.mrb[0].mxu0
  %v8107 = vpop.f32.mrb[0].mxu0
  %8108 = vdwg.mxu0
  %v8109 = vmax.f32 %v6996, 0.0
  %v8110 = vmax.f32 %v6998, 0.0
  %v8111 = vmax.f32 %v7365, 0.0
  %v8112 = vmax.f32 %v7367, 0.0
  %v8113 = vmax.f32 %v7734, 0.0
  %v8114 = vmax.f32 %v7736, 0.0
  %v8115 = vmax.f32 %v8103, 0.0
  %v8116 = vmax.f32 %v8105, 0.0
  %v8117 = vpack.c.bf16 %v8109, %v8109
  %v8118 = vpack.c.bf16 %v8110, %v8110
  %v8119 = vpack.c.bf16 %v8111, %v8111
  %v8120 = vpack.c.bf16 %v8112, %v8112
  %v8121 = vpack.c.bf16 %v8113, %v8113
  %v8122 = vpack.c.bf16 %v8114, %v8114
  %v8123 = vpack.c.bf16 %v8115, %v8115
  %v8124 = vpack.c.bf16 %v8116, %v8116
  %v8125 = vld [vmem:[%s3] sm:$0xf]
  %v8126 = vld [vmem:[%s3 + $0x4] sm:$0xf]
  %v8127 = vld [vmem:[%s3 + $0x8] sm:$0xf]
  %v8128 = vld [vmem:[%s3 + $0xc] sm:$0xf]
  %v8129 = vld [vmem:[%s3 + $0x10] sm:$0xf]
  %v8130 = vld [vmem:[%s3 + $0x14] sm:$0xf]
  %v8131 = vld [vmem:[%s3 + $0x18] sm:$0xf]
  %v8132 = vld [vmem:[%s3 + $0x1c] sm:$0xf]
  %v8133 = vld [vmem:[%s3 + $0x20] sm:$0xf]
  %v8134 = vld [vmem:[%s3 + $0x24] sm:$0xf]
  %v8135 = vld [vmem:[%s3 + $0x28] sm:$0xf]
  %v8136 = vld [vmem:[%s3 + $0x2c] sm:$0xf]
  %v8137 = vld [vmem:[%s3 + $0x30] sm:$0xf]
  %v8138 = vld [vmem:[%s3 + $0x34] sm:$0xf]
  %v8139 = vld [vmem:[%s3 + $0x38] sm:$0xf]
  %v8140 = vld [vmem:[%s3 + $0x3c] sm:$0xf]
  %v8141 = vld [vmem:[%s3 + $0x40] sm:$0xf]
  %v8142 = vld [vmem:[%s3 + $0x44] sm:$0xf]
  %v8143 = vld [vmem:[%s3 + $0x48] sm:$0xf]
  %v8144 = vld [vmem:[%s3 + $0x4c] sm:$0xf]
  %v8145 = vld [vmem:[%s3 + $0x50] sm:$0xf]
  %v8146 = vld [vmem:[%s3 + $0x54] sm:$0xf]
  %v8147 = vld [vmem:[%s3 + $0x58] sm:$0xf]
  %v8148 = vld [vmem:[%s3 + $0x5c] sm:$0xf]
  %v8149 = vld [vmem:[%s3 + $0x60] sm:$0xf]
  %v8150 = vld [vmem:[%s3 + $0x64] sm:$0xf]
  %v8151 = vld [vmem:[%s3 + $0x68] sm:$0xf]
  %v8152 = vld [vmem:[%s3 + $0x6c] sm:$0xf]
  %v8153 = vld [vmem:[%s3 + $0x70] sm:$0xf]
  %v8154 = vld [vmem:[%s3 + $0x74] sm:$0xf]
  %v8155 = vld [vmem:[%s3 + $0x78] sm:$0xf]
  %v8156 = vld [vmem:[%s3 + $0x7c] sm:$0xf]
  %v8157 = vld [vmem:[%s3 + $0x80] sm:$0xf]
  %v8158 = vld [vmem:[%s3 + $0x84] sm:$0xf]
  %v8159 = vld [vmem:[%s3 + $0x88] sm:$0xf]
  %v8160 = vld [vmem:[%s3 + $0x8c] sm:$0xf]
  %v8161 = vld [vmem:[%s3 + $0x90] sm:$0xf]
  %v8162 = vld [vmem:[%s3 + $0x94] sm:$0xf]
  %v8163 = vld [vmem:[%s3 + $0x98] sm:$0xf]
  %v8164 = vld [vmem:[%s3 + $0x9c] sm:$0xf]
  %v8165 = vld [vmem:[%s3 + $0xa0] sm:$0xf]
  %v8166 = vld [vmem:[%s3 + $0xa4] sm:$0xf]
  %v8167 = vld [vmem:[%s3 + $0xa8] sm:$0xf]
  %v8168 = vld [vmem:[%s3 + $0xac] sm:$0xf]
  %v8169 = vld [vmem:[%s3 + $0xb0] sm:$0xf]
  %v8170 = vld [vmem:[%s3 + $0xb4] sm:$0xf]
  %v8171 = vld [vmem:[%s3 + $0xb8] sm:$0xf]
  %v8172 = vld [vmem:[%s3 + $0xbc] sm:$0xf]
  %v8173 = vld [vmem:[%s3 + $0xc0] sm:$0xf]
  %v8174 = vld [vmem:[%s3 + $0xc4] sm:$0xf]
  %v8175 = vld [vmem:[%s3 + $0xc8] sm:$0xf]
  %v8176 = vld [vmem:[%s3 + $0xcc] sm:$0xf]
  %v8177 = vld [vmem:[%s3 + $0xd0] sm:$0xf]
  %v8178 = vld [vmem:[%s3 + $0xd4] sm:$0xf]
  %v8179 = vld [vmem:[%s3 + $0xd8] sm:$0xf]
  %v8180 = vld [vmem:[%s3 + $0xdc] sm:$0xf]
  %v8181 = vld [vmem:[%s3 + $0xe0] sm:$0xf]
  %v8182 = vld [vmem:[%s3 + $0xe4] sm:$0xf]
  %v8183 = vld [vmem:[%s3 + $0xe8] sm:$0xf]
  %v8184 = vld [vmem:[%s3 + $0xec] sm:$0xf]
  %v8185 = vld [vmem:[%s3 + $0xf0] sm:$0xf]
  %v8186 = vld [vmem:[%s3 + $0xf4] sm:$0xf]
  %v8187 = vld [vmem:[%s3 + $0xf8] sm:$0xf]
  %v8188 = vld [vmem:[%s3 + $0xfc] sm:$0xf]
  %v8189 = vld [vmem:[%s3 + $0x100] sm:$0xf]
  %v8190 = vld [vmem:[%s3 + $0x104] sm:$0xf]
  %v8191 = vld [vmem:[%s3 + $0x108] sm:$0xf]
  %v8192 = vld [vmem:[%s3 + $0x10c] sm:$0xf]
  %v8193 = vld [vmem:[%s3 + $0x110] sm:$0xf]
  %v8194 = vld [vmem:[%s3 + $0x114] sm:$0xf]
  %v8195 = vld [vmem:[%s3 + $0x118] sm:$0xf]
  %v8196 = vld [vmem:[%s3 + $0x11c] sm:$0xf]
  %v8197 = vld [vmem:[%s3 + $0x120] sm:$0xf]
  %v8198 = vld [vmem:[%s3 + $0x124] sm:$0xf]
  %v8199 = vld [vmem:[%s3 + $0x128] sm:$0xf]
  %v8200 = vld [vmem:[%s3 + $0x12c] sm:$0xf]
  %v8201 = vld [vmem:[%s3 + $0x130] sm:$0xf]
  %v8202 = vld [vmem:[%s3 + $0x134] sm:$0xf]
  %v8203 = vld [vmem:[%s3 + $0x138] sm:$0xf]
  %v8204 = vld [vmem:[%s3 + $0x13c] sm:$0xf]
  %v8205 = vld [vmem:[%s3 + $0x140] sm:$0xf]
  %v8206 = vld [vmem:[%s3 + $0x144] sm:$0xf]
  %v8207 = vld [vmem:[%s3 + $0x148] sm:$0xf]
  %v8208 = vld [vmem:[%s3 + $0x14c] sm:$0xf]
  %v8209 = vld [vmem:[%s3 + $0x150] sm:$0xf]
  %v8210 = vld [vmem:[%s3 + $0x154] sm:$0xf]
  %v8211 = vld [vmem:[%s3 + $0x158] sm:$0xf]
  %v8212 = vld [vmem:[%s3 + $0x15c] sm:$0xf]
  %v8213 = vld [vmem:[%s3 + $0x160] sm:$0xf]
  %v8214 = vld [vmem:[%s3 + $0x164] sm:$0xf]
  %v8215 = vld [vmem:[%s3 + $0x168] sm:$0xf]
  %v8216 = vld [vmem:[%s3 + $0x16c] sm:$0xf]
  %v8217 = vld [vmem:[%s3 + $0x170] sm:$0xf]
  %v8218 = vld [vmem:[%s3 + $0x174] sm:$0xf]
  %v8219 = vld [vmem:[%s3 + $0x178] sm:$0xf]
  %v8220 = vld [vmem:[%s3 + $0x17c] sm:$0xf]
  %v8221 = vld [vmem:[%s3 + $0x180] sm:$0xf]
  %v8222 = vld [vmem:[%s3 + $0x184] sm:$0xf]
  %v8223 = vld [vmem:[%s3 + $0x188] sm:$0xf]
  %v8224 = vld [vmem:[%s3 + $0x18c] sm:$0xf]
  %v8225 = vld [vmem:[%s3 + $0x190] sm:$0xf]
  %v8226 = vld [vmem:[%s3 + $0x194] sm:$0xf]
  %v8227 = vld [vmem:[%s3 + $0x198] sm:$0xf]
  %v8228 = vld [vmem:[%s3 + $0x19c] sm:$0xf]
  %v8229 = vld [vmem:[%s3 + $0x1a0] sm:$0xf]
  %v8230 = vld [vmem:[%s3 + $0x1a4] sm:$0xf]
  %v8231 = vld [vmem:[%s3 + $0x1a8] sm:$0xf]
  %v8232 = vld [vmem:[%s3 + $0x1ac] sm:$0xf]
  %v8233 = vld [vmem:[%s3 + $0x1b0] sm:$0xf]
  %v8234 = vld [vmem:[%s3 + $0x1b4] sm:$0xf]
  %v8235 = vld [vmem:[%s3 + $0x1b8] sm:$0xf]
  %v8236 = vld [vmem:[%s3 + $0x1bc] sm:$0xf]
  %v8237 = vld [vmem:[%s3 + $0x1c0] sm:$0xf]
  %v8238 = vld [vmem:[%s3 + $0x1c4] sm:$0xf]
  %v8239 = vld [vmem:[%s3 + $0x1c8] sm:$0xf]
  %v8240 = vld [vmem:[%s3 + $0x1cc] sm:$0xf]
  %v8241 = vld [vmem:[%s3 + $0x1d0] sm:$0xf]
  %v8242 = vld [vmem:[%s3 + $0x1d4] sm:$0xf]
  %v8243 = vld [vmem:[%s3 + $0x1d8] sm:$0xf]
  %v8244 = vld [vmem:[%s3 + $0x1dc] sm:$0xf]
  %v8245 = vld [vmem:[%s3 + $0x1e0] sm:$0xf]
  %v8246 = vld [vmem:[%s3 + $0x1e4] sm:$0xf]
  %v8247 = vld [vmem:[%s3 + $0x1e8] sm:$0xf]
  %v8248 = vld [vmem:[%s3 + $0x1ec] sm:$0xf]
  %v8249 = vld [vmem:[%s3 + $0x1f0] sm:$0xf]
  %v8250 = vld [vmem:[%s3 + $0x1f4] sm:$0xf]
  %v8251 = vld [vmem:[%s3 + $0x1f8] sm:$0xf]
  %v8252 = vld [vmem:[%s3 + $0x1fc] sm:$0xf]
  %v8253 = vld [vmem:[%s4] sm:$0x1]
  %v8255 = vlaneseq
  %v8256 = vshrl.u32 %v8255, 7
  %v8257 = vsub.s32 0, %v8256
  %v8258 = vrot.slane %v8253, %v8257
  %v8388 = vunpack.c.l.b16 %v8125
  %v8389 = vunpack.c.l.b16 %v8126
  %v8390 = vunpack.c.l.b16 %v8127
  %v8391 = vunpack.c.l.b16 %v8128
  %v8392 = vunpack.c.l.b16 %v8129
  %v8393 = vunpack.c.l.b16 %v8130
  %v8394 = vunpack.c.l.b16 %v8131
  %v8395 = vunpack.c.l.b16 %v8132
  %v8396 = vunpack.c.l.b16 %v8133
  %v8397 = vunpack.c.l.b16 %v8134
  %v8398 = vunpack.c.l.b16 %v8135
  %v8399 = vunpack.c.l.b16 %v8136
  %v8400 = vunpack.c.l.b16 %v8137
  %v8401 = vunpack.c.l.b16 %v8138
  %v8402 = vunpack.c.l.b16 %v8139
  %v8403 = vunpack.c.l.b16 %v8140
  %v8404 = vunpack.c.l.b16 %v8141
  %v8405 = vunpack.c.l.b16 %v8142
  %v8406 = vunpack.c.l.b16 %v8143
  %v8407 = vunpack.c.l.b16 %v8144
  %v8408 = vunpack.c.l.b16 %v8145
  %v8409 = vunpack.c.l.b16 %v8146
  %v8410 = vunpack.c.l.b16 %v8147
  %v8411 = vunpack.c.l.b16 %v8148
  %v8412 = vunpack.c.l.b16 %v8149
  %v8413 = vunpack.c.l.b16 %v8150
  %v8414 = vunpack.c.l.b16 %v8151
  %v8415 = vunpack.c.l.b16 %v8152
  %v8416 = vunpack.c.l.b16 %v8153
  %v8417 = vunpack.c.l.b16 %v8154
  %v8418 = vunpack.c.l.b16 %v8155
  %v8419 = vunpack.c.l.b16 %v8156
  %v8420 = vunpack.c.l.b16 %v8157
  %v8421 = vunpack.c.l.b16 %v8158
  %v8422 = vunpack.c.l.b16 %v8159
  %v8423 = vunpack.c.l.b16 %v8160
  %v8424 = vunpack.c.l.b16 %v8161
  %v8425 = vunpack.c.l.b16 %v8162
  %v8426 = vunpack.c.l.b16 %v8163
  %v8427 = vunpack.c.l.b16 %v8164
  %v8428 = vunpack.c.l.b16 %v8165
  %v8429 = vunpack.c.l.b16 %v8166
  %v8430 = vunpack.c.l.b16 %v8167
  %v8431 = vunpack.c.l.b16 %v8168
  %v8432 = vunpack.c.l.b16 %v8169
  %v8433 = vunpack.c.l.b16 %v8170
  %v8434 = vunpack.c.l.b16 %v8171
  %v8435 = vunpack.c.l.b16 %v8172
  %v8436 = vunpack.c.l.b16 %v8173
  %v8437 = vunpack.c.l.b16 %v8174
  %v8438 = vunpack.c.l.b16 %v8175
  %v8439 = vunpack.c.l.b16 %v8176
  %v8440 = vunpack.c.l.b16 %v8177
  %v8441 = vunpack.c.l.b16 %v8178
  %v8442 = vunpack.c.l.b16 %v8179
  %v8443 = vunpack.c.l.b16 %v8180
  %v8444 = vunpack.c.l.b16 %v8181
  %v8445 = vunpack.c.l.b16 %v8182
  %v8446 = vunpack.c.l.b16 %v8183
  %v8447 = vunpack.c.l.b16 %v8184
  %v8448 = vunpack.c.l.b16 %v8185
  %v8449 = vunpack.c.l.b16 %v8186
  %v8450 = vunpack.c.l.b16 %v8187
  %v8451 = vunpack.c.l.b16 %v8188
  %v8452 = vunpack.c.l.b16 %v8189
  %v8453 = vunpack.c.l.b16 %v8190
  %v8454 = vunpack.c.l.b16 %v8191
  %v8455 = vunpack.c.l.b16 %v8192
  %v8456 = vunpack.c.l.b16 %v8193
  %v8457 = vunpack.c.l.b16 %v8194
  %v8458 = vunpack.c.l.b16 %v8195
  %v8459 = vunpack.c.l.b16 %v8196
  %v8460 = vunpack.c.l.b16 %v8197
  %v8461 = vunpack.c.l.b16 %v8198
  %v8462 = vunpack.c.l.b16 %v8199
  %v8463 = vunpack.c.l.b16 %v8200
  %v8464 = vunpack.c.l.b16 %v8201
  %v8465 = vunpack.c.l.b16 %v8202
  %v8466 = vunpack.c.l.b16 %v8203
  %v8467 = vunpack.c.l.b16 %v8204
  %v8468 = vunpack.c.l.b16 %v8205
  %v8469 = vunpack.c.l.b16 %v8206
  %v8470 = vunpack.c.l.b16 %v8207
  %v8471 = vunpack.c.l.b16 %v8208
  %v8472 = vunpack.c.l.b16 %v8209
  %v8473 = vunpack.c.l.b16 %v8210
  %v8474 = vunpack.c.l.b16 %v8211
  %v8475 = vunpack.c.l.b16 %v8212
  %v8476 = vunpack.c.l.b16 %v8213
  %v8477 = vunpack.c.l.b16 %v8214
  %v8478 = vunpack.c.l.b16 %v8215
  %v8479 = vunpack.c.l.b16 %v8216
  %v8480 = vunpack.c.l.b16 %v8217
  %v8481 = vunpack.c.l.b16 %v8218
  %v8482 = vunpack.c.l.b16 %v8219
  %v8483 = vunpack.c.l.b16 %v8220
  %v8484 = vunpack.c.l.b16 %v8221
  %v8485 = vunpack.c.l.b16 %v8222
  %v8486 = vunpack.c.l.b16 %v8223
  %v8487 = vunpack.c.l.b16 %v8224
  %v8488 = vunpack.c.l.b16 %v8225
  %v8489 = vunpack.c.l.b16 %v8226
  %v8490 = vunpack.c.l.b16 %v8227
  %v8491 = vunpack.c.l.b16 %v8228
  %v8492 = vunpack.c.l.b16 %v8229
  %v8493 = vunpack.c.l.b16 %v8230
  %v8494 = vunpack.c.l.b16 %v8231
  %v8495 = vunpack.c.l.b16 %v8232
  %v8496 = vunpack.c.l.b16 %v8233
  %v8497 = vunpack.c.l.b16 %v8234
  %v8498 = vunpack.c.l.b16 %v8235
  %v8499 = vunpack.c.l.b16 %v8236
  %v8500 = vunpack.c.l.b16 %v8237
  %v8501 = vunpack.c.l.b16 %v8238
  %v8502 = vunpack.c.l.b16 %v8239
  %v8503 = vunpack.c.l.b16 %v8240
  %v8504 = vunpack.c.l.b16 %v8241
  %v8505 = vunpack.c.l.b16 %v8242
  %v8506 = vunpack.c.l.b16 %v8243
  %v8507 = vunpack.c.l.b16 %v8244
  %v8508 = vunpack.c.l.b16 %v8245
  %v8509 = vunpack.c.l.b16 %v8246
  %v8510 = vunpack.c.l.b16 %v8247
  %v8511 = vunpack.c.l.b16 %v8248
  %v8512 = vunpack.c.l.b16 %v8249
  %v8513 = vunpack.c.l.b16 %v8250
  %v8514 = vunpack.c.l.b16 %v8251
  %v8515 = vunpack.c.l.b16 %v8252
  %v8516 = vpack.c.b16 %v8389, %v8388
  %v8517 = vpack.c.b16 %v8391, %v8390
  %v8518 = vpack.c.b16 %v8393, %v8392
  %v8519 = vpack.c.b16 %v8395, %v8394
  %v8520 = vpack.c.b16 %v8397, %v8396
  %v8521 = vpack.c.b16 %v8399, %v8398
  %v8522 = vpack.c.b16 %v8401, %v8400
  %v8523 = vpack.c.b16 %v8403, %v8402
  %v8524 = vpack.c.b16 %v8405, %v8404
  %v8525 = vpack.c.b16 %v8407, %v8406
  %v8526 = vpack.c.b16 %v8409, %v8408
  %v8527 = vpack.c.b16 %v8411, %v8410
  %v8528 = vpack.c.b16 %v8413, %v8412
  %v8529 = vpack.c.b16 %v8415, %v8414
  %v8530 = vpack.c.b16 %v8417, %v8416
  %v8531 = vpack.c.b16 %v8419, %v8418
  %v8532 = vpack.c.b16 %v8421, %v8420
  %v8533 = vpack.c.b16 %v8423, %v8422
  %v8534 = vpack.c.b16 %v8425, %v8424
  %v8535 = vpack.c.b16 %v8427, %v8426
  %v8536 = vpack.c.b16 %v8429, %v8428
  %v8537 = vpack.c.b16 %v8431, %v8430
  %v8538 = vpack.c.b16 %v8433, %v8432
  %v8539 = vpack.c.b16 %v8435, %v8434
  %v8540 = vpack.c.b16 %v8437, %v8436
  %v8541 = vpack.c.b16 %v8439, %v8438
  %v8542 = vpack.c.b16 %v8441, %v8440
  %v8543 = vpack.c.b16 %v8443, %v8442
  %v8544 = vpack.c.b16 %v8445, %v8444
  %v8545 = vpack.c.b16 %v8447, %v8446
  %v8546 = vpack.c.b16 %v8449, %v8448
  %v8547 = vpack.c.b16 %v8451, %v8450
  %v8548 = vpack.c.b16 %v8453, %v8452
  %v8549 = vpack.c.b16 %v8455, %v8454
  %v8550 = vpack.c.b16 %v8457, %v8456
  %v8551 = vpack.c.b16 %v8459, %v8458
  %v8552 = vpack.c.b16 %v8461, %v8460
  %v8553 = vpack.c.b16 %v8463, %v8462
  %v8554 = vpack.c.b16 %v8465, %v8464
  %v8555 = vpack.c.b16 %v8467, %v8466
  %v8556 = vpack.c.b16 %v8469, %v8468
  %v8557 = vpack.c.b16 %v8471, %v8470
  %v8558 = vpack.c.b16 %v8473, %v8472
  %v8559 = vpack.c.b16 %v8475, %v8474
  %v8560 = vpack.c.b16 %v8477, %v8476
  %v8561 = vpack.c.b16 %v8479, %v8478
  %v8562 = vpack.c.b16 %v8481, %v8480
  %v8563 = vpack.c.b16 %v8483, %v8482
  %v8564 = vpack.c.b16 %v8485, %v8484
  %v8565 = vpack.c.b16 %v8487, %v8486
  %v8566 = vpack.c.b16 %v8489, %v8488
  %v8567 = vpack.c.b16 %v8491, %v8490
  %v8568 = vpack.c.b16 %v8493, %v8492
  %v8569 = vpack.c.b16 %v8495, %v8494
  %v8570 = vpack.c.b16 %v8497, %v8496
  %v8571 = vpack.c.b16 %v8499, %v8498
  %v8572 = vpack.c.b16 %v8501, %v8500
  %v8573 = vpack.c.b16 %v8503, %v8502
  %v8574 = vpack.c.b16 %v8505, %v8504
  %v8575 = vpack.c.b16 %v8507, %v8506
  %v8576 = vpack.c.b16 %v8509, %v8508
  %v8577 = vpack.c.b16 %v8511, %v8510
  %v8578 = vpack.c.b16 %v8513, %v8512
  %v8579 = vpack.c.b16 %v8515, %v8514
  %8644 = vmatprep.subr.bf16.mxu0 0
  %8645 = vmatpush1.bf16.msra.mxu0 %v8516
  %8646 = vmatprep.subr.bf16.mxu0 0
  %8647 = vmatpush1.bf16.msra.mxu0 %v8517
  %8648 = vmatprep.subr.bf16.mxu0 0
  %8649 = vmatpush1.bf16.msra.mxu0 %v8518
  %8650 = vmatprep.subr.bf16.mxu0 0
  %8651 = vmatpush1.bf16.msra.mxu0 %v8519
  %8652 = vmatprep.subr.bf16.mxu0 0
  %8653 = vmatpush1.bf16.msra.mxu0 %v8520
  %8654 = vmatprep.subr.bf16.mxu0 0
  %8655 = vmatpush1.bf16.msra.mxu0 %v8521
  %8656 = vmatprep.subr.bf16.mxu0 0
  %8657 = vmatpush1.bf16.msra.mxu0 %v8522
  %8658 = vmatprep.subr.bf16.mxu0 0
  %8659 = vmatpush1.bf16.msra.mxu0 %v8523
  %8660 = vmatprep.subr.bf16.mxu0 0
  %8661 = vmatpush1.bf16.msra.mxu0 %v8524
  %8662 = vmatprep.subr.bf16.mxu0 0
  %8663 = vmatpush1.bf16.msra.mxu0 %v8525
  %8664 = vmatprep.subr.bf16.mxu0 0
  %8665 = vmatpush1.bf16.msra.mxu0 %v8526
  %8666 = vmatprep.subr.bf16.mxu0 0
  %8667 = vmatpush1.bf16.msra.mxu0 %v8527
  %8668 = vmatprep.subr.bf16.mxu0 0
  %8669 = vmatpush1.bf16.msra.mxu0 %v8528
  %8670 = vmatprep.subr.bf16.mxu0 0
  %8671 = vmatpush1.bf16.msra.mxu0 %v8529
  %8672 = vmatprep.subr.bf16.mxu0 0
  %8673 = vmatpush1.bf16.msra.mxu0 %v8530
  %8674 = vmatprep.subr.bf16.mxu0 0
  %8675 = vmatpush1.bf16.msra.mxu0 %v8531
  %8676 = vmatprep.mubr.bf16.mxu0 %v8118
  %8677 = vmatmul.mubr.bf16.gmra.mrb[0].mxu0 %v8117
  %v8678 = vpop.f32.mrb[0].mxu0
  %v8679 = vadd.f32 %v8258, %v8678
  %v8680 = vpop.f32.mrb[0].mxu0
  %v8681 = vpop.f32.mrb[0].mxu0
  %v8682 = vpop.f32.mrb[0].mxu0
  %8683 = vdwg.mxu0
  %8684 = vmatprep.subr.bf16.mxu0 0
  %8685 = vmatpush1.bf16.msra.mxu0 %v8532
  %8686 = vmatprep.subr.bf16.mxu0 0
  %8687 = vmatpush1.bf16.msra.mxu0 %v8533
  %8688 = vmatprep.subr.bf16.mxu0 0
  %8689 = vmatpush1.bf16.msra.mxu0 %v8534
  %8690 = vmatprep.subr.bf16.mxu0 0
  %8691 = vmatpush1.bf16.msra.mxu0 %v8535
  %8692 = vmatprep.subr.bf16.mxu0 0
  %8693 = vmatpush1.bf16.msra.mxu0 %v8536
  %8694 = vmatprep.subr.bf16.mxu0 0
  %8695 = vmatpush1.bf16.msra.mxu0 %v8537
  %8696 = vmatprep.subr.bf16.mxu0 0
  %8697 = vmatpush1.bf16.msra.mxu0 %v8538
  %8698 = vmatprep.subr.bf16.mxu0 0
  %8699 = vmatpush1.bf16.msra.mxu0 %v8539
  %8700 = vmatprep.subr.bf16.mxu0 0
  %8701 = vmatpush1.bf16.msra.mxu0 %v8540
  %8702 = vmatprep.subr.bf16.mxu0 0
  %8703 = vmatpush1.bf16.msra.mxu0 %v8541
  %8704 = vmatprep.subr.bf16.mxu0 0
  %8705 = vmatpush1.bf16.msra.mxu0 %v8542
  %8706 = vmatprep.subr.bf16.mxu0 0
  %8707 = vmatpush1.bf16.msra.mxu0 %v8543
  %8708 = vmatprep.subr.bf16.mxu0 0
  %8709 = vmatpush1.bf16.msra.mxu0 %v8544
  %8710 = vmatprep.subr.bf16.mxu0 0
  %8711 = vmatpush1.bf16.msra.mxu0 %v8545
  %8712 = vmatprep.subr.bf16.mxu0 0
  %8713 = vmatpush1.bf16.msra.mxu0 %v8546
  %8714 = vmatprep.subr.bf16.mxu0 0
  %8715 = vmatpush1.bf16.msra.mxu0 %v8547
  %8716 = vmatprep.mubr.bf16.mxu0 %v8120
  %8717 = vmatmul.mubr.bf16.gmra.mrb[0].mxu0 %v8119
  %v8718 = vpop.f32.mrb[0].mxu0
  %v8719 = vadd.f32 %v8679, %v8718
  %v8720 = vpop.f32.mrb[0].mxu0
  %v8721 = vpop.f32.mrb[0].mxu0
  %v8722 = vpop.f32.mrb[0].mxu0
  %8723 = vdwg.mxu0
  %8724 = vmatprep.subr.bf16.mxu0 0
  %8725 = vmatpush1.bf16.msra.mxu0 %v8548
  %8726 = vmatprep.subr.bf16.mxu0 0
  %8727 = vmatpush1.bf16.msra.mxu0 %v8549
  %8728 = vmatprep.subr.bf16.mxu0 0
  %8729 = vmatpush1.bf16.msra.mxu0 %v8550
  %8730 = vmatprep.subr.bf16.mxu0 0
  %8731 = vmatpush1.bf16.msra.mxu0 %v8551
  %8732 = vmatprep.subr.bf16.mxu0 0
  %8733 = vmatpush1.bf16.msra.mxu0 %v8552
  %8734 = vmatprep.subr.bf16.mxu0 0
  %8735 = vmatpush1.bf16.msra.mxu0 %v8553
  %8736 = vmatprep.subr.bf16.mxu0 0
  %8737 = vmatpush1.bf16.msra.mxu0 %v8554
  %8738 = vmatprep.subr.bf16.mxu0 0
  %8739 = vmatpush1.bf16.msra.mxu0 %v8555
  %8740 = vmatprep.subr.bf16.mxu0 0
  %8741 = vmatpush1.bf16.msra.mxu0 %v8556
  %8742 = vmatprep.subr.bf16.mxu0 0
  %8743 = vmatpush1.bf16.msra.mxu0 %v8557
  %8744 = vmatprep.subr.bf16.mxu0 0
  %8745 = vmatpush1.bf16.msra.mxu0 %v8558
  %8746 = vmatprep.subr.bf16.mxu0 0
  %8747 = vmatpush1.bf16.msra.mxu0 %v8559
  %8748 = vmatprep.subr.bf16.mxu0 0
  %8749 = vmatpush1.bf16.msra.mxu0 %v8560
  %8750 = vmatprep.subr.bf16.mxu0 0
  %8751 = vmatpush1.bf16.msra.mxu0 %v8561
  %8752 = vmatprep.subr.bf16.mxu0 0
  %8753 = vmatpush1.bf16.msra.mxu0 %v8562
  %8754 = vmatprep.subr.bf16.mxu0 0
  %8755 = vmatpush1.bf16.msra.mxu0 %v8563
  %8756 = vmatprep.mubr.bf16.mxu0 %v8122
  %8757 = vmatmul.mubr.bf16.gmra.mrb[0].mxu0 %v8121
  %v8758 = vpop.f32.mrb[0].mxu0
  %v8759 = vadd.f32 %v8719, %v8758
  %v8760 = vpop.f32.mrb[0].mxu0
  %v8761 = vpop.f32.mrb[0].mxu0
  %v8762 = vpop.f32.mrb[0].mxu0
  %8763 = vdwg.mxu0
  %8764 = vmatprep.subr.bf16.mxu0 0
  %8765 = vmatpush1.bf16.msra.mxu0 %v8564
  %8766 = vmatprep.subr.bf16.mxu0 0
  %8767 = vmatpush1.bf16.msra.mxu0 %v8565
  %8768 = vmatprep.subr.bf16.mxu0 0
  %8769 = vmatpush1.bf16.msra.mxu0 %v8566
  %8770 = vmatprep.subr.bf16.mxu0 0
  %8771 = vmatpush1.bf16.msra.mxu0 %v8567
  %8772 = vmatprep.subr.bf16.mxu0 0
  %8773 = vmatpush1.bf16.msra.mxu0 %v8568
  %8774 = vmatprep.subr.bf16.mxu0 0
  %8775 = vmatpush1.bf16.msra.mxu0 %v8569
  %8776 = vmatprep.subr.bf16.mxu0 0
  %8777 = vmatpush1.bf16.msra.mxu0 %v8570
  %8778 = vmatprep.subr.bf16.mxu0 0
  %8779 = vmatpush1.bf16.msra.mxu0 %v8571
  %8780 = vmatprep.subr.bf16.mxu0 0
  %8781 = vmatpush1.bf16.msra.mxu0 %v8572
  %8782 = vmatprep.subr.bf16.mxu0 0
  %8783 = vmatpush1.bf16.msra.mxu0 %v8573
  %8784 = vmatprep.subr.bf16.mxu0 0
  %8785 = vmatpush1.bf16.msra.mxu0 %v8574
  %8786 = vmatprep.subr.bf16.mxu0 0
  %8787 = vmatpush1.bf16.msra.mxu0 %v8575
  %8788 = vmatprep.subr.bf16.mxu0 0
  %8789 = vmatpush1.bf16.msra.mxu0 %v8576
  %8790 = vmatprep.subr.bf16.mxu0 0
  %8791 = vmatpush1.bf16.msra.mxu0 %v8577
  %8792 = vmatprep.subr.bf16.mxu0 0
  %8793 = vmatpush1.bf16.msra.mxu0 %v8578
  %8794 = vmatprep.subr.bf16.mxu0 0
  %8795 = vmatpush1.bf16.msra.mxu0 %v8579
  %8796 = vmatprep.mubr.bf16.mxu0 %v8124
  %8797 = vmatmul.mubr.bf16.gmra.mrb[0].mxu0 %v8123
  %v8798 = vpop.f32.mrb[0].mxu0
  %v8799 = vadd.f32 %v8759, %v8798
  %v8800 = vpop.f32.mrb[0].mxu0
  %v8801 = vpop.f32.mrb[0].mxu0
  %v8802 = vpop.f32.mrb[0].mxu0
  %8803 = vdwg.mxu0
  %v8804 = vmax.f32 %v8799, 0.0
  %v8805 = vlaneseq
  %v8806 = vshrl.u32 %v8805, 7
  %vm8807 = vcmp.lt.s32.totalorder %v8806, 2
  %v8808 = vsel %vm8807, 1, 0
  %v8809 = vcvt.s32.f32 %v8808
  %v8810 = vmul.f32 %v8804, %v8809
  %v8811 = vrot.slane %v8810, 4
  %v8812 = vadd.f32 %v8810, %v8811
  %v8813 = vrot.slane %v8812, 2
  %v8814 = vadd.f32 %v8812, %v8813
  %v8815 = vrot.slane %v8814, 1
  %v8816 = vadd.f32 %v8814, %v8815
  %v8817 = vmul.f32 %v8816, 0.5
  %v8818 = vsub.f32 %v8804, %v8817
  %v8819 = vmul.f32 %v8818, %v8809
  %v8820 = vmul.f32 %v8819, %v8819
  %v8821 = vrot.slane %v8820, 4
  %v8822 = vadd.f32 %v8820, %v8821
  %v8823 = vrot.slane %v8822, 2
  %v8824 = vadd.f32 %v8822, %v8823
  %v8825 = vrot.slane %v8824, 1
  %v8826 = vadd.f32 %v8824, %v8825
  %v8827 = vmul.f32 %v8826, 0.5
  %v8828 = vadd.f32 %v8827, 1e-05
  %v8829 = vrsqrt.pop %v8828
  %v8830 = vmul.f32 %v8818, %v8829
  %v8831 = vld [vmem:[%s5] sm:$0x1]
  %v8833 = vlaneseq
  %v8834 = vshrl.u32 %v8833, 7
  %v8835 = vsub.s32 0, %v8834
  %v8836 = vrot.slane %v8831, %v8835
  %v8838 = vmul.f32 %v8830, %v8836
  %8839 = vadd.xlane.f32.xlu0 %v8838
  %v8840 = vpop.xlane.xlu0 %8839
  %v8841 = vld [vmem:[#allocation2] sm:$0x1]
  %v8843 = vlaneseq
  %v8844 = vshrl.u32 %v8843, 7
  %v8845 = vsub.s32 0, %v8844
  %v8846 = vrot.slane %v8841, %v8845
  %v8848 = vadd.f32 %v8840, %v8846
  %vm8849 = vcmask 7168
  %8850 = vst.msk [vmem:[%s7] sm:$0xff] %vm8849, %v8848
  // Predicated region
  $region30: #{optical_flow_forward.7} parent=0 // pred_check
    _
  $region31: #{optical_flow_forward.7} parent=0 // pred_check_branch
    %8852 = sbr.rel (0) target = $region33
  $region32: #{optical_flow_forward.7} parent=0 // pred_region
    _
  $region33: #{optical_flow_forward.7} parent=0 // pred_fallthru
    _
  // Predicated region
  $region34: #{optical_flow_forward.7} parent=0 // pred_check
    _
  $region35: #{optical_flow_forward.7} parent=0 // pred_check_branch
    %8854 = sbr.rel (0) target = $region37
  $region36: #{optical_flow_forward.7} parent=0 // pred_region
    _
  $region37: #{optical_flow_forward.7} parent=0 // pred_fallthru
    _

</llo_original>
